<compile_context>
chip_gen: v5e
topology: v5e:2x2
jax: 0.10.0
libtpu: 0.0.40
codegen_flags: <defaults>
</compile_context>

<pallas_src>
import jax
import jax.numpy as jnp
from jax import lax
from jax.experimental import pallas as pl
from jax.experimental.pallas import tpu as pltpu

C_IN = 50        # conv in/out channels == LSTM sequence length
KSZ = 3          # conv kernel size
EMBED = 200      # embedding dim == LSTM hidden size (Linear in_features)
HID = 200        # LSTM hidden size
HP = 256         # lane-aligned padded hidden size (gates at 0/256/512/768)
G4 = 4 * HP      # padded gate width (1024)
LSTM_IN = 588    # 198 + 196 + 194 after three stacked valid convs
L1, L2, L3 = EMBED - 2, EMBED - 4, EMBED - 6   # 198, 196, 194
VOCAB = 100
BATCH = 2


# ---------------------------------------------------------------------------
# Kernel A: fused conv chain + ReLU + concat + (X @ Wih + bias) gate projection
# ---------------------------------------------------------------------------
def _conv_proj_kernel(emb_ref, cw_ref, cb_ref, w1_ref, w2_ref, w3_ref, gb_ref,
                      gx_ref):
    # emb_ref: (1, 50, 200); cw_ref: (K, C_out, C_in); cb_ref: (C_out, 1)
    # w{1,2,3}_ref: (198/196/194, 1024) gate-aligned Wih segments
    # gb_ref: (1, 1024) gate-aligned (b_ih + b_hh); gx_ref: (1, 50, 1024)
    def conv_relu(x):
        lo = x.shape[1] - KSZ + 1
        acc = cb_ref[...] + jnp.dot(cw_ref[0], x[:, 0:lo],
                                    preferred_element_type=jnp.float32)
        for k in range(1, KSZ):
            acc = acc + jnp.dot(cw_ref[k], x[:, k:k + lo],
                                preferred_element_type=jnp.float32)
        return acc, jnp.maximum(acc, 0.0)

    x0 = emb_ref[0]                      # (50, 200)
    c1, h1 = conv_relu(x0)               # (50, 198)
    c2, h2 = conv_relu(c1)               # (50, 196)
    _, h3 = conv_relu(c2)                # (50, 194); raw c3 is never consumed
    # concat([h1,h2,h3]) @ Wih  ==  h1@W1 + h2@W2 + h3@W3   (one big lane-dense GEMM)
    gx_ref[0] = (jnp.dot(h1, w1_ref[...], preferred_element_type=jnp.float32)
                 + jnp.dot(h2, w2_ref[...], preferred_element_type=jnp.float32)
                 + jnp.dot(h3, w3_ref[...], preferred_element_type=jnp.float32)
                 + gb_ref[...])          # (50, 1024)


def conv_proj(emb, prep):
    B, C, E = emb.shape
    return pl.pallas_call(
        _conv_proj_kernel,
        out_shape=jax.ShapeDtypeStruct((B, C, G4), jnp.float32),
        grid=(B,),
        in_specs=[
            pl.BlockSpec((1, C, E), lambda b: (b, 0, 0)),
            pl.BlockSpec((KSZ, C_IN, C_IN), lambda b: (0, 0, 0)),
            pl.BlockSpec((C_IN, 1), lambda b: (0, 0)),
            pl.BlockSpec((L1, G4), lambda b: (0, 0)),
            pl.BlockSpec((L2, G4), lambda b: (0, 0)),
            pl.BlockSpec((L3, G4), lambda b: (0, 0)),
            pl.BlockSpec((1, G4), lambda b: (0, 0)),
        ],
        out_specs=pl.BlockSpec((1, C, G4), lambda b: (b, 0, 0)),
        compiler_params=pltpu.CompilerParams(
            dimension_semantics=("parallel",),
            vmem_limit_bytes=32 * 1024 * 1024),
    )(emb, prep["conv_w_koc"], prep["conv_b_col"],
      prep["wih1"], prep["wih2"], prep["wih3"], prep["gate_b"])


# ---------------------------------------------------------------------------
# Kernel B: LSTM recurrence only (h @ Whh + precomputed gate inputs)
# ---------------------------------------------------------------------------
def _lstm_kernel(gx_ref, whh_ref, h_ref):
    # gx_ref: (T, B, 1024) time-major precomputed gate inputs (X@Wih + bias)
    # whh_ref: (256, 1024) gate-aligned, zero rows beyond HID
    # h_ref:  (T, B, 256) lane-dense hidden-state output (cols >= HID are 0)
    T = gx_ref.shape[0]
    B = gx_ref.shape[1]
    U = 5 if T % 5 == 0 else 1           # manual unroll window

    def one_step(t, carry):
        h, c = carry
        gates = gx_ref[t] + jnp.dot(h, whh_ref[...],
                                    preferred_element_type=jnp.float32)  # (B, 1024)
        # torch gate order i, f, g, o; each gate starts at a 256-aligned lane.
        i_g = jax.nn.sigmoid(gates[:, 0 * HP:1 * HP])
        f_g = jax.nn.sigmoid(gates[:, 1 * HP:2 * HP])
        g_g = jnp.tanh(gates[:, 2 * HP:3 * HP])
        o_g = jax.nn.sigmoid(gates[:, 3 * HP:4 * HP])
        c = f_g * c + i_g * g_g
        h = o_g * jnp.tanh(c)
        h_ref[t] = h                     # lane-dense (B, 256) store
        return (h, c)

    def block(tb, carry):
        t0 = tb * U
        for u in range(U):               # static unroll inside the visible loop
            carry = one_step(t0 + u, carry)
        return carry

    init = (jnp.zeros((B, HP), jnp.float32), jnp.zeros((B, HP), jnp.float32))
    lax.fori_loop(0, T // U, block, init)


def lstm(gx_t, whh):
    T, B, G = gx_t.shape
    return pl.pallas_call(
        _lstm_kernel,
        out_shape=jax.ShapeDtypeStruct((T, B, HP), jnp.float32),
        grid=(1,),
        in_specs=[
            pl.BlockSpec((T, B, G), lambda i: (0, 0, 0)),
            pl.BlockSpec((HP, G), lambda i: (0, 0)),
        ],
        out_specs=pl.BlockSpec((T, B, HP), lambda i: (0, 0, 0)),
        compiler_params=pltpu.CompilerParams(
            dimension_semantics=("arbitrary",),
            vmem_limit_bytes=32 * 1024 * 1024),
    )(gx_t, whh)


# ---------------------------------------------------------------------------
# One-time parameter preparation (outside jit): transposes, gate alignment
# ---------------------------------------------------------------------------
def _gate_pad_cols(w):
    # w: (rows, 4*HID) in torch gate order i,f,g,o -> (rows, 4*HP), gate g at
    # columns [g*HP, g*HP + HID), zeros elsewhere.
    rows = w.shape[0]
    out = jnp.zeros((rows, G4), jnp.float32)
    for g in range(4):
        out = out.at[:, g * HP:g * HP + HID].set(w[:, g * HID:(g + 1) * HID])
    return out


def prepare_params(p):
    wih_pad = _gate_pad_cols(jnp.asarray(p["w_ih"], jnp.float32).T)      # (588, 1024)
    whh_pad = jnp.zeros((HP, G4), jnp.float32)
    whh_pad = whh_pad.at[:HID, :].set(
        _gate_pad_cols(jnp.asarray(p["w_hh"], jnp.float32).T))           # (256, 1024)
    gate_b = _gate_pad_cols(
        (p["b_ih"] + p["b_hh"]).astype(jnp.float32)[None, :])            # (1, 1024)
    lin_w_pad = jnp.zeros((HP, 1), jnp.float32)
    lin_w_pad = lin_w_pad.at[:HID, :].set(p["lin_w"].astype(jnp.float32).T)
    return dict(
        embed=jnp.asarray(p["embed"], jnp.float32),
        conv_w_koc=jnp.transpose(p["conv_w"], (2, 0, 1)).astype(jnp.float32),
        conv_b_col=p["conv_b"].astype(jnp.float32)[:, None],
        wih1=wih_pad[0:L1],
        wih2=wih_pad[L1:L1 + L2],
        wih3=wih_pad[L1 + L2:L1 + L2 + L3],
        whh=whh_pad,
        gate_b=gate_b,
        lin_w_pad=lin_w_pad,
        lin_b=jnp.asarray(p["lin_b"], jnp.float32),
    )


# ---------------------------------------------------------------------------
# Full forward (embedding gather, final Linear, tiny transposes stay in XLA)
# ---------------------------------------------------------------------------
def forward(idx, prep):
    emb = jnp.take(prep["embed"], idx, axis=0)               # (B, 50, 200)
    gx = conv_proj(emb, prep)                                # (B, 50, 1024)
    gx_t = jnp.transpose(gx, (1, 0, 2))                      # time-major (50, B, 1024)
    h_seq = lstm(gx_t, prep["whh"])                          # (50, B, 256)
    # Dropout(0.2) is identity in eval; Linear(200 -> 1) via zero-padded weight.
    y = jnp.einsum("tbh,ho->tbo", h_seq, prep["lin_w_pad"]) + prep["lin_b"]
    return jnp.transpose(y, (1, 0, 2))                       # (B, 50, 1)


# ---------------------------------------------------------------------------
# Pure-JAX reference for verification
# ---------------------------------------------------------------------------
def reference(idx, params):
    emb = params["embed"][idx]
    w, b = params["conv_w"], params["conv_b"]

    def conv(xx):
        L_out = xx.shape[2] - KSZ + 1
        out = jnp.zeros((xx.shape[0], C_IN, L_out), jnp.float32)
        for k in range(KSZ):
            out = out + jnp.einsum("oc,bcl->bol", w[:, :, k], xx[:, :, k:k + L_out])
        return out + b[None, :, None]

    c1 = conv(emb); h1 = jax.nn.relu(c1)
    c2 = conv(c1);  h2 = jax.nn.relu(c2)
    c3 = conv(c2);  h3 = jax.nn.relu(c3)
    h = jnp.concatenate([h1, h2, h3], axis=-1)

    wih, whh = params["w_ih"], params["w_hh"]
    bias = params["b_ih"] + params["b_hh"]
    B = h.shape[0]

    def step(carry, x_t):
        hh, cc = carry
        gates = x_t @ wih.T + hh @ whh.T + bias
        i = jax.nn.sigmoid(gates[:, :HID])
        f = jax.nn.sigmoid(gates[:, HID:2 * HID])
        g = jnp.tanh(gates[:, 2 * HID:3 * HID])
        o = jax.nn.sigmoid(gates[:, 3 * HID:])
        cc = f * cc + i * g
        hh = o * jnp.tanh(cc)
        return (hh, cc), hh

    init = (jnp.zeros((B, HID), jnp.float32), jnp.zeros((B, HID), jnp.float32))
    _, hs = lax.scan(step, init, jnp.transpose(h, (1, 0, 2)))
    hs = jnp.transpose(hs, (1, 0, 2))
    return hs @ params["lin_w"].T + params["lin_b"]


if __name__ == "__main__":
    key = jax.random.PRNGKey(0)
    ks = jax.random.split(key, 9)
    params = {
        "embed": jax.random.normal(ks[0], (VOCAB, EMBED), jnp.float32) * 0.5,
        "conv_w": jax.random.normal(ks[1], (C_IN, C_IN, KSZ), jnp.float32)
                  / jnp.sqrt(float(C_IN * KSZ)),
        "conv_b": jax.random.normal(ks[2], (C_IN,), jnp.float32) * 0.05,
        "w_ih": jax.random.normal(ks[3], (4 * HID, LSTM_IN), jnp.float32)
                / jnp.sqrt(float(LSTM_IN)),
        "w_hh": jax.random.normal(ks[4], (4 * HID, HID), jnp.float32)
                / jnp.sqrt(float(HID)),
        "b_ih": jax.random.normal(ks[5], (4 * HID,), jnp.float32) * 0.05,
        "b_hh": jax.random.normal(ks[6], (4 * HID,), jnp.float32) * 0.05,
        "lin_w": jax.random.normal(ks[7], (1, HID), jnp.float32)
                 / jnp.sqrt(float(HID)),
        "lin_b": jnp.zeros((1,), jnp.float32),
    }
    idx = jax.random.randint(ks[8], (BATCH, C_IN), 0, VOCAB)

    prep = prepare_params(params)              # one-time, outside jit
    out = jax.jit(forward)(idx, prep)
    out = jax.block_until_ready(out)

    ref = reference(idx, params)
    assert out.shape == (BATCH, C_IN, 1), out.shape
    assert jnp.allclose(out, ref, atol=2e-2, rtol=2e-2), \
        float(jnp.max(jnp.abs(out - ref)))
    print("KERNEL_OK")
</pallas_src>

<mosaic_0001>
module attributes {stable_mosaic.version = 11 : i64} {
  func.func @_conv_proj_kernel(%arg0: i32, %arg1: memref<1x50x200xf32, #tpu.memory_space<vmem>>, %arg2: memref<3x50x50xf32, #tpu.memory_space<vmem>>, %arg3: memref<50x1xf32, #tpu.memory_space<vmem>>, %arg4: memref<198x1024xf32, #tpu.memory_space<vmem>>, %arg5: memref<196x1024xf32, #tpu.memory_space<vmem>>, %arg6: memref<194x1024xf32, #tpu.memory_space<vmem>>, %arg7: memref<1x1024xf32, #tpu.memory_space<vmem>>, %arg8: memref<1x50x1024xf32, #tpu.memory_space<vmem>>) attributes {dimension_semantics = [#tpu.dimension_semantics<parallel>], iteration_bounds = array<i64: 2>, scalar_prefetch = 0 : i64, scratch_operands = 0 : i64, tpu.core_type = #tpu.core_type<tc>, window_params = [{transform_indices = @transform_0, window_bounds = array<i64: 1, 50, 200>}, {pipeline_mode = #tpu.pipeline_mode<synchronous>, transform_indices = @transform_1, window_bounds = array<i64: 3, 50, 50>}, {pipeline_mode = #tpu.pipeline_mode<synchronous>, transform_indices = @transform_2, window_bounds = array<i64: 50, 1>}, {pipeline_mode = #tpu.pipeline_mode<synchronous>, transform_indices = @transform_3, window_bounds = array<i64: 198, 1024>}, {pipeline_mode = #tpu.pipeline_mode<synchronous>, transform_indices = @transform_4, window_bounds = array<i64: 196, 1024>}, {pipeline_mode = #tpu.pipeline_mode<synchronous>, transform_indices = @transform_5, window_bounds = array<i64: 194, 1024>}, {pipeline_mode = #tpu.pipeline_mode<synchronous>, transform_indices = @transform_6, window_bounds = array<i64: 1, 1024>}, {transform_indices = @transform_7, window_bounds = array<i64: 1, 50, 1024>}]} {
    %c0 = arith.constant 0 : index
    %c0_0 = arith.constant 0 : index
    %c0_1 = arith.constant 0 : index
    %0 = vector.load %arg1[%c0, %c0_0, %c0_1] : memref<1x50x200xf32, #tpu.memory_space<vmem>>, vector<1x50x200xf32>
    %1 = vector.shape_cast %0 : vector<1x50x200xf32> to vector<50x200xf32>
    %c0_2 = arith.constant 0 : index
    %c0_3 = arith.constant 0 : index
    %2 = vector.load %arg3[%c0_2, %c0_3] : memref<50x1xf32, #tpu.memory_space<vmem>>, vector<50x1xf32>
    %c0_4 = arith.constant 0 : index
    %c0_5 = arith.constant 0 : index
    %c0_6 = arith.constant 0 : index
    %3 = vector.load %arg2[%c0_4, %c0_5, %c0_6] : memref<3x50x50xf32, #tpu.memory_space<vmem>>, vector<1x50x50xf32>
    %4 = vector.shape_cast %3 : vector<1x50x50xf32> to vector<50x50xf32>
    %5 = vector.extract_strided_slice %1 {offsets = [0, 0], sizes = [50, 198], strides = [1, 1]} : vector<50x200xf32> to vector<50x198xf32>
    %cst = arith.constant dense<0.000000e+00> : vector<50x198xf32>
    %6 = tpu.matmul %4, %5, %cst {dimension_numbers = #tpu.dot_dimension_numbers<[1], [0], [0], [1], [0, 0, 1, 1], [], []>} : vector<50x50xf32>, vector<50x198xf32>, vector<50x198xf32> -> vector<50x198xf32>
    %7 = vector.broadcast %2 : vector<50x1xf32> to vector<50x198xf32>
    %8 = arith.addf %7, %6 : vector<50x198xf32>
    %c1 = arith.constant 1 : index
    %c0_7 = arith.constant 0 : index
    %c0_8 = arith.constant 0 : index
    %9 = vector.load %arg2[%c1, %c0_7, %c0_8] : memref<3x50x50xf32, #tpu.memory_space<vmem>>, vector<1x50x50xf32>
    %10 = vector.shape_cast %9 : vector<1x50x50xf32> to vector<50x50xf32>
    %11 = vector.extract_strided_slice %1 {offsets = [0, 1], sizes = [50, 198], strides = [1, 1]} : vector<50x200xf32> to vector<50x198xf32>
    %cst_9 = arith.constant dense<0.000000e+00> : vector<50x198xf32>
    %12 = tpu.matmul %10, %11, %cst_9 {dimension_numbers = #tpu.dot_dimension_numbers<[1], [0], [0], [1], [0, 0, 1, 1], [], []>} : vector<50x50xf32>, vector<50x198xf32>, vector<50x198xf32> -> vector<50x198xf32>
    %13 = arith.addf %8, %12 : vector<50x198xf32>
    %c2 = arith.constant 2 : index
    %c0_10 = arith.constant 0 : index
    %c0_11 = arith.constant 0 : index
    %14 = vector.load %arg2[%c2, %c0_10, %c0_11] : memref<3x50x50xf32, #tpu.memory_space<vmem>>, vector<1x50x50xf32>
    %15 = vector.shape_cast %14 : vector<1x50x50xf32> to vector<50x50xf32>
    %16 = vector.extract_strided_slice %1 {offsets = [0, 2], sizes = [50, 198], strides = [1, 1]} : vector<50x200xf32> to vector<50x198xf32>
    %cst_12 = arith.constant dense<0.000000e+00> : vector<50x198xf32>
    %17 = tpu.matmul %15, %16, %cst_12 {dimension_numbers = #tpu.dot_dimension_numbers<[1], [0], [0], [1], [0, 0, 1, 1], [], []>} : vector<50x50xf32>, vector<50x198xf32>, vector<50x198xf32> -> vector<50x198xf32>
    %18 = arith.addf %13, %17 : vector<50x198xf32>
    %cst_13 = arith.constant 0.000000e+00 : f32
    %19 = vector.broadcast %cst_13 : f32 to vector<50x198xf32>
    %20 = arith.maximumf %18, %19 : vector<50x198xf32>
    %c0_14 = arith.constant 0 : index
    %c0_15 = arith.constant 0 : index
    %21 = vector.load %arg3[%c0_14, %c0_15] : memref<50x1xf32, #tpu.memory_space<vmem>>, vector<50x1xf32>
    %c0_16 = arith.constant 0 : index
    %c0_17 = arith.constant 0 : index
    %c0_18 = arith.constant 0 : index
    %22 = vector.load %arg2[%c0_16, %c0_17, %c0_18] : memref<3x50x50xf32, #tpu.memory_space<vmem>>, vector<1x50x50xf32>
    %23 = vector.shape_cast %22 : vector<1x50x50xf32> to vector<50x50xf32>
    %24 = vector.extract_strided_slice %18 {offsets = [0, 0], sizes = [50, 196], strides = [1, 1]} : vector<50x198xf32> to vector<50x196xf32>
    %cst_19 = arith.constant dense<0.000000e+00> : vector<50x196xf32>
    %25 = tpu.matmul %23, %24, %cst_19 {dimension_numbers = #tpu.dot_dimension_numbers<[1], [0], [0], [1], [0, 0, 1, 1], [], []>} : vector<50x50xf32>, vector<50x196xf32>, vector<50x196xf32> -> vector<50x196xf32>
    %26 = vector.broadcast %21 : vector<50x1xf32> to vector<50x196xf32>
    %27 = arith.addf %26, %25 : vector<50x196xf32>
    %c1_20 = arith.constant 1 : index
    %c0_21 = arith.constant 0 : index
    %c0_22 = arith.constant 0 : index
    %28 = vector.load %arg2[%c1_20, %c0_21, %c0_22] : memref<3x50x50xf32, #tpu.memory_space<vmem>>, vector<1x50x50xf32>
    %29 = vector.shape_cast %28 : vector<1x50x50xf32> to vector<50x50xf32>
    %30 = vector.extract_strided_slice %18 {offsets = [0, 1], sizes = [50, 196], strides = [1, 1]} : vector<50x198xf32> to vector<50x196xf32>
    %cst_23 = arith.constant dense<0.000000e+00> : vector<50x196xf32>
    %31 = tpu.matmul %29, %30, %cst_23 {dimension_numbers = #tpu.dot_dimension_numbers<[1], [0], [0], [1], [0, 0, 1, 1], [], []>} : vector<50x50xf32>, vector<50x196xf32>, vector<50x196xf32> -> vector<50x196xf32>
    %32 = arith.addf %27, %31 : vector<50x196xf32>
    %c2_24 = arith.constant 2 : index
    %c0_25 = arith.constant 0 : index
    %c0_26 = arith.constant 0 : index
    %33 = vector.load %arg2[%c2_24, %c0_25, %c0_26] : memref<3x50x50xf32, #tpu.memory_space<vmem>>, vector<1x50x50xf32>
    %34 = vector.shape_cast %33 : vector<1x50x50xf32> to vector<50x50xf32>
    %35 = vector.extract_strided_slice %18 {offsets = [0, 2], sizes = [50, 196], strides = [1, 1]} : vector<50x198xf32> to vector<50x196xf32>
    %cst_27 = arith.constant dense<0.000000e+00> : vector<50x196xf32>
    %36 = tpu.matmul %34, %35, %cst_27 {dimension_numbers = #tpu.dot_dimension_numbers<[1], [0], [0], [1], [0, 0, 1, 1], [], []>} : vector<50x50xf32>, vector<50x196xf32>, vector<50x196xf32> -> vector<50x196xf32>
    %37 = arith.addf %32, %36 : vector<50x196xf32>
    %cst_28 = arith.constant 0.000000e+00 : f32
    %38 = vector.broadcast %cst_28 : f32 to vector<50x196xf32>
    %39 = arith.maximumf %37, %38 : vector<50x196xf32>
    %c0_29 = arith.constant 0 : index
    %c0_30 = arith.constant 0 : index
    %40 = vector.load %arg3[%c0_29, %c0_30] : memref<50x1xf32, #tpu.memory_space<vmem>>, vector<50x1xf32>
    %c0_31 = arith.constant 0 : index
    %c0_32 = arith.constant 0 : index
    %c0_33 = arith.constant 0 : index
    %41 = vector.load %arg2[%c0_31, %c0_32, %c0_33] : memref<3x50x50xf32, #tpu.memory_space<vmem>>, vector<1x50x50xf32>
    %42 = vector.shape_cast %41 : vector<1x50x50xf32> to vector<50x50xf32>
    %43 = vector.extract_strided_slice %37 {offsets = [0, 0], sizes = [50, 194], strides = [1, 1]} : vector<50x196xf32> to vector<50x194xf32>
    %cst_34 = arith.constant dense<0.000000e+00> : vector<50x194xf32>
    %44 = tpu.matmul %42, %43, %cst_34 {dimension_numbers = #tpu.dot_dimension_numbers<[1], [0], [0], [1], [0, 0, 1, 1], [], []>} : vector<50x50xf32>, vector<50x194xf32>, vector<50x194xf32> -> vector<50x194xf32>
    %45 = vector.broadcast %40 : vector<50x1xf32> to vector<50x194xf32>
    %46 = arith.addf %45, %44 : vector<50x194xf32>
    %c1_35 = arith.constant 1 : index
    %c0_36 = arith.constant 0 : index
    %c0_37 = arith.constant 0 : index
    %47 = vector.load %arg2[%c1_35, %c0_36, %c0_37] : memref<3x50x50xf32, #tpu.memory_space<vmem>>, vector<1x50x50xf32>
    %48 = vector.shape_cast %47 : vector<1x50x50xf32> to vector<50x50xf32>
    %49 = vector.extract_strided_slice %37 {offsets = [0, 1], sizes = [50, 194], strides = [1, 1]} : vector<50x196xf32> to vector<50x194xf32>
    %cst_38 = arith.constant dense<0.000000e+00> : vector<50x194xf32>
    %50 = tpu.matmul %48, %49, %cst_38 {dimension_numbers = #tpu.dot_dimension_numbers<[1], [0], [0], [1], [0, 0, 1, 1], [], []>} : vector<50x50xf32>, vector<50x194xf32>, vector<50x194xf32> -> vector<50x194xf32>
    %51 = arith.addf %46, %50 : vector<50x194xf32>
    %c2_39 = arith.constant 2 : index
    %c0_40 = arith.constant 0 : index
    %c0_41 = arith.constant 0 : index
    %52 = vector.load %arg2[%c2_39, %c0_40, %c0_41] : memref<3x50x50xf32, #tpu.memory_space<vmem>>, vector<1x50x50xf32>
    %53 = vector.shape_cast %52 : vector<1x50x50xf32> to vector<50x50xf32>
    %54 = vector.extract_strided_slice %37 {offsets = [0, 2], sizes = [50, 194], strides = [1, 1]} : vector<50x196xf32> to vector<50x194xf32>
    %cst_42 = arith.constant dense<0.000000e+00> : vector<50x194xf32>
    %55 = tpu.matmul %53, %54, %cst_42 {dimension_numbers = #tpu.dot_dimension_numbers<[1], [0], [0], [1], [0, 0, 1, 1], [], []>} : vector<50x50xf32>, vector<50x194xf32>, vector<50x194xf32> -> vector<50x194xf32>
    %56 = arith.addf %51, %55 : vector<50x194xf32>
    %cst_43 = arith.constant 0.000000e+00 : f32
    %57 = vector.broadcast %cst_43 : f32 to vector<50x194xf32>
    %58 = arith.maximumf %56, %57 : vector<50x194xf32>
    %c0_44 = arith.constant 0 : index
    %c0_45 = arith.constant 0 : index
    %59 = vector.load %arg4[%c0_44, %c0_45] : memref<198x1024xf32, #tpu.memory_space<vmem>>, vector<198x1024xf32>
    %cst_46 = arith.constant dense<0.000000e+00> : vector<50x1024xf32>
    %60 = tpu.matmul %20, %59, %cst_46 {dimension_numbers = #tpu.dot_dimension_numbers<[1], [0], [0], [1], [0, 0, 1, 1], [], []>} : vector<50x198xf32>, vector<198x1024xf32>, vector<50x1024xf32> -> vector<50x1024xf32>
    %c0_47 = arith.constant 0 : index
    %c0_48 = arith.constant 0 : index
    %61 = vector.load %arg5[%c0_47, %c0_48] : memref<196x1024xf32, #tpu.memory_space<vmem>>, vector<196x1024xf32>
    %cst_49 = arith.constant dense<0.000000e+00> : vector<50x1024xf32>
    %62 = tpu.matmul %39, %61, %cst_49 {dimension_numbers = #tpu.dot_dimension_numbers<[1], [0], [0], [1], [0, 0, 1, 1], [], []>} : vector<50x196xf32>, vector<196x1024xf32>, vector<50x1024xf32> -> vector<50x1024xf32>
    %63 = arith.addf %60, %62 : vector<50x1024xf32>
    %c0_50 = arith.constant 0 : index
    %c0_51 = arith.constant 0 : index
    %64 = vector.load %arg6[%c0_50, %c0_51] : memref<194x1024xf32, #tpu.memory_space<vmem>>, vector<194x1024xf32>
    %cst_52 = arith.constant dense<0.000000e+00> : vector<50x1024xf32>
    %65 = tpu.matmul %58, %64, %cst_52 {dimension_numbers = #tpu.dot_dimension_numbers<[1], [0], [0], [1], [0, 0, 1, 1], [], []>} : vector<50x194xf32>, vector<194x1024xf32>, vector<50x1024xf32> -> vector<50x1024xf32>
    %66 = arith.addf %63, %65 : vector<50x1024xf32>
    %c0_53 = arith.constant 0 : index
    %c0_54 = arith.constant 0 : index
    %67 = vector.load %arg7[%c0_53, %c0_54] : memref<1x1024xf32, #tpu.memory_space<vmem>>, vector<1x1024xf32>
    %68 = vector.broadcast %67 : vector<1x1024xf32> to vector<50x1024xf32>
    %69 = arith.addf %66, %68 : vector<50x1024xf32>
    %c0_55 = arith.constant 0 : index
    %c0_56 = arith.constant 0 : index
    %c0_57 = arith.constant 0 : index
    %70 = vector.load %arg8[%c0_55, %c0_56, %c0_57] : memref<1x50x1024xf32, #tpu.memory_space<vmem>>, vector<1x50x1024xf32>
    %71 = vector.shape_cast %70 : vector<1x50x1024xf32> to vector<50x1024xf32>
    %72 = vector.shape_cast %69 : vector<50x1024xf32> to vector<1x50x1024xf32>
    tpu.vector_store %arg8[%c0_55, %c0_56, %c0_57], %72 {strides = array<i32>} : memref<1x50x1024xf32, #tpu.memory_space<vmem>>, vector<1x50x1024xf32>,
    return
  }
  func.func @transform_0(%arg0: i32) -> (i32, i32, i32) {
    %c0_i32 = arith.constant 0 : i32
    %c0_i32_0 = arith.constant 0 : i32
    %c0_i32_1 = arith.constant 0 : i32
    return %arg0, %c0_i32, %c0_i32_0 : i32, i32, i32
  }
  func.func @transform_1(%arg0: i32) -> (i32, i32, i32) {
    %c0_i32 = arith.constant 0 : i32
    %c0_i32_0 = arith.constant 0 : i32
    %c0_i32_1 = arith.constant 0 : i32
    %c0_i32_2 = arith.constant 0 : i32
    return %c0_i32, %c0_i32_0, %c0_i32_1 : i32, i32, i32
  }
  func.func @transform_2(%arg0: i32) -> (i32, i32) {
    %c0_i32 = arith.constant 0 : i32
    %c0_i32_0 = arith.constant 0 : i32
    %c0_i32_1 = arith.constant 0 : i32
    return %c0_i32, %c0_i32_0 : i32, i32
  }
  func.func @transform_3(%arg0: i32) -> (i32, i32) {
    %c0_i32 = arith.constant 0 : i32
    %c0_i32_0 = arith.constant 0 : i32
    %c0_i32_1 = arith.constant 0 : i32
    return %c0_i32, %c0_i32_0 : i32, i32
  }
  func.func @transform_4(%arg0: i32) -> (i32, i32) {
    %c0_i32 = arith.constant 0 : i32
    %c0_i32_0 = arith.constant 0 : i32
    %c0_i32_1 = arith.constant 0 : i32
    return %c0_i32, %c0_i32_0 : i32, i32
  }
  func.func @transform_5(%arg0: i32) -> (i32, i32) {
    %c0_i32 = arith.constant 0 : i32
    %c0_i32_0 = arith.constant 0 : i32
    %c0_i32_1 = arith.constant 0 : i32
    return %c0_i32, %c0_i32_0 : i32, i32
  }
  func.func @transform_6(%arg0: i32) -> (i32, i32) {
    %c0_i32 = arith.constant 0 : i32
    %c0_i32_0 = arith.constant 0 : i32
    %c0_i32_1 = arith.constant 0 : i32
    return %c0_i32, %c0_i32_0 : i32, i32
  }
  func.func @transform_7(%arg0: i32) -> (i32, i32, i32) {
    %c0_i32 = arith.constant 0 : i32
    %c0_i32_0 = arith.constant 0 : i32
    %c0_i32_1 = arith.constant 0 : i32
    return %arg0, %c0_i32, %c0_i32_0 : i32, i32, i32
  }
}

module attributes {stable_mosaic.version = 11 : i64} {
  func.func @_lstm_kernel(%arg0: i32, %arg1: memref<50x2x1024xf32, #tpu.memory_space<vmem>>, %arg2: memref<256x1024xf32, #tpu.memory_space<vmem>>, %arg3: memref<50x2x256xf32, #tpu.memory_space<vmem>>) attributes {dimension_semantics = [#tpu.dimension_semantics<arbitrary>], iteration_bounds = array<i64: 1>, scalar_prefetch = 0 : i64, scratch_operands = 0 : i64, tpu.core_type = #tpu.core_type<tc>, window_params = [{pipeline_mode = #tpu.pipeline_mode<synchronous>, transform_indices = @transform_0, window_bounds = array<i64: 50, 2, 1024>}, {pipeline_mode = #tpu.pipeline_mode<synchronous>, transform_indices = @transform_1, window_bounds = array<i64: 256, 1024>}, {pipeline_mode = #tpu.pipeline_mode<synchronous>, transform_indices = @transform_2, window_bounds = array<i64: 50, 2, 256>}]} {
    %cst = arith.constant 0.000000e+00 : f32
    %0 = vector.broadcast %cst : f32 to vector<2x256xf32>
    %cst_0 = arith.constant 0.000000e+00 : f32
    %1 = vector.broadcast %cst_0 : f32 to vector<2x256xf32>
    %c0_i32 = arith.constant 0 : i32
    %c10_i32 = arith.constant 10 : i32
    %2 = arith.addi %c0_i32, %c10_i32 : i32
    %c1_i32 = arith.constant 1 : i32
    %3:2 = scf.for %arg4 = %c0_i32 to %2 step %c1_i32 iter_args(%arg5 = %0, %arg6 = %1) -> (vector<2x256xf32>, vector<2x256xf32>)  : i32 {
      %c5_i32 = arith.constant 5 : i32
      %4 = arith.muli %arg4, %c5_i32 : i32
      %c0_i32_2 = arith.constant 0 : i32
      %5 = arith.addi %4, %c0_i32_2 : i32
      %6 = arith.index_cast %5 : i32 to index
      %c0 = arith.constant 0 : index
      %c0_3 = arith.constant 0 : index
      %7 = vector.load %arg1[%6, %c0, %c0_3] : memref<50x2x1024xf32, #tpu.memory_space<vmem>>, vector<1x2x1024xf32>
      %8 = vector.shape_cast %7 : vector<1x2x1024xf32> to vector<2x1024xf32>
      %c0_4 = arith.constant 0 : index
      %c0_5 = arith.constant 0 : index
      %9 = vector.load %arg2[%c0_4, %c0_5] : memref<256x1024xf32, #tpu.memory_space<vmem>>, vector<256x1024xf32>
      %cst_6 = arith.constant dense<0.000000e+00> : vector<2x1024xf32>
      %10 = tpu.matmul %arg5, %9, %cst_6 {dimension_numbers = #tpu.dot_dimension_numbers<[1], [0], [0], [1], [0, 0, 1, 1], [], []>} : vector<2x256xf32>, vector<256x1024xf32>, vector<2x1024xf32> -> vector<2x1024xf32>
      %11 = arith.addf %8, %10 : vector<2x1024xf32>
      %12 = vector.extract_strided_slice %11 {offsets = [0, 0], sizes = [2, 256], strides = [1, 1]} : vector<2x1024xf32> to vector<2x256xf32>
      %13 = arith.negf %12 : vector<2x256xf32>
      %14 = math.exp %13 : vector<2x256xf32>
      %cst_7 = arith.constant 1.000000e+00 : f32
      %15 = vector.broadcast %cst_7 : f32 to vector<2x256xf32>
      %16 = arith.addf %15, %14 : vector<2x256xf32>
      %17 = arith.divf %15, %16 : vector<2x256xf32>
      %18 = vector.extract_strided_slice %11 {offsets = [0, 256], sizes = [2, 256], strides = [1, 1]} : vector<2x1024xf32> to vector<2x256xf32>
      %19 = arith.negf %18 : vector<2x256xf32>
      %20 = math.exp %19 : vector<2x256xf32>
      %cst_8 = arith.constant 1.000000e+00 : f32
      %21 = vector.broadcast %cst_8 : f32 to vector<2x256xf32>
      %22 = arith.addf %21, %20 : vector<2x256xf32>
      %23 = arith.divf %21, %22 : vector<2x256xf32>
      %24 = vector.extract_strided_slice %11 {offsets = [0, 512], sizes = [2, 256], strides = [1, 1]} : vector<2x1024xf32> to vector<2x256xf32>
      %25 = math.tanh %24 : vector<2x256xf32>
      %26 = vector.extract_strided_slice %11 {offsets = [0, 768], sizes = [2, 256], strides = [1, 1]} : vector<2x1024xf32> to vector<2x256xf32>
      %27 = arith.negf %26 : vector<2x256xf32>
      %28 = math.exp %27 : vector<2x256xf32>
      %cst_9 = arith.constant 1.000000e+00 : f32
      %29 = vector.broadcast %cst_9 : f32 to vector<2x256xf32>
      %30 = arith.addf %29, %28 : vector<2x256xf32>
      %31 = arith.divf %29, %30 : vector<2x256xf32>
      %32 = arith.mulf %23, %arg6 : vector<2x256xf32>
      %33 = arith.mulf %17, %25 : vector<2x256xf32>
      %34 = arith.addf %32, %33 : vector<2x256xf32>
      %35 = math.tanh %34 : vector<2x256xf32>
      %36 = arith.mulf %31, %35 : vector<2x256xf32>
      %37 = arith.index_cast %5 : i32 to index
      %c0_10 = arith.constant 0 : index
      %c0_11 = arith.constant 0 : index
      %38 = vector.load %arg3[%37, %c0_10, %c0_11] : memref<50x2x256xf32, #tpu.memory_space<vmem>>, vector<1x2x256xf32>
      %39 = vector.shape_cast %38 : vector<1x2x256xf32> to vector<2x256xf32>
      %40 = vector.shape_cast %36 : vector<2x256xf32> to vector<1x2x256xf32>
      tpu.vector_store %arg3[%37, %c0_10, %c0_11], %40 {strides = array<i32>} : memref<50x2x256xf32, #tpu.memory_space<vmem>>, vector<1x2x256xf32>,
      %c1_i32_12 = arith.constant 1 : i32
      %41 = arith.addi %4, %c1_i32_12 : i32
      %42 = arith.index_cast %41 : i32 to index
      %c0_13 = arith.constant 0 : index
      %c0_14 = arith.constant 0 : index
      %43 = vector.load %arg1[%42, %c0_13, %c0_14] : memref<50x2x1024xf32, #tpu.memory_space<vmem>>, vector<1x2x1024xf32>
      %44 = vector.shape_cast %43 : vector<1x2x1024xf32> to vector<2x1024xf32>
      %c0_15 = arith.constant 0 : index
      %c0_16 = arith.constant 0 : index
      %45 = vector.load %arg2[%c0_15, %c0_16] : memref<256x1024xf32, #tpu.memory_space<vmem>>, vector<256x1024xf32>
      %cst_17 = arith.constant dense<0.000000e+00> : vector<2x1024xf32>
      %46 = tpu.matmul %36, %45, %cst_17 {dimension_numbers = #tpu.dot_dimension_numbers<[1], [0], [0], [1], [0, 0, 1, 1], [], []>} : vector<2x256xf32>, vector<256x1024xf32>, vector<2x1024xf32> -> vector<2x1024xf32>
      %47 = arith.addf %44, %46 : vector<2x1024xf32>
      %48 = vector.extract_strided_slice %47 {offsets = [0, 0], sizes = [2, 256], strides = [1, 1]} : vector<2x1024xf32> to vector<2x256xf32>
      %49 = arith.negf %48 : vector<2x256xf32>
      %50 = math.exp %49 : vector<2x256xf32>
      %cst_18 = arith.constant 1.000000e+00 : f32
      %51 = vector.broadcast %cst_18 : f32 to vector<2x256xf32>
      %52 = arith.addf %51, %50 : vector<2x256xf32>
      %53 = arith.divf %51, %52 : vector<2x256xf32>
      %54 = vector.extract_strided_slice %47 {offsets = [0, 256], sizes = [2, 256], strides = [1, 1]} : vector<2x1024xf32> to vector<2x256xf32>
      %55 = arith.negf %54 : vector<2x256xf32>
      %56 = math.exp %55 : vector<2x256xf32>
      %cst_19 = arith.constant 1.000000e+00 : f32
      %57 = vector.broadcast %cst_19 : f32 to vector<2x256xf32>
      %58 = arith.addf %57, %56 : vector<2x256xf32>
      %59 = arith.divf %57, %58 : vector<2x256xf32>
      %60 = vector.extract_strided_slice %47 {offsets = [0, 512], sizes = [2, 256], strides = [1, 1]} : vector<2x1024xf32> to vector<2x256xf32>
      %61 = math.tanh %60 : vector<2x256xf32>
      %62 = vector.extract_strided_slice %47 {offsets = [0, 768], sizes = [2, 256], strides = [1, 1]} : vector<2x1024xf32> to vector<2x256xf32>
      %63 = arith.negf %62 : vector<2x256xf32>
      %64 = math.exp %63 : vector<2x256xf32>
      %cst_20 = arith.constant 1.000000e+00 : f32
      %65 = vector.broadcast %cst_20 : f32 to vector<2x256xf32>
      %66 = arith.addf %65, %64 : vector<2x256xf32>
      %67 = arith.divf %65, %66 : vector<2x256xf32>
      %68 = arith.mulf %59, %34 : vector<2x256xf32>
      %69 = arith.mulf %53, %61 : vector<2x256xf32>
      %70 = arith.addf %68, %69 : vector<2x256xf32>
      %71 = math.tanh %70 : vector<2x256xf32>
      %72 = arith.mulf %67, %71 : vector<2x256xf32>
      %73 = arith.index_cast %41 : i32 to index
      %c0_21 = arith.constant 0 : index
      %c0_22 = arith.constant 0 : index
      %74 = vector.load %arg3[%73, %c0_21, %c0_22] : memref<50x2x256xf32, #tpu.memory_space<vmem>>, vector<1x2x256xf32>
      %75 = vector.shape_cast %74 : vector<1x2x256xf32> to vector<2x256xf32>
      %76 = vector.shape_cast %72 : vector<2x256xf32> to vector<1x2x256xf32>
      tpu.vector_store %arg3[%73, %c0_21, %c0_22], %76 {strides = array<i32>} : memref<50x2x256xf32, #tpu.memory_space<vmem>>, vector<1x2x256xf32>,
      %c2_i32 = arith.constant 2 : i32
      %77 = arith.addi %4, %c2_i32 : i32
      %78 = arith.index_cast %77 : i32 to index
      %c0_23 = arith.constant 0 : index
      %c0_24 = arith.constant 0 : index
      %79 = vector.load %arg1[%78, %c0_23, %c0_24] : memref<50x2x1024xf32, #tpu.memory_space<vmem>>, vector<1x2x1024xf32>
      %80 = vector.shape_cast %79 : vector<1x2x1024xf32> to vector<2x1024xf32>
      %c0_25 = arith.constant 0 : index
      %c0_26 = arith.constant 0 : index
      %81 = vector.load %arg2[%c0_25, %c0_26] : memref<256x1024xf32, #tpu.memory_space<vmem>>, vector<256x1024xf32>
      %cst_27 = arith.constant dense<0.000000e+00> : vector<2x1024xf32>
      %82 = tpu.matmul %72, %81, %cst_27 {dimension_numbers = #tpu.dot_dimension_numbers<[1], [0], [0], [1], [0, 0, 1, 1], [], []>} : vector<2x256xf32>, vector<256x1024xf32>, vector<2x1024xf32> -> vector<2x1024xf32>
      %83 = arith.addf %80, %82 : vector<2x1024xf32>
      %84 = vector.extract_strided_slice %83 {offsets = [0, 0], sizes = [2, 256], strides = [1, 1]} : vector<2x1024xf32> to vector<2x256xf32>
      %85 = arith.negf %84 : vector<2x256xf32>
      %86 = math.exp %85 : vector<2x256xf32>
      %cst_28 = arith.constant 1.000000e+00 : f32
      %87 = vector.broadcast %cst_28 : f32 to vector<2x256xf32>
      %88 = arith.addf %87, %86 : vector<2x256xf32>
      %89 = arith.divf %87, %88 : vector<2x256xf32>
      %90 = vector.extract_strided_slice %83 {offsets = [0, 256], sizes = [2, 256], strides = [1, 1]} : vector<2x1024xf32> to vector<2x256xf32>
      %91 = arith.negf %90 : vector<2x256xf32>
      %92 = math.exp %91 : vector<2x256xf32>
      %cst_29 = arith.constant 1.000000e+00 : f32
      %93 = vector.broadcast %cst_29 : f32 to vector<2x256xf32>
      %94 = arith.addf %93, %92 : vector<2x256xf32>
      %95 = arith.divf %93, %94 : vector<2x256xf32>
      %96 = vector.extract_strided_slice %83 {offsets = [0, 512], sizes = [2, 256], strides = [1, 1]} : vector<2x1024xf32> to vector<2x256xf32>
      %97 = math.tanh %96 : vector<2x256xf32>
      %98 = vector.extract_strided_slice %83 {offsets = [0, 768], sizes = [2, 256], strides = [1, 1]} : vector<2x1024xf32> to vector<2x256xf32>
      %99 = arith.negf %98 : vector<2x256xf32>
      %100 = math.exp %99 : vector<2x256xf32>
      %cst_30 = arith.constant 1.000000e+00 : f32
      %101 = vector.broadcast %cst_30 : f32 to vector<2x256xf32>
      %102 = arith.addf %101, %100 : vector<2x256xf32>
      %103 = arith.divf %101, %102 : vector<2x256xf32>
      %104 = arith.mulf %95, %70 : vector<2x256xf32>
      %105 = arith.mulf %89, %97 : vector<2x256xf32>
      %106 = arith.addf %104, %105 : vector<2x256xf32>
      %107 = math.tanh %106 : vector<2x256xf32>
      %108 = arith.mulf %103, %107 : vector<2x256xf32>
      %109 = arith.index_cast %77 : i32 to index
      %c0_31 = arith.constant 0 : index
      %c0_32 = arith.constant 0 : index
      %110 = vector.load %arg3[%109, %c0_31, %c0_32] : memref<50x2x256xf32, #tpu.memory_space<vmem>>, vector<1x2x256xf32>
      %111 = vector.shape_cast %110 : vector<1x2x256xf32> to vector<2x256xf32>
      %112 = vector.shape_cast %108 : vector<2x256xf32> to vector<1x2x256xf32>
      tpu.vector_store %arg3[%109, %c0_31, %c0_32], %112 {strides = array<i32>} : memref<50x2x256xf32, #tpu.memory_space<vmem>>, vector<1x2x256xf32>,
      %c3_i32 = arith.constant 3 : i32
      %113 = arith.addi %4, %c3_i32 : i32
      %114 = arith.index_cast %113 : i32 to index
      %c0_33 = arith.constant 0 : index
      %c0_34 = arith.constant 0 : index
      %115 = vector.load %arg1[%114, %c0_33, %c0_34] : memref<50x2x1024xf32, #tpu.memory_space<vmem>>, vector<1x2x1024xf32>
      %116 = vector.shape_cast %115 : vector<1x2x1024xf32> to vector<2x1024xf32>
      %c0_35 = arith.constant 0 : index
      %c0_36 = arith.constant 0 : index
      %117 = vector.load %arg2[%c0_35, %c0_36] : memref<256x1024xf32, #tpu.memory_space<vmem>>, vector<256x1024xf32>
      %cst_37 = arith.constant dense<0.000000e+00> : vector<2x1024xf32>
      %118 = tpu.matmul %108, %117, %cst_37 {dimension_numbers = #tpu.dot_dimension_numbers<[1], [0], [0], [1], [0, 0, 1, 1], [], []>} : vector<2x256xf32>, vector<256x1024xf32>, vector<2x1024xf32> -> vector<2x1024xf32>
      %119 = arith.addf %116, %118 : vector<2x1024xf32>
      %120 = vector.extract_strided_slice %119 {offsets = [0, 0], sizes = [2, 256], strides = [1, 1]} : vector<2x1024xf32> to vector<2x256xf32>
      %121 = arith.negf %120 : vector<2x256xf32>
      %122 = math.exp %121 : vector<2x256xf32>
      %cst_38 = arith.constant 1.000000e+00 : f32
      %123 = vector.broadcast %cst_38 : f32 to vector<2x256xf32>
      %124 = arith.addf %123, %122 : vector<2x256xf32>
      %125 = arith.divf %123, %124 : vector<2x256xf32>
      %126 = vector.extract_strided_slice %119 {offsets = [0, 256], sizes = [2, 256], strides = [1, 1]} : vector<2x1024xf32> to vector<2x256xf32>
      %127 = arith.negf %126 : vector<2x256xf32>
      %128 = math.exp %127 : vector<2x256xf32>
      %cst_39 = arith.constant 1.000000e+00 : f32
      %129 = vector.broadcast %cst_39 : f32 to vector<2x256xf32>
      %130 = arith.addf %129, %128 : vector<2x256xf32>
      %131 = arith.divf %129, %130 : vector<2x256xf32>
      %132 = vector.extract_strided_slice %119 {offsets = [0, 512], sizes = [2, 256], strides = [1, 1]} : vector<2x1024xf32> to vector<2x256xf32>
      %133 = math.tanh %132 : vector<2x256xf32>
      %134 = vector.extract_strided_slice %119 {offsets = [0, 768], sizes = [2, 256], strides = [1, 1]} : vector<2x1024xf32> to vector<2x256xf32>
      %135 = arith.negf %134 : vector<2x256xf32>
      %136 = math.exp %135 : vector<2x256xf32>
      %cst_40 = arith.constant 1.000000e+00 : f32
      %137 = vector.broadcast %cst_40 : f32 to vector<2x256xf32>
      %138 = arith.addf %137, %136 : vector<2x256xf32>
      %139 = arith.divf %137, %138 : vector<2x256xf32>
      %140 = arith.mulf %131, %106 : vector<2x256xf32>
      %141 = arith.mulf %125, %133 : vector<2x256xf32>
      %142 = arith.addf %140, %141 : vector<2x256xf32>
      %143 = math.tanh %142 : vector<2x256xf32>
      %144 = arith.mulf %139, %143 : vector<2x256xf32>
      %145 = arith.index_cast %113 : i32 to index
      %c0_41 = arith.constant 0 : index
      %c0_42 = arith.constant 0 : index
      %146 = vector.load %arg3[%145, %c0_41, %c0_42] : memref<50x2x256xf32, #tpu.memory_space<vmem>>, vector<1x2x256xf32>
      %147 = vector.shape_cast %146 : vector<1x2x256xf32> to vector<2x256xf32>
      %148 = vector.shape_cast %144 : vector<2x256xf32> to vector<1x2x256xf32>
      tpu.vector_store %arg3[%145, %c0_41, %c0_42], %148 {strides = array<i32>} : memref<50x2x256xf32, #tpu.memory_space<vmem>>, vector<1x2x256xf32>,
      %c4_i32 = arith.constant 4 : i32
      %149 = arith.addi %4, %c4_i32 : i32
      %150 = arith.index_cast %149 : i32 to index
      %c0_43 = arith.constant 0 : index
      %c0_44 = arith.constant 0 : index
      %151 = vector.load %arg1[%150, %c0_43, %c0_44] : memref<50x2x1024xf32, #tpu.memory_space<vmem>>, vector<1x2x1024xf32>
      %152 = vector.shape_cast %151 : vector<1x2x1024xf32> to vector<2x1024xf32>
      %c0_45 = arith.constant 0 : index
      %c0_46 = arith.constant 0 : index
      %153 = vector.load %arg2[%c0_45, %c0_46] : memref<256x1024xf32, #tpu.memory_space<vmem>>, vector<256x1024xf32>
      %cst_47 = arith.constant dense<0.000000e+00> : vector<2x1024xf32>
      %154 = tpu.matmul %144, %153, %cst_47 {dimension_numbers = #tpu.dot_dimension_numbers<[1], [0], [0], [1], [0, 0, 1, 1], [], []>} : vector<2x256xf32>, vector<256x1024xf32>, vector<2x1024xf32> -> vector<2x1024xf32>
      %155 = arith.addf %152, %154 : vector<2x1024xf32>
      %156 = vector.extract_strided_slice %155 {offsets = [0, 0], sizes = [2, 256], strides = [1, 1]} : vector<2x1024xf32> to vector<2x256xf32>
      %157 = arith.negf %156 : vector<2x256xf32>
      %158 = math.exp %157 : vector<2x256xf32>
      %cst_48 = arith.constant 1.000000e+00 : f32
      %159 = vector.broadcast %cst_48 : f32 to vector<2x256xf32>
      %160 = arith.addf %159, %158 : vector<2x256xf32>
      %161 = arith.divf %159, %160 : vector<2x256xf32>
      %162 = vector.extract_strided_slice %155 {offsets = [0, 256], sizes = [2, 256], strides = [1, 1]} : vector<2x1024xf32> to vector<2x256xf32>
      %163 = arith.negf %162 : vector<2x256xf32>
      %164 = math.exp %163 : vector<2x256xf32>
      %cst_49 = arith.constant 1.000000e+00 : f32
      %165 = vector.broadcast %cst_49 : f32 to vector<2x256xf32>
      %166 = arith.addf %165, %164 : vector<2x256xf32>
      %167 = arith.divf %165, %166 : vector<2x256xf32>
      %168 = vector.extract_strided_slice %155 {offsets = [0, 512], sizes = [2, 256], strides = [1, 1]} : vector<2x1024xf32> to vector<2x256xf32>
      %169 = math.tanh %168 : vector<2x256xf32>
      %170 = vector.extract_strided_slice %155 {offsets = [0, 768], sizes = [2, 256], strides = [1, 1]} : vector<2x1024xf32> to vector<2x256xf32>
      %171 = arith.negf %170 : vector<2x256xf32>
      %172 = math.exp %171 : vector<2x256xf32>
      %cst_50 = arith.constant 1.000000e+00 : f32
      %173 = vector.broadcast %cst_50 : f32 to vector<2x256xf32>
      %174 = arith.addf %173, %172 : vector<2x256xf32>
      %175 = arith.divf %173, %174 : vector<2x256xf32>
      %176 = arith.mulf %167, %142 : vector<2x256xf32>
      %177 = arith.mulf %161, %169 : vector<2x256xf32>
      %178 = arith.addf %176, %177 : vector<2x256xf32>
      %179 = math.tanh %178 : vector<2x256xf32>
      %180 = arith.mulf %175, %179 : vector<2x256xf32>
      %181 = arith.index_cast %149 : i32 to index
      %c0_51 = arith.constant 0 : index
      %c0_52 = arith.constant 0 : index
      %182 = vector.load %arg3[%181, %c0_51, %c0_52] : memref<50x2x256xf32, #tpu.memory_space<vmem>>, vector<1x2x256xf32>
      %183 = vector.shape_cast %182 : vector<1x2x256xf32> to vector<2x256xf32>
      %184 = vector.shape_cast %180 : vector<2x256xf32> to vector<1x2x256xf32>
      tpu.vector_store %arg3[%181, %c0_51, %c0_52], %184 {strides = array<i32>} : memref<50x2x256xf32, #tpu.memory_space<vmem>>, vector<1x2x256xf32>,
      scf.yield %180, %178 : vector<2x256xf32>, vector<2x256xf32>
    }
    %c10_i32_1 = arith.constant 10 : i32
    return
  }
  func.func @transform_0(%arg0: i32) -> (i32, i32, i32) {
    %c0_i32 = arith.constant 0 : i32
    %c0_i32_0 = arith.constant 0 : i32
    %c0_i32_1 = arith.constant 0 : i32
    %c0_i32_2 = arith.constant 0 : i32
    return %c0_i32, %c0_i32_0, %c0_i32_1 : i32, i32, i32
  }
  func.func @transform_1(%arg0: i32) -> (i32, i32) {
    %c0_i32 = arith.constant 0 : i32
    %c0_i32_0 = arith.constant 0 : i32
    %c0_i32_1 = arith.constant 0 : i32
    return %c0_i32, %c0_i32_0 : i32, i32
  }
  func.func @transform_2(%arg0: i32) -> (i32, i32, i32) {
    %c0_i32 = arith.constant 0 : i32
    %c0_i32_0 = arith.constant 0 : i32
    %c0_i32_1 = arith.constant 0 : i32
    %c0_i32_2 = arith.constant 0 : i32
    return %c0_i32, %c0_i32_0, %c0_i32_1 : i32, i32, i32
  }
}

</mosaic_0001>

<llo_original>
// kernel: forward.2
$region0: #{forward.2}
  #allocation0 [shape = 'u32[]', space=smem, size = 0x4, offset = 0x4, fixed_abs, tag = 'smem constant byte address 0x4 - core index']
  #allocation1 [shape = 'u32[72,128]{1,0:T(1,128)}', space=vmem, size = 0x9000, scoped, tag = 'internal scratch']
  %s0 = inlined_call_operand.vmem [shape: f32[2,50,200], index: 0, kind: input, shape index: {}]
  %s1 = inlined_call_operand.vmem [shape: f32[3,50,50], index: 1, kind: input, shape index: {}]
  %s2 = inlined_call_operand.vmem [shape: f32[50,1], index: 2, kind: input, shape index: {}]
  %s3 = inlined_call_operand.hbm [shape: f32[198,1024], index: 3, kind: input, shape index: {}]
  %s4 = inlined_call_operand.hbm [shape: f32[196,1024], index: 4, kind: input, shape index: {}]
  %s5 = inlined_call_operand.hbm [shape: f32[194,1024], index: 5, kind: input, shape index: {}]
  %s6 = inlined_call_operand.vmem [shape: f32[1,1024], index: 6, kind: input, shape index: {}]
  %s7 = inlined_call_operand.vmem [shape: f32[2,50,1024], index: 7, kind: output, shape index: {}]
  %s8 = sld [smem:[#allocation0]]
  $region73: #{forward.2} parent=0
    _
  %s10 = ssub.s32 1, %s8
  %s11 = scalar_select 0, %s10, %s8
  $region1: #{forward.2} parent=0
    #allocation2 [shape = 'u8[819200]{0}', space=vmem, size = 0xc8000, scoped, tag = 'input window, operand 3, single buffered']
    #allocation3 [shape = 's32[2]{0}', space=sflag, size = 0x8, scoped, tag = 'scoped memory for forward.2']
    #allocation4 [shape = 'u8[819200]{0}', space=vmem, size = 0xc8000, scoped, tag = 'input window, operand 4, single buffered']
    #allocation5 [shape = 's32[1]{0}', space=sflag, size = 0x4, scoped, tag = 'scoped memory for forward.2']
    #allocation6 [shape = 'u8[819200]{0}', space=vmem, size = 0xc8000, scoped, tag = 'input window, operand 5, single buffered']
    %12 = vsyncpa [#allocation3], 0
    %13 = vsyncpa [#allocation5], 0
    loop: start=0, step=1, limit=4
    $region2: #{forward.2} parent=1 // loop_pre_header
      _
    $region3: #{forward.2} parent=1 // loop_header
      %s15 = sphi 0, %s19
      %p16 = scmp.ge.s32.totalorder %s15, 4
      %s25 = sphi 0, %s27
      %s28 = sphi 0, %s25
      %s29 = sphi 0, %s28
      %s45 = sphi 0, %s29
      %s49 = sphi 0, %s49
      %s51 = sphi 0, %s49
      %s52 = sphi 0, %s51
      %s66 = sphi 0, %s52
      %s70 = sphi 0, %s70
      %s72 = sphi 0, %s70
      %s73 = sphi 0, %s72
      %s87 = sphi 0, %s73
      %s91 = sphi 0, %s91
      %s93 = sphi 0, %s91
      %s94 = sphi 0, %s93
      %s108 = sphi 0, %s94
      %s112 = sphi 0, %s112
      %s114 = sphi 0, %s112
      %s115 = sphi 0, %s114
      %s129 = sphi 0, %s115
      %s133 = sphi 0, %s133
      %s135 = sphi 0, %s133
      %s136 = sphi 0, %s135
      %s150 = sphi 0, %s136
      %s154 = sphi 0, %s154
      %s156 = sphi 0, %s154
      %s157 = sphi 0, %s156
      %s171 = sphi 0, %s157
      %s177 = sphi 0, %s179
      %s180 = sphi 0, %s177
      %s181 = sphi 0, %s180
      %s197 = sphi 0, %s181
    $region4: #{forward.2} parent=1 // loop_header_branch
      %18 = sbr.rel (%p16) target = $region8
    $region5: #{forward.2} parent=1 // loop_body
      %s20 = ssub.s32 %s15, 1
      %s21 = ssub.s32 %s15, 2
      %s22 = sadd.s32 %s15, 1
      %s23 = ssub.s32 %s15, %s22
      %p24 = scmp.eq.s32.totalorder %s23, 0
      %s26 = sadd.s32 %s25, 1
      %s27 = scalar_select %p24, %s25, %s26
      %p30 = pneg %p24
      %p31 = scmp.eq.s32.totalorder %s15, 1
      %p32 = por %p30, %p31
      %p33 = scmp.ne.s32.totalorder %s25, %s28
      %p34 = scmp.eq.s32.totalorder %s15, 0
      %p35 = por %p33, %p34
      %p36 = scmp.ne.s32.totalorder %s25, %s28
      %p37 = scmp.eq.s32.totalorder %s20, 1
      %p38 = por %p36, %p37
      %p39 = scmp.ne.s32.totalorder %s28, %s29
      %p40 = scmp.eq.s32.totalorder %s20, 0
      %p41 = por %p39, %p40
      %p42 = scmp.ne.s32.totalorder %s28, %s29
      %p43 = scmp.eq.s32.totalorder %s21, 1
      %p44 = por %p42, %p43
      %p46 = scmp.ne.s32.totalorder %s29, %s45
      %p47 = scmp.eq.s32.totalorder %s21, 0
      %p48 = por %p46, %p47
      %s50 = sadd.s32 %s49, 1
      %p53 = scmp.eq.s32.totalorder %s15, 1
      %p54 = scmp.ne.s32.totalorder %s49, %s51
      %p55 = scmp.eq.s32.totalorder %s15, 0
      %p56 = por %p54, %p55
      %p57 = scmp.ne.s32.totalorder %s49, %s51
      %p58 = scmp.eq.s32.totalorder %s20, 1
      %p59 = por %p57, %p58
      %p60 = scmp.ne.s32.totalorder %s51, %s52
      %p61 = scmp.eq.s32.totalorder %s20, 0
      %p62 = por %p60, %p61
      %p63 = scmp.ne.s32.totalorder %s51, %s52
      %p64 = scmp.eq.s32.totalorder %s21, 1
      %p65 = por %p63, %p64
      %p67 = scmp.ne.s32.totalorder %s52, %s66
      %p68 = scmp.eq.s32.totalorder %s21, 0
      %p69 = por %p67, %p68
      %s71 = sadd.s32 %s70, 1
      %p74 = scmp.eq.s32.totalorder %s15, 1
      %p75 = scmp.ne.s32.totalorder %s70, %s72
      %p76 = scmp.eq.s32.totalorder %s15, 0
      %p77 = por %p75, %p76
      %p78 = scmp.ne.s32.totalorder %s70, %s72
      %p79 = scmp.eq.s32.totalorder %s20, 1
      %p80 = por %p78, %p79
      %p81 = scmp.ne.s32.totalorder %s72, %s73
      %p82 = scmp.eq.s32.totalorder %s20, 0
      %p83 = por %p81, %p82
      %p84 = scmp.ne.s32.totalorder %s72, %s73
      %p85 = scmp.eq.s32.totalorder %s21, 1
      %p86 = por %p84, %p85
      %p88 = scmp.ne.s32.totalorder %s73, %s87
      %p89 = scmp.eq.s32.totalorder %s21, 0
      %p90 = por %p88, %p89
      %s92 = sadd.s32 %s91, 1
      %p95 = scmp.eq.s32.totalorder %s15, 1
      %p96 = scmp.ne.s32.totalorder %s91, %s93
      %p97 = scmp.eq.s32.totalorder %s15, 0
      %p98 = por %p96, %p97
      %p99 = scmp.ne.s32.totalorder %s91, %s93
      %p100 = scmp.eq.s32.totalorder %s20, 1
      %p101 = por %p99, %p100
      %p102 = scmp.ne.s32.totalorder %s93, %s94
      %p103 = scmp.eq.s32.totalorder %s20, 0
      %p104 = por %p102, %p103
      %p105 = scmp.ne.s32.totalorder %s93, %s94
      %p106 = scmp.eq.s32.totalorder %s21, 1
      %p107 = por %p105, %p106
      %p109 = scmp.ne.s32.totalorder %s94, %s108
      %p110 = scmp.eq.s32.totalorder %s21, 0
      %p111 = por %p109, %p110
      %s113 = sadd.s32 %s112, 1
      %p116 = scmp.eq.s32.totalorder %s15, 1
      %p117 = scmp.ne.s32.totalorder %s112, %s114
      %p118 = scmp.eq.s32.totalorder %s15, 0
      %p119 = por %p117, %p118
      %p120 = scmp.ne.s32.totalorder %s112, %s114
      %p121 = scmp.eq.s32.totalorder %s20, 1
      %p122 = por %p120, %p121
      %p123 = scmp.ne.s32.totalorder %s114, %s115
      %p124 = scmp.eq.s32.totalorder %s20, 0
      %p125 = por %p123, %p124
      %p126 = scmp.ne.s32.totalorder %s114, %s115
      %p127 = scmp.eq.s32.totalorder %s21, 1
      %p128 = por %p126, %p127
      %p130 = scmp.ne.s32.totalorder %s115, %s129
      %p131 = scmp.eq.s32.totalorder %s21, 0
      %p132 = por %p130, %p131
      %s134 = sadd.s32 %s133, 1
      %p137 = scmp.eq.s32.totalorder %s15, 1
      %p138 = scmp.ne.s32.totalorder %s133, %s135
      %p139 = scmp.eq.s32.totalorder %s15, 0
      %p140 = por %p138, %p139
      %p141 = scmp.ne.s32.totalorder %s133, %s135
      %p142 = scmp.eq.s32.totalorder %s20, 1
      %p143 = por %p141, %p142
      %p144 = scmp.ne.s32.totalorder %s135, %s136
      %p145 = scmp.eq.s32.totalorder %s20, 0
      %p146 = por %p144, %p145
      %p147 = scmp.ne.s32.totalorder %s135, %s136
      %p148 = scmp.eq.s32.totalorder %s21, 1
      %p149 = por %p147, %p148
      %p151 = scmp.ne.s32.totalorder %s136, %s150
      %p152 = scmp.eq.s32.totalorder %s21, 0
      %p153 = por %p151, %p152
      %s155 = sadd.s32 %s154, 1
      %p158 = scmp.eq.s32.totalorder %s15, 1
      %p159 = scmp.ne.s32.totalorder %s154, %s156
      %p160 = scmp.eq.s32.totalorder %s15, 0
      %p161 = por %p159, %p160
      %p162 = scmp.ne.s32.totalorder %s154, %s156
      %p163 = scmp.eq.s32.totalorder %s20, 1
      %p164 = por %p162, %p163
      %p165 = scmp.ne.s32.totalorder %s156, %s157
      %p166 = scmp.eq.s32.totalorder %s20, 0
      %p167 = por %p165, %p166
      %p168 = scmp.ne.s32.totalorder %s156, %s157
      %p169 = scmp.eq.s32.totalorder %s21, 1
      %p170 = por %p168, %p169
      %p172 = scmp.ne.s32.totalorder %s157, %s171
      %p173 = scmp.eq.s32.totalorder %s21, 0
      %p174 = por %p172, %p173
      %s175 = ssub.s32 %s15, %s22
      %p176 = scmp.eq.s32.totalorder %s175, 0
      %s178 = sadd.s32 %s177, 1
      %s179 = scalar_select %p176, %s177, %s178
      %p182 = pneg %p176
      %p183 = scmp.eq.s32.totalorder %s15, 1
      %p184 = por %p182, %p183
      %p185 = scmp.ne.s32.totalorder %s177, %s180
      %p186 = scmp.eq.s32.totalorder %s15, 0
      %p187 = por %p185, %p186
      %p188 = scmp.ne.s32.totalorder %s177, %s180
      %p189 = scmp.eq.s32.totalorder %s20, 1
      %p190 = por %p188, %p189
      %p191 = scmp.ne.s32.totalorder %s180, %s181
      %p192 = scmp.eq.s32.totalorder %s20, 0
      %p193 = por %p191, %p192
      %p194 = scmp.ne.s32.totalorder %s180, %s181
      %p195 = scmp.eq.s32.totalorder %s21, 1
      %p196 = por %p194, %p195
      %p198 = scmp.ne.s32.totalorder %s181, %s197
      %p199 = scmp.eq.s32.totalorder %s21, 0
      %p200 = por %p198, %p199
      %p201 = scmp.le.s32.totalorder 1, %s15
      %p202 = scmp.lt.s32.totalorder %s15, 3
      %p203 = pnand %p201, %p202
      %p204 = pneg %p203
      // Predicated region
      $region9: #{forward.2} parent=5 // pred_check
        _
      $region10: #{forward.2} parent=5 // pred_check_branch
        %206 = sbr.rel (%p203) target = $region12
      $region11: #{forward.2} parent=5 // pred_region
        %s207 = ssub.s32 %s15, 1
        // Predicated region
        $region13: #{forward.2} parent=11 // pred_check
          %p208 = pneg %p62
        $region14: #{forward.2} parent=11 // pred_check_branch
          %210 = sbr.rel (%p208) target = $region16
        $region15: #{forward.2} parent=11 // pred_region
          _
        $region16: #{forward.2} parent=11 // pred_fallthru
          _
        // Predicated region
        $region17: #{forward.2} parent=11 // pred_check
          %p211 = pneg %p83
        $region18: #{forward.2} parent=11 // pred_check_branch
          %213 = sbr.rel (%p211) target = $region20
        $region19: #{forward.2} parent=11 // pred_region
          _
        $region20: #{forward.2} parent=11 // pred_fallthru
          _
        // Predicated region
        $region21: #{forward.2} parent=11 // pred_check
          %p214 = pneg %p104
        $region22: #{forward.2} parent=11 // pred_check_branch
          %216 = sbr.rel (%p214) target = $region24
        $region23: #{forward.2} parent=11 // pred_region
          %218 = vsyncadd [#allocation3], 0
          %s219 = sshll.u32 %s3, 4
          %s220 = int_to_ptr.hbm [resolvable:$true] %s219
          %s221 = sshll.u32 [#allocation2], 4
          %s222 = int_to_ptr.vmem [resolvable:$true] %s221
          %227 = dma.hbm_to_vmem [thread:$0]  %s220, 25600, %s222, [#allocation3], 1024, 1024, 64
        $region24: #{forward.2} parent=11 // pred_fallthru
          _
        // Predicated region
        $region25: #{forward.2} parent=11 // pred_check
          %p228 = pneg %p125
        $region26: #{forward.2} parent=11 // pred_check_branch
          %230 = sbr.rel (%p228) target = $region28
        $region27: #{forward.2} parent=11 // pred_region
          %232 = vsyncadd [#allocation5], 0
          %s233 = sshll.u32 %s4, 4
          %s234 = int_to_ptr.hbm [resolvable:$true] %s233
          %s235 = sshll.u32 [#allocation4], 4
          %s236 = int_to_ptr.vmem [resolvable:$true] %s235
          %241 = dma.hbm_to_vmem [thread:$0]  %s234, 25600, %s236, [#allocation5], 1024, 1024, 64
        $region28: #{forward.2} parent=11 // pred_fallthru
          _
        // Predicated region
        $region29: #{forward.2} parent=11 // pred_check
          %p242 = pneg %p146
        $region30: #{forward.2} parent=11 // pred_check_branch
          %244 = sbr.rel (%p242) target = $region32
        $region31: #{forward.2} parent=11 // pred_region
          %246 = vsyncadd [#allocation5], 0
          %s247 = sshll.u32 %s5, 4
          %s248 = int_to_ptr.hbm [resolvable:$true] %s247
          %s249 = sshll.u32 [#allocation6], 4
          %s250 = int_to_ptr.vmem [resolvable:$true] %s249
          %255 = dma.hbm_to_vmem [thread:$0]  %s248, 25600, %s250, [#allocation5], 1024, 1024, 64
        $region32: #{forward.2} parent=11 // pred_fallthru
          _
        // Predicated region
        $region33: #{forward.2} parent=11 // pred_check
          %p256 = pneg %p167
        $region34: #{forward.2} parent=11 // pred_check_branch
          %258 = sbr.rel (%p256) target = $region36
        $region35: #{forward.2} parent=11 // pred_region
          _
        $region36: #{forward.2} parent=11 // pred_fallthru
          _
      $region12: #{forward.2} parent=5 // pred_fallthru
        _
      %p259 = scmp.lt.s32.totalorder %s15, 2
      // Predicated region
      $region37: #{forward.2} parent=5 // pred_check
        %p260 = pneg %p259
      $region38: #{forward.2} parent=5 // pred_check_branch
        %262 = sbr.rel (%p260) target = $region40
      $region39: #{forward.2} parent=5 // pred_region
        // Predicated region
        $region41: #{forward.2} parent=39 // pred_check
          %p263 = pneg %p35
        $region42: #{forward.2} parent=39 // pred_check_branch
          %265 = sbr.rel (%p263) target = $region44
        $region43: #{forward.2} parent=39 // pred_region
          %p266 = scmp.lt.s32.totalorder %s15, 1
          %s267 = scalar_select %p266, %s15, 1
          %s268 = smul.addr %s267, 14
          %s269 = smul.addr %s268, 8
          %s270 = scalar_lea.vmem %s0, %s269
        $region44: #{forward.2} parent=39 // pred_fallthru
          _
      $region40: #{forward.2} parent=5 // pred_fallthru
        _
      %p271 = scmp.le.s32.totalorder 1, %s15
      %p272 = scmp.lt.s32.totalorder %s15, 3
      %p273 = pnand %p271, %p272
      %p274 = pneg %p273
      // Predicated region
      $region45: #{forward.2} parent=5 // pred_check
        _
      $region46: #{forward.2} parent=5 // pred_check_branch
        %276 = sbr.rel (%p273) target = $region48
      $region47: #{forward.2} parent=5 // pred_region
        %s277 = ssub.s32 %s15, 1
        // Predicated region
        $region49: #{forward.2} parent=47 // pred_check
          %p278 = pneg %p104
        $region50: #{forward.2} parent=47 // pred_check_branch
          %280 = sbr.rel (%p278) target = $region52
        $region51: #{forward.2} parent=47 // pred_region
          %282 = dma.done [#allocation3], 25600
        $region52: #{forward.2} parent=47 // pred_fallthru
          _
        // Predicated region
        $region53: #{forward.2} parent=47 // pred_check
          %p283 = pneg %p125
        $region54: #{forward.2} parent=47 // pred_check_branch
          %285 = sbr.rel (%p283) target = $region56
        $region55: #{forward.2} parent=47 // pred_region
          %287 = dma.done [#allocation5], 25600
        $region56: #{forward.2} parent=47 // pred_fallthru
          _
        // Predicated region
        $region57: #{forward.2} parent=47 // pred_check
          %p288 = pneg %p146
        $region58: #{forward.2} parent=47 // pred_check_branch
          %290 = sbr.rel (%p288) target = $region60
        $region59: #{forward.2} parent=47 // pred_region
          %292 = dma.done [#allocation5], 25600
        $region60: #{forward.2} parent=47 // pred_fallthru
          _
        %p293 = scmp.lt.s32.totalorder %s20, 1
        %s294 = scalar_select %p293, %s20, 1
        %s295 = smul.addr %s294, 14
        %s296 = smul.addr %s295, 8
        %s297 = scalar_lea.vmem %s0, %s296
        %p298 = pneg %p41
        %p299 = pneg %p38
        %p300 = pneg %p62
        %p301 = pneg %p59
        %p302 = pneg %p83
        %p303 = pneg %p80
        %p304 = pneg %p104
        %p305 = pneg %p101
        %p306 = pneg %p125
        %p307 = pneg %p122
        %p308 = pneg %p146
        %p309 = pneg %p143
        %p310 = pneg %p167
        %p311 = pneg %p164
        %p312 = pneg %p193
        %p313 = pneg %p190
        %p314 = scmp.lt.s32.totalorder %s20, 1
        %s315 = scalar_select %p314, %s20, 1
        %s316 = smul.addr %s315, 56
        %s317 = smul.addr %s316, 8
        %s318 = scalar_lea.vmem %s7, %s317
        %p319 = scmp.lt.s32.totalorder %s20, 1
        %s320 = scalar_select %p319, %s20, 1
        %s321 = smul.addr %s320, 14
        %s322 = smul.addr %s321, 8
        %s323 = scalar_lea.vmem %s0, %s322
        %p324 = scmp.lt.s32.totalorder %s20, 1
        %s325 = scalar_select %p324, %s20, 1
        %s326 = smul.addr %s325, 56
        %s327 = smul.addr %s326, 8
        %s328 = scalar_lea.vmem %s7, %s327
        %v329 = vld [vmem:[%s323] sm:$0xff]
        %v330 = vld [vmem:[%s323 + $0x8] sm:$0xff]
        %v331 = vld [vmem:[%s323 + $0x10] sm:$0xff]
        %v332 = vld [vmem:[%s323 + $0x18] sm:$0xff]
        %v333 = vld [vmem:[%s323 + $0x20] sm:$0xff]
        %v334 = vld [vmem:[%s323 + $0x28] sm:$0xff]
        %v335 = vld [vmem:[%s323 + $0x30] sm:$0xff]
        %v336 = vld [vmem:[%s323 + $0x38] sm:$0xff]
        %v337 = vld [vmem:[%s323 + $0x40] sm:$0xff]
        %v338 = vld [vmem:[%s323 + $0x48] sm:$0xff]
        %v339 = vld [vmem:[%s323 + $0x50] sm:$0xff]
        %v340 = vld [vmem:[%s323 + $0x58] sm:$0xff]
        %v341 = vld [vmem:[%s323 + $0x60] sm:$0x3]
        %v342 = vld [vmem:[%s323 + $0x68] sm:$0x3]
        %v343 = vld [vmem:[%s2] sm:$0xff]
        %v344 = vld [vmem:[%s2 + $0x8] sm:$0xff]
        %v345 = vld [vmem:[%s2 + $0x10] sm:$0xff]
        %v346 = vld [vmem:[%s2 + $0x18] sm:$0xff]
        %v347 = vld [vmem:[%s2 + $0x20] sm:$0xff]
        %v348 = vld [vmem:[%s2 + $0x28] sm:$0xff]
        %v349 = vld [vmem:[%s2 + $0x30] sm:$0x3]
        %v350 = vld [vmem:[%s1] sm:$0xff]
        %v351 = vld [vmem:[%s1 + $0x8] sm:$0xff]
        %v352 = vld [vmem:[%s1 + $0x10] sm:$0xff]
        %v353 = vld [vmem:[%s1 + $0x18] sm:$0xff]
        %v354 = vld [vmem:[%s1 + $0x20] sm:$0xff]
        %v355 = vld [vmem:[%s1 + $0x28] sm:$0xff]
        %v356 = vld [vmem:[%s1 + $0x30] sm:$0x3]
        %vm357 = vcmask 408576
        %v359 = vsel %vm357, %v350, 0
        %v362 = vsel %vm357, %v351, 0
        %v365 = vsel %vm357, %v352, 0
        %v368 = vsel %vm357, %v353, 0
        %v371 = vsel %vm357, %v354, 0
        %v374 = vsel %vm357, %v355, 0
        %v377 = vsel %vm357, %v356, 0
        %vm379 = vcmask 1041408
        %v381 = vsel %vm379, %v341, 0
        %v384 = vsel %vm379, %v342, 0
        %386 = vmatpush.msra.mxu0 0.0
        %387 = vmatpush.msra.mxu0 0.0
        %388 = vmatpush.msra.mxu0 0.0
        %389 = vmatpush.msra.mxu0 0.0
        %390 = vmatpush.msra.mxu0 0.0
        %391 = vmatpush.msra.mxu0 0.0
        %392 = vmatpush.msra.mxu0 0.0
        %393 = vmatpush.msra.mxu0 0.0
        %394 = vmatpush.msra.mxu0 0.0
        %395 = vmatpush.msra.mxu0 %v381
        %396 = vmatpush.msra.mxu0 %v339
        %397 = vmatpush.msra.mxu0 %v337
        %398 = vmatpush.msra.mxu0 %v335
        %399 = vmatpush.msra.mxu0 %v333
        %400 = vmatpush.msra.mxu0 %v331
        %401 = vmatpush.msra.mxu0 %v329
        %402 = vmatmul.f32.gmra.mxu0 %v359
        %v403 = vpop.f32.mrf.mxu0
        %v404 = vadd.f32 0.0, %v403
        %405 = vmatmul.f32.gmra.mxu0 %v362
        %v406 = vpop.f32.mrf.mxu0
        %v407 = vadd.f32 0.0, %v406
        %408 = vmatmul.f32.gmra.mxu0 %v365
        %v409 = vpop.f32.mrf.mxu0
        %v410 = vadd.f32 0.0, %v409
        %411 = vmatmul.f32.gmra.mxu0 %v368
        %v412 = vpop.f32.mrf.mxu0
        %v413 = vadd.f32 0.0, %v412
        %414 = vmatmul.f32.gmra.mxu0 %v371
        %v415 = vpop.f32.mrf.mxu0
        %v416 = vadd.f32 0.0, %v415
        %417 = vmatmul.f32.gmra.mxu0 %v374
        %v418 = vpop.f32.mrf.mxu0
        %v419 = vadd.f32 0.0, %v418
        %420 = vmatmul.f32.gmra.mxu0 %v377
        %v421 = vpop.f32.mrf.mxu0
        %v422 = vadd.f32 0.0, %v421
        %423 = vdwg.mxu0
        %424 = vmatpush.msra.mxu0 0.0
        %425 = vmatpush.msra.mxu0 0.0
        %426 = vmatpush.msra.mxu0 0.0
        %427 = vmatpush.msra.mxu0 0.0
        %428 = vmatpush.msra.mxu0 0.0
        %429 = vmatpush.msra.mxu0 0.0
        %430 = vmatpush.msra.mxu0 0.0
        %431 = vmatpush.msra.mxu0 0.0
        %432 = vmatpush.msra.mxu0 0.0
        %433 = vmatpush.msra.mxu0 %v384
        %434 = vmatpush.msra.mxu0 %v340
        %435 = vmatpush.msra.mxu0 %v338
        %436 = vmatpush.msra.mxu0 %v336
        %437 = vmatpush.msra.mxu0 %v334
        %438 = vmatpush.msra.mxu0 %v332
        %439 = vmatpush.msra.mxu0 %v330
        %440 = vmatmul.f32.gmra.mxu0 %v359
        %v441 = vpop.f32.mrf.mxu0
        %v442 = vadd.f32 0.0, %v441
        %443 = vmatmul.f32.gmra.mxu0 %v362
        %v444 = vpop.f32.mrf.mxu0
        %v445 = vadd.f32 0.0, %v444
        %446 = vmatmul.f32.gmra.mxu0 %v365
        %v447 = vpop.f32.mrf.mxu0
        %v448 = vadd.f32 0.0, %v447
        %449 = vmatmul.f32.gmra.mxu0 %v368
        %v450 = vpop.f32.mrf.mxu0
        %v451 = vadd.f32 0.0, %v450
        %452 = vmatmul.f32.gmra.mxu0 %v371
        %v453 = vpop.f32.mrf.mxu0
        %v454 = vadd.f32 0.0, %v453
        %455 = vmatmul.f32.gmra.mxu0 %v374
        %v456 = vpop.f32.mrf.mxu0
        %v457 = vadd.f32 0.0, %v456
        %458 = vmatmul.f32.gmra.mxu0 %v377
        %v459 = vpop.f32.mrf.mxu0
        %v460 = vadd.f32 0.0, %v459
        %461 = vdwg.mxu0
        %463 = vset.pattern.permute.xlu0 0
        %464 = vperm.xlu0 %463, %v343
        %v465 = vpop.permute.xlu0 %464
        %468 = vset.pattern.permute.xlu0 0
        %469 = vperm.xlu0 %468, %v344
        %v470 = vpop.permute.xlu0 %469
        %473 = vset.pattern.permute.xlu0 0
        %474 = vperm.xlu0 %473, %v345
        %v475 = vpop.permute.xlu0 %474
        %478 = vset.pattern.permute.xlu0 0
        %479 = vperm.xlu0 %478, %v346
        %v480 = vpop.permute.xlu0 %479
        %483 = vset.pattern.permute.xlu0 0
        %484 = vperm.xlu0 %483, %v347
        %v485 = vpop.permute.xlu0 %484
        %488 = vset.pattern.permute.xlu0 0
        %489 = vperm.xlu0 %488, %v348
        %v490 = vpop.permute.xlu0 %489
        %493 = vset.pattern.permute.xlu0 0
        %494 = vperm.xlu0 %493, %v349
        %v495 = vpop.permute.xlu0 %494
        %v497 = vadd.f32 %v465, %v404
        %v498 = vadd.f32 %v465, %v442
        %v499 = vadd.f32 %v470, %v407
        %v500 = vadd.f32 %v470, %v445
        %v501 = vadd.f32 %v475, %v410
        %v502 = vadd.f32 %v475, %v448
        %v503 = vadd.f32 %v480, %v413
        %v504 = vadd.f32 %v480, %v451
        %v505 = vadd.f32 %v485, %v416
        %v506 = vadd.f32 %v485, %v454
        %v507 = vadd.f32 %v490, %v419
        %v508 = vadd.f32 %v490, %v457
        %v509 = vadd.f32 %v495, %v422
        %v510 = vadd.f32 %v495, %v460
        %s511 = scalar_lea.vmem %s1, 56
        %v512 = vld [vmem:[%s511] sm:$0xff]
        %v513 = vld [vmem:[%s511 + $0x8] sm:$0xff]
        %v514 = vld [vmem:[%s511 + $0x10] sm:$0xff]
        %v515 = vld [vmem:[%s511 + $0x18] sm:$0xff]
        %v516 = vld [vmem:[%s511 + $0x20] sm:$0xff]
        %v517 = vld [vmem:[%s511 + $0x28] sm:$0xff]
        %v518 = vld [vmem:[%s511 + $0x30] sm:$0x3]
        %531 = vrot.lane.b32.xlu0 %v329, 127
        %v532 = vpop.permute.xlu0 %531
        %533 = vrot.lane.b32.xlu0 %v330, 127
        %v534 = vpop.permute.xlu0 %533
        %535 = vrot.lane.b32.xlu0 %v331, 127
        %v536 = vpop.permute.xlu0 %535
        %537 = vrot.lane.b32.xlu0 %v332, 127
        %v538 = vpop.permute.xlu0 %537
        %539 = vrot.lane.b32.xlu0 %v333, 127
        %v540 = vpop.permute.xlu0 %539
        %541 = vrot.lane.b32.xlu0 %v334, 127
        %v542 = vpop.permute.xlu0 %541
        %543 = vrot.lane.b32.xlu0 %v335, 127
        %v544 = vpop.permute.xlu0 %543
        %545 = vrot.lane.b32.xlu0 %v336, 127
        %v546 = vpop.permute.xlu0 %545
        %547 = vrot.lane.b32.xlu0 %v337, 127
        %v548 = vpop.permute.xlu0 %547
        %549 = vrot.lane.b32.xlu0 %v338, 127
        %v550 = vpop.permute.xlu0 %549
        %551 = vrot.lane.b32.xlu0 %v339, 127
        %v552 = vpop.permute.xlu0 %551
        %553 = vrot.lane.b32.xlu0 %v340, 127
        %v554 = vpop.permute.xlu0 %553
        %555 = vrot.lane.b32.xlu0 %v341, 127
        %v556 = vpop.permute.xlu0 %555
        %557 = vrot.lane.b32.xlu0 %v342, 127
        %v558 = vpop.permute.xlu0 %557
        %vm559 = vcmask 1039360
        %v560 = vsel %vm559, %v532, %v534
        %v561 = vsel %vm559, %v536, %v538
        %v562 = vsel %vm559, %v540, %v542
        %v563 = vsel %vm559, %v544, %v546
        %v564 = vsel %vm559, %v548, %v550
        %v565 = vsel %vm559, %v552, %v554
        %v566 = vsel %vm559, %v556, %v558
        %v580 = vsel %vm357, %v512, 0
        %v583 = vsel %vm357, %v513, 0
        %v586 = vsel %vm357, %v514, 0
        %v589 = vsel %vm357, %v515, 0
        %v592 = vsel %vm357, %v516, 0
        %v595 = vsel %vm357, %v517, 0
        %v598 = vsel %vm357, %v518, 0
        %v600 = vsel %vm379, %v566, 0
        %v602 = vsel %vm379, %v558, 0
        %604 = vmatpush.msra.mxu0 0.0
        %605 = vmatpush.msra.mxu0 0.0
        %606 = vmatpush.msra.mxu0 0.0
        %607 = vmatpush.msra.mxu0 0.0
        %608 = vmatpush.msra.mxu0 0.0
        %609 = vmatpush.msra.mxu0 0.0
        %610 = vmatpush.msra.mxu0 0.0
        %611 = vmatpush.msra.mxu0 0.0
        %612 = vmatpush.msra.mxu0 0.0
        %613 = vmatpush.msra.mxu0 %v600
        %614 = vmatpush.msra.mxu0 %v565
        %615 = vmatpush.msra.mxu0 %v564
        %616 = vmatpush.msra.mxu0 %v563
        %617 = vmatpush.msra.mxu0 %v562
        %618 = vmatpush.msra.mxu0 %v561
        %619 = vmatpush.msra.mxu0 %v560
        %620 = vmatmul.f32.gmra.mxu0 %v580
        %v621 = vpop.f32.mrf.mxu0
        %v622 = vadd.f32 0.0, %v621
        %623 = vmatmul.f32.gmra.mxu0 %v583
        %v624 = vpop.f32.mrf.mxu0
        %v625 = vadd.f32 0.0, %v624
        %626 = vmatmul.f32.gmra.mxu0 %v586
        %v627 = vpop.f32.mrf.mxu0
        %v628 = vadd.f32 0.0, %v627
        %629 = vmatmul.f32.gmra.mxu0 %v589
        %v630 = vpop.f32.mrf.mxu0
        %v631 = vadd.f32 0.0, %v630
        %632 = vmatmul.f32.gmra.mxu0 %v592
        %v633 = vpop.f32.mrf.mxu0
        %v634 = vadd.f32 0.0, %v633
        %635 = vmatmul.f32.gmra.mxu0 %v595
        %v636 = vpop.f32.mrf.mxu0
        %v637 = vadd.f32 0.0, %v636
        %638 = vmatmul.f32.gmra.mxu0 %v598
        %v639 = vpop.f32.mrf.mxu0
        %v640 = vadd.f32 0.0, %v639
        %641 = vdwg.mxu0
        %642 = vmatpush.msra.mxu0 0.0
        %643 = vmatpush.msra.mxu0 0.0
        %644 = vmatpush.msra.mxu0 0.0
        %645 = vmatpush.msra.mxu0 0.0
        %646 = vmatpush.msra.mxu0 0.0
        %647 = vmatpush.msra.mxu0 0.0
        %648 = vmatpush.msra.mxu0 0.0
        %649 = vmatpush.msra.mxu0 0.0
        %650 = vmatpush.msra.mxu0 0.0
        %651 = vmatpush.msra.mxu0 %v602
        %652 = vmatpush.msra.mxu0 %v554
        %653 = vmatpush.msra.mxu0 %v550
        %654 = vmatpush.msra.mxu0 %v546
        %655 = vmatpush.msra.mxu0 %v542
        %656 = vmatpush.msra.mxu0 %v538
        %657 = vmatpush.msra.mxu0 %v534
        %658 = vmatmul.f32.gmra.mxu0 %v580
        %v659 = vpop.f32.mrf.mxu0
        %v660 = vadd.f32 0.0, %v659
        %661 = vmatmul.f32.gmra.mxu0 %v583
        %v662 = vpop.f32.mrf.mxu0
        %v663 = vadd.f32 0.0, %v662
        %664 = vmatmul.f32.gmra.mxu0 %v586
        %v665 = vpop.f32.mrf.mxu0
        %v666 = vadd.f32 0.0, %v665
        %667 = vmatmul.f32.gmra.mxu0 %v589
        %v668 = vpop.f32.mrf.mxu0
        %v669 = vadd.f32 0.0, %v668
        %670 = vmatmul.f32.gmra.mxu0 %v592
        %v671 = vpop.f32.mrf.mxu0
        %v672 = vadd.f32 0.0, %v671
        %673 = vmatmul.f32.gmra.mxu0 %v595
        %v674 = vpop.f32.mrf.mxu0
        %v675 = vadd.f32 0.0, %v674
        %676 = vmatmul.f32.gmra.mxu0 %v598
        %v677 = vpop.f32.mrf.mxu0
        %v678 = vadd.f32 0.0, %v677
        %679 = vdwg.mxu0
        %v680 = vadd.f32 %v497, %v622
        %v681 = vadd.f32 %v498, %v660
        %v682 = vadd.f32 %v499, %v625
        %v683 = vadd.f32 %v500, %v663
        %v684 = vadd.f32 %v501, %v628
        %v685 = vadd.f32 %v502, %v666
        %v686 = vadd.f32 %v503, %v631
        %v687 = vadd.f32 %v504, %v669
        %v688 = vadd.f32 %v505, %v634
        %v689 = vadd.f32 %v506, %v672
        %v690 = vadd.f32 %v507, %v637
        %v691 = vadd.f32 %v508, %v675
        %v692 = vadd.f32 %v509, %v640
        %v693 = vadd.f32 %v510, %v678
        %s694 = scalar_lea.vmem %s1, 112
        %v695 = vld [vmem:[%s694] sm:$0xff]
        %v696 = vld [vmem:[%s694 + $0x8] sm:$0xff]
        %v697 = vld [vmem:[%s694 + $0x10] sm:$0xff]
        %v698 = vld [vmem:[%s694 + $0x18] sm:$0xff]
        %v699 = vld [vmem:[%s694 + $0x20] sm:$0xff]
        %v700 = vld [vmem:[%s694 + $0x28] sm:$0xff]
        %v701 = vld [vmem:[%s694 + $0x30] sm:$0x3]
        %702 = vrot.lane.b32.xlu0 %v329, 126
        %v703 = vpop.permute.xlu0 %702
        %704 = vrot.lane.b32.xlu0 %v330, 126
        %v705 = vpop.permute.xlu0 %704
        %706 = vrot.lane.b32.xlu0 %v331, 126
        %v707 = vpop.permute.xlu0 %706
        %708 = vrot.lane.b32.xlu0 %v332, 126
        %v709 = vpop.permute.xlu0 %708
        %710 = vrot.lane.b32.xlu0 %v333, 126
        %v711 = vpop.permute.xlu0 %710
        %712 = vrot.lane.b32.xlu0 %v334, 126
        %v713 = vpop.permute.xlu0 %712
        %714 = vrot.lane.b32.xlu0 %v335, 126
        %v715 = vpop.permute.xlu0 %714
        %716 = vrot.lane.b32.xlu0 %v336, 126
        %v717 = vpop.permute.xlu0 %716
        %718 = vrot.lane.b32.xlu0 %v337, 126
        %v719 = vpop.permute.xlu0 %718
        %720 = vrot.lane.b32.xlu0 %v338, 126
        %v721 = vpop.permute.xlu0 %720
        %722 = vrot.lane.b32.xlu0 %v339, 126
        %v723 = vpop.permute.xlu0 %722
        %724 = vrot.lane.b32.xlu0 %v340, 126
        %v725 = vpop.permute.xlu0 %724
        %726 = vrot.lane.b32.xlu0 %v341, 126
        %v727 = vpop.permute.xlu0 %726
        %728 = vrot.lane.b32.xlu0 %v342, 126
        %v729 = vpop.permute.xlu0 %728
        %vm730 = vcmask 1031168
        %v731 = vsel %vm730, %v703, %v705
        %v732 = vsel %vm730, %v707, %v709
        %v733 = vsel %vm730, %v711, %v713
        %v734 = vsel %vm730, %v715, %v717
        %v735 = vsel %vm730, %v719, %v721
        %v736 = vsel %vm730, %v723, %v725
        %v737 = vsel %vm730, %v727, %v729
        %v751 = vsel %vm357, %v695, 0
        %v754 = vsel %vm357, %v696, 0
        %v757 = vsel %vm357, %v697, 0
        %v760 = vsel %vm357, %v698, 0
        %v763 = vsel %vm357, %v699, 0
        %v766 = vsel %vm357, %v700, 0
        %v769 = vsel %vm357, %v701, 0
        %v771 = vsel %vm379, %v737, 0
        %v773 = vsel %vm379, %v729, 0
        %775 = vmatpush.msra.mxu0 0.0
        %776 = vmatpush.msra.mxu0 0.0
        %777 = vmatpush.msra.mxu0 0.0
        %778 = vmatpush.msra.mxu0 0.0
        %779 = vmatpush.msra.mxu0 0.0
        %780 = vmatpush.msra.mxu0 0.0
        %781 = vmatpush.msra.mxu0 0.0
        %782 = vmatpush.msra.mxu0 0.0
        %783 = vmatpush.msra.mxu0 0.0
        %784 = vmatpush.msra.mxu0 %v771
        %785 = vmatpush.msra.mxu0 %v736
        %786 = vmatpush.msra.mxu0 %v735
        %787 = vmatpush.msra.mxu0 %v734
        %788 = vmatpush.msra.mxu0 %v733
        %789 = vmatpush.msra.mxu0 %v732
        %790 = vmatpush.msra.mxu0 %v731
        %791 = vmatmul.f32.gmra.mxu0 %v751
        %v792 = vpop.f32.mrf.mxu0
        %v793 = vadd.f32 0.0, %v792
        %794 = vmatmul.f32.gmra.mxu0 %v754
        %v795 = vpop.f32.mrf.mxu0
        %v796 = vadd.f32 0.0, %v795
        %797 = vmatmul.f32.gmra.mxu0 %v757
        %v798 = vpop.f32.mrf.mxu0
        %v799 = vadd.f32 0.0, %v798
        %800 = vmatmul.f32.gmra.mxu0 %v760
        %v801 = vpop.f32.mrf.mxu0
        %v802 = vadd.f32 0.0, %v801
        %803 = vmatmul.f32.gmra.mxu0 %v763
        %v804 = vpop.f32.mrf.mxu0
        %v805 = vadd.f32 0.0, %v804
        %806 = vmatmul.f32.gmra.mxu0 %v766
        %v807 = vpop.f32.mrf.mxu0
        %v808 = vadd.f32 0.0, %v807
        %809 = vmatmul.f32.gmra.mxu0 %v769
        %v810 = vpop.f32.mrf.mxu0
        %v811 = vadd.f32 0.0, %v810
        %812 = vdwg.mxu0
        %813 = vmatpush.msra.mxu0 0.0
        %814 = vmatpush.msra.mxu0 0.0
        %815 = vmatpush.msra.mxu0 0.0
        %816 = vmatpush.msra.mxu0 0.0
        %817 = vmatpush.msra.mxu0 0.0
        %818 = vmatpush.msra.mxu0 0.0
        %819 = vmatpush.msra.mxu0 0.0
        %820 = vmatpush.msra.mxu0 0.0
        %821 = vmatpush.msra.mxu0 0.0
        %822 = vmatpush.msra.mxu0 %v773
        %823 = vmatpush.msra.mxu0 %v725
        %824 = vmatpush.msra.mxu0 %v721
        %825 = vmatpush.msra.mxu0 %v717
        %826 = vmatpush.msra.mxu0 %v713
        %827 = vmatpush.msra.mxu0 %v709
        %828 = vmatpush.msra.mxu0 %v705
        %829 = vmatmul.f32.gmra.mxu0 %v751
        %v830 = vpop.f32.mrf.mxu0
        %v831 = vadd.f32 0.0, %v830
        %832 = vmatmul.f32.gmra.mxu0 %v754
        %v833 = vpop.f32.mrf.mxu0
        %v834 = vadd.f32 0.0, %v833
        %835 = vmatmul.f32.gmra.mxu0 %v757
        %v836 = vpop.f32.mrf.mxu0
        %v837 = vadd.f32 0.0, %v836
        %838 = vmatmul.f32.gmra.mxu0 %v760
        %v839 = vpop.f32.mrf.mxu0
        %v840 = vadd.f32 0.0, %v839
        %841 = vmatmul.f32.gmra.mxu0 %v763
        %v842 = vpop.f32.mrf.mxu0
        %v843 = vadd.f32 0.0, %v842
        %844 = vmatmul.f32.gmra.mxu0 %v766
        %v845 = vpop.f32.mrf.mxu0
        %v846 = vadd.f32 0.0, %v845
        %847 = vmatmul.f32.gmra.mxu0 %v769
        %v848 = vpop.f32.mrf.mxu0
        %v849 = vadd.f32 0.0, %v848
        %850 = vdwg.mxu0
        %v851 = vadd.f32 %v680, %v793
        %v852 = vadd.f32 %v681, %v831
        %v853 = vadd.f32 %v682, %v796
        %v854 = vadd.f32 %v683, %v834
        %v855 = vadd.f32 %v684, %v799
        %v856 = vadd.f32 %v685, %v837
        %v857 = vadd.f32 %v686, %v802
        %v858 = vadd.f32 %v687, %v840
        %v859 = vadd.f32 %v688, %v805
        %v860 = vadd.f32 %v689, %v843
        %v861 = vadd.f32 %v690, %v808
        %v862 = vadd.f32 %v691, %v846
        %v863 = vadd.f32 %v692, %v811
        %v864 = vadd.f32 %v693, %v849
        %v865 = vmax.f32 %v851, 0.0
        %v866 = vmax.f32 %v852, 0.0
        %v867 = vmax.f32 %v853, 0.0
        %v868 = vmax.f32 %v854, 0.0
        %v869 = vmax.f32 %v855, 0.0
        %v870 = vmax.f32 %v856, 0.0
        %v871 = vmax.f32 %v857, 0.0
        %v872 = vmax.f32 %v858, 0.0
        %v873 = vmax.f32 %v859, 0.0
        %v874 = vmax.f32 %v860, 0.0
        %v875 = vmax.f32 %v861, 0.0
        %v876 = vmax.f32 %v862, 0.0
        %v877 = vmax.f32 %v863, 0.0
        %v878 = vmax.f32 %v864, 0.0
        %v880 = vsel %vm379, %v863, 0
        %v883 = vsel %vm379, %v864, 0
        %885 = vmatpush.msra.mxu0 0.0
        %886 = vmatpush.msra.mxu0 0.0
        %887 = vmatpush.msra.mxu0 0.0
        %888 = vmatpush.msra.mxu0 0.0
        %889 = vmatpush.msra.mxu0 0.0
        %890 = vmatpush.msra.mxu0 0.0
        %891 = vmatpush.msra.mxu0 0.0
        %892 = vmatpush.msra.mxu0 0.0
        %893 = vmatpush.msra.mxu0 0.0
        %894 = vmatpush.msra.mxu0 %v880
        %895 = vmatpush.msra.mxu0 %v861
        %896 = vmatpush.msra.mxu0 %v859
        %897 = vmatpush.msra.mxu0 %v857
        %898 = vmatpush.msra.mxu0 %v855
        %899 = vmatpush.msra.mxu0 %v853
        %900 = vmatpush.msra.mxu0 %v851
        %901 = vmatmul.f32.gmra.mxu0 %v359
        %v902 = vpop.f32.mrf.mxu0
        %v903 = vadd.f32 0.0, %v902
        %904 = vmatmul.f32.gmra.mxu0 %v362
        %v905 = vpop.f32.mrf.mxu0
        %v906 = vadd.f32 0.0, %v905
        %907 = vmatmul.f32.gmra.mxu0 %v365
        %v908 = vpop.f32.mrf.mxu0
        %v909 = vadd.f32 0.0, %v908
        %910 = vmatmul.f32.gmra.mxu0 %v368
        %v911 = vpop.f32.mrf.mxu0
        %v912 = vadd.f32 0.0, %v911
        %913 = vmatmul.f32.gmra.mxu0 %v371
        %v914 = vpop.f32.mrf.mxu0
        %v915 = vadd.f32 0.0, %v914
        %916 = vmatmul.f32.gmra.mxu0 %v374
        %v917 = vpop.f32.mrf.mxu0
        %v918 = vadd.f32 0.0, %v917
        %919 = vmatmul.f32.gmra.mxu0 %v377
        %v920 = vpop.f32.mrf.mxu0
        %v921 = vadd.f32 0.0, %v920
        %922 = vdwg.mxu0
        %923 = vmatpush.msra.mxu0 0.0
        %924 = vmatpush.msra.mxu0 0.0
        %925 = vmatpush.msra.mxu0 0.0
        %926 = vmatpush.msra.mxu0 0.0
        %927 = vmatpush.msra.mxu0 0.0
        %928 = vmatpush.msra.mxu0 0.0
        %929 = vmatpush.msra.mxu0 0.0
        %930 = vmatpush.msra.mxu0 0.0
        %931 = vmatpush.msra.mxu0 0.0
        %932 = vmatpush.msra.mxu0 %v883
        %933 = vmatpush.msra.mxu0 %v862
        %934 = vmatpush.msra.mxu0 %v860
        %935 = vmatpush.msra.mxu0 %v858
        %936 = vmatpush.msra.mxu0 %v856
        %937 = vmatpush.msra.mxu0 %v854
        %938 = vmatpush.msra.mxu0 %v852
        %939 = vmatmul.f32.gmra.mxu0 %v359
        %v940 = vpop.f32.mrf.mxu0
        %v941 = vadd.f32 0.0, %v940
        %942 = vmatmul.f32.gmra.mxu0 %v362
        %v943 = vpop.f32.mrf.mxu0
        %v944 = vadd.f32 0.0, %v943
        %945 = vmatmul.f32.gmra.mxu0 %v365
        %v946 = vpop.f32.mrf.mxu0
        %v947 = vadd.f32 0.0, %v946
        %948 = vmatmul.f32.gmra.mxu0 %v368
        %v949 = vpop.f32.mrf.mxu0
        %v950 = vadd.f32 0.0, %v949
        %951 = vmatmul.f32.gmra.mxu0 %v371
        %v952 = vpop.f32.mrf.mxu0
        %v953 = vadd.f32 0.0, %v952
        %954 = vmatmul.f32.gmra.mxu0 %v374
        %v955 = vpop.f32.mrf.mxu0
        %v956 = vadd.f32 0.0, %v955
        %957 = vmatmul.f32.gmra.mxu0 %v377
        %v958 = vpop.f32.mrf.mxu0
        %v959 = vadd.f32 0.0, %v958
        %960 = vdwg.mxu0
        %v961 = vadd.f32 %v465, %v903
        %v962 = vadd.f32 %v465, %v941
        %v963 = vadd.f32 %v470, %v906
        %v964 = vadd.f32 %v470, %v944
        %v965 = vadd.f32 %v475, %v909
        %v966 = vadd.f32 %v475, %v947
        %v967 = vadd.f32 %v480, %v912
        %v968 = vadd.f32 %v480, %v950
        %v969 = vadd.f32 %v485, %v915
        %v970 = vadd.f32 %v485, %v953
        %v971 = vadd.f32 %v490, %v918
        %v972 = vadd.f32 %v490, %v956
        %v973 = vadd.f32 %v495, %v921
        %v974 = vadd.f32 %v495, %v959
        %987 = vrot.lane.b32.xlu0 %v851, 127
        %v988 = vpop.permute.xlu0 %987
        %989 = vrot.lane.b32.xlu0 %v852, 127
        %v990 = vpop.permute.xlu0 %989
        %991 = vrot.lane.b32.xlu0 %v853, 127
        %v992 = vpop.permute.xlu0 %991
        %993 = vrot.lane.b32.xlu0 %v854, 127
        %v994 = vpop.permute.xlu0 %993
        %995 = vrot.lane.b32.xlu0 %v855, 127
        %v996 = vpop.permute.xlu0 %995
        %997 = vrot.lane.b32.xlu0 %v856, 127
        %v998 = vpop.permute.xlu0 %997
        %999 = vrot.lane.b32.xlu0 %v857, 127
        %v1000 = vpop.permute.xlu0 %999
        %1001 = vrot.lane.b32.xlu0 %v858, 127
        %v1002 = vpop.permute.xlu0 %1001
        %1003 = vrot.lane.b32.xlu0 %v859, 127
        %v1004 = vpop.permute.xlu0 %1003
        %1005 = vrot.lane.b32.xlu0 %v860, 127
        %v1006 = vpop.permute.xlu0 %1005
        %1007 = vrot.lane.b32.xlu0 %v861, 127
        %v1008 = vpop.permute.xlu0 %1007
        %1009 = vrot.lane.b32.xlu0 %v862, 127
        %v1010 = vpop.permute.xlu0 %1009
        %1011 = vrot.lane.b32.xlu0 %v863, 127
        %v1012 = vpop.permute.xlu0 %1011
        %1013 = vrot.lane.b32.xlu0 %v864, 127
        %v1014 = vpop.permute.xlu0 %1013
        %v1015 = vsel %vm559, %v988, %v990
        %v1016 = vsel %vm559, %v992, %v994
        %v1017 = vsel %vm559, %v996, %v998
        %v1018 = vsel %vm559, %v1000, %v1002
        %v1019 = vsel %vm559, %v1004, %v1006
        %v1020 = vsel %vm559, %v1008, %v1010
        %v1021 = vsel %vm559, %v1012, %v1014
        %v1034 = vsel %vm379, %v1021, 0
        %v1036 = vsel %vm379, %v1014, 0
        %1038 = vmatpush.msra.mxu0 0.0
        %1039 = vmatpush.msra.mxu0 0.0
        %1040 = vmatpush.msra.mxu0 0.0
        %1041 = vmatpush.msra.mxu0 0.0
        %1042 = vmatpush.msra.mxu0 0.0
        %1043 = vmatpush.msra.mxu0 0.0
        %1044 = vmatpush.msra.mxu0 0.0
        %1045 = vmatpush.msra.mxu0 0.0
        %1046 = vmatpush.msra.mxu0 0.0
        %1047 = vmatpush.msra.mxu0 %v1034
        %1048 = vmatpush.msra.mxu0 %v1020
        %1049 = vmatpush.msra.mxu0 %v1019
        %1050 = vmatpush.msra.mxu0 %v1018
        %1051 = vmatpush.msra.mxu0 %v1017
        %1052 = vmatpush.msra.mxu0 %v1016
        %1053 = vmatpush.msra.mxu0 %v1015
        %1054 = vmatmul.f32.gmra.mxu0 %v580
        %v1055 = vpop.f32.mrf.mxu0
        %v1056 = vadd.f32 0.0, %v1055
        %1057 = vmatmul.f32.gmra.mxu0 %v583
        %v1058 = vpop.f32.mrf.mxu0
        %v1059 = vadd.f32 0.0, %v1058
        %1060 = vmatmul.f32.gmra.mxu0 %v586
        %v1061 = vpop.f32.mrf.mxu0
        %v1062 = vadd.f32 0.0, %v1061
        %1063 = vmatmul.f32.gmra.mxu0 %v589
        %v1064 = vpop.f32.mrf.mxu0
        %v1065 = vadd.f32 0.0, %v1064
        %1066 = vmatmul.f32.gmra.mxu0 %v592
        %v1067 = vpop.f32.mrf.mxu0
        %v1068 = vadd.f32 0.0, %v1067
        %1069 = vmatmul.f32.gmra.mxu0 %v595
        %v1070 = vpop.f32.mrf.mxu0
        %v1071 = vadd.f32 0.0, %v1070
        %1072 = vmatmul.f32.gmra.mxu0 %v598
        %v1073 = vpop.f32.mrf.mxu0
        %v1074 = vadd.f32 0.0, %v1073
        %1075 = vdwg.mxu0
        %1076 = vmatpush.msra.mxu0 0.0
        %1077 = vmatpush.msra.mxu0 0.0
        %1078 = vmatpush.msra.mxu0 0.0
        %1079 = vmatpush.msra.mxu0 0.0
        %1080 = vmatpush.msra.mxu0 0.0
        %1081 = vmatpush.msra.mxu0 0.0
        %1082 = vmatpush.msra.mxu0 0.0
        %1083 = vmatpush.msra.mxu0 0.0
        %1084 = vmatpush.msra.mxu0 0.0
        %1085 = vmatpush.msra.mxu0 %v1036
        %1086 = vmatpush.msra.mxu0 %v1010
        %1087 = vmatpush.msra.mxu0 %v1006
        %1088 = vmatpush.msra.mxu0 %v1002
        %1089 = vmatpush.msra.mxu0 %v998
        %1090 = vmatpush.msra.mxu0 %v994
        %1091 = vmatpush.msra.mxu0 %v990
        %1092 = vmatmul.f32.gmra.mxu0 %v580
        %v1093 = vpop.f32.mrf.mxu0
        %v1094 = vadd.f32 0.0, %v1093
        %1095 = vmatmul.f32.gmra.mxu0 %v583
        %v1096 = vpop.f32.mrf.mxu0
        %v1097 = vadd.f32 0.0, %v1096
        %1098 = vmatmul.f32.gmra.mxu0 %v586
        %v1099 = vpop.f32.mrf.mxu0
        %v1100 = vadd.f32 0.0, %v1099
        %1101 = vmatmul.f32.gmra.mxu0 %v589
        %v1102 = vpop.f32.mrf.mxu0
        %v1103 = vadd.f32 0.0, %v1102
        %1104 = vmatmul.f32.gmra.mxu0 %v592
        %v1105 = vpop.f32.mrf.mxu0
        %v1106 = vadd.f32 0.0, %v1105
        %1107 = vmatmul.f32.gmra.mxu0 %v595
        %v1108 = vpop.f32.mrf.mxu0
        %v1109 = vadd.f32 0.0, %v1108
        %1110 = vmatmul.f32.gmra.mxu0 %v598
        %v1111 = vpop.f32.mrf.mxu0
        %v1112 = vadd.f32 0.0, %v1111
        %1113 = vdwg.mxu0
        %v1114 = vadd.f32 %v961, %v1056
        %v1115 = vadd.f32 %v962, %v1094
        %v1116 = vadd.f32 %v963, %v1059
        %v1117 = vadd.f32 %v964, %v1097
        %v1118 = vadd.f32 %v965, %v1062
        %v1119 = vadd.f32 %v966, %v1100
        %v1120 = vadd.f32 %v967, %v1065
        %v1121 = vadd.f32 %v968, %v1103
        %v1122 = vadd.f32 %v969, %v1068
        %v1123 = vadd.f32 %v970, %v1106
        %v1124 = vadd.f32 %v971, %v1071
        %v1125 = vadd.f32 %v972, %v1109
        %v1126 = vadd.f32 %v973, %v1074
        %v1127 = vadd.f32 %v974, %v1112
        %1128 = vrot.lane.b32.xlu0 %v851, 126
        %v1129 = vpop.permute.xlu0 %1128
        %1130 = vrot.lane.b32.xlu0 %v852, 126
        %v1131 = vpop.permute.xlu0 %1130
        %1132 = vrot.lane.b32.xlu0 %v853, 126
        %v1133 = vpop.permute.xlu0 %1132
        %1134 = vrot.lane.b32.xlu0 %v854, 126
        %v1135 = vpop.permute.xlu0 %1134
        %1136 = vrot.lane.b32.xlu0 %v855, 126
        %v1137 = vpop.permute.xlu0 %1136
        %1138 = vrot.lane.b32.xlu0 %v856, 126
        %v1139 = vpop.permute.xlu0 %1138
        %1140 = vrot.lane.b32.xlu0 %v857, 126
        %v1141 = vpop.permute.xlu0 %1140
        %1142 = vrot.lane.b32.xlu0 %v858, 126
        %v1143 = vpop.permute.xlu0 %1142
        %1144 = vrot.lane.b32.xlu0 %v859, 126
        %v1145 = vpop.permute.xlu0 %1144
        %1146 = vrot.lane.b32.xlu0 %v860, 126
        %v1147 = vpop.permute.xlu0 %1146
        %1148 = vrot.lane.b32.xlu0 %v861, 126
        %v1149 = vpop.permute.xlu0 %1148
        %1150 = vrot.lane.b32.xlu0 %v862, 126
        %v1151 = vpop.permute.xlu0 %1150
        %1152 = vrot.lane.b32.xlu0 %v863, 126
        %v1153 = vpop.permute.xlu0 %1152
        %1154 = vrot.lane.b32.xlu0 %v864, 126
        %v1155 = vpop.permute.xlu0 %1154
        %v1156 = vsel %vm730, %v1129, %v1131
        %v1157 = vsel %vm730, %v1133, %v1135
        %v1158 = vsel %vm730, %v1137, %v1139
        %v1159 = vsel %vm730, %v1141, %v1143
        %v1160 = vsel %vm730, %v1145, %v1147
        %v1161 = vsel %vm730, %v1149, %v1151
        %v1162 = vsel %vm730, %v1153, %v1155
        %v1175 = vsel %vm379, %v1162, 0
        %v1177 = vsel %vm379, %v1155, 0
        %1179 = vmatpush.msra.mxu0 0.0
        %1180 = vmatpush.msra.mxu0 0.0
        %1181 = vmatpush.msra.mxu0 0.0
        %1182 = vmatpush.msra.mxu0 0.0
        %1183 = vmatpush.msra.mxu0 0.0
        %1184 = vmatpush.msra.mxu0 0.0
        %1185 = vmatpush.msra.mxu0 0.0
        %1186 = vmatpush.msra.mxu0 0.0
        %1187 = vmatpush.msra.mxu0 0.0
        %1188 = vmatpush.msra.mxu0 %v1175
        %1189 = vmatpush.msra.mxu0 %v1161
        %1190 = vmatpush.msra.mxu0 %v1160
        %1191 = vmatpush.msra.mxu0 %v1159
        %1192 = vmatpush.msra.mxu0 %v1158
        %1193 = vmatpush.msra.mxu0 %v1157
        %1194 = vmatpush.msra.mxu0 %v1156
        %1195 = vmatmul.f32.gmra.mxu0 %v751
        %v1196 = vpop.f32.mrf.mxu0
        %v1197 = vadd.f32 0.0, %v1196
        %1198 = vmatmul.f32.gmra.mxu0 %v754
        %v1199 = vpop.f32.mrf.mxu0
        %v1200 = vadd.f32 0.0, %v1199
        %1201 = vmatmul.f32.gmra.mxu0 %v757
        %v1202 = vpop.f32.mrf.mxu0
        %v1203 = vadd.f32 0.0, %v1202
        %1204 = vmatmul.f32.gmra.mxu0 %v760
        %v1205 = vpop.f32.mrf.mxu0
        %v1206 = vadd.f32 0.0, %v1205
        %1207 = vmatmul.f32.gmra.mxu0 %v763
        %v1208 = vpop.f32.mrf.mxu0
        %v1209 = vadd.f32 0.0, %v1208
        %1210 = vmatmul.f32.gmra.mxu0 %v766
        %v1211 = vpop.f32.mrf.mxu0
        %v1212 = vadd.f32 0.0, %v1211
        %1213 = vmatmul.f32.gmra.mxu0 %v769
        %v1214 = vpop.f32.mrf.mxu0
        %v1215 = vadd.f32 0.0, %v1214
        %1216 = vdwg.mxu0
        %1217 = vmatpush.msra.mxu0 0.0
        %1218 = vmatpush.msra.mxu0 0.0
        %1219 = vmatpush.msra.mxu0 0.0
        %1220 = vmatpush.msra.mxu0 0.0
        %1221 = vmatpush.msra.mxu0 0.0
        %1222 = vmatpush.msra.mxu0 0.0
        %1223 = vmatpush.msra.mxu0 0.0
        %1224 = vmatpush.msra.mxu0 0.0
        %1225 = vmatpush.msra.mxu0 0.0
        %1226 = vmatpush.msra.mxu0 %v1177
        %1227 = vmatpush.msra.mxu0 %v1151
        %1228 = vmatpush.msra.mxu0 %v1147
        %1229 = vmatpush.msra.mxu0 %v1143
        %1230 = vmatpush.msra.mxu0 %v1139
        %1231 = vmatpush.msra.mxu0 %v1135
        %1232 = vmatpush.msra.mxu0 %v1131
        %1233 = vmatmul.f32.gmra.mxu0 %v751
        %v1234 = vpop.f32.mrf.mxu0
        %v1235 = vadd.f32 0.0, %v1234
        %1236 = vmatmul.f32.gmra.mxu0 %v754
        %v1237 = vpop.f32.mrf.mxu0
        %v1238 = vadd.f32 0.0, %v1237
        %1239 = vmatmul.f32.gmra.mxu0 %v757
        %v1240 = vpop.f32.mrf.mxu0
        %v1241 = vadd.f32 0.0, %v1240
        %1242 = vmatmul.f32.gmra.mxu0 %v760
        %v1243 = vpop.f32.mrf.mxu0
        %v1244 = vadd.f32 0.0, %v1243
        %1245 = vmatmul.f32.gmra.mxu0 %v763
        %v1246 = vpop.f32.mrf.mxu0
        %v1247 = vadd.f32 0.0, %v1246
        %1248 = vmatmul.f32.gmra.mxu0 %v766
        %v1249 = vpop.f32.mrf.mxu0
        %v1250 = vadd.f32 0.0, %v1249
        %1251 = vmatmul.f32.gmra.mxu0 %v769
        %v1252 = vpop.f32.mrf.mxu0
        %v1253 = vadd.f32 0.0, %v1252
        %1254 = vdwg.mxu0
        %v1255 = vadd.f32 %v1114, %v1197
        %v1256 = vadd.f32 %v1115, %v1235
        %v1257 = vadd.f32 %v1116, %v1200
        %v1258 = vadd.f32 %v1117, %v1238
        %v1259 = vadd.f32 %v1118, %v1203
        %v1260 = vadd.f32 %v1119, %v1241
        %v1261 = vadd.f32 %v1120, %v1206
        %v1262 = vadd.f32 %v1121, %v1244
        %v1263 = vadd.f32 %v1122, %v1209
        %v1264 = vadd.f32 %v1123, %v1247
        %v1265 = vadd.f32 %v1124, %v1212
        %v1266 = vadd.f32 %v1125, %v1250
        %v1267 = vadd.f32 %v1126, %v1215
        %v1268 = vadd.f32 %v1127, %v1253
        %v1269 = vmax.f32 %v1255, 0.0
        %v1270 = vmax.f32 %v1256, 0.0
        %v1271 = vmax.f32 %v1257, 0.0
        %v1272 = vmax.f32 %v1258, 0.0
        %v1273 = vmax.f32 %v1259, 0.0
        %v1274 = vmax.f32 %v1260, 0.0
        %v1275 = vmax.f32 %v1261, 0.0
        %v1276 = vmax.f32 %v1262, 0.0
        %v1277 = vmax.f32 %v1263, 0.0
        %v1278 = vmax.f32 %v1264, 0.0
        %v1279 = vmax.f32 %v1265, 0.0
        %v1280 = vmax.f32 %v1266, 0.0
        %v1281 = vmax.f32 %v1267, 0.0
        %v1282 = vmax.f32 %v1268, 0.0
        %v1284 = vsel %vm379, %v1267, 0
        %v1287 = vsel %vm379, %v1268, 0
        %1289 = vmatpush.msra.mxu0 0.0
        %1290 = vmatpush.msra.mxu0 0.0
        %1291 = vmatpush.msra.mxu0 0.0
        %1292 = vmatpush.msra.mxu0 0.0
        %1293 = vmatpush.msra.mxu0 0.0
        %1294 = vmatpush.msra.mxu0 0.0
        %1295 = vmatpush.msra.mxu0 0.0
        %1296 = vmatpush.msra.mxu0 0.0
        %1297 = vmatpush.msra.mxu0 0.0
        %1298 = vmatpush.msra.mxu0 %v1284
        %1299 = vmatpush.msra.mxu0 %v1265
        %1300 = vmatpush.msra.mxu0 %v1263
        %1301 = vmatpush.msra.mxu0 %v1261
        %1302 = vmatpush.msra.mxu0 %v1259
        %1303 = vmatpush.msra.mxu0 %v1257
        %1304 = vmatpush.msra.mxu0 %v1255
        %1305 = vmatmul.f32.gmra.mxu0 %v359
        %v1306 = vpop.f32.mrf.mxu0
        %v1307 = vadd.f32 0.0, %v1306
        %1308 = vmatmul.f32.gmra.mxu0 %v362
        %v1309 = vpop.f32.mrf.mxu0
        %v1310 = vadd.f32 0.0, %v1309
        %1311 = vmatmul.f32.gmra.mxu0 %v365
        %v1312 = vpop.f32.mrf.mxu0
        %v1313 = vadd.f32 0.0, %v1312
        %1314 = vmatmul.f32.gmra.mxu0 %v368
        %v1315 = vpop.f32.mrf.mxu0
        %v1316 = vadd.f32 0.0, %v1315
        %1317 = vmatmul.f32.gmra.mxu0 %v371
        %v1318 = vpop.f32.mrf.mxu0
        %v1319 = vadd.f32 0.0, %v1318
        %1320 = vmatmul.f32.gmra.mxu0 %v374
        %v1321 = vpop.f32.mrf.mxu0
        %v1322 = vadd.f32 0.0, %v1321
        %1323 = vmatmul.f32.gmra.mxu0 %v377
        %v1324 = vpop.f32.mrf.mxu0
        %v1325 = vadd.f32 0.0, %v1324
        %1326 = vdwg.mxu0
        %1327 = vmatpush.msra.mxu0 0.0
        %1328 = vmatpush.msra.mxu0 0.0
        %1329 = vmatpush.msra.mxu0 0.0
        %1330 = vmatpush.msra.mxu0 0.0
        %1331 = vmatpush.msra.mxu0 0.0
        %1332 = vmatpush.msra.mxu0 0.0
        %1333 = vmatpush.msra.mxu0 0.0
        %1334 = vmatpush.msra.mxu0 0.0
        %1335 = vmatpush.msra.mxu0 0.0
        %1336 = vmatpush.msra.mxu0 %v1287
        %1337 = vmatpush.msra.mxu0 %v1266
        %1338 = vmatpush.msra.mxu0 %v1264
        %1339 = vmatpush.msra.mxu0 %v1262
        %1340 = vmatpush.msra.mxu0 %v1260
        %1341 = vmatpush.msra.mxu0 %v1258
        %1342 = vmatpush.msra.mxu0 %v1256
        %1343 = vmatmul.f32.gmra.mxu0 %v359
        %v1344 = vpop.f32.mrf.mxu0
        %v1345 = vadd.f32 0.0, %v1344
        %1346 = vmatmul.f32.gmra.mxu0 %v362
        %v1347 = vpop.f32.mrf.mxu0
        %v1348 = vadd.f32 0.0, %v1347
        %1349 = vmatmul.f32.gmra.mxu0 %v365
        %v1350 = vpop.f32.mrf.mxu0
        %v1351 = vadd.f32 0.0, %v1350
        %1352 = vmatmul.f32.gmra.mxu0 %v368
        %v1353 = vpop.f32.mrf.mxu0
        %v1354 = vadd.f32 0.0, %v1353
        %1355 = vmatmul.f32.gmra.mxu0 %v371
        %v1356 = vpop.f32.mrf.mxu0
        %v1357 = vadd.f32 0.0, %v1356
        %1358 = vmatmul.f32.gmra.mxu0 %v374
        %v1359 = vpop.f32.mrf.mxu0
        %v1360 = vadd.f32 0.0, %v1359
        %1361 = vmatmul.f32.gmra.mxu0 %v377
        %v1362 = vpop.f32.mrf.mxu0
        %v1363 = vadd.f32 0.0, %v1362
        %1364 = vdwg.mxu0
        %v1365 = vadd.f32 %v465, %v1307
        %v1366 = vadd.f32 %v465, %v1345
        %v1367 = vadd.f32 %v470, %v1310
        %v1368 = vadd.f32 %v470, %v1348
        %v1369 = vadd.f32 %v475, %v1313
        %v1370 = vadd.f32 %v475, %v1351
        %v1371 = vadd.f32 %v480, %v1316
        %v1372 = vadd.f32 %v480, %v1354
        %v1373 = vadd.f32 %v485, %v1319
        %v1374 = vadd.f32 %v485, %v1357
        %v1375 = vadd.f32 %v490, %v1322
        %v1376 = vadd.f32 %v490, %v1360
        %v1377 = vadd.f32 %v495, %v1325
        %v1378 = vadd.f32 %v495, %v1363
        %1391 = vrot.lane.b32.xlu0 %v1255, 127
        %v1392 = vpop.permute.xlu0 %1391
        %1393 = vrot.lane.b32.xlu0 %v1256, 127
        %v1394 = vpop.permute.xlu0 %1393
        %1395 = vrot.lane.b32.xlu0 %v1257, 127
        %v1396 = vpop.permute.xlu0 %1395
        %1397 = vrot.lane.b32.xlu0 %v1258, 127
        %v1398 = vpop.permute.xlu0 %1397
        %1399 = vrot.lane.b32.xlu0 %v1259, 127
        %v1400 = vpop.permute.xlu0 %1399
        %1401 = vrot.lane.b32.xlu0 %v1260, 127
        %v1402 = vpop.permute.xlu0 %1401
        %1403 = vrot.lane.b32.xlu0 %v1261, 127
        %v1404 = vpop.permute.xlu0 %1403
        %1405 = vrot.lane.b32.xlu0 %v1262, 127
        %v1406 = vpop.permute.xlu0 %1405
        %1407 = vrot.lane.b32.xlu0 %v1263, 127
        %v1408 = vpop.permute.xlu0 %1407
        %1409 = vrot.lane.b32.xlu0 %v1264, 127
        %v1410 = vpop.permute.xlu0 %1409
        %1411 = vrot.lane.b32.xlu0 %v1265, 127
        %v1412 = vpop.permute.xlu0 %1411
        %1413 = vrot.lane.b32.xlu0 %v1266, 127
        %v1414 = vpop.permute.xlu0 %1413
        %1415 = vrot.lane.b32.xlu0 %v1267, 127
        %v1416 = vpop.permute.xlu0 %1415
        %1417 = vrot.lane.b32.xlu0 %v1268, 127
        %v1418 = vpop.permute.xlu0 %1417
        %v1419 = vsel %vm559, %v1392, %v1394
        %v1420 = vsel %vm559, %v1396, %v1398
        %v1421 = vsel %vm559, %v1400, %v1402
        %v1422 = vsel %vm559, %v1404, %v1406
        %v1423 = vsel %vm559, %v1408, %v1410
        %v1424 = vsel %vm559, %v1412, %v1414
        %v1425 = vsel %vm559, %v1416, %v1418
        %v1438 = vsel %vm379, %v1425, 0
        %v1440 = vsel %vm379, %v1418, 0
        %1442 = vmatpush.msra.mxu0 0.0
        %1443 = vmatpush.msra.mxu0 0.0
        %1444 = vmatpush.msra.mxu0 0.0
        %1445 = vmatpush.msra.mxu0 0.0
        %1446 = vmatpush.msra.mxu0 0.0
        %1447 = vmatpush.msra.mxu0 0.0
        %1448 = vmatpush.msra.mxu0 0.0
        %1449 = vmatpush.msra.mxu0 0.0
        %1450 = vmatpush.msra.mxu0 0.0
        %1451 = vmatpush.msra.mxu0 %v1438
        %1452 = vmatpush.msra.mxu0 %v1424
        %1453 = vmatpush.msra.mxu0 %v1423
        %1454 = vmatpush.msra.mxu0 %v1422
        %1455 = vmatpush.msra.mxu0 %v1421
        %1456 = vmatpush.msra.mxu0 %v1420
        %1457 = vmatpush.msra.mxu0 %v1419
        %1458 = vmatmul.f32.gmra.mxu0 %v580
        %v1459 = vpop.f32.mrf.mxu0
        %v1460 = vadd.f32 0.0, %v1459
        %1461 = vmatmul.f32.gmra.mxu0 %v583
        %v1462 = vpop.f32.mrf.mxu0
        %v1463 = vadd.f32 0.0, %v1462
        %1464 = vmatmul.f32.gmra.mxu0 %v586
        %v1465 = vpop.f32.mrf.mxu0
        %v1466 = vadd.f32 0.0, %v1465
        %1467 = vmatmul.f32.gmra.mxu0 %v589
        %v1468 = vpop.f32.mrf.mxu0
        %v1469 = vadd.f32 0.0, %v1468
        %1470 = vmatmul.f32.gmra.mxu0 %v592
        %v1471 = vpop.f32.mrf.mxu0
        %v1472 = vadd.f32 0.0, %v1471
        %1473 = vmatmul.f32.gmra.mxu0 %v595
        %v1474 = vpop.f32.mrf.mxu0
        %v1475 = vadd.f32 0.0, %v1474
        %1476 = vmatmul.f32.gmra.mxu0 %v598
        %v1477 = vpop.f32.mrf.mxu0
        %v1478 = vadd.f32 0.0, %v1477
        %1479 = vdwg.mxu0
        %1480 = vmatpush.msra.mxu0 0.0
        %1481 = vmatpush.msra.mxu0 0.0
        %1482 = vmatpush.msra.mxu0 0.0
        %1483 = vmatpush.msra.mxu0 0.0
        %1484 = vmatpush.msra.mxu0 0.0
        %1485 = vmatpush.msra.mxu0 0.0
        %1486 = vmatpush.msra.mxu0 0.0
        %1487 = vmatpush.msra.mxu0 0.0
        %1488 = vmatpush.msra.mxu0 0.0
        %1489 = vmatpush.msra.mxu0 %v1440
        %1490 = vmatpush.msra.mxu0 %v1414
        %1491 = vmatpush.msra.mxu0 %v1410
        %1492 = vmatpush.msra.mxu0 %v1406
        %1493 = vmatpush.msra.mxu0 %v1402
        %1494 = vmatpush.msra.mxu0 %v1398
        %1495 = vmatpush.msra.mxu0 %v1394
        %1496 = vmatmul.f32.gmra.mxu0 %v580
        %v1497 = vpop.f32.mrf.mxu0
        %v1498 = vadd.f32 0.0, %v1497
        %1499 = vmatmul.f32.gmra.mxu0 %v583
        %v1500 = vpop.f32.mrf.mxu0
        %v1501 = vadd.f32 0.0, %v1500
        %1502 = vmatmul.f32.gmra.mxu0 %v586
        %v1503 = vpop.f32.mrf.mxu0
        %v1504 = vadd.f32 0.0, %v1503
        %1505 = vmatmul.f32.gmra.mxu0 %v589
        %v1506 = vpop.f32.mrf.mxu0
        %v1507 = vadd.f32 0.0, %v1506
        %1508 = vmatmul.f32.gmra.mxu0 %v592
        %v1509 = vpop.f32.mrf.mxu0
        %v1510 = vadd.f32 0.0, %v1509
        %1511 = vmatmul.f32.gmra.mxu0 %v595
        %v1512 = vpop.f32.mrf.mxu0
        %v1513 = vadd.f32 0.0, %v1512
        %1514 = vmatmul.f32.gmra.mxu0 %v598
        %v1515 = vpop.f32.mrf.mxu0
        %v1516 = vadd.f32 0.0, %v1515
        %1517 = vdwg.mxu0
        %v1518 = vadd.f32 %v1365, %v1460
        %v1519 = vadd.f32 %v1366, %v1498
        %v1520 = vadd.f32 %v1367, %v1463
        %v1521 = vadd.f32 %v1368, %v1501
        %v1522 = vadd.f32 %v1369, %v1466
        %v1523 = vadd.f32 %v1370, %v1504
        %v1524 = vadd.f32 %v1371, %v1469
        %v1525 = vadd.f32 %v1372, %v1507
        %v1526 = vadd.f32 %v1373, %v1472
        %v1527 = vadd.f32 %v1374, %v1510
        %v1528 = vadd.f32 %v1375, %v1475
        %v1529 = vadd.f32 %v1376, %v1513
        %v1530 = vadd.f32 %v1377, %v1478
        %v1531 = vadd.f32 %v1378, %v1516
        %1532 = vrot.lane.b32.xlu0 %v1255, 126
        %v1533 = vpop.permute.xlu0 %1532
        %1534 = vrot.lane.b32.xlu0 %v1256, 126
        %v1535 = vpop.permute.xlu0 %1534
        %1536 = vrot.lane.b32.xlu0 %v1257, 126
        %v1537 = vpop.permute.xlu0 %1536
        %1538 = vrot.lane.b32.xlu0 %v1258, 126
        %v1539 = vpop.permute.xlu0 %1538
        %1540 = vrot.lane.b32.xlu0 %v1259, 126
        %v1541 = vpop.permute.xlu0 %1540
        %1542 = vrot.lane.b32.xlu0 %v1260, 126
        %v1543 = vpop.permute.xlu0 %1542
        %1544 = vrot.lane.b32.xlu0 %v1261, 126
        %v1545 = vpop.permute.xlu0 %1544
        %1546 = vrot.lane.b32.xlu0 %v1262, 126
        %v1547 = vpop.permute.xlu0 %1546
        %1548 = vrot.lane.b32.xlu0 %v1263, 126
        %v1549 = vpop.permute.xlu0 %1548
        %1550 = vrot.lane.b32.xlu0 %v1264, 126
        %v1551 = vpop.permute.xlu0 %1550
        %1552 = vrot.lane.b32.xlu0 %v1265, 126
        %v1553 = vpop.permute.xlu0 %1552
        %1554 = vrot.lane.b32.xlu0 %v1266, 126
        %v1555 = vpop.permute.xlu0 %1554
        %1556 = vrot.lane.b32.xlu0 %v1267, 126
        %v1557 = vpop.permute.xlu0 %1556
        %1558 = vrot.lane.b32.xlu0 %v1268, 126
        %v1559 = vpop.permute.xlu0 %1558
        %v1560 = vsel %vm730, %v1533, %v1535
        %v1561 = vsel %vm730, %v1537, %v1539
        %v1562 = vsel %vm730, %v1541, %v1543
        %v1563 = vsel %vm730, %v1545, %v1547
        %v1564 = vsel %vm730, %v1549, %v1551
        %v1565 = vsel %vm730, %v1553, %v1555
        %v1566 = vsel %vm730, %v1557, %v1559
        %v1579 = vsel %vm379, %v1566, 0
        %v1581 = vsel %vm379, %v1559, 0
        %1583 = vmatpush.msra.mxu0 0.0
        %1584 = vmatpush.msra.mxu0 0.0
        %1585 = vmatpush.msra.mxu0 0.0
        %1586 = vmatpush.msra.mxu0 0.0
        %1587 = vmatpush.msra.mxu0 0.0
        %1588 = vmatpush.msra.mxu0 0.0
        %1589 = vmatpush.msra.mxu0 0.0
        %1590 = vmatpush.msra.mxu0 0.0
        %1591 = vmatpush.msra.mxu0 0.0
        %1592 = vmatpush.msra.mxu0 %v1579
        %1593 = vmatpush.msra.mxu0 %v1565
        %1594 = vmatpush.msra.mxu0 %v1564
        %1595 = vmatpush.msra.mxu0 %v1563
        %1596 = vmatpush.msra.mxu0 %v1562
        %1597 = vmatpush.msra.mxu0 %v1561
        %1598 = vmatpush.msra.mxu0 %v1560
        %1599 = vmatmul.f32.gmra.mxu0 %v751
        %v1600 = vpop.f32.mrf.mxu0
        %v1601 = vadd.f32 0.0, %v1600
        %1602 = vmatmul.f32.gmra.mxu0 %v754
        %v1603 = vpop.f32.mrf.mxu0
        %v1604 = vadd.f32 0.0, %v1603
        %1605 = vmatmul.f32.gmra.mxu0 %v757
        %v1606 = vpop.f32.mrf.mxu0
        %v1607 = vadd.f32 0.0, %v1606
        %1608 = vmatmul.f32.gmra.mxu0 %v760
        %v1609 = vpop.f32.mrf.mxu0
        %v1610 = vadd.f32 0.0, %v1609
        %1611 = vmatmul.f32.gmra.mxu0 %v763
        %v1612 = vpop.f32.mrf.mxu0
        %v1613 = vadd.f32 0.0, %v1612
        %1614 = vmatmul.f32.gmra.mxu0 %v766
        %v1615 = vpop.f32.mrf.mxu0
        %v1616 = vadd.f32 0.0, %v1615
        %1617 = vmatmul.f32.gmra.mxu0 %v769
        %v1618 = vpop.f32.mrf.mxu0
        %v1619 = vadd.f32 0.0, %v1618
        %1620 = vdwg.mxu0
        %1621 = vmatpush.msra.mxu0 0.0
        %1622 = vmatpush.msra.mxu0 0.0
        %1623 = vmatpush.msra.mxu0 0.0
        %1624 = vmatpush.msra.mxu0 0.0
        %1625 = vmatpush.msra.mxu0 0.0
        %1626 = vmatpush.msra.mxu0 0.0
        %1627 = vmatpush.msra.mxu0 0.0
        %1628 = vmatpush.msra.mxu0 0.0
        %1629 = vmatpush.msra.mxu0 0.0
        %1630 = vmatpush.msra.mxu0 %v1581
        %1631 = vmatpush.msra.mxu0 %v1555
        %1632 = vmatpush.msra.mxu0 %v1551
        %1633 = vmatpush.msra.mxu0 %v1547
        %1634 = vmatpush.msra.mxu0 %v1543
        %1635 = vmatpush.msra.mxu0 %v1539
        %1636 = vmatpush.msra.mxu0 %v1535
        %1637 = vmatmul.f32.gmra.mxu0 %v751
        %v1638 = vpop.f32.mrf.mxu0
        %v1639 = vadd.f32 0.0, %v1638
        %1640 = vmatmul.f32.gmra.mxu0 %v754
        %v1641 = vpop.f32.mrf.mxu0
        %v1642 = vadd.f32 0.0, %v1641
        %1643 = vmatmul.f32.gmra.mxu0 %v757
        %v1644 = vpop.f32.mrf.mxu0
        %v1645 = vadd.f32 0.0, %v1644
        %1646 = vmatmul.f32.gmra.mxu0 %v760
        %v1647 = vpop.f32.mrf.mxu0
        %v1648 = vadd.f32 0.0, %v1647
        %1649 = vmatmul.f32.gmra.mxu0 %v763
        %v1650 = vpop.f32.mrf.mxu0
        %v1651 = vadd.f32 0.0, %v1650
        %1652 = vmatmul.f32.gmra.mxu0 %v766
        %v1653 = vpop.f32.mrf.mxu0
        %v1654 = vadd.f32 0.0, %v1653
        %1655 = vmatmul.f32.gmra.mxu0 %v769
        %v1656 = vpop.f32.mrf.mxu0
        %v1657 = vadd.f32 0.0, %v1656
        %1658 = vdwg.mxu0
        %v1659 = vadd.f32 %v1518, %v1601
        %v1660 = vadd.f32 %v1519, %v1639
        %v1661 = vadd.f32 %v1520, %v1604
        %v1662 = vadd.f32 %v1521, %v1642
        %v1663 = vadd.f32 %v1522, %v1607
        %v1664 = vadd.f32 %v1523, %v1645
        %v1665 = vadd.f32 %v1524, %v1610
        %v1666 = vadd.f32 %v1525, %v1648
        %v1667 = vadd.f32 %v1526, %v1613
        %v1668 = vadd.f32 %v1527, %v1651
        %v1669 = vadd.f32 %v1528, %v1616
        %v1670 = vadd.f32 %v1529, %v1654
        %v1671 = vadd.f32 %v1530, %v1619
        %v1672 = vadd.f32 %v1531, %v1657
        %v1673 = vmax.f32 %v1659, 0.0
        %v1674 = vmax.f32 %v1660, 0.0
        %v1675 = vmax.f32 %v1661, 0.0
        %v1676 = vmax.f32 %v1662, 0.0
        %v1677 = vmax.f32 %v1663, 0.0
        %v1678 = vmax.f32 %v1664, 0.0
        %v1679 = vmax.f32 %v1665, 0.0
        %v1680 = vmax.f32 %v1666, 0.0
        %v1681 = vmax.f32 %v1667, 0.0
        %v1682 = vmax.f32 %v1668, 0.0
        %v1683 = vmax.f32 %v1669, 0.0
        %v1684 = vmax.f32 %v1670, 0.0
        %v1685 = vmax.f32 %v1671, 0.0
        %v1686 = vmax.f32 %v1672, 0.0
        %v1687 = vld [vmem:[#allocation2] sm:$0xff]
        %v1688 = vld [vmem:[#allocation2 + $0x8] sm:$0xff]
        %v1689 = vld [vmem:[#allocation2 + $0x10] sm:$0xff]
        %v1690 = vld [vmem:[#allocation2 + $0x18] sm:$0xff]
        %v1691 = vld [vmem:[#allocation2 + $0x20] sm:$0xff]
        %v1692 = vld [vmem:[#allocation2 + $0x28] sm:$0xff]
        %v1693 = vld [vmem:[#allocation2 + $0x30] sm:$0xff]
        %v1694 = vld [vmem:[#allocation2 + $0x38] sm:$0xff]
        %v1695 = vld [vmem:[#allocation2 + $0x40] sm:$0xff]
        %v1696 = vld [vmem:[#allocation2 + $0x48] sm:$0xff]
        %v1697 = vld [vmem:[#allocation2 + $0x50] sm:$0xff]
        %v1698 = vld [vmem:[#allocation2 + $0x58] sm:$0xff]
        %v1699 = vld [vmem:[#allocation2 + $0x60] sm:$0xff]
        %v1700 = vld [vmem:[#allocation2 + $0x68] sm:$0xff]
        %v1701 = vld [vmem:[#allocation2 + $0x70] sm:$0xff]
        %v1702 = vld [vmem:[#allocation2 + $0x78] sm:$0xff]
        %v1703 = vld [vmem:[#allocation2 + $0x80] sm:$0xff]
        %v1704 = vld [vmem:[#allocation2 + $0x88] sm:$0xff]
        %v1705 = vld [vmem:[#allocation2 + $0x90] sm:$0xff]
        %v1706 = vld [vmem:[#allocation2 + $0x98] sm:$0xff]
        %v1707 = vld [vmem:[#allocation2 + $0xa0] sm:$0xff]
        %v1708 = vld [vmem:[#allocation2 + $0xa8] sm:$0xff]
        %v1709 = vld [vmem:[#allocation2 + $0xb0] sm:$0xff]
        %v1710 = vld [vmem:[#allocation2 + $0xb8] sm:$0xff]
        %v1711 = vld [vmem:[#allocation2 + $0xc0] sm:$0xff]
        %v1712 = vld [vmem:[#allocation2 + $0xc8] sm:$0xff]
        %v1713 = vld [vmem:[#allocation2 + $0xd0] sm:$0xff]
        %v1714 = vld [vmem:[#allocation2 + $0xd8] sm:$0xff]
        %v1715 = vld [vmem:[#allocation2 + $0xe0] sm:$0xff]
        %v1716 = vld [vmem:[#allocation2 + $0xe8] sm:$0xff]
        %v1717 = vld [vmem:[#allocation2 + $0xf0] sm:$0xff]
        %v1718 = vld [vmem:[#allocation2 + $0xf8] sm:$0xff]
        %v1719 = vld [vmem:[#allocation2 + $0x100] sm:$0xff]
        %v1720 = vld [vmem:[#allocation2 + $0x108] sm:$0xff]
        %v1721 = vld [vmem:[#allocation2 + $0x110] sm:$0xff]
        %v1722 = vld [vmem:[#allocation2 + $0x118] sm:$0xff]
        %v1723 = vld [vmem:[#allocation2 + $0x120] sm:$0xff]
        %v1724 = vld [vmem:[#allocation2 + $0x128] sm:$0xff]
        %v1725 = vld [vmem:[#allocation2 + $0x130] sm:$0xff]
        %v1726 = vld [vmem:[#allocation2 + $0x138] sm:$0xff]
        %v1727 = vld [vmem:[#allocation2 + $0x140] sm:$0xff]
        %v1728 = vld [vmem:[#allocation2 + $0x148] sm:$0xff]
        %v1729 = vld [vmem:[#allocation2 + $0x150] sm:$0xff]
        %v1730 = vld [vmem:[#allocation2 + $0x158] sm:$0xff]
        %v1731 = vld [vmem:[#allocation2 + $0x160] sm:$0xff]
        %v1732 = vld [vmem:[#allocation2 + $0x168] sm:$0xff]
        %v1733 = vld [vmem:[#allocation2 + $0x170] sm:$0xff]
        %v1734 = vld [vmem:[#allocation2 + $0x178] sm:$0xff]
        %v1735 = vld [vmem:[#allocation2 + $0x180] sm:$0xff]
        %v1736 = vld [vmem:[#allocation2 + $0x188] sm:$0xff]
        %v1737 = vld [vmem:[#allocation2 + $0x190] sm:$0xff]
        %v1738 = vld [vmem:[#allocation2 + $0x198] sm:$0xff]
        %v1739 = vld [vmem:[#allocation2 + $0x1a0] sm:$0xff]
        %v1740 = vld [vmem:[#allocation2 + $0x1a8] sm:$0xff]
        %v1741 = vld [vmem:[#allocation2 + $0x1b0] sm:$0xff]
        %v1742 = vld [vmem:[#allocation2 + $0x1b8] sm:$0xff]
        %v1743 = vld [vmem:[#allocation2 + $0x1c0] sm:$0xff]
        %v1744 = vld [vmem:[#allocation2 + $0x1c8] sm:$0xff]
        %v1745 = vld [vmem:[#allocation2 + $0x1d0] sm:$0xff]
        %v1746 = vld [vmem:[#allocation2 + $0x1d8] sm:$0xff]
        %v1747 = vld [vmem:[#allocation2 + $0x1e0] sm:$0xff]
        %v1748 = vld [vmem:[#allocation2 + $0x1e8] sm:$0xff]
        %v1749 = vld [vmem:[#allocation2 + $0x1f0] sm:$0xff]
        %v1750 = vld [vmem:[#allocation2 + $0x1f8] sm:$0xff]
        %v1751 = vld [vmem:[#allocation2 + $0x200] sm:$0xff]
        %v1752 = vld [vmem:[#allocation2 + $0x208] sm:$0xff]
        %v1753 = vld [vmem:[#allocation2 + $0x210] sm:$0xff]
        %v1754 = vld [vmem:[#allocation2 + $0x218] sm:$0xff]
        %v1755 = vld [vmem:[#allocation2 + $0x220] sm:$0xff]
        %v1756 = vld [vmem:[#allocation2 + $0x228] sm:$0xff]
        %v1757 = vld [vmem:[#allocation2 + $0x230] sm:$0xff]
        %v1758 = vld [vmem:[#allocation2 + $0x238] sm:$0xff]
        %v1759 = vld [vmem:[#allocation2 + $0x240] sm:$0xff]
        %v1760 = vld [vmem:[#allocation2 + $0x248] sm:$0xff]
        %v1761 = vld [vmem:[#allocation2 + $0x250] sm:$0xff]
        %v1762 = vld [vmem:[#allocation2 + $0x258] sm:$0xff]
        %v1763 = vld [vmem:[#allocation2 + $0x260] sm:$0xff]
        %v1764 = vld [vmem:[#allocation2 + $0x268] sm:$0xff]
        %v1765 = vld [vmem:[#allocation2 + $0x270] sm:$0xff]
        %v1766 = vld [vmem:[#allocation2 + $0x278] sm:$0xff]
        %v1767 = vld [vmem:[#allocation2 + $0x280] sm:$0xff]
        %v1768 = vld [vmem:[#allocation2 + $0x288] sm:$0xff]
        %v1769 = vld [vmem:[#allocation2 + $0x290] sm:$0xff]
        %v1770 = vld [vmem:[#allocation2 + $0x298] sm:$0xff]
        %v1771 = vld [vmem:[#allocation2 + $0x2a0] sm:$0xff]
        %v1772 = vld [vmem:[#allocation2 + $0x2a8] sm:$0xff]
        %v1773 = vld [vmem:[#allocation2 + $0x2b0] sm:$0xff]
        %v1774 = vld [vmem:[#allocation2 + $0x2b8] sm:$0xff]
        %v1775 = vld [vmem:[#allocation2 + $0x2c0] sm:$0xff]
        %v1776 = vld [vmem:[#allocation2 + $0x2c8] sm:$0xff]
        %v1777 = vld [vmem:[#allocation2 + $0x2d0] sm:$0xff]
        %v1778 = vld [vmem:[#allocation2 + $0x2d8] sm:$0xff]
        %v1779 = vld [vmem:[#allocation2 + $0x2e0] sm:$0xff]
        %v1780 = vld [vmem:[#allocation2 + $0x2e8] sm:$0xff]
        %v1781 = vld [vmem:[#allocation2 + $0x2f0] sm:$0xff]
        %v1782 = vld [vmem:[#allocation2 + $0x2f8] sm:$0xff]
        %v1783 = vld [vmem:[#allocation2 + $0x300] sm:$0xff]
        %v1784 = vld [vmem:[#allocation2 + $0x308] sm:$0xff]
        %v1785 = vld [vmem:[#allocation2 + $0x310] sm:$0xff]
        %v1786 = vld [vmem:[#allocation2 + $0x318] sm:$0xff]
        %v1787 = vld [vmem:[#allocation2 + $0x320] sm:$0xff]
        %v1788 = vld [vmem:[#allocation2 + $0x328] sm:$0xff]
        %v1789 = vld [vmem:[#allocation2 + $0x330] sm:$0xff]
        %v1790 = vld [vmem:[#allocation2 + $0x338] sm:$0xff]
        %v1791 = vld [vmem:[#allocation2 + $0x340] sm:$0xff]
        %v1792 = vld [vmem:[#allocation2 + $0x348] sm:$0xff]
        %v1793 = vld [vmem:[#allocation2 + $0x350] sm:$0xff]
        %v1794 = vld [vmem:[#allocation2 + $0x358] sm:$0xff]
        %v1795 = vld [vmem:[#allocation2 + $0x360] sm:$0xff]
        %v1796 = vld [vmem:[#allocation2 + $0x368] sm:$0xff]
        %v1797 = vld [vmem:[#allocation2 + $0x370] sm:$0xff]
        %v1798 = vld [vmem:[#allocation2 + $0x378] sm:$0xff]
        %v1799 = vld [vmem:[#allocation2 + $0x380] sm:$0xff]
        %v1800 = vld [vmem:[#allocation2 + $0x388] sm:$0xff]
        %v1801 = vld [vmem:[#allocation2 + $0x390] sm:$0xff]
        %v1802 = vld [vmem:[#allocation2 + $0x398] sm:$0xff]
        %v1803 = vld [vmem:[#allocation2 + $0x3a0] sm:$0xff]
        %v1804 = vld [vmem:[#allocation2 + $0x3a8] sm:$0xff]
        %v1805 = vld [vmem:[#allocation2 + $0x3b0] sm:$0xff]
        %v1806 = vld [vmem:[#allocation2 + $0x3b8] sm:$0xff]
        %v1807 = vld [vmem:[#allocation2 + $0x3c0] sm:$0xff]
        %v1808 = vld [vmem:[#allocation2 + $0x3c8] sm:$0xff]
        %v1809 = vld [vmem:[#allocation2 + $0x3d0] sm:$0xff]
        %v1810 = vld [vmem:[#allocation2 + $0x3d8] sm:$0xff]
        %v1811 = vld [vmem:[#allocation2 + $0x3e0] sm:$0xff]
        %v1812 = vld [vmem:[#allocation2 + $0x3e8] sm:$0xff]
        %v1813 = vld [vmem:[#allocation2 + $0x3f0] sm:$0xff]
        %v1814 = vld [vmem:[#allocation2 + $0x3f8] sm:$0xff]
        %v1815 = vld [vmem:[#allocation2 + $0x400] sm:$0xff]
        %v1816 = vld [vmem:[#allocation2 + $0x408] sm:$0xff]
        %v1817 = vld [vmem:[#allocation2 + $0x410] sm:$0xff]
        %v1818 = vld [vmem:[#allocation2 + $0x418] sm:$0xff]
        %v1819 = vld [vmem:[#allocation2 + $0x420] sm:$0xff]
        %v1820 = vld [vmem:[#allocation2 + $0x428] sm:$0xff]
        %v1821 = vld [vmem:[#allocation2 + $0x430] sm:$0xff]
        %v1822 = vld [vmem:[#allocation2 + $0x438] sm:$0xff]
        %v1823 = vld [vmem:[#allocation2 + $0x440] sm:$0xff]
        %v1824 = vld [vmem:[#allocation2 + $0x448] sm:$0xff]
        %v1825 = vld [vmem:[#allocation2 + $0x450] sm:$0xff]
        %v1826 = vld [vmem:[#allocation2 + $0x458] sm:$0xff]
        %v1827 = vld [vmem:[#allocation2 + $0x460] sm:$0xff]
        %v1828 = vld [vmem:[#allocation2 + $0x468] sm:$0xff]
        %v1829 = vld [vmem:[#allocation2 + $0x470] sm:$0xff]
        %v1830 = vld [vmem:[#allocation2 + $0x478] sm:$0xff]
        %v1831 = vld [vmem:[#allocation2 + $0x480] sm:$0xff]
        %v1832 = vld [vmem:[#allocation2 + $0x488] sm:$0xff]
        %v1833 = vld [vmem:[#allocation2 + $0x490] sm:$0xff]
        %v1834 = vld [vmem:[#allocation2 + $0x498] sm:$0xff]
        %v1835 = vld [vmem:[#allocation2 + $0x4a0] sm:$0xff]
        %v1836 = vld [vmem:[#allocation2 + $0x4a8] sm:$0xff]
        %v1837 = vld [vmem:[#allocation2 + $0x4b0] sm:$0xff]
        %v1838 = vld [vmem:[#allocation2 + $0x4b8] sm:$0xff]
        %v1839 = vld [vmem:[#allocation2 + $0x4c0] sm:$0xff]
        %v1840 = vld [vmem:[#allocation2 + $0x4c8] sm:$0xff]
        %v1841 = vld [vmem:[#allocation2 + $0x4d0] sm:$0xff]
        %v1842 = vld [vmem:[#allocation2 + $0x4d8] sm:$0xff]
        %v1843 = vld [vmem:[#allocation2 + $0x4e0] sm:$0xff]
        %v1844 = vld [vmem:[#allocation2 + $0x4e8] sm:$0xff]
        %v1845 = vld [vmem:[#allocation2 + $0x4f0] sm:$0xff]
        %v1846 = vld [vmem:[#allocation2 + $0x4f8] sm:$0xff]
        %v1847 = vld [vmem:[#allocation2 + $0x500] sm:$0xff]
        %v1848 = vld [vmem:[#allocation2 + $0x508] sm:$0xff]
        %v1849 = vld [vmem:[#allocation2 + $0x510] sm:$0xff]
        %v1850 = vld [vmem:[#allocation2 + $0x518] sm:$0xff]
        %v1851 = vld [vmem:[#allocation2 + $0x520] sm:$0xff]
        %v1852 = vld [vmem:[#allocation2 + $0x528] sm:$0xff]
        %v1853 = vld [vmem:[#allocation2 + $0x530] sm:$0xff]
        %v1854 = vld [vmem:[#allocation2 + $0x538] sm:$0xff]
        %v1855 = vld [vmem:[#allocation2 + $0x540] sm:$0xff]
        %v1856 = vld [vmem:[#allocation2 + $0x548] sm:$0xff]
        %v1857 = vld [vmem:[#allocation2 + $0x550] sm:$0xff]
        %v1858 = vld [vmem:[#allocation2 + $0x558] sm:$0xff]
        %v1859 = vld [vmem:[#allocation2 + $0x560] sm:$0xff]
        %v1860 = vld [vmem:[#allocation2 + $0x568] sm:$0xff]
        %v1861 = vld [vmem:[#allocation2 + $0x570] sm:$0xff]
        %v1862 = vld [vmem:[#allocation2 + $0x578] sm:$0xff]
        %v1863 = vld [vmem:[#allocation2 + $0x580] sm:$0xff]
        %v1864 = vld [vmem:[#allocation2 + $0x588] sm:$0xff]
        %v1865 = vld [vmem:[#allocation2 + $0x590] sm:$0xff]
        %v1866 = vld [vmem:[#allocation2 + $0x598] sm:$0xff]
        %v1867 = vld [vmem:[#allocation2 + $0x5a0] sm:$0xff]
        %v1868 = vld [vmem:[#allocation2 + $0x5a8] sm:$0xff]
        %v1869 = vld [vmem:[#allocation2 + $0x5b0] sm:$0xff]
        %v1870 = vld [vmem:[#allocation2 + $0x5b8] sm:$0xff]
        %v1871 = vld [vmem:[#allocation2 + $0x5c0] sm:$0xff]
        %v1872 = vld [vmem:[#allocation2 + $0x5c8] sm:$0xff]
        %v1873 = vld [vmem:[#allocation2 + $0x5d0] sm:$0xff]
        %v1874 = vld [vmem:[#allocation2 + $0x5d8] sm:$0xff]
        %v1875 = vld [vmem:[#allocation2 + $0x5e0] sm:$0xff]
        %v1876 = vld [vmem:[#allocation2 + $0x5e8] sm:$0xff]
        %v1877 = vld [vmem:[#allocation2 + $0x5f0] sm:$0xff]
        %v1878 = vld [vmem:[#allocation2 + $0x5f8] sm:$0xff]
        %v1879 = vld [vmem:[#allocation2 + $0x600] sm:$0x3f]
        %v1880 = vld [vmem:[#allocation2 + $0x608] sm:$0x3f]
        %v1881 = vld [vmem:[#allocation2 + $0x610] sm:$0x3f]
        %v1882 = vld [vmem:[#allocation2 + $0x618] sm:$0x3f]
        %v1883 = vld [vmem:[#allocation2 + $0x620] sm:$0x3f]
        %v1884 = vld [vmem:[#allocation2 + $0x628] sm:$0x3f]
        %v1885 = vld [vmem:[#allocation2 + $0x630] sm:$0x3f]
        %v1886 = vld [vmem:[#allocation2 + $0x638] sm:$0x3f]
        %v1887 = vld [vmem:[#allocation4] sm:$0xff]
        %v1888 = vld [vmem:[#allocation4 + $0x8] sm:$0xff]
        %v1889 = vld [vmem:[#allocation4 + $0x10] sm:$0xff]
        %v1890 = vld [vmem:[#allocation4 + $0x18] sm:$0xff]
        %v1891 = vld [vmem:[#allocation4 + $0x20] sm:$0xff]
        %v1892 = vld [vmem:[#allocation4 + $0x28] sm:$0xff]
        %v1893 = vld [vmem:[#allocation4 + $0x30] sm:$0xff]
        %v1894 = vld [vmem:[#allocation4 + $0x38] sm:$0xff]
        %v1895 = vld [vmem:[#allocation4 + $0x40] sm:$0xff]
        %v1896 = vld [vmem:[#allocation4 + $0x48] sm:$0xff]
        %v1897 = vld [vmem:[#allocation4 + $0x50] sm:$0xff]
        %v1898 = vld [vmem:[#allocation4 + $0x58] sm:$0xff]
        %v1899 = vld [vmem:[#allocation4 + $0x60] sm:$0xff]
        %v1900 = vld [vmem:[#allocation4 + $0x68] sm:$0xff]
        %v1901 = vld [vmem:[#allocation4 + $0x70] sm:$0xff]
        %v1902 = vld [vmem:[#allocation4 + $0x78] sm:$0xff]
        %v1903 = vld [vmem:[#allocation4 + $0x80] sm:$0xff]
        %v1904 = vld [vmem:[#allocation4 + $0x88] sm:$0xff]
        %v1905 = vld [vmem:[#allocation4 + $0x90] sm:$0xff]
        %v1906 = vld [vmem:[#allocation4 + $0x98] sm:$0xff]
        %v1907 = vld [vmem:[#allocation4 + $0xa0] sm:$0xff]
        %v1908 = vld [vmem:[#allocation4 + $0xa8] sm:$0xff]
        %v1909 = vld [vmem:[#allocation4 + $0xb0] sm:$0xff]
        %v1910 = vld [vmem:[#allocation4 + $0xb8] sm:$0xff]
        %v1911 = vld [vmem:[#allocation4 + $0xc0] sm:$0xff]
        %v1912 = vld [vmem:[#allocation4 + $0xc8] sm:$0xff]
        %v1913 = vld [vmem:[#allocation4 + $0xd0] sm:$0xff]
        %v1914 = vld [vmem:[#allocation4 + $0xd8] sm:$0xff]
        %v1915 = vld [vmem:[#allocation4 + $0xe0] sm:$0xff]
        %v1916 = vld [vmem:[#allocation4 + $0xe8] sm:$0xff]
        %v1917 = vld [vmem:[#allocation4 + $0xf0] sm:$0xff]
        %v1918 = vld [vmem:[#allocation4 + $0xf8] sm:$0xff]
        %v1919 = vld [vmem:[#allocation4 + $0x100] sm:$0xff]
        %v1920 = vld [vmem:[#allocation4 + $0x108] sm:$0xff]
        %v1921 = vld [vmem:[#allocation4 + $0x110] sm:$0xff]
        %v1922 = vld [vmem:[#allocation4 + $0x118] sm:$0xff]
        %v1923 = vld [vmem:[#allocation4 + $0x120] sm:$0xff]
        %v1924 = vld [vmem:[#allocation4 + $0x128] sm:$0xff]
        %v1925 = vld [vmem:[#allocation4 + $0x130] sm:$0xff]
        %v1926 = vld [vmem:[#allocation4 + $0x138] sm:$0xff]
        %v1927 = vld [vmem:[#allocation4 + $0x140] sm:$0xff]
        %v1928 = vld [vmem:[#allocation4 + $0x148] sm:$0xff]
        %v1929 = vld [vmem:[#allocation4 + $0x150] sm:$0xff]
        %v1930 = vld [vmem:[#allocation4 + $0x158] sm:$0xff]
        %v1931 = vld [vmem:[#allocation4 + $0x160] sm:$0xff]
        %v1932 = vld [vmem:[#allocation4 + $0x168] sm:$0xff]
        %v1933 = vld [vmem:[#allocation4 + $0x170] sm:$0xff]
        %v1934 = vld [vmem:[#allocation4 + $0x178] sm:$0xff]
        %v1935 = vld [vmem:[#allocation4 + $0x180] sm:$0xff]
        %v1936 = vld [vmem:[#allocation4 + $0x188] sm:$0xff]
        %v1937 = vld [vmem:[#allocation4 + $0x190] sm:$0xff]
        %v1938 = vld [vmem:[#allocation4 + $0x198] sm:$0xff]
        %v1939 = vld [vmem:[#allocation4 + $0x1a0] sm:$0xff]
        %v1940 = vld [vmem:[#allocation4 + $0x1a8] sm:$0xff]
        %v1941 = vld [vmem:[#allocation4 + $0x1b0] sm:$0xff]
        %v1942 = vld [vmem:[#allocation4 + $0x1b8] sm:$0xff]
        %v1943 = vld [vmem:[#allocation4 + $0x1c0] sm:$0xff]
        %v1944 = vld [vmem:[#allocation4 + $0x1c8] sm:$0xff]
        %v1945 = vld [vmem:[#allocation4 + $0x1d0] sm:$0xff]
        %v1946 = vld [vmem:[#allocation4 + $0x1d8] sm:$0xff]
        %v1947 = vld [vmem:[#allocation4 + $0x1e0] sm:$0xff]
        %v1948 = vld [vmem:[#allocation4 + $0x1e8] sm:$0xff]
        %v1949 = vld [vmem:[#allocation4 + $0x1f0] sm:$0xff]
        %v1950 = vld [vmem:[#allocation4 + $0x1f8] sm:$0xff]
        %v1951 = vld [vmem:[#allocation4 + $0x200] sm:$0xff]
        %v1952 = vld [vmem:[#allocation4 + $0x208] sm:$0xff]
        %v1953 = vld [vmem:[#allocation4 + $0x210] sm:$0xff]
        %v1954 = vld [vmem:[#allocation4 + $0x218] sm:$0xff]
        %v1955 = vld [vmem:[#allocation4 + $0x220] sm:$0xff]
        %v1956 = vld [vmem:[#allocation4 + $0x228] sm:$0xff]
        %v1957 = vld [vmem:[#allocation4 + $0x230] sm:$0xff]
        %v1958 = vld [vmem:[#allocation4 + $0x238] sm:$0xff]
        %v1959 = vld [vmem:[#allocation4 + $0x240] sm:$0xff]
        %v1960 = vld [vmem:[#allocation4 + $0x248] sm:$0xff]
        %v1961 = vld [vmem:[#allocation4 + $0x250] sm:$0xff]
        %v1962 = vld [vmem:[#allocation4 + $0x258] sm:$0xff]
        %v1963 = vld [vmem:[#allocation4 + $0x260] sm:$0xff]
        %v1964 = vld [vmem:[#allocation4 + $0x268] sm:$0xff]
        %v1965 = vld [vmem:[#allocation4 + $0x270] sm:$0xff]
        %v1966 = vld [vmem:[#allocation4 + $0x278] sm:$0xff]
        %v1967 = vld [vmem:[#allocation4 + $0x280] sm:$0xff]
        %v1968 = vld [vmem:[#allocation4 + $0x288] sm:$0xff]
        %v1969 = vld [vmem:[#allocation4 + $0x290] sm:$0xff]
        %v1970 = vld [vmem:[#allocation4 + $0x298] sm:$0xff]
        %v1971 = vld [vmem:[#allocation4 + $0x2a0] sm:$0xff]
        %v1972 = vld [vmem:[#allocation4 + $0x2a8] sm:$0xff]
        %v1973 = vld [vmem:[#allocation4 + $0x2b0] sm:$0xff]
        %v1974 = vld [vmem:[#allocation4 + $0x2b8] sm:$0xff]
        %v1975 = vld [vmem:[#allocation4 + $0x2c0] sm:$0xff]
        %v1976 = vld [vmem:[#allocation4 + $0x2c8] sm:$0xff]
        %v1977 = vld [vmem:[#allocation4 + $0x2d0] sm:$0xff]
        %v1978 = vld [vmem:[#allocation4 + $0x2d8] sm:$0xff]
        %v1979 = vld [vmem:[#allocation4 + $0x2e0] sm:$0xff]
        %v1980 = vld [vmem:[#allocation4 + $0x2e8] sm:$0xff]
        %v1981 = vld [vmem:[#allocation4 + $0x2f0] sm:$0xff]
        %v1982 = vld [vmem:[#allocation4 + $0x2f8] sm:$0xff]
        %v1983 = vld [vmem:[#allocation4 + $0x300] sm:$0xff]
        %v1984 = vld [vmem:[#allocation4 + $0x308] sm:$0xff]
        %v1985 = vld [vmem:[#allocation4 + $0x310] sm:$0xff]
        %v1986 = vld [vmem:[#allocation4 + $0x318] sm:$0xff]
        %v1987 = vld [vmem:[#allocation4 + $0x320] sm:$0xff]
        %v1988 = vld [vmem:[#allocation4 + $0x328] sm:$0xff]
        %v1989 = vld [vmem:[#allocation4 + $0x330] sm:$0xff]
        %v1990 = vld [vmem:[#allocation4 + $0x338] sm:$0xff]
        %v1991 = vld [vmem:[#allocation4 + $0x340] sm:$0xff]
        %v1992 = vld [vmem:[#allocation4 + $0x348] sm:$0xff]
        %v1993 = vld [vmem:[#allocation4 + $0x350] sm:$0xff]
        %v1994 = vld [vmem:[#allocation4 + $0x358] sm:$0xff]
        %v1995 = vld [vmem:[#allocation4 + $0x360] sm:$0xff]
        %v1996 = vld [vmem:[#allocation4 + $0x368] sm:$0xff]
        %v1997 = vld [vmem:[#allocation4 + $0x370] sm:$0xff]
        %v1998 = vld [vmem:[#allocation4 + $0x378] sm:$0xff]
        %v1999 = vld [vmem:[#allocation4 + $0x380] sm:$0xff]
        %v2000 = vld [vmem:[#allocation4 + $0x388] sm:$0xff]
        %v2001 = vld [vmem:[#allocation4 + $0x390] sm:$0xff]
        %v2002 = vld [vmem:[#allocation4 + $0x398] sm:$0xff]
        %v2003 = vld [vmem:[#allocation4 + $0x3a0] sm:$0xff]
        %v2004 = vld [vmem:[#allocation4 + $0x3a8] sm:$0xff]
        %v2005 = vld [vmem:[#allocation4 + $0x3b0] sm:$0xff]
        %v2006 = vld [vmem:[#allocation4 + $0x3b8] sm:$0xff]
        %v2007 = vld [vmem:[#allocation4 + $0x3c0] sm:$0xff]
        %v2008 = vld [vmem:[#allocation4 + $0x3c8] sm:$0xff]
        %v2009 = vld [vmem:[#allocation4 + $0x3d0] sm:$0xff]
        %v2010 = vld [vmem:[#allocation4 + $0x3d8] sm:$0xff]
        %v2011 = vld [vmem:[#allocation4 + $0x3e0] sm:$0xff]
        %v2012 = vld [vmem:[#allocation4 + $0x3e8] sm:$0xff]
        %v2013 = vld [vmem:[#allocation4 + $0x3f0] sm:$0xff]
        %v2014 = vld [vmem:[#allocation4 + $0x3f8] sm:$0xff]
        %v2015 = vld [vmem:[#allocation4 + $0x400] sm:$0xff]
        %v2016 = vld [vmem:[#allocation4 + $0x408] sm:$0xff]
        %v2017 = vld [vmem:[#allocation4 + $0x410] sm:$0xff]
        %v2018 = vld [vmem:[#allocation4 + $0x418] sm:$0xff]
        %v2019 = vld [vmem:[#allocation4 + $0x420] sm:$0xff]
        %v2020 = vld [vmem:[#allocation4 + $0x428] sm:$0xff]
        %v2021 = vld [vmem:[#allocation4 + $0x430] sm:$0xff]
        %v2022 = vld [vmem:[#allocation4 + $0x438] sm:$0xff]
        %v2023 = vld [vmem:[#allocation4 + $0x440] sm:$0xff]
        %v2024 = vld [vmem:[#allocation4 + $0x448] sm:$0xff]
        %v2025 = vld [vmem:[#allocation4 + $0x450] sm:$0xff]
        %v2026 = vld [vmem:[#allocation4 + $0x458] sm:$0xff]
        %v2027 = vld [vmem:[#allocation4 + $0x460] sm:$0xff]
        %v2028 = vld [vmem:[#allocation4 + $0x468] sm:$0xff]
        %v2029 = vld [vmem:[#allocation4 + $0x470] sm:$0xff]
        %v2030 = vld [vmem:[#allocation4 + $0x478] sm:$0xff]
        %v2031 = vld [vmem:[#allocation4 + $0x480] sm:$0xff]
        %v2032 = vld [vmem:[#allocation4 + $0x488] sm:$0xff]
        %v2033 = vld [vmem:[#allocation4 + $0x490] sm:$0xff]
        %v2034 = vld [vmem:[#allocation4 + $0x498] sm:$0xff]
        %v2035 = vld [vmem:[#allocation4 + $0x4a0] sm:$0xff]
        %v2036 = vld [vmem:[#allocation4 + $0x4a8] sm:$0xff]
        %v2037 = vld [vmem:[#allocation4 + $0x4b0] sm:$0xff]
        %v2038 = vld [vmem:[#allocation4 + $0x4b8] sm:$0xff]
        %v2039 = vld [vmem:[#allocation4 + $0x4c0] sm:$0xff]
        %v2040 = vld [vmem:[#allocation4 + $0x4c8] sm:$0xff]
        %v2041 = vld [vmem:[#allocation4 + $0x4d0] sm:$0xff]
        %v2042 = vld [vmem:[#allocation4 + $0x4d8] sm:$0xff]
        %v2043 = vld [vmem:[#allocation4 + $0x4e0] sm:$0xff]
        %v2044 = vld [vmem:[#allocation4 + $0x4e8] sm:$0xff]
        %v2045 = vld [vmem:[#allocation4 + $0x4f0] sm:$0xff]
        %v2046 = vld [vmem:[#allocation4 + $0x4f8] sm:$0xff]
        %v2047 = vld [vmem:[#allocation4 + $0x500] sm:$0xff]
        %v2048 = vld [vmem:[#allocation4 + $0x508] sm:$0xff]
        %v2049 = vld [vmem:[#allocation4 + $0x510] sm:$0xff]
        %v2050 = vld [vmem:[#allocation4 + $0x518] sm:$0xff]
        %v2051 = vld [vmem:[#allocation4 + $0x520] sm:$0xff]
        %v2052 = vld [vmem:[#allocation4 + $0x528] sm:$0xff]
        %v2053 = vld [vmem:[#allocation4 + $0x530] sm:$0xff]
        %v2054 = vld [vmem:[#allocation4 + $0x538] sm:$0xff]
        %v2055 = vld [vmem:[#allocation4 + $0x540] sm:$0xff]
        %v2056 = vld [vmem:[#allocation4 + $0x548] sm:$0xff]
        %v2057 = vld [vmem:[#allocation4 + $0x550] sm:$0xff]
        %v2058 = vld [vmem:[#allocation4 + $0x558] sm:$0xff]
        %v2059 = vld [vmem:[#allocation4 + $0x560] sm:$0xff]
        %v2060 = vld [vmem:[#allocation4 + $0x568] sm:$0xff]
        %v2061 = vld [vmem:[#allocation4 + $0x570] sm:$0xff]
        %v2062 = vld [vmem:[#allocation4 + $0x578] sm:$0xff]
        %v2063 = vld [vmem:[#allocation4 + $0x580] sm:$0xff]
        %v2064 = vld [vmem:[#allocation4 + $0x588] sm:$0xff]
        %v2065 = vld [vmem:[#allocation4 + $0x590] sm:$0xff]
        %v2066 = vld [vmem:[#allocation4 + $0x598] sm:$0xff]
        %v2067 = vld [vmem:[#allocation4 + $0x5a0] sm:$0xff]
        %v2068 = vld [vmem:[#allocation4 + $0x5a8] sm:$0xff]
        %v2069 = vld [vmem:[#allocation4 + $0x5b0] sm:$0xff]
        %v2070 = vld [vmem:[#allocation4 + $0x5b8] sm:$0xff]
        %v2071 = vld [vmem:[#allocation4 + $0x5c0] sm:$0xff]
        %v2072 = vld [vmem:[#allocation4 + $0x5c8] sm:$0xff]
        %v2073 = vld [vmem:[#allocation4 + $0x5d0] sm:$0xff]
        %v2074 = vld [vmem:[#allocation4 + $0x5d8] sm:$0xff]
        %v2075 = vld [vmem:[#allocation4 + $0x5e0] sm:$0xff]
        %v2076 = vld [vmem:[#allocation4 + $0x5e8] sm:$0xff]
        %v2077 = vld [vmem:[#allocation4 + $0x5f0] sm:$0xff]
        %v2078 = vld [vmem:[#allocation4 + $0x5f8] sm:$0xff]
        %v2079 = vld [vmem:[#allocation4 + $0x600] sm:$0xf]
        %v2080 = vld [vmem:[#allocation4 + $0x608] sm:$0xf]
        %v2081 = vld [vmem:[#allocation4 + $0x610] sm:$0xf]
        %v2082 = vld [vmem:[#allocation4 + $0x618] sm:$0xf]
        %v2083 = vld [vmem:[#allocation4 + $0x620] sm:$0xf]
        %v2084 = vld [vmem:[#allocation4 + $0x628] sm:$0xf]
        %v2085 = vld [vmem:[#allocation4 + $0x630] sm:$0xf]
        %v2086 = vld [vmem:[#allocation4 + $0x638] sm:$0xf]
        %vm2087 = vcmask 556032
        %v2089 = vsel %vm2087, %v1270, 0
        %v2092 = vsel %vm2087, %v1272, 0
        %v2095 = vsel %vm2087, %v1274, 0
        %v2098 = vsel %vm2087, %v1276, 0
        %v2101 = vsel %vm2087, %v1278, 0
        %v2104 = vsel %vm2087, %v1280, 0
        %v2107 = vsel %vm2087, %v1282, 0
        %vm2109 = vcmask 1043456
        %v2111 = vsel %vm2109, %v2079, 0
        %v2114 = vsel %vm2109, %v2080, 0
        %v2117 = vsel %vm2109, %v2081, 0
        %v2120 = vsel %vm2109, %v2082, 0
        %v2123 = vsel %vm2109, %v2083, 0
        %v2126 = vsel %vm2109, %v2084, 0
        %v2129 = vsel %vm2109, %v2085, 0
        %v2132 = vsel %vm2109, %v2086, 0
        %2134 = vmatpush.msra.mxu0 %v2007
        %2135 = vmatpush.msra.mxu0 %v1999
        %2136 = vmatpush.msra.mxu0 %v1991
        %2137 = vmatpush.msra.mxu0 %v1983
        %2138 = vmatpush.msra.mxu0 %v1975
        %2139 = vmatpush.msra.mxu0 %v1967
        %2140 = vmatpush.msra.mxu0 %v1959
        %2141 = vmatpush.msra.mxu0 %v1951
        %2142 = vmatpush.msra.mxu0 %v1943
        %2143 = vmatpush.msra.mxu0 %v1935
        %2144 = vmatpush.msra.mxu0 %v1927
        %2145 = vmatpush.msra.mxu0 %v1919
        %2146 = vmatpush.msra.mxu0 %v1911
        %2147 = vmatpush.msra.mxu0 %v1903
        %2148 = vmatpush.msra.mxu0 %v1895
        %2149 = vmatpush.msra.mxu0 %v1887
        %2150 = vmatmul.f32.gmra.mxu0 %v1269
        %v2151 = vpop.f32.mrf.mxu0
        %v2152 = vadd.f32 0.0, %v2151
        %2153 = vmatmul.f32.gmra.mxu0 %v1271
        %v2154 = vpop.f32.mrf.mxu0
        %v2155 = vadd.f32 0.0, %v2154
        %2156 = vmatmul.f32.gmra.mxu0 %v1273
        %v2157 = vpop.f32.mrf.mxu0
        %v2158 = vadd.f32 0.0, %v2157
        %2159 = vmatmul.f32.gmra.mxu0 %v1275
        %v2160 = vpop.f32.mrf.mxu0
        %v2161 = vadd.f32 0.0, %v2160
        %2162 = vmatmul.f32.gmra.mxu0 %v1277
        %v2163 = vpop.f32.mrf.mxu0
        %v2164 = vadd.f32 0.0, %v2163
        %2165 = vmatmul.f32.gmra.mxu0 %v1279
        %v2166 = vpop.f32.mrf.mxu0
        %v2167 = vadd.f32 0.0, %v2166
        %2168 = vmatmul.f32.gmra.mxu0 %v1281
        %v2169 = vpop.f32.mrf.mxu0
        %v2170 = vadd.f32 0.0, %v2169
        %2171 = vdwg.mxu0
        %2172 = vmatpush.msra.mxu0 0.0
        %2173 = vmatpush.msra.mxu0 0.0
        %2174 = vmatpush.msra.mxu0 0.0
        %2175 = vmatpush.msra.mxu0 0.0
        %2176 = vmatpush.msra.mxu0 0.0
        %2177 = vmatpush.msra.mxu0 0.0
        %2178 = vmatpush.msra.mxu0 0.0
        %2179 = vmatpush.msra.mxu0 %v2111
        %2180 = vmatpush.msra.mxu0 %v2071
        %2181 = vmatpush.msra.mxu0 %v2063
        %2182 = vmatpush.msra.mxu0 %v2055
        %2183 = vmatpush.msra.mxu0 %v2047
        %2184 = vmatpush.msra.mxu0 %v2039
        %2185 = vmatpush.msra.mxu0 %v2031
        %2186 = vmatpush.msra.mxu0 %v2023
        %2187 = vmatpush.msra.mxu0 %v2015
        %2188 = vmatmul.f32.gmra.mxu0 %v2089
        %v2189 = vpop.f32.mrf.mxu0
        %v2190 = vadd.f32 %v2152, %v2189
        %2191 = vmatmul.f32.gmra.mxu0 %v2092
        %v2192 = vpop.f32.mrf.mxu0
        %v2193 = vadd.f32 %v2155, %v2192
        %2194 = vmatmul.f32.gmra.mxu0 %v2095
        %v2195 = vpop.f32.mrf.mxu0
        %v2196 = vadd.f32 %v2158, %v2195
        %2197 = vmatmul.f32.gmra.mxu0 %v2098
        %v2198 = vpop.f32.mrf.mxu0
        %v2199 = vadd.f32 %v2161, %v2198
        %2200 = vmatmul.f32.gmra.mxu0 %v2101
        %v2201 = vpop.f32.mrf.mxu0
        %v2202 = vadd.f32 %v2164, %v2201
        %2203 = vmatmul.f32.gmra.mxu0 %v2104
        %v2204 = vpop.f32.mrf.mxu0
        %v2205 = vadd.f32 %v2167, %v2204
        %2206 = vmatmul.f32.gmra.mxu0 %v2107
        %v2207 = vpop.f32.mrf.mxu0
        %v2208 = vadd.f32 %v2170, %v2207
        %2209 = vdwg.mxu0
        %2210 = vmatpush.msra.mxu0 %v2008
        %2211 = vmatpush.msra.mxu0 %v2000
        %2212 = vmatpush.msra.mxu0 %v1992
        %2213 = vmatpush.msra.mxu0 %v1984
        %2214 = vmatpush.msra.mxu0 %v1976
        %2215 = vmatpush.msra.mxu0 %v1968
        %2216 = vmatpush.msra.mxu0 %v1960
        %2217 = vmatpush.msra.mxu0 %v1952
        %2218 = vmatpush.msra.mxu0 %v1944
        %2219 = vmatpush.msra.mxu0 %v1936
        %2220 = vmatpush.msra.mxu0 %v1928
        %2221 = vmatpush.msra.mxu0 %v1920
        %2222 = vmatpush.msra.mxu0 %v1912
        %2223 = vmatpush.msra.mxu0 %v1904
        %2224 = vmatpush.msra.mxu0 %v1896
        %2225 = vmatpush.msra.mxu0 %v1888
        %2226 = vmatmul.f32.gmra.mxu0 %v1269
        %v2227 = vpop.f32.mrf.mxu0
        %v2228 = vadd.f32 0.0, %v2227
        %2229 = vmatmul.f32.gmra.mxu0 %v1271
        %v2230 = vpop.f32.mrf.mxu0
        %v2231 = vadd.f32 0.0, %v2230
        %2232 = vmatmul.f32.gmra.mxu0 %v1273
        %v2233 = vpop.f32.mrf.mxu0
        %v2234 = vadd.f32 0.0, %v2233
        %2235 = vmatmul.f32.gmra.mxu0 %v1275
        %v2236 = vpop.f32.mrf.mxu0
        %v2237 = vadd.f32 0.0, %v2236
        %2238 = vmatmul.f32.gmra.mxu0 %v1277
        %v2239 = vpop.f32.mrf.mxu0
        %v2240 = vadd.f32 0.0, %v2239
        %2241 = vmatmul.f32.gmra.mxu0 %v1279
        %v2242 = vpop.f32.mrf.mxu0
        %v2243 = vadd.f32 0.0, %v2242
        %2244 = vmatmul.f32.gmra.mxu0 %v1281
        %v2245 = vpop.f32.mrf.mxu0
        %v2246 = vadd.f32 0.0, %v2245
        %2247 = vdwg.mxu0
        %2248 = vmatpush.msra.mxu0 0.0
        %2249 = vmatpush.msra.mxu0 0.0
        %2250 = vmatpush.msra.mxu0 0.0
        %2251 = vmatpush.msra.mxu0 0.0
        %2252 = vmatpush.msra.mxu0 0.0
        %2253 = vmatpush.msra.mxu0 0.0
        %2254 = vmatpush.msra.mxu0 0.0
        %2255 = vmatpush.msra.mxu0 %v2114
        %2256 = vmatpush.msra.mxu0 %v2072
        %2257 = vmatpush.msra.mxu0 %v2064
        %2258 = vmatpush.msra.mxu0 %v2056
        %2259 = vmatpush.msra.mxu0 %v2048
        %2260 = vmatpush.msra.mxu0 %v2040
        %2261 = vmatpush.msra.mxu0 %v2032
        %2262 = vmatpush.msra.mxu0 %v2024
        %2263 = vmatpush.msra.mxu0 %v2016
        %2264 = vmatmul.f32.gmra.mxu0 %v2089
        %v2265 = vpop.f32.mrf.mxu0
        %v2266 = vadd.f32 %v2228, %v2265
        %2267 = vmatmul.f32.gmra.mxu0 %v2092
        %v2268 = vpop.f32.mrf.mxu0
        %v2269 = vadd.f32 %v2231, %v2268
        %2270 = vmatmul.f32.gmra.mxu0 %v2095
        %v2271 = vpop.f32.mrf.mxu0
        %v2272 = vadd.f32 %v2234, %v2271
        %2273 = vmatmul.f32.gmra.mxu0 %v2098
        %v2274 = vpop.f32.mrf.mxu0
        %v2275 = vadd.f32 %v2237, %v2274
        %2276 = vmatmul.f32.gmra.mxu0 %v2101
        %v2277 = vpop.f32.mrf.mxu0
        %v2278 = vadd.f32 %v2240, %v2277
        %2279 = vmatmul.f32.gmra.mxu0 %v2104
        %v2280 = vpop.f32.mrf.mxu0
        %v2281 = vadd.f32 %v2243, %v2280
        %2282 = vmatmul.f32.gmra.mxu0 %v2107
        %v2283 = vpop.f32.mrf.mxu0
        %v2284 = vadd.f32 %v2246, %v2283
        %2285 = vdwg.mxu0
        %2286 = vmatpush.msra.mxu0 %v2009
        %2287 = vmatpush.msra.mxu0 %v2001
        %2288 = vmatpush.msra.mxu0 %v1993
        %2289 = vmatpush.msra.mxu0 %v1985
        %2290 = vmatpush.msra.mxu0 %v1977
        %2291 = vmatpush.msra.mxu0 %v1969
        %2292 = vmatpush.msra.mxu0 %v1961
        %2293 = vmatpush.msra.mxu0 %v1953
        %2294 = vmatpush.msra.mxu0 %v1945
        %2295 = vmatpush.msra.mxu0 %v1937
        %2296 = vmatpush.msra.mxu0 %v1929
        %2297 = vmatpush.msra.mxu0 %v1921
        %2298 = vmatpush.msra.mxu0 %v1913
        %2299 = vmatpush.msra.mxu0 %v1905
        %2300 = vmatpush.msra.mxu0 %v1897
        %2301 = vmatpush.msra.mxu0 %v1889
        %2302 = vmatmul.f32.gmra.mxu0 %v1269
        %v2303 = vpop.f32.mrf.mxu0
        %v2304 = vadd.f32 0.0, %v2303
        %2305 = vmatmul.f32.gmra.mxu0 %v1271
        %v2306 = vpop.f32.mrf.mxu0
        %v2307 = vadd.f32 0.0, %v2306
        %2308 = vmatmul.f32.gmra.mxu0 %v1273
        %v2309 = vpop.f32.mrf.mxu0
        %v2310 = vadd.f32 0.0, %v2309
        %2311 = vmatmul.f32.gmra.mxu0 %v1275
        %v2312 = vpop.f32.mrf.mxu0
        %v2313 = vadd.f32 0.0, %v2312
        %2314 = vmatmul.f32.gmra.mxu0 %v1277
        %v2315 = vpop.f32.mrf.mxu0
        %v2316 = vadd.f32 0.0, %v2315
        %2317 = vmatmul.f32.gmra.mxu0 %v1279
        %v2318 = vpop.f32.mrf.mxu0
        %v2319 = vadd.f32 0.0, %v2318
        %2320 = vmatmul.f32.gmra.mxu0 %v1281
        %v2321 = vpop.f32.mrf.mxu0
        %v2322 = vadd.f32 0.0, %v2321
        %2323 = vdwg.mxu0
        %2324 = vmatpush.msra.mxu0 0.0
        %2325 = vmatpush.msra.mxu0 0.0
        %2326 = vmatpush.msra.mxu0 0.0
        %2327 = vmatpush.msra.mxu0 0.0
        %2328 = vmatpush.msra.mxu0 0.0
        %2329 = vmatpush.msra.mxu0 0.0
        %2330 = vmatpush.msra.mxu0 0.0
        %2331 = vmatpush.msra.mxu0 %v2117
        %2332 = vmatpush.msra.mxu0 %v2073
        %2333 = vmatpush.msra.mxu0 %v2065
        %2334 = vmatpush.msra.mxu0 %v2057
        %2335 = vmatpush.msra.mxu0 %v2049
        %2336 = vmatpush.msra.mxu0 %v2041
        %2337 = vmatpush.msra.mxu0 %v2033
        %2338 = vmatpush.msra.mxu0 %v2025
        %2339 = vmatpush.msra.mxu0 %v2017
        %2340 = vmatmul.f32.gmra.mxu0 %v2089
        %v2341 = vpop.f32.mrf.mxu0
        %v2342 = vadd.f32 %v2304, %v2341
        %2343 = vmatmul.f32.gmra.mxu0 %v2092
        %v2344 = vpop.f32.mrf.mxu0
        %v2345 = vadd.f32 %v2307, %v2344
        %2346 = vmatmul.f32.gmra.mxu0 %v2095
        %v2347 = vpop.f32.mrf.mxu0
        %v2348 = vadd.f32 %v2310, %v2347
        %2349 = vmatmul.f32.gmra.mxu0 %v2098
        %v2350 = vpop.f32.mrf.mxu0
        %v2351 = vadd.f32 %v2313, %v2350
        %2352 = vmatmul.f32.gmra.mxu0 %v2101
        %v2353 = vpop.f32.mrf.mxu0
        %v2354 = vadd.f32 %v2316, %v2353
        %2355 = vmatmul.f32.gmra.mxu0 %v2104
        %v2356 = vpop.f32.mrf.mxu0
        %v2357 = vadd.f32 %v2319, %v2356
        %2358 = vmatmul.f32.gmra.mxu0 %v2107
        %v2359 = vpop.f32.mrf.mxu0
        %v2360 = vadd.f32 %v2322, %v2359
        %2361 = vdwg.mxu0
        %2362 = vmatpush.msra.mxu0 %v2010
        %2363 = vmatpush.msra.mxu0 %v2002
        %2364 = vmatpush.msra.mxu0 %v1994
        %2365 = vmatpush.msra.mxu0 %v1986
        %2366 = vmatpush.msra.mxu0 %v1978
        %2367 = vmatpush.msra.mxu0 %v1970
        %2368 = vmatpush.msra.mxu0 %v1962
        %2369 = vmatpush.msra.mxu0 %v1954
        %2370 = vmatpush.msra.mxu0 %v1946
        %2371 = vmatpush.msra.mxu0 %v1938
        %2372 = vmatpush.msra.mxu0 %v1930
        %2373 = vmatpush.msra.mxu0 %v1922
        %2374 = vmatpush.msra.mxu0 %v1914
        %2375 = vmatpush.msra.mxu0 %v1906
        %2376 = vmatpush.msra.mxu0 %v1898
        %2377 = vmatpush.msra.mxu0 %v1890
        %2378 = vmatmul.f32.gmra.mxu0 %v1269
        %v2379 = vpop.f32.mrf.mxu0
        %v2380 = vadd.f32 0.0, %v2379
        %2381 = vmatmul.f32.gmra.mxu0 %v1271
        %v2382 = vpop.f32.mrf.mxu0
        %v2383 = vadd.f32 0.0, %v2382
        %2384 = vmatmul.f32.gmra.mxu0 %v1273
        %v2385 = vpop.f32.mrf.mxu0
        %v2386 = vadd.f32 0.0, %v2385
        %2387 = vmatmul.f32.gmra.mxu0 %v1275
        %v2388 = vpop.f32.mrf.mxu0
        %v2389 = vadd.f32 0.0, %v2388
        %2390 = vmatmul.f32.gmra.mxu0 %v1277
        %v2391 = vpop.f32.mrf.mxu0
        %v2392 = vadd.f32 0.0, %v2391
        %2393 = vmatmul.f32.gmra.mxu0 %v1279
        %v2394 = vpop.f32.mrf.mxu0
        %v2395 = vadd.f32 0.0, %v2394
        %2396 = vmatmul.f32.gmra.mxu0 %v1281
        %v2397 = vpop.f32.mrf.mxu0
        %v2398 = vadd.f32 0.0, %v2397
        %2399 = vdwg.mxu0
        %2400 = vmatpush.msra.mxu0 0.0
        %2401 = vmatpush.msra.mxu0 0.0
        %2402 = vmatpush.msra.mxu0 0.0
        %2403 = vmatpush.msra.mxu0 0.0
        %2404 = vmatpush.msra.mxu0 0.0
        %2405 = vmatpush.msra.mxu0 0.0
        %2406 = vmatpush.msra.mxu0 0.0
        %2407 = vmatpush.msra.mxu0 %v2120
        %2408 = vmatpush.msra.mxu0 %v2074
        %2409 = vmatpush.msra.mxu0 %v2066
        %2410 = vmatpush.msra.mxu0 %v2058
        %2411 = vmatpush.msra.mxu0 %v2050
        %2412 = vmatpush.msra.mxu0 %v2042
        %2413 = vmatpush.msra.mxu0 %v2034
        %2414 = vmatpush.msra.mxu0 %v2026
        %2415 = vmatpush.msra.mxu0 %v2018
        %2416 = vmatmul.f32.gmra.mxu0 %v2089
        %v2417 = vpop.f32.mrf.mxu0
        %v2418 = vadd.f32 %v2380, %v2417
        %2419 = vmatmul.f32.gmra.mxu0 %v2092
        %v2420 = vpop.f32.mrf.mxu0
        %v2421 = vadd.f32 %v2383, %v2420
        %2422 = vmatmul.f32.gmra.mxu0 %v2095
        %v2423 = vpop.f32.mrf.mxu0
        %v2424 = vadd.f32 %v2386, %v2423
        %2425 = vmatmul.f32.gmra.mxu0 %v2098
        %v2426 = vpop.f32.mrf.mxu0
        %v2427 = vadd.f32 %v2389, %v2426
        %2428 = vmatmul.f32.gmra.mxu0 %v2101
        %v2429 = vpop.f32.mrf.mxu0
        %v2430 = vadd.f32 %v2392, %v2429
        %2431 = vmatmul.f32.gmra.mxu0 %v2104
        %v2432 = vpop.f32.mrf.mxu0
        %v2433 = vadd.f32 %v2395, %v2432
        %2434 = vmatmul.f32.gmra.mxu0 %v2107
        %v2435 = vpop.f32.mrf.mxu0
        %v2436 = vadd.f32 %v2398, %v2435
        %2437 = vdwg.mxu0
        %2438 = vmatpush.msra.mxu0 %v2011
        %2439 = vmatpush.msra.mxu0 %v2003
        %2440 = vmatpush.msra.mxu0 %v1995
        %2441 = vmatpush.msra.mxu0 %v1987
        %2442 = vmatpush.msra.mxu0 %v1979
        %2443 = vmatpush.msra.mxu0 %v1971
        %2444 = vmatpush.msra.mxu0 %v1963
        %2445 = vmatpush.msra.mxu0 %v1955
        %2446 = vmatpush.msra.mxu0 %v1947
        %2447 = vmatpush.msra.mxu0 %v1939
        %2448 = vmatpush.msra.mxu0 %v1931
        %2449 = vmatpush.msra.mxu0 %v1923
        %2450 = vmatpush.msra.mxu0 %v1915
        %2451 = vmatpush.msra.mxu0 %v1907
        %2452 = vmatpush.msra.mxu0 %v1899
        %2453 = vmatpush.msra.mxu0 %v1891
        %2454 = vmatmul.f32.gmra.mxu0 %v1269
        %v2455 = vpop.f32.mrf.mxu0
        %v2456 = vadd.f32 0.0, %v2455
        %2457 = vmatmul.f32.gmra.mxu0 %v1271
        %v2458 = vpop.f32.mrf.mxu0
        %v2459 = vadd.f32 0.0, %v2458
        %2460 = vmatmul.f32.gmra.mxu0 %v1273
        %v2461 = vpop.f32.mrf.mxu0
        %v2462 = vadd.f32 0.0, %v2461
        %2463 = vmatmul.f32.gmra.mxu0 %v1275
        %v2464 = vpop.f32.mrf.mxu0
        %v2465 = vadd.f32 0.0, %v2464
        %2466 = vmatmul.f32.gmra.mxu0 %v1277
        %v2467 = vpop.f32.mrf.mxu0
        %v2468 = vadd.f32 0.0, %v2467
        %2469 = vmatmul.f32.gmra.mxu0 %v1279
        %v2470 = vpop.f32.mrf.mxu0
        %v2471 = vadd.f32 0.0, %v2470
        %2472 = vmatmul.f32.gmra.mxu0 %v1281
        %v2473 = vpop.f32.mrf.mxu0
        %v2474 = vadd.f32 0.0, %v2473
        %2475 = vdwg.mxu0
        %2476 = vmatpush.msra.mxu0 0.0
        %2477 = vmatpush.msra.mxu0 0.0
        %2478 = vmatpush.msra.mxu0 0.0
        %2479 = vmatpush.msra.mxu0 0.0
        %2480 = vmatpush.msra.mxu0 0.0
        %2481 = vmatpush.msra.mxu0 0.0
        %2482 = vmatpush.msra.mxu0 0.0
        %2483 = vmatpush.msra.mxu0 %v2123
        %2484 = vmatpush.msra.mxu0 %v2075
        %2485 = vmatpush.msra.mxu0 %v2067
        %2486 = vmatpush.msra.mxu0 %v2059
        %2487 = vmatpush.msra.mxu0 %v2051
        %2488 = vmatpush.msra.mxu0 %v2043
        %2489 = vmatpush.msra.mxu0 %v2035
        %2490 = vmatpush.msra.mxu0 %v2027
        %2491 = vmatpush.msra.mxu0 %v2019
        %2492 = vmatmul.f32.gmra.mxu0 %v2089
        %v2493 = vpop.f32.mrf.mxu0
        %v2494 = vadd.f32 %v2456, %v2493
        %2495 = vmatmul.f32.gmra.mxu0 %v2092
        %v2496 = vpop.f32.mrf.mxu0
        %v2497 = vadd.f32 %v2459, %v2496
        %2498 = vmatmul.f32.gmra.mxu0 %v2095
        %v2499 = vpop.f32.mrf.mxu0
        %v2500 = vadd.f32 %v2462, %v2499
        %2501 = vmatmul.f32.gmra.mxu0 %v2098
        %v2502 = vpop.f32.mrf.mxu0
        %v2503 = vadd.f32 %v2465, %v2502
        %2504 = vmatmul.f32.gmra.mxu0 %v2101
        %v2505 = vpop.f32.mrf.mxu0
        %v2506 = vadd.f32 %v2468, %v2505
        %2507 = vmatmul.f32.gmra.mxu0 %v2104
        %v2508 = vpop.f32.mrf.mxu0
        %v2509 = vadd.f32 %v2471, %v2508
        %2510 = vmatmul.f32.gmra.mxu0 %v2107
        %v2511 = vpop.f32.mrf.mxu0
        %v2512 = vadd.f32 %v2474, %v2511
        %2513 = vdwg.mxu0
        %2514 = vmatpush.msra.mxu0 %v2012
        %2515 = vmatpush.msra.mxu0 %v2004
        %2516 = vmatpush.msra.mxu0 %v1996
        %2517 = vmatpush.msra.mxu0 %v1988
        %2518 = vmatpush.msra.mxu0 %v1980
        %2519 = vmatpush.msra.mxu0 %v1972
        %2520 = vmatpush.msra.mxu0 %v1964
        %2521 = vmatpush.msra.mxu0 %v1956
        %2522 = vmatpush.msra.mxu0 %v1948
        %2523 = vmatpush.msra.mxu0 %v1940
        %2524 = vmatpush.msra.mxu0 %v1932
        %2525 = vmatpush.msra.mxu0 %v1924
        %2526 = vmatpush.msra.mxu0 %v1916
        %2527 = vmatpush.msra.mxu0 %v1908
        %2528 = vmatpush.msra.mxu0 %v1900
        %2529 = vmatpush.msra.mxu0 %v1892
        %2530 = vmatmul.f32.gmra.mxu0 %v1269
        %v2531 = vpop.f32.mrf.mxu0
        %v2532 = vadd.f32 0.0, %v2531
        %2533 = vmatmul.f32.gmra.mxu0 %v1271
        %v2534 = vpop.f32.mrf.mxu0
        %v2535 = vadd.f32 0.0, %v2534
        %2536 = vmatmul.f32.gmra.mxu0 %v1273
        %v2537 = vpop.f32.mrf.mxu0
        %v2538 = vadd.f32 0.0, %v2537
        %2539 = vmatmul.f32.gmra.mxu0 %v1275
        %v2540 = vpop.f32.mrf.mxu0
        %v2541 = vadd.f32 0.0, %v2540
        %2542 = vmatmul.f32.gmra.mxu0 %v1277
        %v2543 = vpop.f32.mrf.mxu0
        %v2544 = vadd.f32 0.0, %v2543
        %2545 = vmatmul.f32.gmra.mxu0 %v1279
        %v2546 = vpop.f32.mrf.mxu0
        %v2547 = vadd.f32 0.0, %v2546
        %2548 = vmatmul.f32.gmra.mxu0 %v1281
        %v2549 = vpop.f32.mrf.mxu0
        %v2550 = vadd.f32 0.0, %v2549
        %2551 = vdwg.mxu0
        %2552 = vmatpush.msra.mxu0 0.0
        %2553 = vmatpush.msra.mxu0 0.0
        %2554 = vmatpush.msra.mxu0 0.0
        %2555 = vmatpush.msra.mxu0 0.0
        %2556 = vmatpush.msra.mxu0 0.0
        %2557 = vmatpush.msra.mxu0 0.0
        %2558 = vmatpush.msra.mxu0 0.0
        %2559 = vmatpush.msra.mxu0 %v2126
        %2560 = vmatpush.msra.mxu0 %v2076
        %2561 = vmatpush.msra.mxu0 %v2068
        %2562 = vmatpush.msra.mxu0 %v2060
        %2563 = vmatpush.msra.mxu0 %v2052
        %2564 = vmatpush.msra.mxu0 %v2044
        %2565 = vmatpush.msra.mxu0 %v2036
        %2566 = vmatpush.msra.mxu0 %v2028
        %2567 = vmatpush.msra.mxu0 %v2020
        %2568 = vmatmul.f32.gmra.mxu0 %v2089
        %v2569 = vpop.f32.mrf.mxu0
        %v2570 = vadd.f32 %v2532, %v2569
        %2571 = vmatmul.f32.gmra.mxu0 %v2092
        %v2572 = vpop.f32.mrf.mxu0
        %v2573 = vadd.f32 %v2535, %v2572
        %2574 = vmatmul.f32.gmra.mxu0 %v2095
        %v2575 = vpop.f32.mrf.mxu0
        %v2576 = vadd.f32 %v2538, %v2575
        %2577 = vmatmul.f32.gmra.mxu0 %v2098
        %v2578 = vpop.f32.mrf.mxu0
        %v2579 = vadd.f32 %v2541, %v2578
        %2580 = vmatmul.f32.gmra.mxu0 %v2101
        %v2581 = vpop.f32.mrf.mxu0
        %v2582 = vadd.f32 %v2544, %v2581
        %2583 = vmatmul.f32.gmra.mxu0 %v2104
        %v2584 = vpop.f32.mrf.mxu0
        %v2585 = vadd.f32 %v2547, %v2584
        %2586 = vmatmul.f32.gmra.mxu0 %v2107
        %v2587 = vpop.f32.mrf.mxu0
        %v2588 = vadd.f32 %v2550, %v2587
        %2589 = vdwg.mxu0
        %2590 = vmatpush.msra.mxu0 %v2013
        %2591 = vmatpush.msra.mxu0 %v2005
        %2592 = vmatpush.msra.mxu0 %v1997
        %2593 = vmatpush.msra.mxu0 %v1989
        %2594 = vmatpush.msra.mxu0 %v1981
        %2595 = vmatpush.msra.mxu0 %v1973
        %2596 = vmatpush.msra.mxu0 %v1965
        %2597 = vmatpush.msra.mxu0 %v1957
        %2598 = vmatpush.msra.mxu0 %v1949
        %2599 = vmatpush.msra.mxu0 %v1941
        %2600 = vmatpush.msra.mxu0 %v1933
        %2601 = vmatpush.msra.mxu0 %v1925
        %2602 = vmatpush.msra.mxu0 %v1917
        %2603 = vmatpush.msra.mxu0 %v1909
        %2604 = vmatpush.msra.mxu0 %v1901
        %2605 = vmatpush.msra.mxu0 %v1893
        %2606 = vmatmul.f32.gmra.mxu0 %v1269
        %v2607 = vpop.f32.mrf.mxu0
        %v2608 = vadd.f32 0.0, %v2607
        %2609 = vmatmul.f32.gmra.mxu0 %v1271
        %v2610 = vpop.f32.mrf.mxu0
        %v2611 = vadd.f32 0.0, %v2610
        %2612 = vmatmul.f32.gmra.mxu0 %v1273
        %v2613 = vpop.f32.mrf.mxu0
        %v2614 = vadd.f32 0.0, %v2613
        %2615 = vmatmul.f32.gmra.mxu0 %v1275
        %v2616 = vpop.f32.mrf.mxu0
        %v2617 = vadd.f32 0.0, %v2616
        %2618 = vmatmul.f32.gmra.mxu0 %v1277
        %v2619 = vpop.f32.mrf.mxu0
        %v2620 = vadd.f32 0.0, %v2619
        %2621 = vmatmul.f32.gmra.mxu0 %v1279
        %v2622 = vpop.f32.mrf.mxu0
        %v2623 = vadd.f32 0.0, %v2622
        %2624 = vmatmul.f32.gmra.mxu0 %v1281
        %v2625 = vpop.f32.mrf.mxu0
        %v2626 = vadd.f32 0.0, %v2625
        %2627 = vdwg.mxu0
        %2628 = vmatpush.msra.mxu0 0.0
        %2629 = vmatpush.msra.mxu0 0.0
        %2630 = vmatpush.msra.mxu0 0.0
        %2631 = vmatpush.msra.mxu0 0.0
        %2632 = vmatpush.msra.mxu0 0.0
        %2633 = vmatpush.msra.mxu0 0.0
        %2634 = vmatpush.msra.mxu0 0.0
        %2635 = vmatpush.msra.mxu0 %v2129
        %2636 = vmatpush.msra.mxu0 %v2077
        %2637 = vmatpush.msra.mxu0 %v2069
        %2638 = vmatpush.msra.mxu0 %v2061
        %2639 = vmatpush.msra.mxu0 %v2053
        %2640 = vmatpush.msra.mxu0 %v2045
        %2641 = vmatpush.msra.mxu0 %v2037
        %2642 = vmatpush.msra.mxu0 %v2029
        %2643 = vmatpush.msra.mxu0 %v2021
        %2644 = vmatmul.f32.gmra.mxu0 %v2089
        %v2645 = vpop.f32.mrf.mxu0
        %v2646 = vadd.f32 %v2608, %v2645
        %2647 = vmatmul.f32.gmra.mxu0 %v2092
        %v2648 = vpop.f32.mrf.mxu0
        %v2649 = vadd.f32 %v2611, %v2648
        %2650 = vmatmul.f32.gmra.mxu0 %v2095
        %v2651 = vpop.f32.mrf.mxu0
        %v2652 = vadd.f32 %v2614, %v2651
        %2653 = vmatmul.f32.gmra.mxu0 %v2098
        %v2654 = vpop.f32.mrf.mxu0
        %v2655 = vadd.f32 %v2617, %v2654
        %2656 = vmatmul.f32.gmra.mxu0 %v2101
        %v2657 = vpop.f32.mrf.mxu0
        %v2658 = vadd.f32 %v2620, %v2657
        %2659 = vmatmul.f32.gmra.mxu0 %v2104
        %v2660 = vpop.f32.mrf.mxu0
        %v2661 = vadd.f32 %v2623, %v2660
        %2662 = vmatmul.f32.gmra.mxu0 %v2107
        %v2663 = vpop.f32.mrf.mxu0
        %v2664 = vadd.f32 %v2626, %v2663
        %2665 = vdwg.mxu0
        %2666 = vmatpush.msra.mxu0 %v2014
        %2667 = vmatpush.msra.mxu0 %v2006
        %2668 = vmatpush.msra.mxu0 %v1998
        %2669 = vmatpush.msra.mxu0 %v1990
        %2670 = vmatpush.msra.mxu0 %v1982
        %2671 = vmatpush.msra.mxu0 %v1974
        %2672 = vmatpush.msra.mxu0 %v1966
        %2673 = vmatpush.msra.mxu0 %v1958
        %2674 = vmatpush.msra.mxu0 %v1950
        %2675 = vmatpush.msra.mxu0 %v1942
        %2676 = vmatpush.msra.mxu0 %v1934
        %2677 = vmatpush.msra.mxu0 %v1926
        %2678 = vmatpush.msra.mxu0 %v1918
        %2679 = vmatpush.msra.mxu0 %v1910
        %2680 = vmatpush.msra.mxu0 %v1902
        %2681 = vmatpush.msra.mxu0 %v1894
        %2682 = vmatmul.f32.gmra.mxu0 %v1269
        %v2683 = vpop.f32.mrf.mxu0
        %v2684 = vadd.f32 0.0, %v2683
        %2685 = vmatmul.f32.gmra.mxu0 %v1271
        %v2686 = vpop.f32.mrf.mxu0
        %v2687 = vadd.f32 0.0, %v2686
        %2688 = vmatmul.f32.gmra.mxu0 %v1273
        %v2689 = vpop.f32.mrf.mxu0
        %v2690 = vadd.f32 0.0, %v2689
        %2691 = vmatmul.f32.gmra.mxu0 %v1275
        %v2692 = vpop.f32.mrf.mxu0
        %v2693 = vadd.f32 0.0, %v2692
        %2694 = vmatmul.f32.gmra.mxu0 %v1277
        %v2695 = vpop.f32.mrf.mxu0
        %v2696 = vadd.f32 0.0, %v2695
        %2697 = vmatmul.f32.gmra.mxu0 %v1279
        %v2698 = vpop.f32.mrf.mxu0
        %v2699 = vadd.f32 0.0, %v2698
        %2700 = vmatmul.f32.gmra.mxu0 %v1281
        %v2701 = vpop.f32.mrf.mxu0
        %v2702 = vadd.f32 0.0, %v2701
        %2703 = vdwg.mxu0
        %2704 = vmatpush.msra.mxu0 0.0
        %2705 = vmatpush.msra.mxu0 0.0
        %2706 = vmatpush.msra.mxu0 0.0
        %2707 = vmatpush.msra.mxu0 0.0
        %2708 = vmatpush.msra.mxu0 0.0
        %2709 = vmatpush.msra.mxu0 0.0
        %2710 = vmatpush.msra.mxu0 0.0
        %2711 = vmatpush.msra.mxu0 %v2132
        %2712 = vmatpush.msra.mxu0 %v2078
        %2713 = vmatpush.msra.mxu0 %v2070
        %2714 = vmatpush.msra.mxu0 %v2062
        %2715 = vmatpush.msra.mxu0 %v2054
        %2716 = vmatpush.msra.mxu0 %v2046
        %2717 = vmatpush.msra.mxu0 %v2038
        %2718 = vmatpush.msra.mxu0 %v2030
        %2719 = vmatpush.msra.mxu0 %v2022
        %2720 = vmatmul.f32.gmra.mxu0 %v2089
        %v2721 = vpop.f32.mrf.mxu0
        %v2722 = vadd.f32 %v2684, %v2721
        %2723 = vmatmul.f32.gmra.mxu0 %v2092
        %v2724 = vpop.f32.mrf.mxu0
        %v2725 = vadd.f32 %v2687, %v2724
        %2726 = vmatmul.f32.gmra.mxu0 %v2095
        %v2727 = vpop.f32.mrf.mxu0
        %v2728 = vadd.f32 %v2690, %v2727
        %2729 = vmatmul.f32.gmra.mxu0 %v2098
        %v2730 = vpop.f32.mrf.mxu0
        %v2731 = vadd.f32 %v2693, %v2730
        %2732 = vmatmul.f32.gmra.mxu0 %v2101
        %v2733 = vpop.f32.mrf.mxu0
        %v2734 = vadd.f32 %v2696, %v2733
        %2735 = vmatmul.f32.gmra.mxu0 %v2104
        %v2736 = vpop.f32.mrf.mxu0
        %v2737 = vadd.f32 %v2699, %v2736
        %2738 = vmatmul.f32.gmra.mxu0 %v2107
        %v2739 = vpop.f32.mrf.mxu0
        %v2740 = vadd.f32 %v2702, %v2739
        %2741 = vdwg.mxu0
        %vm2742 = vcmask 572416
        %v2744 = vsel %vm2742, %v866, 0
        %v2747 = vsel %vm2742, %v868, 0
        %v2750 = vsel %vm2742, %v870, 0
        %v2753 = vsel %vm2742, %v872, 0
        %v2756 = vsel %vm2742, %v874, 0
        %v2759 = vsel %vm2742, %v876, 0
        %v2762 = vsel %vm2742, %v878, 0
        %vm2764 = vcmask 1045504
        %v2766 = vsel %vm2764, %v1879, 0
        %v2769 = vsel %vm2764, %v1880, 0
        %v2772 = vsel %vm2764, %v1881, 0
        %v2775 = vsel %vm2764, %v1882, 0
        %v2778 = vsel %vm2764, %v1883, 0
        %v2781 = vsel %vm2764, %v1884, 0
        %v2784 = vsel %vm2764, %v1885, 0
        %v2787 = vsel %vm2764, %v1886, 0
        %2789 = vmatpush.msra.mxu0 %v1807
        %2790 = vmatpush.msra.mxu0 %v1799
        %2791 = vmatpush.msra.mxu0 %v1791
        %2792 = vmatpush.msra.mxu0 %v1783
        %2793 = vmatpush.msra.mxu0 %v1775
        %2794 = vmatpush.msra.mxu0 %v1767
        %2795 = vmatpush.msra.mxu0 %v1759
        %2796 = vmatpush.msra.mxu0 %v1751
        %2797 = vmatpush.msra.mxu0 %v1743
        %2798 = vmatpush.msra.mxu0 %v1735
        %2799 = vmatpush.msra.mxu0 %v1727
        %2800 = vmatpush.msra.mxu0 %v1719
        %2801 = vmatpush.msra.mxu0 %v1711
        %2802 = vmatpush.msra.mxu0 %v1703
        %2803 = vmatpush.msra.mxu0 %v1695
        %2804 = vmatpush.msra.mxu0 %v1687
        %2805 = vmatmul.f32.gmra.mxu0 %v865
        %v2806 = vpop.f32.mrf.mxu0
        %v2807 = vadd.f32 %v2190, %v2806
        %2808 = vmatmul.f32.gmra.mxu0 %v867
        %v2809 = vpop.f32.mrf.mxu0
        %v2810 = vadd.f32 %v2193, %v2809
        %2811 = vmatmul.f32.gmra.mxu0 %v869
        %v2812 = vpop.f32.mrf.mxu0
        %v2813 = vadd.f32 %v2196, %v2812
        %2814 = vmatmul.f32.gmra.mxu0 %v871
        %v2815 = vpop.f32.mrf.mxu0
        %v2816 = vadd.f32 %v2199, %v2815
        %2817 = vmatmul.f32.gmra.mxu0 %v873
        %v2818 = vpop.f32.mrf.mxu0
        %v2819 = vadd.f32 %v2202, %v2818
        %2820 = vmatmul.f32.gmra.mxu0 %v875
        %v2821 = vpop.f32.mrf.mxu0
        %v2822 = vadd.f32 %v2205, %v2821
        %2823 = vmatmul.f32.gmra.mxu0 %v877
        %v2824 = vpop.f32.mrf.mxu0
        %v2825 = vadd.f32 %v2208, %v2824
        %2826 = vdwg.mxu0
        %2827 = vmatpush.msra.mxu0 0.0
        %2828 = vmatpush.msra.mxu0 0.0
        %2829 = vmatpush.msra.mxu0 0.0
        %2830 = vmatpush.msra.mxu0 0.0
        %2831 = vmatpush.msra.mxu0 0.0
        %2832 = vmatpush.msra.mxu0 0.0
        %2833 = vmatpush.msra.mxu0 0.0
        %2834 = vmatpush.msra.mxu0 %v2766
        %2835 = vmatpush.msra.mxu0 %v1871
        %2836 = vmatpush.msra.mxu0 %v1863
        %2837 = vmatpush.msra.mxu0 %v1855
        %2838 = vmatpush.msra.mxu0 %v1847
        %2839 = vmatpush.msra.mxu0 %v1839
        %2840 = vmatpush.msra.mxu0 %v1831
        %2841 = vmatpush.msra.mxu0 %v1823
        %2842 = vmatpush.msra.mxu0 %v1815
        %2843 = vmatmul.f32.gmra.mxu0 %v2744
        %v2844 = vpop.f32.mrf.mxu0
        %v2845 = vadd.f32 %v2807, %v2844
        %2846 = vmatmul.f32.gmra.mxu0 %v2747
        %v2847 = vpop.f32.mrf.mxu0
        %v2848 = vadd.f32 %v2810, %v2847
        %2849 = vmatmul.f32.gmra.mxu0 %v2750
        %v2850 = vpop.f32.mrf.mxu0
        %v2851 = vadd.f32 %v2813, %v2850
        %2852 = vmatmul.f32.gmra.mxu0 %v2753
        %v2853 = vpop.f32.mrf.mxu0
        %v2854 = vadd.f32 %v2816, %v2853
        %2855 = vmatmul.f32.gmra.mxu0 %v2756
        %v2856 = vpop.f32.mrf.mxu0
        %v2857 = vadd.f32 %v2819, %v2856
        %2858 = vmatmul.f32.gmra.mxu0 %v2759
        %v2859 = vpop.f32.mrf.mxu0
        %v2860 = vadd.f32 %v2822, %v2859
        %2861 = vmatmul.f32.gmra.mxu0 %v2762
        %v2862 = vpop.f32.mrf.mxu0
        %v2863 = vadd.f32 %v2825, %v2862
        %2864 = vdwg.mxu0
        %2865 = vmatpush.msra.mxu0 %v1808
        %2866 = vmatpush.msra.mxu0 %v1800
        %2867 = vmatpush.msra.mxu0 %v1792
        %2868 = vmatpush.msra.mxu0 %v1784
        %2869 = vmatpush.msra.mxu0 %v1776
        %2870 = vmatpush.msra.mxu0 %v1768
        %2871 = vmatpush.msra.mxu0 %v1760
        %2872 = vmatpush.msra.mxu0 %v1752
        %2873 = vmatpush.msra.mxu0 %v1744
        %2874 = vmatpush.msra.mxu0 %v1736
        %2875 = vmatpush.msra.mxu0 %v1728
        %2876 = vmatpush.msra.mxu0 %v1720
        %2877 = vmatpush.msra.mxu0 %v1712
        %2878 = vmatpush.msra.mxu0 %v1704
        %2879 = vmatpush.msra.mxu0 %v1696
        %2880 = vmatpush.msra.mxu0 %v1688
        %2881 = vmatmul.f32.gmra.mxu0 %v865
        %v2882 = vpop.f32.mrf.mxu0
        %v2883 = vadd.f32 %v2266, %v2882
        %2884 = vmatmul.f32.gmra.mxu0 %v867
        %v2885 = vpop.f32.mrf.mxu0
        %v2886 = vadd.f32 %v2269, %v2885
        %2887 = vmatmul.f32.gmra.mxu0 %v869
        %v2888 = vpop.f32.mrf.mxu0
        %v2889 = vadd.f32 %v2272, %v2888
        %2890 = vmatmul.f32.gmra.mxu0 %v871
        %v2891 = vpop.f32.mrf.mxu0
        %v2892 = vadd.f32 %v2275, %v2891
        %2893 = vmatmul.f32.gmra.mxu0 %v873
        %v2894 = vpop.f32.mrf.mxu0
        %v2895 = vadd.f32 %v2278, %v2894
        %2896 = vmatmul.f32.gmra.mxu0 %v875
        %v2897 = vpop.f32.mrf.mxu0
        %v2898 = vadd.f32 %v2281, %v2897
        %2899 = vmatmul.f32.gmra.mxu0 %v877
        %v2900 = vpop.f32.mrf.mxu0
        %v2901 = vadd.f32 %v2284, %v2900
        %2902 = vdwg.mxu0
        %2903 = vmatpush.msra.mxu0 0.0
        %2904 = vmatpush.msra.mxu0 0.0
        %2905 = vmatpush.msra.mxu0 0.0
        %2906 = vmatpush.msra.mxu0 0.0
        %2907 = vmatpush.msra.mxu0 0.0
        %2908 = vmatpush.msra.mxu0 0.0
        %2909 = vmatpush.msra.mxu0 0.0
        %2910 = vmatpush.msra.mxu0 %v2769
        %2911 = vmatpush.msra.mxu0 %v1872
        %2912 = vmatpush.msra.mxu0 %v1864
        %2913 = vmatpush.msra.mxu0 %v1856
        %2914 = vmatpush.msra.mxu0 %v1848
        %2915 = vmatpush.msra.mxu0 %v1840
        %2916 = vmatpush.msra.mxu0 %v1832
        %2917 = vmatpush.msra.mxu0 %v1824
        %2918 = vmatpush.msra.mxu0 %v1816
        %2919 = vmatmul.f32.gmra.mxu0 %v2744
        %v2920 = vpop.f32.mrf.mxu0
        %v2921 = vadd.f32 %v2883, %v2920
        %2922 = vmatmul.f32.gmra.mxu0 %v2747
        %v2923 = vpop.f32.mrf.mxu0
        %v2924 = vadd.f32 %v2886, %v2923
        %2925 = vmatmul.f32.gmra.mxu0 %v2750
        %v2926 = vpop.f32.mrf.mxu0
        %v2927 = vadd.f32 %v2889, %v2926
        %2928 = vmatmul.f32.gmra.mxu0 %v2753
        %v2929 = vpop.f32.mrf.mxu0
        %v2930 = vadd.f32 %v2892, %v2929
        %2931 = vmatmul.f32.gmra.mxu0 %v2756
        %v2932 = vpop.f32.mrf.mxu0
        %v2933 = vadd.f32 %v2895, %v2932
        %2934 = vmatmul.f32.gmra.mxu0 %v2759
        %v2935 = vpop.f32.mrf.mxu0
        %v2936 = vadd.f32 %v2898, %v2935
        %2937 = vmatmul.f32.gmra.mxu0 %v2762
        %v2938 = vpop.f32.mrf.mxu0
        %v2939 = vadd.f32 %v2901, %v2938
        %2940 = vdwg.mxu0
        %2941 = vmatpush.msra.mxu0 %v1809
        %2942 = vmatpush.msra.mxu0 %v1801
        %2943 = vmatpush.msra.mxu0 %v1793
        %2944 = vmatpush.msra.mxu0 %v1785
        %2945 = vmatpush.msra.mxu0 %v1777
        %2946 = vmatpush.msra.mxu0 %v1769
        %2947 = vmatpush.msra.mxu0 %v1761
        %2948 = vmatpush.msra.mxu0 %v1753
        %2949 = vmatpush.msra.mxu0 %v1745
        %2950 = vmatpush.msra.mxu0 %v1737
        %2951 = vmatpush.msra.mxu0 %v1729
        %2952 = vmatpush.msra.mxu0 %v1721
        %2953 = vmatpush.msra.mxu0 %v1713
        %2954 = vmatpush.msra.mxu0 %v1705
        %2955 = vmatpush.msra.mxu0 %v1697
        %2956 = vmatpush.msra.mxu0 %v1689
        %2957 = vmatmul.f32.gmra.mxu0 %v865
        %v2958 = vpop.f32.mrf.mxu0
        %v2959 = vadd.f32 %v2342, %v2958
        %2960 = vmatmul.f32.gmra.mxu0 %v867
        %v2961 = vpop.f32.mrf.mxu0
        %v2962 = vadd.f32 %v2345, %v2961
        %2963 = vmatmul.f32.gmra.mxu0 %v869
        %v2964 = vpop.f32.mrf.mxu0
        %v2965 = vadd.f32 %v2348, %v2964
        %2966 = vmatmul.f32.gmra.mxu0 %v871
        %v2967 = vpop.f32.mrf.mxu0
        %v2968 = vadd.f32 %v2351, %v2967
        %2969 = vmatmul.f32.gmra.mxu0 %v873
        %v2970 = vpop.f32.mrf.mxu0
        %v2971 = vadd.f32 %v2354, %v2970
        %2972 = vmatmul.f32.gmra.mxu0 %v875
        %v2973 = vpop.f32.mrf.mxu0
        %v2974 = vadd.f32 %v2357, %v2973
        %2975 = vmatmul.f32.gmra.mxu0 %v877
        %v2976 = vpop.f32.mrf.mxu0
        %v2977 = vadd.f32 %v2360, %v2976
        %2978 = vdwg.mxu0
        %2979 = vmatpush.msra.mxu0 0.0
        %2980 = vmatpush.msra.mxu0 0.0
        %2981 = vmatpush.msra.mxu0 0.0
        %2982 = vmatpush.msra.mxu0 0.0
        %2983 = vmatpush.msra.mxu0 0.0
        %2984 = vmatpush.msra.mxu0 0.0
        %2985 = vmatpush.msra.mxu0 0.0
        %2986 = vmatpush.msra.mxu0 %v2772
        %2987 = vmatpush.msra.mxu0 %v1873
        %2988 = vmatpush.msra.mxu0 %v1865
        %2989 = vmatpush.msra.mxu0 %v1857
        %2990 = vmatpush.msra.mxu0 %v1849
        %2991 = vmatpush.msra.mxu0 %v1841
        %2992 = vmatpush.msra.mxu0 %v1833
        %2993 = vmatpush.msra.mxu0 %v1825
        %2994 = vmatpush.msra.mxu0 %v1817
        %2995 = vmatmul.f32.gmra.mxu0 %v2744
        %v2996 = vpop.f32.mrf.mxu0
        %v2997 = vadd.f32 %v2959, %v2996
        %2998 = vmatmul.f32.gmra.mxu0 %v2747
        %v2999 = vpop.f32.mrf.mxu0
        %v3000 = vadd.f32 %v2962, %v2999
        %3001 = vmatmul.f32.gmra.mxu0 %v2750
        %v3002 = vpop.f32.mrf.mxu0
        %v3003 = vadd.f32 %v2965, %v3002
        %3004 = vmatmul.f32.gmra.mxu0 %v2753
        %v3005 = vpop.f32.mrf.mxu0
        %v3006 = vadd.f32 %v2968, %v3005
        %3007 = vmatmul.f32.gmra.mxu0 %v2756
        %v3008 = vpop.f32.mrf.mxu0
        %v3009 = vadd.f32 %v2971, %v3008
        %3010 = vmatmul.f32.gmra.mxu0 %v2759
        %v3011 = vpop.f32.mrf.mxu0
        %v3012 = vadd.f32 %v2974, %v3011
        %3013 = vmatmul.f32.gmra.mxu0 %v2762
        %v3014 = vpop.f32.mrf.mxu0
        %v3015 = vadd.f32 %v2977, %v3014
        %3016 = vdwg.mxu0
        %3017 = vmatpush.msra.mxu0 %v1810
        %3018 = vmatpush.msra.mxu0 %v1802
        %3019 = vmatpush.msra.mxu0 %v1794
        %3020 = vmatpush.msra.mxu0 %v1786
        %3021 = vmatpush.msra.mxu0 %v1778
        %3022 = vmatpush.msra.mxu0 %v1770
        %3023 = vmatpush.msra.mxu0 %v1762
        %3024 = vmatpush.msra.mxu0 %v1754
        %3025 = vmatpush.msra.mxu0 %v1746
        %3026 = vmatpush.msra.mxu0 %v1738
        %3027 = vmatpush.msra.mxu0 %v1730
        %3028 = vmatpush.msra.mxu0 %v1722
        %3029 = vmatpush.msra.mxu0 %v1714
        %3030 = vmatpush.msra.mxu0 %v1706
        %3031 = vmatpush.msra.mxu0 %v1698
        %3032 = vmatpush.msra.mxu0 %v1690
        %3033 = vmatmul.f32.gmra.mxu0 %v865
        %v3034 = vpop.f32.mrf.mxu0
        %v3035 = vadd.f32 %v2418, %v3034
        %3036 = vmatmul.f32.gmra.mxu0 %v867
        %v3037 = vpop.f32.mrf.mxu0
        %v3038 = vadd.f32 %v2421, %v3037
        %3039 = vmatmul.f32.gmra.mxu0 %v869
        %v3040 = vpop.f32.mrf.mxu0
        %v3041 = vadd.f32 %v2424, %v3040
        %3042 = vmatmul.f32.gmra.mxu0 %v871
        %v3043 = vpop.f32.mrf.mxu0
        %v3044 = vadd.f32 %v2427, %v3043
        %3045 = vmatmul.f32.gmra.mxu0 %v873
        %v3046 = vpop.f32.mrf.mxu0
        %v3047 = vadd.f32 %v2430, %v3046
        %3048 = vmatmul.f32.gmra.mxu0 %v875
        %v3049 = vpop.f32.mrf.mxu0
        %v3050 = vadd.f32 %v2433, %v3049
        %3051 = vmatmul.f32.gmra.mxu0 %v877
        %v3052 = vpop.f32.mrf.mxu0
        %v3053 = vadd.f32 %v2436, %v3052
        %3054 = vdwg.mxu0
        %3055 = vmatpush.msra.mxu0 0.0
        %3056 = vmatpush.msra.mxu0 0.0
        %3057 = vmatpush.msra.mxu0 0.0
        %3058 = vmatpush.msra.mxu0 0.0
        %3059 = vmatpush.msra.mxu0 0.0
        %3060 = vmatpush.msra.mxu0 0.0
        %3061 = vmatpush.msra.mxu0 0.0
        %3062 = vmatpush.msra.mxu0 %v2775
        %3063 = vmatpush.msra.mxu0 %v1874
        %3064 = vmatpush.msra.mxu0 %v1866
        %3065 = vmatpush.msra.mxu0 %v1858
        %3066 = vmatpush.msra.mxu0 %v1850
        %3067 = vmatpush.msra.mxu0 %v1842
        %3068 = vmatpush.msra.mxu0 %v1834
        %3069 = vmatpush.msra.mxu0 %v1826
        %3070 = vmatpush.msra.mxu0 %v1818
        %3071 = vmatmul.f32.gmra.mxu0 %v2744
        %v3072 = vpop.f32.mrf.mxu0
        %v3073 = vadd.f32 %v3035, %v3072
        %3074 = vmatmul.f32.gmra.mxu0 %v2747
        %v3075 = vpop.f32.mrf.mxu0
        %v3076 = vadd.f32 %v3038, %v3075
        %3077 = vmatmul.f32.gmra.mxu0 %v2750
        %v3078 = vpop.f32.mrf.mxu0
        %v3079 = vadd.f32 %v3041, %v3078
        %3080 = vmatmul.f32.gmra.mxu0 %v2753
        %v3081 = vpop.f32.mrf.mxu0
        %v3082 = vadd.f32 %v3044, %v3081
        %3083 = vmatmul.f32.gmra.mxu0 %v2756
        %v3084 = vpop.f32.mrf.mxu0
        %v3085 = vadd.f32 %v3047, %v3084
        %3086 = vmatmul.f32.gmra.mxu0 %v2759
        %v3087 = vpop.f32.mrf.mxu0
        %v3088 = vadd.f32 %v3050, %v3087
        %3089 = vmatmul.f32.gmra.mxu0 %v2762
        %v3090 = vpop.f32.mrf.mxu0
        %v3091 = vadd.f32 %v3053, %v3090
        %3092 = vdwg.mxu0
        %3093 = vmatpush.msra.mxu0 %v1811
        %3094 = vmatpush.msra.mxu0 %v1803
        %3095 = vmatpush.msra.mxu0 %v1795
        %3096 = vmatpush.msra.mxu0 %v1787
        %3097 = vmatpush.msra.mxu0 %v1779
        %3098 = vmatpush.msra.mxu0 %v1771
        %3099 = vmatpush.msra.mxu0 %v1763
        %3100 = vmatpush.msra.mxu0 %v1755
        %3101 = vmatpush.msra.mxu0 %v1747
        %3102 = vmatpush.msra.mxu0 %v1739
        %3103 = vmatpush.msra.mxu0 %v1731
        %3104 = vmatpush.msra.mxu0 %v1723
        %3105 = vmatpush.msra.mxu0 %v1715
        %3106 = vmatpush.msra.mxu0 %v1707
        %3107 = vmatpush.msra.mxu0 %v1699
        %3108 = vmatpush.msra.mxu0 %v1691
        %3109 = vmatmul.f32.gmra.mxu0 %v865
        %v3110 = vpop.f32.mrf.mxu0
        %v3111 = vadd.f32 %v2494, %v3110
        %3112 = vmatmul.f32.gmra.mxu0 %v867
        %v3113 = vpop.f32.mrf.mxu0
        %v3114 = vadd.f32 %v2497, %v3113
        %3115 = vmatmul.f32.gmra.mxu0 %v869
        %v3116 = vpop.f32.mrf.mxu0
        %v3117 = vadd.f32 %v2500, %v3116
        %3118 = vmatmul.f32.gmra.mxu0 %v871
        %v3119 = vpop.f32.mrf.mxu0
        %v3120 = vadd.f32 %v2503, %v3119
        %3121 = vmatmul.f32.gmra.mxu0 %v873
        %v3122 = vpop.f32.mrf.mxu0
        %v3123 = vadd.f32 %v2506, %v3122
        %3124 = vmatmul.f32.gmra.mxu0 %v875
        %v3125 = vpop.f32.mrf.mxu0
        %v3126 = vadd.f32 %v2509, %v3125
        %3127 = vmatmul.f32.gmra.mxu0 %v877
        %v3128 = vpop.f32.mrf.mxu0
        %v3129 = vadd.f32 %v2512, %v3128
        %3130 = vdwg.mxu0
        %3131 = vmatpush.msra.mxu0 0.0
        %3132 = vmatpush.msra.mxu0 0.0
        %3133 = vmatpush.msra.mxu0 0.0
        %3134 = vmatpush.msra.mxu0 0.0
        %3135 = vmatpush.msra.mxu0 0.0
        %3136 = vmatpush.msra.mxu0 0.0
        %3137 = vmatpush.msra.mxu0 0.0
        %3138 = vmatpush.msra.mxu0 %v2778
        %3139 = vmatpush.msra.mxu0 %v1875
        %3140 = vmatpush.msra.mxu0 %v1867
        %3141 = vmatpush.msra.mxu0 %v1859
        %3142 = vmatpush.msra.mxu0 %v1851
        %3143 = vmatpush.msra.mxu0 %v1843
        %3144 = vmatpush.msra.mxu0 %v1835
        %3145 = vmatpush.msra.mxu0 %v1827
        %3146 = vmatpush.msra.mxu0 %v1819
        %3147 = vmatmul.f32.gmra.mxu0 %v2744
        %v3148 = vpop.f32.mrf.mxu0
        %v3149 = vadd.f32 %v3111, %v3148
        %3150 = vmatmul.f32.gmra.mxu0 %v2747
        %v3151 = vpop.f32.mrf.mxu0
        %v3152 = vadd.f32 %v3114, %v3151
        %3153 = vmatmul.f32.gmra.mxu0 %v2750
        %v3154 = vpop.f32.mrf.mxu0
        %v3155 = vadd.f32 %v3117, %v3154
        %3156 = vmatmul.f32.gmra.mxu0 %v2753
        %v3157 = vpop.f32.mrf.mxu0
        %v3158 = vadd.f32 %v3120, %v3157
        %3159 = vmatmul.f32.gmra.mxu0 %v2756
        %v3160 = vpop.f32.mrf.mxu0
        %v3161 = vadd.f32 %v3123, %v3160
        %3162 = vmatmul.f32.gmra.mxu0 %v2759
        %v3163 = vpop.f32.mrf.mxu0
        %v3164 = vadd.f32 %v3126, %v3163
        %3165 = vmatmul.f32.gmra.mxu0 %v2762
        %v3166 = vpop.f32.mrf.mxu0
        %v3167 = vadd.f32 %v3129, %v3166
        %3168 = vdwg.mxu0
        %3169 = vmatpush.msra.mxu0 %v1812
        %3170 = vmatpush.msra.mxu0 %v1804
        %3171 = vmatpush.msra.mxu0 %v1796
        %3172 = vmatpush.msra.mxu0 %v1788
        %3173 = vmatpush.msra.mxu0 %v1780
        %3174 = vmatpush.msra.mxu0 %v1772
        %3175 = vmatpush.msra.mxu0 %v1764
        %3176 = vmatpush.msra.mxu0 %v1756
        %3177 = vmatpush.msra.mxu0 %v1748
        %3178 = vmatpush.msra.mxu0 %v1740
        %3179 = vmatpush.msra.mxu0 %v1732
        %3180 = vmatpush.msra.mxu0 %v1724
        %3181 = vmatpush.msra.mxu0 %v1716
        %3182 = vmatpush.msra.mxu0 %v1708
        %3183 = vmatpush.msra.mxu0 %v1700
        %3184 = vmatpush.msra.mxu0 %v1692
        %3185 = vmatmul.f32.gmra.mxu0 %v865
        %v3186 = vpop.f32.mrf.mxu0
        %v3187 = vadd.f32 %v2570, %v3186
        %3188 = vmatmul.f32.gmra.mxu0 %v867
        %v3189 = vpop.f32.mrf.mxu0
        %v3190 = vadd.f32 %v2573, %v3189
        %3191 = vmatmul.f32.gmra.mxu0 %v869
        %v3192 = vpop.f32.mrf.mxu0
        %v3193 = vadd.f32 %v2576, %v3192
        %3194 = vmatmul.f32.gmra.mxu0 %v871
        %v3195 = vpop.f32.mrf.mxu0
        %v3196 = vadd.f32 %v2579, %v3195
        %3197 = vmatmul.f32.gmra.mxu0 %v873
        %v3198 = vpop.f32.mrf.mxu0
        %v3199 = vadd.f32 %v2582, %v3198
        %3200 = vmatmul.f32.gmra.mxu0 %v875
        %v3201 = vpop.f32.mrf.mxu0
        %v3202 = vadd.f32 %v2585, %v3201
        %3203 = vmatmul.f32.gmra.mxu0 %v877
        %v3204 = vpop.f32.mrf.mxu0
        %v3205 = vadd.f32 %v2588, %v3204
        %3206 = vdwg.mxu0
        %3207 = vmatpush.msra.mxu0 0.0
        %3208 = vmatpush.msra.mxu0 0.0
        %3209 = vmatpush.msra.mxu0 0.0
        %3210 = vmatpush.msra.mxu0 0.0
        %3211 = vmatpush.msra.mxu0 0.0
        %3212 = vmatpush.msra.mxu0 0.0
        %3213 = vmatpush.msra.mxu0 0.0
        %3214 = vmatpush.msra.mxu0 %v2781
        %3215 = vmatpush.msra.mxu0 %v1876
        %3216 = vmatpush.msra.mxu0 %v1868
        %3217 = vmatpush.msra.mxu0 %v1860
        %3218 = vmatpush.msra.mxu0 %v1852
        %3219 = vmatpush.msra.mxu0 %v1844
        %3220 = vmatpush.msra.mxu0 %v1836
        %3221 = vmatpush.msra.mxu0 %v1828
        %3222 = vmatpush.msra.mxu0 %v1820
        %3223 = vmatmul.f32.gmra.mxu0 %v2744
        %v3224 = vpop.f32.mrf.mxu0
        %v3225 = vadd.f32 %v3187, %v3224
        %3226 = vmatmul.f32.gmra.mxu0 %v2747
        %v3227 = vpop.f32.mrf.mxu0
        %v3228 = vadd.f32 %v3190, %v3227
        %3229 = vmatmul.f32.gmra.mxu0 %v2750
        %v3230 = vpop.f32.mrf.mxu0
        %v3231 = vadd.f32 %v3193, %v3230
        %3232 = vmatmul.f32.gmra.mxu0 %v2753
        %v3233 = vpop.f32.mrf.mxu0
        %v3234 = vadd.f32 %v3196, %v3233
        %3235 = vmatmul.f32.gmra.mxu0 %v2756
        %v3236 = vpop.f32.mrf.mxu0
        %v3237 = vadd.f32 %v3199, %v3236
        %3238 = vmatmul.f32.gmra.mxu0 %v2759
        %v3239 = vpop.f32.mrf.mxu0
        %v3240 = vadd.f32 %v3202, %v3239
        %3241 = vmatmul.f32.gmra.mxu0 %v2762
        %v3242 = vpop.f32.mrf.mxu0
        %v3243 = vadd.f32 %v3205, %v3242
        %3244 = vdwg.mxu0
        %3245 = vmatpush.msra.mxu0 %v1813
        %3246 = vmatpush.msra.mxu0 %v1805
        %3247 = vmatpush.msra.mxu0 %v1797
        %3248 = vmatpush.msra.mxu0 %v1789
        %3249 = vmatpush.msra.mxu0 %v1781
        %3250 = vmatpush.msra.mxu0 %v1773
        %3251 = vmatpush.msra.mxu0 %v1765
        %3252 = vmatpush.msra.mxu0 %v1757
        %3253 = vmatpush.msra.mxu0 %v1749
        %3254 = vmatpush.msra.mxu0 %v1741
        %3255 = vmatpush.msra.mxu0 %v1733
        %3256 = vmatpush.msra.mxu0 %v1725
        %3257 = vmatpush.msra.mxu0 %v1717
        %3258 = vmatpush.msra.mxu0 %v1709
        %3259 = vmatpush.msra.mxu0 %v1701
        %3260 = vmatpush.msra.mxu0 %v1693
        %3261 = vmatmul.f32.gmra.mxu0 %v865
        %v3262 = vpop.f32.mrf.mxu0
        %v3263 = vadd.f32 %v2646, %v3262
        %3264 = vmatmul.f32.gmra.mxu0 %v867
        %v3265 = vpop.f32.mrf.mxu0
        %v3266 = vadd.f32 %v2649, %v3265
        %3267 = vmatmul.f32.gmra.mxu0 %v869
        %v3268 = vpop.f32.mrf.mxu0
        %v3269 = vadd.f32 %v2652, %v3268
        %3270 = vmatmul.f32.gmra.mxu0 %v871
        %v3271 = vpop.f32.mrf.mxu0
        %v3272 = vadd.f32 %v2655, %v3271
        %3273 = vmatmul.f32.gmra.mxu0 %v873
        %v3274 = vpop.f32.mrf.mxu0
        %v3275 = vadd.f32 %v2658, %v3274
        %3276 = vmatmul.f32.gmra.mxu0 %v875
        %v3277 = vpop.f32.mrf.mxu0
        %v3278 = vadd.f32 %v2661, %v3277
        %3279 = vmatmul.f32.gmra.mxu0 %v877
        %v3280 = vpop.f32.mrf.mxu0
        %v3281 = vadd.f32 %v2664, %v3280
        %3282 = vdwg.mxu0
        %3283 = vmatpush.msra.mxu0 0.0
        %3284 = vmatpush.msra.mxu0 0.0
        %3285 = vmatpush.msra.mxu0 0.0
        %3286 = vmatpush.msra.mxu0 0.0
        %3287 = vmatpush.msra.mxu0 0.0
        %3288 = vmatpush.msra.mxu0 0.0
        %3289 = vmatpush.msra.mxu0 0.0
        %3290 = vmatpush.msra.mxu0 %v2784
        %3291 = vmatpush.msra.mxu0 %v1877
        %3292 = vmatpush.msra.mxu0 %v1869
        %3293 = vmatpush.msra.mxu0 %v1861
        %3294 = vmatpush.msra.mxu0 %v1853
        %3295 = vmatpush.msra.mxu0 %v1845
        %3296 = vmatpush.msra.mxu0 %v1837
        %3297 = vmatpush.msra.mxu0 %v1829
        %3298 = vmatpush.msra.mxu0 %v1821
        %3299 = vmatmul.f32.gmra.mxu0 %v2744
        %v3300 = vpop.f32.mrf.mxu0
        %v3301 = vadd.f32 %v3263, %v3300
        %3302 = vmatmul.f32.gmra.mxu0 %v2747
        %v3303 = vpop.f32.mrf.mxu0
        %v3304 = vadd.f32 %v3266, %v3303
        %3305 = vmatmul.f32.gmra.mxu0 %v2750
        %v3306 = vpop.f32.mrf.mxu0
        %v3307 = vadd.f32 %v3269, %v3306
        %3308 = vmatmul.f32.gmra.mxu0 %v2753
        %v3309 = vpop.f32.mrf.mxu0
        %v3310 = vadd.f32 %v3272, %v3309
        %3311 = vmatmul.f32.gmra.mxu0 %v2756
        %v3312 = vpop.f32.mrf.mxu0
        %v3313 = vadd.f32 %v3275, %v3312
        %3314 = vmatmul.f32.gmra.mxu0 %v2759
        %v3315 = vpop.f32.mrf.mxu0
        %v3316 = vadd.f32 %v3278, %v3315
        %3317 = vmatmul.f32.gmra.mxu0 %v2762
        %v3318 = vpop.f32.mrf.mxu0
        %v3319 = vadd.f32 %v3281, %v3318
        %3320 = vdwg.mxu0
        %3321 = vmatpush.msra.mxu0 %v1814
        %3322 = vmatpush.msra.mxu0 %v1806
        %3323 = vmatpush.msra.mxu0 %v1798
        %3324 = vmatpush.msra.mxu0 %v1790
        %3325 = vmatpush.msra.mxu0 %v1782
        %3326 = vmatpush.msra.mxu0 %v1774
        %3327 = vmatpush.msra.mxu0 %v1766
        %3328 = vmatpush.msra.mxu0 %v1758
        %3329 = vmatpush.msra.mxu0 %v1750
        %3330 = vmatpush.msra.mxu0 %v1742
        %3331 = vmatpush.msra.mxu0 %v1734
        %3332 = vmatpush.msra.mxu0 %v1726
        %3333 = vmatpush.msra.mxu0 %v1718
        %3334 = vmatpush.msra.mxu0 %v1710
        %3335 = vmatpush.msra.mxu0 %v1702
        %3336 = vmatpush.msra.mxu0 %v1694
        %3337 = vmatmul.f32.gmra.mxu0 %v865
        %v3338 = vpop.f32.mrf.mxu0
        %v3339 = vadd.f32 %v2722, %v3338
        %3340 = vmatmul.f32.gmra.mxu0 %v867
        %v3341 = vpop.f32.mrf.mxu0
        %v3342 = vadd.f32 %v2725, %v3341
        %3343 = vmatmul.f32.gmra.mxu0 %v869
        %v3344 = vpop.f32.mrf.mxu0
        %v3345 = vadd.f32 %v2728, %v3344
        %3346 = vmatmul.f32.gmra.mxu0 %v871
        %v3347 = vpop.f32.mrf.mxu0
        %v3348 = vadd.f32 %v2731, %v3347
        %3349 = vmatmul.f32.gmra.mxu0 %v873
        %v3350 = vpop.f32.mrf.mxu0
        %v3351 = vadd.f32 %v2734, %v3350
        %3352 = vmatmul.f32.gmra.mxu0 %v875
        %v3353 = vpop.f32.mrf.mxu0
        %v3354 = vadd.f32 %v2737, %v3353
        %3355 = vmatmul.f32.gmra.mxu0 %v877
        %v3356 = vpop.f32.mrf.mxu0
        %v3357 = vadd.f32 %v2740, %v3356
        %3358 = vdwg.mxu0
        %3359 = vmatpush.msra.mxu0 0.0
        %3360 = vmatpush.msra.mxu0 0.0
        %3361 = vmatpush.msra.mxu0 0.0
        %3362 = vmatpush.msra.mxu0 0.0
        %3363 = vmatpush.msra.mxu0 0.0
        %3364 = vmatpush.msra.mxu0 0.0
        %3365 = vmatpush.msra.mxu0 0.0
        %3366 = vmatpush.msra.mxu0 %v2787
        %3367 = vmatpush.msra.mxu0 %v1878
        %3368 = vmatpush.msra.mxu0 %v1870
        %3369 = vmatpush.msra.mxu0 %v1862
        %3370 = vmatpush.msra.mxu0 %v1854
        %3371 = vmatpush.msra.mxu0 %v1846
        %3372 = vmatpush.msra.mxu0 %v1838
        %3373 = vmatpush.msra.mxu0 %v1830
        %3374 = vmatpush.msra.mxu0 %v1822
        %3375 = vmatmul.f32.gmra.mxu0 %v2744
        %v3376 = vpop.f32.mrf.mxu0
        %v3377 = vadd.f32 %v3339, %v3376
        %3378 = vmatmul.f32.gmra.mxu0 %v2747
        %v3379 = vpop.f32.mrf.mxu0
        %v3380 = vadd.f32 %v3342, %v3379
        %3381 = vmatmul.f32.gmra.mxu0 %v2750
        %v3382 = vpop.f32.mrf.mxu0
        %v3383 = vadd.f32 %v3345, %v3382
        %3384 = vmatmul.f32.gmra.mxu0 %v2753
        %v3385 = vpop.f32.mrf.mxu0
        %v3386 = vadd.f32 %v3348, %v3385
        %3387 = vmatmul.f32.gmra.mxu0 %v2756
        %v3388 = vpop.f32.mrf.mxu0
        %v3389 = vadd.f32 %v3351, %v3388
        %3390 = vmatmul.f32.gmra.mxu0 %v2759
        %v3391 = vpop.f32.mrf.mxu0
        %v3392 = vadd.f32 %v3354, %v3391
        %3393 = vmatmul.f32.gmra.mxu0 %v2762
        %v3394 = vpop.f32.mrf.mxu0
        %v3395 = vadd.f32 %v3357, %v3394
        %3396 = vdwg.mxu0
        %v3397 = vld [vmem:[#allocation6] sm:$0xff]
        %v3398 = vld [vmem:[#allocation6 + $0x8] sm:$0xff]
        %v3399 = vld [vmem:[#allocation6 + $0x10] sm:$0xff]
        %v3400 = vld [vmem:[#allocation6 + $0x18] sm:$0xff]
        %v3401 = vld [vmem:[#allocation6 + $0x20] sm:$0xff]
        %v3402 = vld [vmem:[#allocation6 + $0x28] sm:$0xff]
        %v3403 = vld [vmem:[#allocation6 + $0x30] sm:$0xff]
        %v3404 = vld [vmem:[#allocation6 + $0x38] sm:$0xff]
        %v3405 = vld [vmem:[#allocation6 + $0x40] sm:$0xff]
        %v3406 = vld [vmem:[#allocation6 + $0x48] sm:$0xff]
        %v3407 = vld [vmem:[#allocation6 + $0x50] sm:$0xff]
        %v3408 = vld [vmem:[#allocation6 + $0x58] sm:$0xff]
        %v3409 = vld [vmem:[#allocation6 + $0x60] sm:$0xff]
        %v3410 = vld [vmem:[#allocation6 + $0x68] sm:$0xff]
        %v3411 = vld [vmem:[#allocation6 + $0x70] sm:$0xff]
        %v3412 = vld [vmem:[#allocation6 + $0x78] sm:$0xff]
        %v3413 = vld [vmem:[#allocation6 + $0x80] sm:$0xff]
        %v3414 = vld [vmem:[#allocation6 + $0x88] sm:$0xff]
        %v3415 = vld [vmem:[#allocation6 + $0x90] sm:$0xff]
        %v3416 = vld [vmem:[#allocation6 + $0x98] sm:$0xff]
        %v3417 = vld [vmem:[#allocation6 + $0xa0] sm:$0xff]
        %v3418 = vld [vmem:[#allocation6 + $0xa8] sm:$0xff]
        %v3419 = vld [vmem:[#allocation6 + $0xb0] sm:$0xff]
        %v3420 = vld [vmem:[#allocation6 + $0xb8] sm:$0xff]
        %v3421 = vld [vmem:[#allocation6 + $0xc0] sm:$0xff]
        %v3422 = vld [vmem:[#allocation6 + $0xc8] sm:$0xff]
        %v3423 = vld [vmem:[#allocation6 + $0xd0] sm:$0xff]
        %v3424 = vld [vmem:[#allocation6 + $0xd8] sm:$0xff]
        %v3425 = vld [vmem:[#allocation6 + $0xe0] sm:$0xff]
        %v3426 = vld [vmem:[#allocation6 + $0xe8] sm:$0xff]
        %v3427 = vld [vmem:[#allocation6 + $0xf0] sm:$0xff]
        %v3428 = vld [vmem:[#allocation6 + $0xf8] sm:$0xff]
        %v3429 = vld [vmem:[#allocation6 + $0x100] sm:$0xff]
        %v3430 = vld [vmem:[#allocation6 + $0x108] sm:$0xff]
        %v3431 = vld [vmem:[#allocation6 + $0x110] sm:$0xff]
        %v3432 = vld [vmem:[#allocation6 + $0x118] sm:$0xff]
        %v3433 = vld [vmem:[#allocation6 + $0x120] sm:$0xff]
        %v3434 = vld [vmem:[#allocation6 + $0x128] sm:$0xff]
        %v3435 = vld [vmem:[#allocation6 + $0x130] sm:$0xff]
        %v3436 = vld [vmem:[#allocation6 + $0x138] sm:$0xff]
        %v3437 = vld [vmem:[#allocation6 + $0x140] sm:$0xff]
        %v3438 = vld [vmem:[#allocation6 + $0x148] sm:$0xff]
        %v3439 = vld [vmem:[#allocation6 + $0x150] sm:$0xff]
        %v3440 = vld [vmem:[#allocation6 + $0x158] sm:$0xff]
        %v3441 = vld [vmem:[#allocation6 + $0x160] sm:$0xff]
        %v3442 = vld [vmem:[#allocation6 + $0x168] sm:$0xff]
        %v3443 = vld [vmem:[#allocation6 + $0x170] sm:$0xff]
        %v3444 = vld [vmem:[#allocation6 + $0x178] sm:$0xff]
        %v3445 = vld [vmem:[#allocation6 + $0x180] sm:$0xff]
        %v3446 = vld [vmem:[#allocation6 + $0x188] sm:$0xff]
        %v3447 = vld [vmem:[#allocation6 + $0x190] sm:$0xff]
        %v3448 = vld [vmem:[#allocation6 + $0x198] sm:$0xff]
        %v3449 = vld [vmem:[#allocation6 + $0x1a0] sm:$0xff]
        %v3450 = vld [vmem:[#allocation6 + $0x1a8] sm:$0xff]
        %v3451 = vld [vmem:[#allocation6 + $0x1b0] sm:$0xff]
        %v3452 = vld [vmem:[#allocation6 + $0x1b8] sm:$0xff]
        %v3453 = vld [vmem:[#allocation6 + $0x1c0] sm:$0xff]
        %v3454 = vld [vmem:[#allocation6 + $0x1c8] sm:$0xff]
        %v3455 = vld [vmem:[#allocation6 + $0x1d0] sm:$0xff]
        %v3456 = vld [vmem:[#allocation6 + $0x1d8] sm:$0xff]
        %v3457 = vld [vmem:[#allocation6 + $0x1e0] sm:$0xff]
        %v3458 = vld [vmem:[#allocation6 + $0x1e8] sm:$0xff]
        %v3459 = vld [vmem:[#allocation6 + $0x1f0] sm:$0xff]
        %v3460 = vld [vmem:[#allocation6 + $0x1f8] sm:$0xff]
        %v3461 = vld [vmem:[#allocation6 + $0x200] sm:$0xff]
        %v3462 = vld [vmem:[#allocation6 + $0x208] sm:$0xff]
        %v3463 = vld [vmem:[#allocation6 + $0x210] sm:$0xff]
        %v3464 = vld [vmem:[#allocation6 + $0x218] sm:$0xff]
        %v3465 = vld [vmem:[#allocation6 + $0x220] sm:$0xff]
        %v3466 = vld [vmem:[#allocation6 + $0x228] sm:$0xff]
        %v3467 = vld [vmem:[#allocation6 + $0x230] sm:$0xff]
        %v3468 = vld [vmem:[#allocation6 + $0x238] sm:$0xff]
        %v3469 = vld [vmem:[#allocation6 + $0x240] sm:$0xff]
        %v3470 = vld [vmem:[#allocation6 + $0x248] sm:$0xff]
        %v3471 = vld [vmem:[#allocation6 + $0x250] sm:$0xff]
        %v3472 = vld [vmem:[#allocation6 + $0x258] sm:$0xff]
        %v3473 = vld [vmem:[#allocation6 + $0x260] sm:$0xff]
        %v3474 = vld [vmem:[#allocation6 + $0x268] sm:$0xff]
        %v3475 = vld [vmem:[#allocation6 + $0x270] sm:$0xff]
        %v3476 = vld [vmem:[#allocation6 + $0x278] sm:$0xff]
        %v3477 = vld [vmem:[#allocation6 + $0x280] sm:$0xff]
        %v3478 = vld [vmem:[#allocation6 + $0x288] sm:$0xff]
        %v3479 = vld [vmem:[#allocation6 + $0x290] sm:$0xff]
        %v3480 = vld [vmem:[#allocation6 + $0x298] sm:$0xff]
        %v3481 = vld [vmem:[#allocation6 + $0x2a0] sm:$0xff]
        %v3482 = vld [vmem:[#allocation6 + $0x2a8] sm:$0xff]
        %v3483 = vld [vmem:[#allocation6 + $0x2b0] sm:$0xff]
        %v3484 = vld [vmem:[#allocation6 + $0x2b8] sm:$0xff]
        %v3485 = vld [vmem:[#allocation6 + $0x2c0] sm:$0xff]
        %v3486 = vld [vmem:[#allocation6 + $0x2c8] sm:$0xff]
        %v3487 = vld [vmem:[#allocation6 + $0x2d0] sm:$0xff]
        %v3488 = vld [vmem:[#allocation6 + $0x2d8] sm:$0xff]
        %v3489 = vld [vmem:[#allocation6 + $0x2e0] sm:$0xff]
        %v3490 = vld [vmem:[#allocation6 + $0x2e8] sm:$0xff]
        %v3491 = vld [vmem:[#allocation6 + $0x2f0] sm:$0xff]
        %v3492 = vld [vmem:[#allocation6 + $0x2f8] sm:$0xff]
        %v3493 = vld [vmem:[#allocation6 + $0x300] sm:$0xff]
        %v3494 = vld [vmem:[#allocation6 + $0x308] sm:$0xff]
        %v3495 = vld [vmem:[#allocation6 + $0x310] sm:$0xff]
        %v3496 = vld [vmem:[#allocation6 + $0x318] sm:$0xff]
        %v3497 = vld [vmem:[#allocation6 + $0x320] sm:$0xff]
        %v3498 = vld [vmem:[#allocation6 + $0x328] sm:$0xff]
        %v3499 = vld [vmem:[#allocation6 + $0x330] sm:$0xff]
        %v3500 = vld [vmem:[#allocation6 + $0x338] sm:$0xff]
        %v3501 = vld [vmem:[#allocation6 + $0x340] sm:$0xff]
        %v3502 = vld [vmem:[#allocation6 + $0x348] sm:$0xff]
        %v3503 = vld [vmem:[#allocation6 + $0x350] sm:$0xff]
        %v3504 = vld [vmem:[#allocation6 + $0x358] sm:$0xff]
        %v3505 = vld [vmem:[#allocation6 + $0x360] sm:$0xff]
        %v3506 = vld [vmem:[#allocation6 + $0x368] sm:$0xff]
        %v3507 = vld [vmem:[#allocation6 + $0x370] sm:$0xff]
        %v3508 = vld [vmem:[#allocation6 + $0x378] sm:$0xff]
        %v3509 = vld [vmem:[#allocation6 + $0x380] sm:$0xff]
        %v3510 = vld [vmem:[#allocation6 + $0x388] sm:$0xff]
        %v3511 = vld [vmem:[#allocation6 + $0x390] sm:$0xff]
        %v3512 = vld [vmem:[#allocation6 + $0x398] sm:$0xff]
        %v3513 = vld [vmem:[#allocation6 + $0x3a0] sm:$0xff]
        %v3514 = vld [vmem:[#allocation6 + $0x3a8] sm:$0xff]
        %v3515 = vld [vmem:[#allocation6 + $0x3b0] sm:$0xff]
        %v3516 = vld [vmem:[#allocation6 + $0x3b8] sm:$0xff]
        %v3517 = vld [vmem:[#allocation6 + $0x3c0] sm:$0xff]
        %v3518 = vld [vmem:[#allocation6 + $0x3c8] sm:$0xff]
        %v3519 = vld [vmem:[#allocation6 + $0x3d0] sm:$0xff]
        %v3520 = vld [vmem:[#allocation6 + $0x3d8] sm:$0xff]
        %v3521 = vld [vmem:[#allocation6 + $0x3e0] sm:$0xff]
        %v3522 = vld [vmem:[#allocation6 + $0x3e8] sm:$0xff]
        %v3523 = vld [vmem:[#allocation6 + $0x3f0] sm:$0xff]
        %v3524 = vld [vmem:[#allocation6 + $0x3f8] sm:$0xff]
        %v3525 = vld [vmem:[#allocation6 + $0x400] sm:$0xff]
        %v3526 = vld [vmem:[#allocation6 + $0x408] sm:$0xff]
        %v3527 = vld [vmem:[#allocation6 + $0x410] sm:$0xff]
        %v3528 = vld [vmem:[#allocation6 + $0x418] sm:$0xff]
        %v3529 = vld [vmem:[#allocation6 + $0x420] sm:$0xff]
        %v3530 = vld [vmem:[#allocation6 + $0x428] sm:$0xff]
        %v3531 = vld [vmem:[#allocation6 + $0x430] sm:$0xff]
        %v3532 = vld [vmem:[#allocation6 + $0x438] sm:$0xff]
        %v3533 = vld [vmem:[#allocation6 + $0x440] sm:$0xff]
        %v3534 = vld [vmem:[#allocation6 + $0x448] sm:$0xff]
        %v3535 = vld [vmem:[#allocation6 + $0x450] sm:$0xff]
        %v3536 = vld [vmem:[#allocation6 + $0x458] sm:$0xff]
        %v3537 = vld [vmem:[#allocation6 + $0x460] sm:$0xff]
        %v3538 = vld [vmem:[#allocation6 + $0x468] sm:$0xff]
        %v3539 = vld [vmem:[#allocation6 + $0x470] sm:$0xff]
        %v3540 = vld [vmem:[#allocation6 + $0x478] sm:$0xff]
        %v3541 = vld [vmem:[#allocation6 + $0x480] sm:$0xff]
        %v3542 = vld [vmem:[#allocation6 + $0x488] sm:$0xff]
        %v3543 = vld [vmem:[#allocation6 + $0x490] sm:$0xff]
        %v3544 = vld [vmem:[#allocation6 + $0x498] sm:$0xff]
        %v3545 = vld [vmem:[#allocation6 + $0x4a0] sm:$0xff]
        %v3546 = vld [vmem:[#allocation6 + $0x4a8] sm:$0xff]
        %v3547 = vld [vmem:[#allocation6 + $0x4b0] sm:$0xff]
        %v3548 = vld [vmem:[#allocation6 + $0x4b8] sm:$0xff]
        %v3549 = vld [vmem:[#allocation6 + $0x4c0] sm:$0xff]
        %v3550 = vld [vmem:[#allocation6 + $0x4c8] sm:$0xff]
        %v3551 = vld [vmem:[#allocation6 + $0x4d0] sm:$0xff]
        %v3552 = vld [vmem:[#allocation6 + $0x4d8] sm:$0xff]
        %v3553 = vld [vmem:[#allocation6 + $0x4e0] sm:$0xff]
        %v3554 = vld [vmem:[#allocation6 + $0x4e8] sm:$0xff]
        %v3555 = vld [vmem:[#allocation6 + $0x4f0] sm:$0xff]
        %v3556 = vld [vmem:[#allocation6 + $0x4f8] sm:$0xff]
        %v3557 = vld [vmem:[#allocation6 + $0x500] sm:$0xff]
        %v3558 = vld [vmem:[#allocation6 + $0x508] sm:$0xff]
        %v3559 = vld [vmem:[#allocation6 + $0x510] sm:$0xff]
        %v3560 = vld [vmem:[#allocation6 + $0x518] sm:$0xff]
        %v3561 = vld [vmem:[#allocation6 + $0x520] sm:$0xff]
        %v3562 = vld [vmem:[#allocation6 + $0x528] sm:$0xff]
        %v3563 = vld [vmem:[#allocation6 + $0x530] sm:$0xff]
        %v3564 = vld [vmem:[#allocation6 + $0x538] sm:$0xff]
        %v3565 = vld [vmem:[#allocation6 + $0x540] sm:$0xff]
        %v3566 = vld [vmem:[#allocation6 + $0x548] sm:$0xff]
        %v3567 = vld [vmem:[#allocation6 + $0x550] sm:$0xff]
        %v3568 = vld [vmem:[#allocation6 + $0x558] sm:$0xff]
        %v3569 = vld [vmem:[#allocation6 + $0x560] sm:$0xff]
        %v3570 = vld [vmem:[#allocation6 + $0x568] sm:$0xff]
        %v3571 = vld [vmem:[#allocation6 + $0x570] sm:$0xff]
        %v3572 = vld [vmem:[#allocation6 + $0x578] sm:$0xff]
        %v3573 = vld [vmem:[#allocation6 + $0x580] sm:$0xff]
        %v3574 = vld [vmem:[#allocation6 + $0x588] sm:$0xff]
        %v3575 = vld [vmem:[#allocation6 + $0x590] sm:$0xff]
        %v3576 = vld [vmem:[#allocation6 + $0x598] sm:$0xff]
        %v3577 = vld [vmem:[#allocation6 + $0x5a0] sm:$0xff]
        %v3578 = vld [vmem:[#allocation6 + $0x5a8] sm:$0xff]
        %v3579 = vld [vmem:[#allocation6 + $0x5b0] sm:$0xff]
        %v3580 = vld [vmem:[#allocation6 + $0x5b8] sm:$0xff]
        %v3581 = vld [vmem:[#allocation6 + $0x5c0] sm:$0xff]
        %v3582 = vld [vmem:[#allocation6 + $0x5c8] sm:$0xff]
        %v3583 = vld [vmem:[#allocation6 + $0x5d0] sm:$0xff]
        %v3584 = vld [vmem:[#allocation6 + $0x5d8] sm:$0xff]
        %v3585 = vld [vmem:[#allocation6 + $0x5e0] sm:$0xff]
        %v3586 = vld [vmem:[#allocation6 + $0x5e8] sm:$0xff]
        %v3587 = vld [vmem:[#allocation6 + $0x5f0] sm:$0xff]
        %v3588 = vld [vmem:[#allocation6 + $0x5f8] sm:$0xff]
        %v3589 = vld [vmem:[#allocation6 + $0x600] sm:$0x3]
        %v3590 = vld [vmem:[#allocation6 + $0x608] sm:$0x3]
        %v3591 = vld [vmem:[#allocation6 + $0x610] sm:$0x3]
        %v3592 = vld [vmem:[#allocation6 + $0x618] sm:$0x3]
        %v3593 = vld [vmem:[#allocation6 + $0x620] sm:$0x3]
        %v3594 = vld [vmem:[#allocation6 + $0x628] sm:$0x3]
        %v3595 = vld [vmem:[#allocation6 + $0x630] sm:$0x3]
        %v3596 = vld [vmem:[#allocation6 + $0x638] sm:$0x3]
        %vm3597 = vcmask 539648
        %v3599 = vsel %vm3597, %v1674, 0
        %v3602 = vsel %vm3597, %v1676, 0
        %v3605 = vsel %vm3597, %v1678, 0
        %v3608 = vsel %vm3597, %v1680, 0
        %v3611 = vsel %vm3597, %v1682, 0
        %v3614 = vsel %vm3597, %v1684, 0
        %v3617 = vsel %vm3597, %v1686, 0
        %v3620 = vsel %vm379, %v3589, 0
        %v3623 = vsel %vm379, %v3590, 0
        %v3626 = vsel %vm379, %v3591, 0
        %v3629 = vsel %vm379, %v3592, 0
        %v3632 = vsel %vm379, %v3593, 0
        %v3635 = vsel %vm379, %v3594, 0
        %v3638 = vsel %vm379, %v3595, 0
        %v3641 = vsel %vm379, %v3596, 0
        %3643 = vmatpush.msra.mxu0 %v3517
        %3644 = vmatpush.msra.mxu0 %v3509
        %3645 = vmatpush.msra.mxu0 %v3501
        %3646 = vmatpush.msra.mxu0 %v3493
        %3647 = vmatpush.msra.mxu0 %v3485
        %3648 = vmatpush.msra.mxu0 %v3477
        %3649 = vmatpush.msra.mxu0 %v3469
        %3650 = vmatpush.msra.mxu0 %v3461
        %3651 = vmatpush.msra.mxu0 %v3453
        %3652 = vmatpush.msra.mxu0 %v3445
        %3653 = vmatpush.msra.mxu0 %v3437
        %3654 = vmatpush.msra.mxu0 %v3429
        %3655 = vmatpush.msra.mxu0 %v3421
        %3656 = vmatpush.msra.mxu0 %v3413
        %3657 = vmatpush.msra.mxu0 %v3405
        %3658 = vmatpush.msra.mxu0 %v3397
        %3659 = vmatmul.f32.gmra.mxu0 %v1673
        %v3660 = vpop.f32.mrf.mxu0
        %v3661 = vadd.f32 0.0, %v3660
        %3662 = vmatmul.f32.gmra.mxu0 %v1675
        %v3663 = vpop.f32.mrf.mxu0
        %v3664 = vadd.f32 0.0, %v3663
        %3665 = vmatmul.f32.gmra.mxu0 %v1677
        %v3666 = vpop.f32.mrf.mxu0
        %v3667 = vadd.f32 0.0, %v3666
        %3668 = vmatmul.f32.gmra.mxu0 %v1679
        %v3669 = vpop.f32.mrf.mxu0
        %v3670 = vadd.f32 0.0, %v3669
        %3671 = vmatmul.f32.gmra.mxu0 %v1681
        %v3672 = vpop.f32.mrf.mxu0
        %v3673 = vadd.f32 0.0, %v3672
        %3674 = vmatmul.f32.gmra.mxu0 %v1683
        %v3675 = vpop.f32.mrf.mxu0
        %v3676 = vadd.f32 0.0, %v3675
        %3677 = vmatmul.f32.gmra.mxu0 %v1685
        %v3678 = vpop.f32.mrf.mxu0
        %v3679 = vadd.f32 0.0, %v3678
        %3680 = vdwg.mxu0
        %3681 = vmatpush.msra.mxu0 0.0
        %3682 = vmatpush.msra.mxu0 0.0
        %3683 = vmatpush.msra.mxu0 0.0
        %3684 = vmatpush.msra.mxu0 0.0
        %3685 = vmatpush.msra.mxu0 0.0
        %3686 = vmatpush.msra.mxu0 0.0
        %3687 = vmatpush.msra.mxu0 0.0
        %3688 = vmatpush.msra.mxu0 %v3620
        %3689 = vmatpush.msra.mxu0 %v3581
        %3690 = vmatpush.msra.mxu0 %v3573
        %3691 = vmatpush.msra.mxu0 %v3565
        %3692 = vmatpush.msra.mxu0 %v3557
        %3693 = vmatpush.msra.mxu0 %v3549
        %3694 = vmatpush.msra.mxu0 %v3541
        %3695 = vmatpush.msra.mxu0 %v3533
        %3696 = vmatpush.msra.mxu0 %v3525
        %3697 = vmatmul.f32.gmra.mxu0 %v3599
        %v3698 = vpop.f32.mrf.mxu0
        %v3699 = vadd.f32 %v3661, %v3698
        %3700 = vmatmul.f32.gmra.mxu0 %v3602
        %v3701 = vpop.f32.mrf.mxu0
        %v3702 = vadd.f32 %v3664, %v3701
        %3703 = vmatmul.f32.gmra.mxu0 %v3605
        %v3704 = vpop.f32.mrf.mxu0
        %v3705 = vadd.f32 %v3667, %v3704
        %3706 = vmatmul.f32.gmra.mxu0 %v3608
        %v3707 = vpop.f32.mrf.mxu0
        %v3708 = vadd.f32 %v3670, %v3707
        %3709 = vmatmul.f32.gmra.mxu0 %v3611
        %v3710 = vpop.f32.mrf.mxu0
        %v3711 = vadd.f32 %v3673, %v3710
        %3712 = vmatmul.f32.gmra.mxu0 %v3614
        %v3713 = vpop.f32.mrf.mxu0
        %v3714 = vadd.f32 %v3676, %v3713
        %3715 = vmatmul.f32.gmra.mxu0 %v3617
        %v3716 = vpop.f32.mrf.mxu0
        %v3717 = vadd.f32 %v3679, %v3716
        %3718 = vdwg.mxu0
        %3719 = vmatpush.msra.mxu0 %v3518
        %3720 = vmatpush.msra.mxu0 %v3510
        %3721 = vmatpush.msra.mxu0 %v3502
        %3722 = vmatpush.msra.mxu0 %v3494
        %3723 = vmatpush.msra.mxu0 %v3486
        %3724 = vmatpush.msra.mxu0 %v3478
        %3725 = vmatpush.msra.mxu0 %v3470
        %3726 = vmatpush.msra.mxu0 %v3462
        %3727 = vmatpush.msra.mxu0 %v3454
        %3728 = vmatpush.msra.mxu0 %v3446
        %3729 = vmatpush.msra.mxu0 %v3438
        %3730 = vmatpush.msra.mxu0 %v3430
        %3731 = vmatpush.msra.mxu0 %v3422
        %3732 = vmatpush.msra.mxu0 %v3414
        %3733 = vmatpush.msra.mxu0 %v3406
        %3734 = vmatpush.msra.mxu0 %v3398
        %3735 = vmatmul.f32.gmra.mxu0 %v1673
        %v3736 = vpop.f32.mrf.mxu0
        %v3737 = vadd.f32 0.0, %v3736
        %3738 = vmatmul.f32.gmra.mxu0 %v1675
        %v3739 = vpop.f32.mrf.mxu0
        %v3740 = vadd.f32 0.0, %v3739
        %3741 = vmatmul.f32.gmra.mxu0 %v1677
        %v3742 = vpop.f32.mrf.mxu0
        %v3743 = vadd.f32 0.0, %v3742
        %3744 = vmatmul.f32.gmra.mxu0 %v1679
        %v3745 = vpop.f32.mrf.mxu0
        %v3746 = vadd.f32 0.0, %v3745
        %3747 = vmatmul.f32.gmra.mxu0 %v1681
        %v3748 = vpop.f32.mrf.mxu0
        %v3749 = vadd.f32 0.0, %v3748
        %3750 = vmatmul.f32.gmra.mxu0 %v1683
        %v3751 = vpop.f32.mrf.mxu0
        %v3752 = vadd.f32 0.0, %v3751
        %3753 = vmatmul.f32.gmra.mxu0 %v1685
        %v3754 = vpop.f32.mrf.mxu0
        %v3755 = vadd.f32 0.0, %v3754
        %3756 = vdwg.mxu0
        %3757 = vmatpush.msra.mxu0 0.0
        %3758 = vmatpush.msra.mxu0 0.0
        %3759 = vmatpush.msra.mxu0 0.0
        %3760 = vmatpush.msra.mxu0 0.0
        %3761 = vmatpush.msra.mxu0 0.0
        %3762 = vmatpush.msra.mxu0 0.0
        %3763 = vmatpush.msra.mxu0 0.0
        %3764 = vmatpush.msra.mxu0 %v3623
        %3765 = vmatpush.msra.mxu0 %v3582
        %3766 = vmatpush.msra.mxu0 %v3574
        %3767 = vmatpush.msra.mxu0 %v3566
        %3768 = vmatpush.msra.mxu0 %v3558
        %3769 = vmatpush.msra.mxu0 %v3550
        %3770 = vmatpush.msra.mxu0 %v3542
        %3771 = vmatpush.msra.mxu0 %v3534
        %3772 = vmatpush.msra.mxu0 %v3526
        %3773 = vmatmul.f32.gmra.mxu0 %v3599
        %v3774 = vpop.f32.mrf.mxu0
        %v3775 = vadd.f32 %v3737, %v3774
        %3776 = vmatmul.f32.gmra.mxu0 %v3602
        %v3777 = vpop.f32.mrf.mxu0
        %v3778 = vadd.f32 %v3740, %v3777
        %3779 = vmatmul.f32.gmra.mxu0 %v3605
        %v3780 = vpop.f32.mrf.mxu0
        %v3781 = vadd.f32 %v3743, %v3780
        %3782 = vmatmul.f32.gmra.mxu0 %v3608
        %v3783 = vpop.f32.mrf.mxu0
        %v3784 = vadd.f32 %v3746, %v3783
        %3785 = vmatmul.f32.gmra.mxu0 %v3611
        %v3786 = vpop.f32.mrf.mxu0
        %v3787 = vadd.f32 %v3749, %v3786
        %3788 = vmatmul.f32.gmra.mxu0 %v3614
        %v3789 = vpop.f32.mrf.mxu0
        %v3790 = vadd.f32 %v3752, %v3789
        %3791 = vmatmul.f32.gmra.mxu0 %v3617
        %v3792 = vpop.f32.mrf.mxu0
        %v3793 = vadd.f32 %v3755, %v3792
        %3794 = vdwg.mxu0
        %3795 = vmatpush.msra.mxu0 %v3519
        %3796 = vmatpush.msra.mxu0 %v3511
        %3797 = vmatpush.msra.mxu0 %v3503
        %3798 = vmatpush.msra.mxu0 %v3495
        %3799 = vmatpush.msra.mxu0 %v3487
        %3800 = vmatpush.msra.mxu0 %v3479
        %3801 = vmatpush.msra.mxu0 %v3471
        %3802 = vmatpush.msra.mxu0 %v3463
        %3803 = vmatpush.msra.mxu0 %v3455
        %3804 = vmatpush.msra.mxu0 %v3447
        %3805 = vmatpush.msra.mxu0 %v3439
        %3806 = vmatpush.msra.mxu0 %v3431
        %3807 = vmatpush.msra.mxu0 %v3423
        %3808 = vmatpush.msra.mxu0 %v3415
        %3809 = vmatpush.msra.mxu0 %v3407
        %3810 = vmatpush.msra.mxu0 %v3399
        %3811 = vmatmul.f32.gmra.mxu0 %v1673
        %v3812 = vpop.f32.mrf.mxu0
        %v3813 = vadd.f32 0.0, %v3812
        %3814 = vmatmul.f32.gmra.mxu0 %v1675
        %v3815 = vpop.f32.mrf.mxu0
        %v3816 = vadd.f32 0.0, %v3815
        %3817 = vmatmul.f32.gmra.mxu0 %v1677
        %v3818 = vpop.f32.mrf.mxu0
        %v3819 = vadd.f32 0.0, %v3818
        %3820 = vmatmul.f32.gmra.mxu0 %v1679
        %v3821 = vpop.f32.mrf.mxu0
        %v3822 = vadd.f32 0.0, %v3821
        %3823 = vmatmul.f32.gmra.mxu0 %v1681
        %v3824 = vpop.f32.mrf.mxu0
        %v3825 = vadd.f32 0.0, %v3824
        %3826 = vmatmul.f32.gmra.mxu0 %v1683
        %v3827 = vpop.f32.mrf.mxu0
        %v3828 = vadd.f32 0.0, %v3827
        %3829 = vmatmul.f32.gmra.mxu0 %v1685
        %v3830 = vpop.f32.mrf.mxu0
        %v3831 = vadd.f32 0.0, %v3830
        %3832 = vdwg.mxu0
        %3833 = vmatpush.msra.mxu0 0.0
        %3834 = vmatpush.msra.mxu0 0.0
        %3835 = vmatpush.msra.mxu0 0.0
        %3836 = vmatpush.msra.mxu0 0.0
        %3837 = vmatpush.msra.mxu0 0.0
        %3838 = vmatpush.msra.mxu0 0.0
        %3839 = vmatpush.msra.mxu0 0.0
        %3840 = vmatpush.msra.mxu0 %v3626
        %3841 = vmatpush.msra.mxu0 %v3583
        %3842 = vmatpush.msra.mxu0 %v3575
        %3843 = vmatpush.msra.mxu0 %v3567
        %3844 = vmatpush.msra.mxu0 %v3559
        %3845 = vmatpush.msra.mxu0 %v3551
        %3846 = vmatpush.msra.mxu0 %v3543
        %3847 = vmatpush.msra.mxu0 %v3535
        %3848 = vmatpush.msra.mxu0 %v3527
        %3849 = vmatmul.f32.gmra.mxu0 %v3599
        %v3850 = vpop.f32.mrf.mxu0
        %v3851 = vadd.f32 %v3813, %v3850
        %3852 = vmatmul.f32.gmra.mxu0 %v3602
        %v3853 = vpop.f32.mrf.mxu0
        %v3854 = vadd.f32 %v3816, %v3853
        %3855 = vmatmul.f32.gmra.mxu0 %v3605
        %v3856 = vpop.f32.mrf.mxu0
        %v3857 = vadd.f32 %v3819, %v3856
        %3858 = vmatmul.f32.gmra.mxu0 %v3608
        %v3859 = vpop.f32.mrf.mxu0
        %v3860 = vadd.f32 %v3822, %v3859
        %3861 = vmatmul.f32.gmra.mxu0 %v3611
        %v3862 = vpop.f32.mrf.mxu0
        %v3863 = vadd.f32 %v3825, %v3862
        %3864 = vmatmul.f32.gmra.mxu0 %v3614
        %v3865 = vpop.f32.mrf.mxu0
        %v3866 = vadd.f32 %v3828, %v3865
        %3867 = vmatmul.f32.gmra.mxu0 %v3617
        %v3868 = vpop.f32.mrf.mxu0
        %v3869 = vadd.f32 %v3831, %v3868
        %3870 = vdwg.mxu0
        %3871 = vmatpush.msra.mxu0 %v3520
        %3872 = vmatpush.msra.mxu0 %v3512
        %3873 = vmatpush.msra.mxu0 %v3504
        %3874 = vmatpush.msra.mxu0 %v3496
        %3875 = vmatpush.msra.mxu0 %v3488
        %3876 = vmatpush.msra.mxu0 %v3480
        %3877 = vmatpush.msra.mxu0 %v3472
        %3878 = vmatpush.msra.mxu0 %v3464
        %3879 = vmatpush.msra.mxu0 %v3456
        %3880 = vmatpush.msra.mxu0 %v3448
        %3881 = vmatpush.msra.mxu0 %v3440
        %3882 = vmatpush.msra.mxu0 %v3432
        %3883 = vmatpush.msra.mxu0 %v3424
        %3884 = vmatpush.msra.mxu0 %v3416
        %3885 = vmatpush.msra.mxu0 %v3408
        %3886 = vmatpush.msra.mxu0 %v3400
        %3887 = vmatmul.f32.gmra.mxu0 %v1673
        %v3888 = vpop.f32.mrf.mxu0
        %v3889 = vadd.f32 0.0, %v3888
        %3890 = vmatmul.f32.gmra.mxu0 %v1675
        %v3891 = vpop.f32.mrf.mxu0
        %v3892 = vadd.f32 0.0, %v3891
        %3893 = vmatmul.f32.gmra.mxu0 %v1677
        %v3894 = vpop.f32.mrf.mxu0
        %v3895 = vadd.f32 0.0, %v3894
        %3896 = vmatmul.f32.gmra.mxu0 %v1679
        %v3897 = vpop.f32.mrf.mxu0
        %v3898 = vadd.f32 0.0, %v3897
        %3899 = vmatmul.f32.gmra.mxu0 %v1681
        %v3900 = vpop.f32.mrf.mxu0
        %v3901 = vadd.f32 0.0, %v3900
        %3902 = vmatmul.f32.gmra.mxu0 %v1683
        %v3903 = vpop.f32.mrf.mxu0
        %v3904 = vadd.f32 0.0, %v3903
        %3905 = vmatmul.f32.gmra.mxu0 %v1685
        %v3906 = vpop.f32.mrf.mxu0
        %v3907 = vadd.f32 0.0, %v3906
        %3908 = vdwg.mxu0
        %3909 = vmatpush.msra.mxu0 0.0
        %3910 = vmatpush.msra.mxu0 0.0
        %3911 = vmatpush.msra.mxu0 0.0
        %3912 = vmatpush.msra.mxu0 0.0
        %3913 = vmatpush.msra.mxu0 0.0
        %3914 = vmatpush.msra.mxu0 0.0
        %3915 = vmatpush.msra.mxu0 0.0
        %3916 = vmatpush.msra.mxu0 %v3629
        %3917 = vmatpush.msra.mxu0 %v3584
        %3918 = vmatpush.msra.mxu0 %v3576
        %3919 = vmatpush.msra.mxu0 %v3568
        %3920 = vmatpush.msra.mxu0 %v3560
        %3921 = vmatpush.msra.mxu0 %v3552
        %3922 = vmatpush.msra.mxu0 %v3544
        %3923 = vmatpush.msra.mxu0 %v3536
        %3924 = vmatpush.msra.mxu0 %v3528
        %3925 = vmatmul.f32.gmra.mxu0 %v3599
        %v3926 = vpop.f32.mrf.mxu0
        %v3927 = vadd.f32 %v3889, %v3926
        %3928 = vmatmul.f32.gmra.mxu0 %v3602
        %v3929 = vpop.f32.mrf.mxu0
        %v3930 = vadd.f32 %v3892, %v3929
        %3931 = vmatmul.f32.gmra.mxu0 %v3605
        %v3932 = vpop.f32.mrf.mxu0
        %v3933 = vadd.f32 %v3895, %v3932
        %3934 = vmatmul.f32.gmra.mxu0 %v3608
        %v3935 = vpop.f32.mrf.mxu0
        %v3936 = vadd.f32 %v3898, %v3935
        %3937 = vmatmul.f32.gmra.mxu0 %v3611
        %v3938 = vpop.f32.mrf.mxu0
        %v3939 = vadd.f32 %v3901, %v3938
        %3940 = vmatmul.f32.gmra.mxu0 %v3614
        %v3941 = vpop.f32.mrf.mxu0
        %v3942 = vadd.f32 %v3904, %v3941
        %3943 = vmatmul.f32.gmra.mxu0 %v3617
        %v3944 = vpop.f32.mrf.mxu0
        %v3945 = vadd.f32 %v3907, %v3944
        %3946 = vdwg.mxu0
        %3947 = vmatpush.msra.mxu0 %v3521
        %3948 = vmatpush.msra.mxu0 %v3513
        %3949 = vmatpush.msra.mxu0 %v3505
        %3950 = vmatpush.msra.mxu0 %v3497
        %3951 = vmatpush.msra.mxu0 %v3489
        %3952 = vmatpush.msra.mxu0 %v3481
        %3953 = vmatpush.msra.mxu0 %v3473
        %3954 = vmatpush.msra.mxu0 %v3465
        %3955 = vmatpush.msra.mxu0 %v3457
        %3956 = vmatpush.msra.mxu0 %v3449
        %3957 = vmatpush.msra.mxu0 %v3441
        %3958 = vmatpush.msra.mxu0 %v3433
        %3959 = vmatpush.msra.mxu0 %v3425
        %3960 = vmatpush.msra.mxu0 %v3417
        %3961 = vmatpush.msra.mxu0 %v3409
        %3962 = vmatpush.msra.mxu0 %v3401
        %3963 = vmatmul.f32.gmra.mxu0 %v1673
        %v3964 = vpop.f32.mrf.mxu0
        %v3965 = vadd.f32 0.0, %v3964
        %3966 = vmatmul.f32.gmra.mxu0 %v1675
        %v3967 = vpop.f32.mrf.mxu0
        %v3968 = vadd.f32 0.0, %v3967
        %3969 = vmatmul.f32.gmra.mxu0 %v1677
        %v3970 = vpop.f32.mrf.mxu0
        %v3971 = vadd.f32 0.0, %v3970
        %3972 = vmatmul.f32.gmra.mxu0 %v1679
        %v3973 = vpop.f32.mrf.mxu0
        %v3974 = vadd.f32 0.0, %v3973
        %3975 = vmatmul.f32.gmra.mxu0 %v1681
        %v3976 = vpop.f32.mrf.mxu0
        %v3977 = vadd.f32 0.0, %v3976
        %3978 = vmatmul.f32.gmra.mxu0 %v1683
        %v3979 = vpop.f32.mrf.mxu0
        %v3980 = vadd.f32 0.0, %v3979
        %3981 = vmatmul.f32.gmra.mxu0 %v1685
        %v3982 = vpop.f32.mrf.mxu0
        %v3983 = vadd.f32 0.0, %v3982
        %3984 = vdwg.mxu0
        %3985 = vmatpush.msra.mxu0 0.0
        %3986 = vmatpush.msra.mxu0 0.0
        %3987 = vmatpush.msra.mxu0 0.0
        %3988 = vmatpush.msra.mxu0 0.0
        %3989 = vmatpush.msra.mxu0 0.0
        %3990 = vmatpush.msra.mxu0 0.0
        %3991 = vmatpush.msra.mxu0 0.0
        %3992 = vmatpush.msra.mxu0 %v3632
        %3993 = vmatpush.msra.mxu0 %v3585
        %3994 = vmatpush.msra.mxu0 %v3577
        %3995 = vmatpush.msra.mxu0 %v3569
        %3996 = vmatpush.msra.mxu0 %v3561
        %3997 = vmatpush.msra.mxu0 %v3553
        %3998 = vmatpush.msra.mxu0 %v3545
        %3999 = vmatpush.msra.mxu0 %v3537
        %4000 = vmatpush.msra.mxu0 %v3529
        %4001 = vmatmul.f32.gmra.mxu0 %v3599
        %v4002 = vpop.f32.mrf.mxu0
        %v4003 = vadd.f32 %v3965, %v4002
        %4004 = vmatmul.f32.gmra.mxu0 %v3602
        %v4005 = vpop.f32.mrf.mxu0
        %v4006 = vadd.f32 %v3968, %v4005
        %4007 = vmatmul.f32.gmra.mxu0 %v3605
        %v4008 = vpop.f32.mrf.mxu0
        %v4009 = vadd.f32 %v3971, %v4008
        %4010 = vmatmul.f32.gmra.mxu0 %v3608
        %v4011 = vpop.f32.mrf.mxu0
        %v4012 = vadd.f32 %v3974, %v4011
        %4013 = vmatmul.f32.gmra.mxu0 %v3611
        %v4014 = vpop.f32.mrf.mxu0
        %v4015 = vadd.f32 %v3977, %v4014
        %4016 = vmatmul.f32.gmra.mxu0 %v3614
        %v4017 = vpop.f32.mrf.mxu0
        %v4018 = vadd.f32 %v3980, %v4017
        %4019 = vmatmul.f32.gmra.mxu0 %v3617
        %v4020 = vpop.f32.mrf.mxu0
        %v4021 = vadd.f32 %v3983, %v4020
        %4022 = vdwg.mxu0
        %4023 = vmatpush.msra.mxu0 %v3522
        %4024 = vmatpush.msra.mxu0 %v3514
        %4025 = vmatpush.msra.mxu0 %v3506
        %4026 = vmatpush.msra.mxu0 %v3498
        %4027 = vmatpush.msra.mxu0 %v3490
        %4028 = vmatpush.msra.mxu0 %v3482
        %4029 = vmatpush.msra.mxu0 %v3474
        %4030 = vmatpush.msra.mxu0 %v3466
        %4031 = vmatpush.msra.mxu0 %v3458
        %4032 = vmatpush.msra.mxu0 %v3450
        %4033 = vmatpush.msra.mxu0 %v3442
        %4034 = vmatpush.msra.mxu0 %v3434
        %4035 = vmatpush.msra.mxu0 %v3426
        %4036 = vmatpush.msra.mxu0 %v3418
        %4037 = vmatpush.msra.mxu0 %v3410
        %4038 = vmatpush.msra.mxu0 %v3402
        %4039 = vmatmul.f32.gmra.mxu0 %v1673
        %v4040 = vpop.f32.mrf.mxu0
        %v4041 = vadd.f32 0.0, %v4040
        %4042 = vmatmul.f32.gmra.mxu0 %v1675
        %v4043 = vpop.f32.mrf.mxu0
        %v4044 = vadd.f32 0.0, %v4043
        %4045 = vmatmul.f32.gmra.mxu0 %v1677
        %v4046 = vpop.f32.mrf.mxu0
        %v4047 = vadd.f32 0.0, %v4046
        %4048 = vmatmul.f32.gmra.mxu0 %v1679
        %v4049 = vpop.f32.mrf.mxu0
        %v4050 = vadd.f32 0.0, %v4049
        %4051 = vmatmul.f32.gmra.mxu0 %v1681
        %v4052 = vpop.f32.mrf.mxu0
        %v4053 = vadd.f32 0.0, %v4052
        %4054 = vmatmul.f32.gmra.mxu0 %v1683
        %v4055 = vpop.f32.mrf.mxu0
        %v4056 = vadd.f32 0.0, %v4055
        %4057 = vmatmul.f32.gmra.mxu0 %v1685
        %v4058 = vpop.f32.mrf.mxu0
        %v4059 = vadd.f32 0.0, %v4058
        %4060 = vdwg.mxu0
        %4061 = vmatpush.msra.mxu0 0.0
        %4062 = vmatpush.msra.mxu0 0.0
        %4063 = vmatpush.msra.mxu0 0.0
        %4064 = vmatpush.msra.mxu0 0.0
        %4065 = vmatpush.msra.mxu0 0.0
        %4066 = vmatpush.msra.mxu0 0.0
        %4067 = vmatpush.msra.mxu0 0.0
        %4068 = vmatpush.msra.mxu0 %v3635
        %4069 = vmatpush.msra.mxu0 %v3586
        %4070 = vmatpush.msra.mxu0 %v3578
        %4071 = vmatpush.msra.mxu0 %v3570
        %4072 = vmatpush.msra.mxu0 %v3562
        %4073 = vmatpush.msra.mxu0 %v3554
        %4074 = vmatpush.msra.mxu0 %v3546
        %4075 = vmatpush.msra.mxu0 %v3538
        %4076 = vmatpush.msra.mxu0 %v3530
        %4077 = vmatmul.f32.gmra.mxu0 %v3599
        %v4078 = vpop.f32.mrf.mxu0
        %v4079 = vadd.f32 %v4041, %v4078
        %4080 = vmatmul.f32.gmra.mxu0 %v3602
        %v4081 = vpop.f32.mrf.mxu0
        %v4082 = vadd.f32 %v4044, %v4081
        %4083 = vmatmul.f32.gmra.mxu0 %v3605
        %v4084 = vpop.f32.mrf.mxu0
        %v4085 = vadd.f32 %v4047, %v4084
        %4086 = vmatmul.f32.gmra.mxu0 %v3608
        %v4087 = vpop.f32.mrf.mxu0
        %v4088 = vadd.f32 %v4050, %v4087
        %4089 = vmatmul.f32.gmra.mxu0 %v3611
        %v4090 = vpop.f32.mrf.mxu0
        %v4091 = vadd.f32 %v4053, %v4090
        %4092 = vmatmul.f32.gmra.mxu0 %v3614
        %v4093 = vpop.f32.mrf.mxu0
        %v4094 = vadd.f32 %v4056, %v4093
        %4095 = vmatmul.f32.gmra.mxu0 %v3617
        %v4096 = vpop.f32.mrf.mxu0
        %v4097 = vadd.f32 %v4059, %v4096
        %4098 = vdwg.mxu0
        %4099 = vmatpush.msra.mxu0 %v3523
        %4100 = vmatpush.msra.mxu0 %v3515
        %4101 = vmatpush.msra.mxu0 %v3507
        %4102 = vmatpush.msra.mxu0 %v3499
        %4103 = vmatpush.msra.mxu0 %v3491
        %4104 = vmatpush.msra.mxu0 %v3483
        %4105 = vmatpush.msra.mxu0 %v3475
        %4106 = vmatpush.msra.mxu0 %v3467
        %4107 = vmatpush.msra.mxu0 %v3459
        %4108 = vmatpush.msra.mxu0 %v3451
        %4109 = vmatpush.msra.mxu0 %v3443
        %4110 = vmatpush.msra.mxu0 %v3435
        %4111 = vmatpush.msra.mxu0 %v3427
        %4112 = vmatpush.msra.mxu0 %v3419
        %4113 = vmatpush.msra.mxu0 %v3411
        %4114 = vmatpush.msra.mxu0 %v3403
        %4115 = vmatmul.f32.gmra.mxu0 %v1673
        %v4116 = vpop.f32.mrf.mxu0
        %v4117 = vadd.f32 0.0, %v4116
        %4118 = vmatmul.f32.gmra.mxu0 %v1675
        %v4119 = vpop.f32.mrf.mxu0
        %v4120 = vadd.f32 0.0, %v4119
        %4121 = vmatmul.f32.gmra.mxu0 %v1677
        %v4122 = vpop.f32.mrf.mxu0
        %v4123 = vadd.f32 0.0, %v4122
        %4124 = vmatmul.f32.gmra.mxu0 %v1679
        %v4125 = vpop.f32.mrf.mxu0
        %v4126 = vadd.f32 0.0, %v4125
        %4127 = vmatmul.f32.gmra.mxu0 %v1681
        %v4128 = vpop.f32.mrf.mxu0
        %v4129 = vadd.f32 0.0, %v4128
        %4130 = vmatmul.f32.gmra.mxu0 %v1683
        %v4131 = vpop.f32.mrf.mxu0
        %v4132 = vadd.f32 0.0, %v4131
        %4133 = vmatmul.f32.gmra.mxu0 %v1685
        %v4134 = vpop.f32.mrf.mxu0
        %v4135 = vadd.f32 0.0, %v4134
        %4136 = vdwg.mxu0
        %4137 = vmatpush.msra.mxu0 0.0
        %4138 = vmatpush.msra.mxu0 0.0
        %4139 = vmatpush.msra.mxu0 0.0
        %4140 = vmatpush.msra.mxu0 0.0
        %4141 = vmatpush.msra.mxu0 0.0
        %4142 = vmatpush.msra.mxu0 0.0
        %4143 = vmatpush.msra.mxu0 0.0
        %4144 = vmatpush.msra.mxu0 %v3638
        %4145 = vmatpush.msra.mxu0 %v3587
        %4146 = vmatpush.msra.mxu0 %v3579
        %4147 = vmatpush.msra.mxu0 %v3571
        %4148 = vmatpush.msra.mxu0 %v3563
        %4149 = vmatpush.msra.mxu0 %v3555
        %4150 = vmatpush.msra.mxu0 %v3547
        %4151 = vmatpush.msra.mxu0 %v3539
        %4152 = vmatpush.msra.mxu0 %v3531
        %4153 = vmatmul.f32.gmra.mxu0 %v3599
        %v4154 = vpop.f32.mrf.mxu0
        %v4155 = vadd.f32 %v4117, %v4154
        %4156 = vmatmul.f32.gmra.mxu0 %v3602
        %v4157 = vpop.f32.mrf.mxu0
        %v4158 = vadd.f32 %v4120, %v4157
        %4159 = vmatmul.f32.gmra.mxu0 %v3605
        %v4160 = vpop.f32.mrf.mxu0
        %v4161 = vadd.f32 %v4123, %v4160
        %4162 = vmatmul.f32.gmra.mxu0 %v3608
        %v4163 = vpop.f32.mrf.mxu0
        %v4164 = vadd.f32 %v4126, %v4163
        %4165 = vmatmul.f32.gmra.mxu0 %v3611
        %v4166 = vpop.f32.mrf.mxu0
        %v4167 = vadd.f32 %v4129, %v4166
        %4168 = vmatmul.f32.gmra.mxu0 %v3614
        %v4169 = vpop.f32.mrf.mxu0
        %v4170 = vadd.f32 %v4132, %v4169
        %4171 = vmatmul.f32.gmra.mxu0 %v3617
        %v4172 = vpop.f32.mrf.mxu0
        %v4173 = vadd.f32 %v4135, %v4172
        %4174 = vdwg.mxu0
        %4175 = vmatpush.msra.mxu0 %v3524
        %4176 = vmatpush.msra.mxu0 %v3516
        %4177 = vmatpush.msra.mxu0 %v3508
        %4178 = vmatpush.msra.mxu0 %v3500
        %4179 = vmatpush.msra.mxu0 %v3492
        %4180 = vmatpush.msra.mxu0 %v3484
        %4181 = vmatpush.msra.mxu0 %v3476
        %4182 = vmatpush.msra.mxu0 %v3468
        %4183 = vmatpush.msra.mxu0 %v3460
        %4184 = vmatpush.msra.mxu0 %v3452
        %4185 = vmatpush.msra.mxu0 %v3444
        %4186 = vmatpush.msra.mxu0 %v3436
        %4187 = vmatpush.msra.mxu0 %v3428
        %4188 = vmatpush.msra.mxu0 %v3420
        %4189 = vmatpush.msra.mxu0 %v3412
        %4190 = vmatpush.msra.mxu0 %v3404
        %4191 = vmatmul.f32.gmra.mxu0 %v1673
        %v4192 = vpop.f32.mrf.mxu0
        %v4193 = vadd.f32 0.0, %v4192
        %4194 = vmatmul.f32.gmra.mxu0 %v1675
        %v4195 = vpop.f32.mrf.mxu0
        %v4196 = vadd.f32 0.0, %v4195
        %4197 = vmatmul.f32.gmra.mxu0 %v1677
        %v4198 = vpop.f32.mrf.mxu0
        %v4199 = vadd.f32 0.0, %v4198
        %4200 = vmatmul.f32.gmra.mxu0 %v1679
        %v4201 = vpop.f32.mrf.mxu0
        %v4202 = vadd.f32 0.0, %v4201
        %4203 = vmatmul.f32.gmra.mxu0 %v1681
        %v4204 = vpop.f32.mrf.mxu0
        %v4205 = vadd.f32 0.0, %v4204
        %4206 = vmatmul.f32.gmra.mxu0 %v1683
        %v4207 = vpop.f32.mrf.mxu0
        %v4208 = vadd.f32 0.0, %v4207
        %4209 = vmatmul.f32.gmra.mxu0 %v1685
        %v4210 = vpop.f32.mrf.mxu0
        %v4211 = vadd.f32 0.0, %v4210
        %4212 = vdwg.mxu0
        %4213 = vmatpush.msra.mxu0 0.0
        %4214 = vmatpush.msra.mxu0 0.0
        %4215 = vmatpush.msra.mxu0 0.0
        %4216 = vmatpush.msra.mxu0 0.0
        %4217 = vmatpush.msra.mxu0 0.0
        %4218 = vmatpush.msra.mxu0 0.0
        %4219 = vmatpush.msra.mxu0 0.0
        %4220 = vmatpush.msra.mxu0 %v3641
        %4221 = vmatpush.msra.mxu0 %v3588
        %4222 = vmatpush.msra.mxu0 %v3580
        %4223 = vmatpush.msra.mxu0 %v3572
        %4224 = vmatpush.msra.mxu0 %v3564
        %4225 = vmatpush.msra.mxu0 %v3556
        %4226 = vmatpush.msra.mxu0 %v3548
        %4227 = vmatpush.msra.mxu0 %v3540
        %4228 = vmatpush.msra.mxu0 %v3532
        %4229 = vmatmul.f32.gmra.mxu0 %v3599
        %v4230 = vpop.f32.mrf.mxu0
        %v4231 = vadd.f32 %v4193, %v4230
        %4232 = vmatmul.f32.gmra.mxu0 %v3602
        %v4233 = vpop.f32.mrf.mxu0
        %v4234 = vadd.f32 %v4196, %v4233
        %4235 = vmatmul.f32.gmra.mxu0 %v3605
        %v4236 = vpop.f32.mrf.mxu0
        %v4237 = vadd.f32 %v4199, %v4236
        %4238 = vmatmul.f32.gmra.mxu0 %v3608
        %v4239 = vpop.f32.mrf.mxu0
        %v4240 = vadd.f32 %v4202, %v4239
        %4241 = vmatmul.f32.gmra.mxu0 %v3611
        %v4242 = vpop.f32.mrf.mxu0
        %v4243 = vadd.f32 %v4205, %v4242
        %4244 = vmatmul.f32.gmra.mxu0 %v3614
        %v4245 = vpop.f32.mrf.mxu0
        %v4246 = vadd.f32 %v4208, %v4245
        %4247 = vmatmul.f32.gmra.mxu0 %v3617
        %v4248 = vpop.f32.mrf.mxu0
        %v4249 = vadd.f32 %v4211, %v4248
        %4250 = vdwg.mxu0
        %v4251 = vadd.f32 %v2845, %v3699
        %v4252 = vadd.f32 %v2921, %v3775
        %v4253 = vadd.f32 %v2997, %v3851
        %v4254 = vadd.f32 %v3073, %v3927
        %v4255 = vadd.f32 %v3149, %v4003
        %v4256 = vadd.f32 %v3225, %v4079
        %v4257 = vadd.f32 %v3301, %v4155
        %v4258 = vadd.f32 %v3377, %v4231
        %v4259 = vadd.f32 %v2848, %v3702
        %v4260 = vadd.f32 %v2924, %v3778
        %v4261 = vadd.f32 %v3000, %v3854
        %v4262 = vadd.f32 %v3076, %v3930
        %v4263 = vadd.f32 %v3152, %v4006
        %v4264 = vadd.f32 %v3228, %v4082
        %v4265 = vadd.f32 %v3304, %v4158
        %v4266 = vadd.f32 %v3380, %v4234
        %v4267 = vadd.f32 %v2851, %v3705
        %v4268 = vadd.f32 %v2927, %v3781
        %v4269 = vadd.f32 %v3003, %v3857
        %v4270 = vadd.f32 %v3079, %v3933
        %v4271 = vadd.f32 %v3155, %v4009
        %v4272 = vadd.f32 %v3231, %v4085
        %v4273 = vadd.f32 %v3307, %v4161
        %v4274 = vadd.f32 %v3383, %v4237
        %v4275 = vadd.f32 %v2854, %v3708
        %v4276 = vadd.f32 %v2930, %v3784
        %v4277 = vadd.f32 %v3006, %v3860
        %v4278 = vadd.f32 %v3082, %v3936
        %v4279 = vadd.f32 %v3158, %v4012
        %v4280 = vadd.f32 %v3234, %v4088
        %v4281 = vadd.f32 %v3310, %v4164
        %v4282 = vadd.f32 %v3386, %v4240
        %v4283 = vadd.f32 %v2857, %v3711
        %v4284 = vadd.f32 %v2933, %v3787
        %v4285 = vadd.f32 %v3009, %v3863
        %v4286 = vadd.f32 %v3085, %v3939
        %v4287 = vadd.f32 %v3161, %v4015
        %v4288 = vadd.f32 %v3237, %v4091
        %v4289 = vadd.f32 %v3313, %v4167
        %v4290 = vadd.f32 %v3389, %v4243
        %v4291 = vadd.f32 %v2860, %v3714
        %v4292 = vadd.f32 %v2936, %v3790
        %v4293 = vadd.f32 %v3012, %v3866
        %v4294 = vadd.f32 %v3088, %v3942
        %v4295 = vadd.f32 %v3164, %v4018
        %v4296 = vadd.f32 %v3240, %v4094
        %v4297 = vadd.f32 %v3316, %v4170
        %v4298 = vadd.f32 %v3392, %v4246
        %v4299 = vadd.f32 %v2863, %v3717
        %v4300 = vadd.f32 %v2939, %v3793
        %v4301 = vadd.f32 %v3015, %v3869
        %v4302 = vadd.f32 %v3091, %v3945
        %v4303 = vadd.f32 %v3167, %v4021
        %v4304 = vadd.f32 %v3243, %v4097
        %v4305 = vadd.f32 %v3319, %v4173
        %v4306 = vadd.f32 %v3395, %v4249
        %v4307 = vld [vmem:[%s6] sm:$0xff]
        %v4309 = vperm.slane %v4307, 0
        %v4310 = vperm.slane %v4307, 1
        %v4311 = vperm.slane %v4307, 2
        %v4312 = vperm.slane %v4307, 3
        %v4313 = vperm.slane %v4307, 4
        %v4314 = vperm.slane %v4307, 5
        %v4315 = vperm.slane %v4307, 6
        %v4316 = vperm.slane %v4307, 7
        %v4325 = vadd.f32 %v4251, %v4309
        %v4326 = vadd.f32 %v4252, %v4310
        %v4327 = vadd.f32 %v4253, %v4311
        %v4328 = vadd.f32 %v4254, %v4312
        %v4329 = vadd.f32 %v4255, %v4313
        %v4330 = vadd.f32 %v4256, %v4314
        %v4331 = vadd.f32 %v4257, %v4315
        %v4332 = vadd.f32 %v4258, %v4316
        %v4333 = vadd.f32 %v4259, %v4309
        %v4334 = vadd.f32 %v4260, %v4310
        %v4335 = vadd.f32 %v4261, %v4311
        %v4336 = vadd.f32 %v4262, %v4312
        %v4337 = vadd.f32 %v4263, %v4313
        %v4338 = vadd.f32 %v4264, %v4314
        %v4339 = vadd.f32 %v4265, %v4315
        %v4340 = vadd.f32 %v4266, %v4316
        %v4341 = vadd.f32 %v4267, %v4309
        %v4342 = vadd.f32 %v4268, %v4310
        %v4343 = vadd.f32 %v4269, %v4311
        %v4344 = vadd.f32 %v4270, %v4312
        %v4345 = vadd.f32 %v4271, %v4313
        %v4346 = vadd.f32 %v4272, %v4314
        %v4347 = vadd.f32 %v4273, %v4315
        %v4348 = vadd.f32 %v4274, %v4316
        %v4349 = vadd.f32 %v4275, %v4309
        %v4350 = vadd.f32 %v4276, %v4310
        %v4351 = vadd.f32 %v4277, %v4311
        %v4352 = vadd.f32 %v4278, %v4312
        %v4353 = vadd.f32 %v4279, %v4313
        %v4354 = vadd.f32 %v4280, %v4314
        %v4355 = vadd.f32 %v4281, %v4315
        %v4356 = vadd.f32 %v4282, %v4316
        %v4357 = vadd.f32 %v4283, %v4309
        %v4358 = vadd.f32 %v4284, %v4310
        %v4359 = vadd.f32 %v4285, %v4311
        %v4360 = vadd.f32 %v4286, %v4312
        %v4361 = vadd.f32 %v4287, %v4313
        %v4362 = vadd.f32 %v4288, %v4314
        %v4363 = vadd.f32 %v4289, %v4315
        %v4364 = vadd.f32 %v4290, %v4316
        %v4365 = vadd.f32 %v4291, %v4309
        %v4366 = vadd.f32 %v4292, %v4310
        %v4367 = vadd.f32 %v4293, %v4311
        %v4368 = vadd.f32 %v4294, %v4312
        %v4369 = vadd.f32 %v4295, %v4313
        %v4370 = vadd.f32 %v4296, %v4314
        %v4371 = vadd.f32 %v4297, %v4315
        %v4372 = vadd.f32 %v4298, %v4316
        %v4373 = vadd.f32 %v4299, %v4309
        %v4374 = vadd.f32 %v4300, %v4310
        %v4375 = vadd.f32 %v4301, %v4311
        %v4376 = vadd.f32 %v4302, %v4312
        %v4377 = vadd.f32 %v4303, %v4313
        %v4378 = vadd.f32 %v4304, %v4314
        %v4379 = vadd.f32 %v4305, %v4315
        %v4380 = vadd.f32 %v4306, %v4316
        %4381 = vst [vmem:[%s328] sm:$0xff] %v4325
        %4382 = vst [vmem:[%s328 + $0x8] sm:$0xff] %v4326
        %4383 = vst [vmem:[%s328 + $0x10] sm:$0xff] %v4327
        %4384 = vst [vmem:[%s328 + $0x18] sm:$0xff] %v4328
        %4385 = vst [vmem:[%s328 + $0x20] sm:$0xff] %v4329
        %4386 = vst [vmem:[%s328 + $0x28] sm:$0xff] %v4330
        %4387 = vst [vmem:[%s328 + $0x30] sm:$0xff] %v4331
        %4388 = vst [vmem:[%s328 + $0x38] sm:$0xff] %v4332
        %4389 = vst [vmem:[%s328 + $0x40] sm:$0xff] %v4333
        %4390 = vst [vmem:[%s328 + $0x48] sm:$0xff] %v4334
        %4391 = vst [vmem:[%s328 + $0x50] sm:$0xff] %v4335
        %4392 = vst [vmem:[%s328 + $0x58] sm:$0xff] %v4336
        %4393 = vst [vmem:[%s328 + $0x60] sm:$0xff] %v4337
        %4394 = vst [vmem:[%s328 + $0x68] sm:$0xff] %v4338
        %4395 = vst [vmem:[%s328 + $0x70] sm:$0xff] %v4339
        %4396 = vst [vmem:[%s328 + $0x78] sm:$0xff] %v4340
        %4397 = vst [vmem:[%s328 + $0x80] sm:$0xff] %v4341
        %4398 = vst [vmem:[%s328 + $0x88] sm:$0xff] %v4342
        %4399 = vst [vmem:[%s328 + $0x90] sm:$0xff] %v4343
        %4400 = vst [vmem:[%s328 + $0x98] sm:$0xff] %v4344
        %4401 = vst [vmem:[%s328 + $0xa0] sm:$0xff] %v4345
        %4402 = vst [vmem:[%s328 + $0xa8] sm:$0xff] %v4346
        %4403 = vst [vmem:[%s328 + $0xb0] sm:$0xff] %v4347
        %4404 = vst [vmem:[%s328 + $0xb8] sm:$0xff] %v4348
        %4405 = vst [vmem:[%s328 + $0xc0] sm:$0xff] %v4349
        %4406 = vst [vmem:[%s328 + $0xc8] sm:$0xff] %v4350
        %4407 = vst [vmem:[%s328 + $0xd0] sm:$0xff] %v4351
        %4408 = vst [vmem:[%s328 + $0xd8] sm:$0xff] %v4352
        %4409 = vst [vmem:[%s328 + $0xe0] sm:$0xff] %v4353
        %4410 = vst [vmem:[%s328 + $0xe8] sm:$0xff] %v4354
        %4411 = vst [vmem:[%s328 + $0xf0] sm:$0xff] %v4355
        %4412 = vst [vmem:[%s328 + $0xf8] sm:$0xff] %v4356
        %4413 = vst [vmem:[%s328 + $0x100] sm:$0xff] %v4357
        %4414 = vst [vmem:[%s328 + $0x108] sm:$0xff] %v4358
        %4415 = vst [vmem:[%s328 + $0x110] sm:$0xff] %v4359
        %4416 = vst [vmem:[%s328 + $0x118] sm:$0xff] %v4360
        %4417 = vst [vmem:[%s328 + $0x120] sm:$0xff] %v4361
        %4418 = vst [vmem:[%s328 + $0x128] sm:$0xff] %v4362
        %4419 = vst [vmem:[%s328 + $0x130] sm:$0xff] %v4363
        %4420 = vst [vmem:[%s328 + $0x138] sm:$0xff] %v4364
        %4421 = vst [vmem:[%s328 + $0x140] sm:$0xff] %v4365
        %4422 = vst [vmem:[%s328 + $0x148] sm:$0xff] %v4366
        %4423 = vst [vmem:[%s328 + $0x150] sm:$0xff] %v4367
        %4424 = vst [vmem:[%s328 + $0x158] sm:$0xff] %v4368
        %4425 = vst [vmem:[%s328 + $0x160] sm:$0xff] %v4369
        %4426 = vst [vmem:[%s328 + $0x168] sm:$0xff] %v4370
        %4427 = vst [vmem:[%s328 + $0x170] sm:$0xff] %v4371
        %4428 = vst [vmem:[%s328 + $0x178] sm:$0xff] %v4372
        %4429 = vst [vmem:[%s328 + $0x180] sm:$0x3] %v4373
        %4430 = vst [vmem:[%s328 + $0x188] sm:$0x3] %v4374
        %4431 = vst [vmem:[%s328 + $0x190] sm:$0x3] %v4375
        %4432 = vst [vmem:[%s328 + $0x198] sm:$0x3] %v4376
        %4433 = vst [vmem:[%s328 + $0x1a0] sm:$0x3] %v4377
        %4434 = vst [vmem:[%s328 + $0x1a8] sm:$0x3] %v4378
        %4435 = vst [vmem:[%s328 + $0x1b0] sm:$0x3] %v4379
        %4436 = vst [vmem:[%s328 + $0x1b8] sm:$0x3] %v4380
        %p4437 = scmp.lt.s32.totalorder %s20, 1
        %s4438 = scalar_select %p4437, %s20, 1
        %s4439 = smul.addr %s4438, 56
        %s4440 = smul.addr %s4439, 8
        %s4441 = scalar_lea.vmem %s7, %s4440
        // Predicated region
        $region61: #{forward.2} parent=47 // pred_check
          %p4442 = pneg %p190
        $region62: #{forward.2} parent=47 // pred_check_branch
          %4444 = sbr.rel (%p4442) target = $region64
        $region63: #{forward.2} parent=47 // pred_region
          _
        $region64: #{forward.2} parent=47 // pred_fallthru
          _
      $region48: #{forward.2} parent=5 // pred_fallthru
        _
      %p4445 = scmp.le.s32.totalorder 2, %s15
      // Predicated region
      $region65: #{forward.2} parent=5 // pred_check
        %p4446 = pneg %p4445
      $region66: #{forward.2} parent=5 // pred_check_branch
        %4448 = sbr.rel (%p4446) target = $region68
      $region67: #{forward.2} parent=5 // pred_region
        %s4449 = ssub.s32 %s15, 2
        // Predicated region
        $region69: #{forward.2} parent=67 // pred_check
          %p4450 = pneg %p196
        $region70: #{forward.2} parent=67 // pred_check_branch
          %4452 = sbr.rel (%p4450) target = $region72
        $region71: #{forward.2} parent=67 // pred_region
          %p4453 = scmp.lt.s32.totalorder %s21, 1
          %s4454 = scalar_select %p4453, %s21, 1
          %s4455 = smul.addr %s4454, 56
          %s4456 = smul.addr %s4455, 8
          %s4457 = scalar_lea.vmem %s7, %s4456
        $region72: #{forward.2} parent=67 // pred_fallthru
          _
      $region68: #{forward.2} parent=5 // pred_fallthru
        _
    $region6: #{forward.2} parent=1 // loop_footer
      %s19 = sadd.s32 1, %s15
    $region7: #{forward.2} parent=1 // loop_footer_branch
      %14 = sbr.rel target = $region3
    $region8: #{forward.2} parent=1 // loop_exit
      _
    %4458 = vsyncpa [#allocation3], 1
    %s4459 = scalar_lea.sflag [#allocation3], 1
    %4460 = vsyncpa %s4459, 1
    %4461 = vsyncpa [#allocation5], 1

// kernel: forward.3
$region0: #{forward.3}
  #allocation0 [shape = 'u32[]', space=smem, size = 0x4, offset = 0x4, fixed_abs, tag = 'smem constant byte address 0x4 - core index']
  #allocation1 [shape = 'u32[72,128]{1,0:T(1,128)}', space=vmem, size = 0x9000, scoped, tag = 'internal scratch']
  %s0 = inlined_call_operand.vmem [shape: f32[50,2,1024], index: 0, kind: input, shape index: {}]
  %s1 = inlined_call_operand.vmem [shape: f32[256,1024], index: 1, kind: input, shape index: {}]
  %s2 = inlined_call_operand.vmem [shape: f32[50,2,256], index: 2, kind: output, shape index: {}]
  %s3 = sld [smem:[#allocation0]]
  $region25: #{forward.3} parent=0
    _
  %s5 = ssub.s32 1, %s3
  %s6 = scalar_select 0, %s5, %s3
  // Predicated region
  $region2: #{forward.3} parent=0 // pred_check
    _
  $region3: #{forward.3} parent=0 // pred_check_branch
    %8 = sbr.rel (0) target = $region5
  $region4: #{forward.3} parent=0 // pred_region
    _
  $region5: #{forward.3} parent=0 // pred_fallthru
    _
  // Predicated region
  $region6: #{forward.3} parent=0 // pred_check
    _
  $region7: #{forward.3} parent=0 // pred_check_branch
    %10 = sbr.rel (0) target = $region9
  $region8: #{forward.3} parent=0 // pred_region
    _
  $region9: #{forward.3} parent=0 // pred_fallthru
    _
  loop: start=0, step=1, limit=10
  $region10: #{forward.3} parent=0 // loop_pre_header
    _
  $region11: #{forward.3} parent=0 // loop_header
    %s12 = sphi 0, %s16
    %p13 = scmp.ge.s32.totalorder %s12, 10
    %v17 = vphi 0.0, %v3442
    %v18 = vphi 0.0, %v3440
  $region12: #{forward.3} parent=0 // loop_header_branch
    %15 = sbr.rel (%p13) target = $region16
  $region13: #{forward.3} parent=0 // loop_body
    %s19 = smul.u32 %s12, 5
    %s20 = smul.u32 %s19, 8
    %s21 = smul.addr %s20, 2
    %s22 = scalar_lea.vmem %s0, %s21
    %v23 = vld [vmem:[%s22] sm:$0xff]
    %v24 = vld [vmem:[%s22 + $0x8] sm:$0xff]
    %v25 = vld [vmem:[%s1] sm:$0xff]
    %v26 = vld [vmem:[%s1 + $0x8] sm:$0xff]
    %v27 = vld [vmem:[%s1 + $0x10] sm:$0xff]
    %v28 = vld [vmem:[%s1 + $0x18] sm:$0xff]
    %v29 = vld [vmem:[%s1 + $0x20] sm:$0xff]
    %v30 = vld [vmem:[%s1 + $0x28] sm:$0xff]
    %v31 = vld [vmem:[%s1 + $0x30] sm:$0xff]
    %v32 = vld [vmem:[%s1 + $0x38] sm:$0xff]
    %v33 = vld [vmem:[%s1 + $0x40] sm:$0xff]
    %v34 = vld [vmem:[%s1 + $0x48] sm:$0xff]
    %v35 = vld [vmem:[%s1 + $0x50] sm:$0xff]
    %v36 = vld [vmem:[%s1 + $0x58] sm:$0xff]
    %v37 = vld [vmem:[%s1 + $0x60] sm:$0xff]
    %v38 = vld [vmem:[%s1 + $0x68] sm:$0xff]
    %v39 = vld [vmem:[%s1 + $0x70] sm:$0xff]
    %v40 = vld [vmem:[%s1 + $0x78] sm:$0xff]
    %v41 = vld [vmem:[%s1 + $0x80] sm:$0xff]
    %v42 = vld [vmem:[%s1 + $0x88] sm:$0xff]
    %v43 = vld [vmem:[%s1 + $0x90] sm:$0xff]
    %v44 = vld [vmem:[%s1 + $0x98] sm:$0xff]
    %v45 = vld [vmem:[%s1 + $0xa0] sm:$0xff]
    %v46 = vld [vmem:[%s1 + $0xa8] sm:$0xff]
    %v47 = vld [vmem:[%s1 + $0xb0] sm:$0xff]
    %v48 = vld [vmem:[%s1 + $0xb8] sm:$0xff]
    %v49 = vld [vmem:[%s1 + $0xc0] sm:$0xff]
    %v50 = vld [vmem:[%s1 + $0xc8] sm:$0xff]
    %v51 = vld [vmem:[%s1 + $0xd0] sm:$0xff]
    %v52 = vld [vmem:[%s1 + $0xd8] sm:$0xff]
    %v53 = vld [vmem:[%s1 + $0xe0] sm:$0xff]
    %v54 = vld [vmem:[%s1 + $0xe8] sm:$0xff]
    %v55 = vld [vmem:[%s1 + $0xf0] sm:$0xff]
    %v56 = vld [vmem:[%s1 + $0xf8] sm:$0xff]
    %v57 = vld [vmem:[%s1 + $0x100] sm:$0xff]
    %v58 = vld [vmem:[%s1 + $0x108] sm:$0xff]
    %v59 = vld [vmem:[%s1 + $0x110] sm:$0xff]
    %v60 = vld [vmem:[%s1 + $0x118] sm:$0xff]
    %v61 = vld [vmem:[%s1 + $0x120] sm:$0xff]
    %v62 = vld [vmem:[%s1 + $0x128] sm:$0xff]
    %v63 = vld [vmem:[%s1 + $0x130] sm:$0xff]
    %v64 = vld [vmem:[%s1 + $0x138] sm:$0xff]
    %v65 = vld [vmem:[%s1 + $0x140] sm:$0xff]
    %v66 = vld [vmem:[%s1 + $0x148] sm:$0xff]
    %v67 = vld [vmem:[%s1 + $0x150] sm:$0xff]
    %v68 = vld [vmem:[%s1 + $0x158] sm:$0xff]
    %v69 = vld [vmem:[%s1 + $0x160] sm:$0xff]
    %v70 = vld [vmem:[%s1 + $0x168] sm:$0xff]
    %v71 = vld [vmem:[%s1 + $0x170] sm:$0xff]
    %v72 = vld [vmem:[%s1 + $0x178] sm:$0xff]
    %v73 = vld [vmem:[%s1 + $0x180] sm:$0xff]
    %v74 = vld [vmem:[%s1 + $0x188] sm:$0xff]
    %v75 = vld [vmem:[%s1 + $0x190] sm:$0xff]
    %v76 = vld [vmem:[%s1 + $0x198] sm:$0xff]
    %v77 = vld [vmem:[%s1 + $0x1a0] sm:$0xff]
    %v78 = vld [vmem:[%s1 + $0x1a8] sm:$0xff]
    %v79 = vld [vmem:[%s1 + $0x1b0] sm:$0xff]
    %v80 = vld [vmem:[%s1 + $0x1b8] sm:$0xff]
    %v81 = vld [vmem:[%s1 + $0x1c0] sm:$0xff]
    %v82 = vld [vmem:[%s1 + $0x1c8] sm:$0xff]
    %v83 = vld [vmem:[%s1 + $0x1d0] sm:$0xff]
    %v84 = vld [vmem:[%s1 + $0x1d8] sm:$0xff]
    %v85 = vld [vmem:[%s1 + $0x1e0] sm:$0xff]
    %v86 = vld [vmem:[%s1 + $0x1e8] sm:$0xff]
    %v87 = vld [vmem:[%s1 + $0x1f0] sm:$0xff]
    %v88 = vld [vmem:[%s1 + $0x1f8] sm:$0xff]
    %v89 = vld [vmem:[%s1 + $0x200] sm:$0xff]
    %v90 = vld [vmem:[%s1 + $0x208] sm:$0xff]
    %v91 = vld [vmem:[%s1 + $0x210] sm:$0xff]
    %v92 = vld [vmem:[%s1 + $0x218] sm:$0xff]
    %v93 = vld [vmem:[%s1 + $0x220] sm:$0xff]
    %v94 = vld [vmem:[%s1 + $0x228] sm:$0xff]
    %v95 = vld [vmem:[%s1 + $0x230] sm:$0xff]
    %v96 = vld [vmem:[%s1 + $0x238] sm:$0xff]
    %v97 = vld [vmem:[%s1 + $0x240] sm:$0xff]
    %v98 = vld [vmem:[%s1 + $0x248] sm:$0xff]
    %v99 = vld [vmem:[%s1 + $0x250] sm:$0xff]
    %v100 = vld [vmem:[%s1 + $0x258] sm:$0xff]
    %v101 = vld [vmem:[%s1 + $0x260] sm:$0xff]
    %v102 = vld [vmem:[%s1 + $0x268] sm:$0xff]
    %v103 = vld [vmem:[%s1 + $0x270] sm:$0xff]
    %v104 = vld [vmem:[%s1 + $0x278] sm:$0xff]
    %v105 = vld [vmem:[%s1 + $0x280] sm:$0xff]
    %v106 = vld [vmem:[%s1 + $0x288] sm:$0xff]
    %v107 = vld [vmem:[%s1 + $0x290] sm:$0xff]
    %v108 = vld [vmem:[%s1 + $0x298] sm:$0xff]
    %v109 = vld [vmem:[%s1 + $0x2a0] sm:$0xff]
    %v110 = vld [vmem:[%s1 + $0x2a8] sm:$0xff]
    %v111 = vld [vmem:[%s1 + $0x2b0] sm:$0xff]
    %v112 = vld [vmem:[%s1 + $0x2b8] sm:$0xff]
    %v113 = vld [vmem:[%s1 + $0x2c0] sm:$0xff]
    %v114 = vld [vmem:[%s1 + $0x2c8] sm:$0xff]
    %v115 = vld [vmem:[%s1 + $0x2d0] sm:$0xff]
    %v116 = vld [vmem:[%s1 + $0x2d8] sm:$0xff]
    %v117 = vld [vmem:[%s1 + $0x2e0] sm:$0xff]
    %v118 = vld [vmem:[%s1 + $0x2e8] sm:$0xff]
    %v119 = vld [vmem:[%s1 + $0x2f0] sm:$0xff]
    %v120 = vld [vmem:[%s1 + $0x2f8] sm:$0xff]
    %v121 = vld [vmem:[%s1 + $0x300] sm:$0xff]
    %v122 = vld [vmem:[%s1 + $0x308] sm:$0xff]
    %v123 = vld [vmem:[%s1 + $0x310] sm:$0xff]
    %v124 = vld [vmem:[%s1 + $0x318] sm:$0xff]
    %v125 = vld [vmem:[%s1 + $0x320] sm:$0xff]
    %v126 = vld [vmem:[%s1 + $0x328] sm:$0xff]
    %v127 = vld [vmem:[%s1 + $0x330] sm:$0xff]
    %v128 = vld [vmem:[%s1 + $0x338] sm:$0xff]
    %v129 = vld [vmem:[%s1 + $0x340] sm:$0xff]
    %v130 = vld [vmem:[%s1 + $0x348] sm:$0xff]
    %v131 = vld [vmem:[%s1 + $0x350] sm:$0xff]
    %v132 = vld [vmem:[%s1 + $0x358] sm:$0xff]
    %v133 = vld [vmem:[%s1 + $0x360] sm:$0xff]
    %v134 = vld [vmem:[%s1 + $0x368] sm:$0xff]
    %v135 = vld [vmem:[%s1 + $0x370] sm:$0xff]
    %v136 = vld [vmem:[%s1 + $0x378] sm:$0xff]
    %v137 = vld [vmem:[%s1 + $0x380] sm:$0xff]
    %v138 = vld [vmem:[%s1 + $0x388] sm:$0xff]
    %v139 = vld [vmem:[%s1 + $0x390] sm:$0xff]
    %v140 = vld [vmem:[%s1 + $0x398] sm:$0xff]
    %v141 = vld [vmem:[%s1 + $0x3a0] sm:$0xff]
    %v142 = vld [vmem:[%s1 + $0x3a8] sm:$0xff]
    %v143 = vld [vmem:[%s1 + $0x3b0] sm:$0xff]
    %v144 = vld [vmem:[%s1 + $0x3b8] sm:$0xff]
    %v145 = vld [vmem:[%s1 + $0x3c0] sm:$0xff]
    %v146 = vld [vmem:[%s1 + $0x3c8] sm:$0xff]
    %v147 = vld [vmem:[%s1 + $0x3d0] sm:$0xff]
    %v148 = vld [vmem:[%s1 + $0x3d8] sm:$0xff]
    %v149 = vld [vmem:[%s1 + $0x3e0] sm:$0xff]
    %v150 = vld [vmem:[%s1 + $0x3e8] sm:$0xff]
    %v151 = vld [vmem:[%s1 + $0x3f0] sm:$0xff]
    %v152 = vld [vmem:[%s1 + $0x3f8] sm:$0xff]
    %v153 = vld [vmem:[%s1 + $0x400] sm:$0xff]
    %v154 = vld [vmem:[%s1 + $0x408] sm:$0xff]
    %v155 = vld [vmem:[%s1 + $0x410] sm:$0xff]
    %v156 = vld [vmem:[%s1 + $0x418] sm:$0xff]
    %v157 = vld [vmem:[%s1 + $0x420] sm:$0xff]
    %v158 = vld [vmem:[%s1 + $0x428] sm:$0xff]
    %v159 = vld [vmem:[%s1 + $0x430] sm:$0xff]
    %v160 = vld [vmem:[%s1 + $0x438] sm:$0xff]
    %v161 = vld [vmem:[%s1 + $0x440] sm:$0xff]
    %v162 = vld [vmem:[%s1 + $0x448] sm:$0xff]
    %v163 = vld [vmem:[%s1 + $0x450] sm:$0xff]
    %v164 = vld [vmem:[%s1 + $0x458] sm:$0xff]
    %v165 = vld [vmem:[%s1 + $0x460] sm:$0xff]
    %v166 = vld [vmem:[%s1 + $0x468] sm:$0xff]
    %v167 = vld [vmem:[%s1 + $0x470] sm:$0xff]
    %v168 = vld [vmem:[%s1 + $0x478] sm:$0xff]
    %v169 = vld [vmem:[%s1 + $0x480] sm:$0xff]
    %v170 = vld [vmem:[%s1 + $0x488] sm:$0xff]
    %v171 = vld [vmem:[%s1 + $0x490] sm:$0xff]
    %v172 = vld [vmem:[%s1 + $0x498] sm:$0xff]
    %v173 = vld [vmem:[%s1 + $0x4a0] sm:$0xff]
    %v174 = vld [vmem:[%s1 + $0x4a8] sm:$0xff]
    %v175 = vld [vmem:[%s1 + $0x4b0] sm:$0xff]
    %v176 = vld [vmem:[%s1 + $0x4b8] sm:$0xff]
    %v177 = vld [vmem:[%s1 + $0x4c0] sm:$0xff]
    %v178 = vld [vmem:[%s1 + $0x4c8] sm:$0xff]
    %v179 = vld [vmem:[%s1 + $0x4d0] sm:$0xff]
    %v180 = vld [vmem:[%s1 + $0x4d8] sm:$0xff]
    %v181 = vld [vmem:[%s1 + $0x4e0] sm:$0xff]
    %v182 = vld [vmem:[%s1 + $0x4e8] sm:$0xff]
    %v183 = vld [vmem:[%s1 + $0x4f0] sm:$0xff]
    %v184 = vld [vmem:[%s1 + $0x4f8] sm:$0xff]
    %v185 = vld [vmem:[%s1 + $0x500] sm:$0xff]
    %v186 = vld [vmem:[%s1 + $0x508] sm:$0xff]
    %v187 = vld [vmem:[%s1 + $0x510] sm:$0xff]
    %v188 = vld [vmem:[%s1 + $0x518] sm:$0xff]
    %v189 = vld [vmem:[%s1 + $0x520] sm:$0xff]
    %v190 = vld [vmem:[%s1 + $0x528] sm:$0xff]
    %v191 = vld [vmem:[%s1 + $0x530] sm:$0xff]
    %v192 = vld [vmem:[%s1 + $0x538] sm:$0xff]
    %v193 = vld [vmem:[%s1 + $0x540] sm:$0xff]
    %v194 = vld [vmem:[%s1 + $0x548] sm:$0xff]
    %v195 = vld [vmem:[%s1 + $0x550] sm:$0xff]
    %v196 = vld [vmem:[%s1 + $0x558] sm:$0xff]
    %v197 = vld [vmem:[%s1 + $0x560] sm:$0xff]
    %v198 = vld [vmem:[%s1 + $0x568] sm:$0xff]
    %v199 = vld [vmem:[%s1 + $0x570] sm:$0xff]
    %v200 = vld [vmem:[%s1 + $0x578] sm:$0xff]
    %v201 = vld [vmem:[%s1 + $0x580] sm:$0xff]
    %v202 = vld [vmem:[%s1 + $0x588] sm:$0xff]
    %v203 = vld [vmem:[%s1 + $0x590] sm:$0xff]
    %v204 = vld [vmem:[%s1 + $0x598] sm:$0xff]
    %v205 = vld [vmem:[%s1 + $0x5a0] sm:$0xff]
    %v206 = vld [vmem:[%s1 + $0x5a8] sm:$0xff]
    %v207 = vld [vmem:[%s1 + $0x5b0] sm:$0xff]
    %v208 = vld [vmem:[%s1 + $0x5b8] sm:$0xff]
    %v209 = vld [vmem:[%s1 + $0x5c0] sm:$0xff]
    %v210 = vld [vmem:[%s1 + $0x5c8] sm:$0xff]
    %v211 = vld [vmem:[%s1 + $0x5d0] sm:$0xff]
    %v212 = vld [vmem:[%s1 + $0x5d8] sm:$0xff]
    %v213 = vld [vmem:[%s1 + $0x5e0] sm:$0xff]
    %v214 = vld [vmem:[%s1 + $0x5e8] sm:$0xff]
    %v215 = vld [vmem:[%s1 + $0x5f0] sm:$0xff]
    %v216 = vld [vmem:[%s1 + $0x5f8] sm:$0xff]
    %v217 = vld [vmem:[%s1 + $0x600] sm:$0xff]
    %v218 = vld [vmem:[%s1 + $0x608] sm:$0xff]
    %v219 = vld [vmem:[%s1 + $0x610] sm:$0xff]
    %v220 = vld [vmem:[%s1 + $0x618] sm:$0xff]
    %v221 = vld [vmem:[%s1 + $0x620] sm:$0xff]
    %v222 = vld [vmem:[%s1 + $0x628] sm:$0xff]
    %v223 = vld [vmem:[%s1 + $0x630] sm:$0xff]
    %v224 = vld [vmem:[%s1 + $0x638] sm:$0xff]
    %v225 = vld [vmem:[%s1 + $0x640] sm:$0xff]
    %v226 = vld [vmem:[%s1 + $0x648] sm:$0xff]
    %v227 = vld [vmem:[%s1 + $0x650] sm:$0xff]
    %v228 = vld [vmem:[%s1 + $0x658] sm:$0xff]
    %v229 = vld [vmem:[%s1 + $0x660] sm:$0xff]
    %v230 = vld [vmem:[%s1 + $0x668] sm:$0xff]
    %v231 = vld [vmem:[%s1 + $0x670] sm:$0xff]
    %v232 = vld [vmem:[%s1 + $0x678] sm:$0xff]
    %v233 = vld [vmem:[%s1 + $0x680] sm:$0xff]
    %v234 = vld [vmem:[%s1 + $0x688] sm:$0xff]
    %v235 = vld [vmem:[%s1 + $0x690] sm:$0xff]
    %v236 = vld [vmem:[%s1 + $0x698] sm:$0xff]
    %v237 = vld [vmem:[%s1 + $0x6a0] sm:$0xff]
    %v238 = vld [vmem:[%s1 + $0x6a8] sm:$0xff]
    %v239 = vld [vmem:[%s1 + $0x6b0] sm:$0xff]
    %v240 = vld [vmem:[%s1 + $0x6b8] sm:$0xff]
    %v241 = vld [vmem:[%s1 + $0x6c0] sm:$0xff]
    %v242 = vld [vmem:[%s1 + $0x6c8] sm:$0xff]
    %v243 = vld [vmem:[%s1 + $0x6d0] sm:$0xff]
    %v244 = vld [vmem:[%s1 + $0x6d8] sm:$0xff]
    %v245 = vld [vmem:[%s1 + $0x6e0] sm:$0xff]
    %v246 = vld [vmem:[%s1 + $0x6e8] sm:$0xff]
    %v247 = vld [vmem:[%s1 + $0x6f0] sm:$0xff]
    %v248 = vld [vmem:[%s1 + $0x6f8] sm:$0xff]
    %v249 = vld [vmem:[%s1 + $0x700] sm:$0xff]
    %v250 = vld [vmem:[%s1 + $0x708] sm:$0xff]
    %v251 = vld [vmem:[%s1 + $0x710] sm:$0xff]
    %v252 = vld [vmem:[%s1 + $0x718] sm:$0xff]
    %v253 = vld [vmem:[%s1 + $0x720] sm:$0xff]
    %v254 = vld [vmem:[%s1 + $0x728] sm:$0xff]
    %v255 = vld [vmem:[%s1 + $0x730] sm:$0xff]
    %v256 = vld [vmem:[%s1 + $0x738] sm:$0xff]
    %v257 = vld [vmem:[%s1 + $0x740] sm:$0xff]
    %v258 = vld [vmem:[%s1 + $0x748] sm:$0xff]
    %v259 = vld [vmem:[%s1 + $0x750] sm:$0xff]
    %v260 = vld [vmem:[%s1 + $0x758] sm:$0xff]
    %v261 = vld [vmem:[%s1 + $0x760] sm:$0xff]
    %v262 = vld [vmem:[%s1 + $0x768] sm:$0xff]
    %v263 = vld [vmem:[%s1 + $0x770] sm:$0xff]
    %v264 = vld [vmem:[%s1 + $0x778] sm:$0xff]
    %v265 = vld [vmem:[%s1 + $0x780] sm:$0xff]
    %v266 = vld [vmem:[%s1 + $0x788] sm:$0xff]
    %v267 = vld [vmem:[%s1 + $0x790] sm:$0xff]
    %v268 = vld [vmem:[%s1 + $0x798] sm:$0xff]
    %v269 = vld [vmem:[%s1 + $0x7a0] sm:$0xff]
    %v270 = vld [vmem:[%s1 + $0x7a8] sm:$0xff]
    %v271 = vld [vmem:[%s1 + $0x7b0] sm:$0xff]
    %v272 = vld [vmem:[%s1 + $0x7b8] sm:$0xff]
    %v273 = vld [vmem:[%s1 + $0x7c0] sm:$0xff]
    %v274 = vld [vmem:[%s1 + $0x7c8] sm:$0xff]
    %v275 = vld [vmem:[%s1 + $0x7d0] sm:$0xff]
    %v276 = vld [vmem:[%s1 + $0x7d8] sm:$0xff]
    %v277 = vld [vmem:[%s1 + $0x7e0] sm:$0xff]
    %v278 = vld [vmem:[%s1 + $0x7e8] sm:$0xff]
    %v279 = vld [vmem:[%s1 + $0x7f0] sm:$0xff]
    %v280 = vld [vmem:[%s1 + $0x7f8] sm:$0xff]
    %282 = vst [vmem:[#allocation1] ss:$4 sm:$0xff] %v17
    %v283 = vld.sshfl [vmem:[#allocation1] sm:$0xff pattern:$0x73625140]
    %v284 = vld.sshfl [vmem:[#allocation1 + $0x8] sm:$0xff pattern:$0x73625140]
    %287 = vmatpush.msra.mxu0 %v145
    %288 = vmatpush.msra.mxu0 %v137
    %289 = vmatpush.msra.mxu0 %v129
    %290 = vmatpush.msra.mxu0 %v121
    %291 = vmatpush.msra.mxu0 %v113
    %292 = vmatpush.msra.mxu0 %v105
    %293 = vmatpush.msra.mxu0 %v97
    %294 = vmatpush.msra.mxu0 %v89
    %295 = vmatpush.msra.mxu0 %v81
    %296 = vmatpush.msra.mxu0 %v73
    %297 = vmatpush.msra.mxu0 %v65
    %298 = vmatpush.msra.mxu0 %v57
    %299 = vmatpush.msra.mxu0 %v49
    %300 = vmatpush.msra.mxu0 %v41
    %301 = vmatpush.msra.mxu0 %v33
    %302 = vmatpush.msra.mxu0 %v25
    %303 = vmatmul.f32.gmra.mxu0 %v283
    %v304 = vpop.f32.mrf.mxu0
    %v305 = vadd.f32 0.0, %v304
    %306 = vdwg.mxu0
    %307 = vmatpush.msra.mxu0 %v273
    %308 = vmatpush.msra.mxu0 %v265
    %309 = vmatpush.msra.mxu0 %v257
    %310 = vmatpush.msra.mxu0 %v249
    %311 = vmatpush.msra.mxu0 %v241
    %312 = vmatpush.msra.mxu0 %v233
    %313 = vmatpush.msra.mxu0 %v225
    %314 = vmatpush.msra.mxu0 %v217
    %315 = vmatpush.msra.mxu0 %v209
    %316 = vmatpush.msra.mxu0 %v201
    %317 = vmatpush.msra.mxu0 %v193
    %318 = vmatpush.msra.mxu0 %v185
    %319 = vmatpush.msra.mxu0 %v177
    %320 = vmatpush.msra.mxu0 %v169
    %321 = vmatpush.msra.mxu0 %v161
    %322 = vmatpush.msra.mxu0 %v153
    %323 = vmatmul.f32.gmra.mxu0 %v284
    %v324 = vpop.f32.mrf.mxu0
    %v325 = vadd.f32 %v305, %v324
    %326 = vdwg.mxu0
    %327 = vmatpush.msra.mxu0 %v146
    %328 = vmatpush.msra.mxu0 %v138
    %329 = vmatpush.msra.mxu0 %v130
    %330 = vmatpush.msra.mxu0 %v122
    %331 = vmatpush.msra.mxu0 %v114
    %332 = vmatpush.msra.mxu0 %v106
    %333 = vmatpush.msra.mxu0 %v98
    %334 = vmatpush.msra.mxu0 %v90
    %335 = vmatpush.msra.mxu0 %v82
    %336 = vmatpush.msra.mxu0 %v74
    %337 = vmatpush.msra.mxu0 %v66
    %338 = vmatpush.msra.mxu0 %v58
    %339 = vmatpush.msra.mxu0 %v50
    %340 = vmatpush.msra.mxu0 %v42
    %341 = vmatpush.msra.mxu0 %v34
    %342 = vmatpush.msra.mxu0 %v26
    %343 = vmatmul.f32.gmra.mxu0 %v283
    %v344 = vpop.f32.mrf.mxu0
    %v345 = vadd.f32 0.0, %v344
    %346 = vdwg.mxu0
    %347 = vmatpush.msra.mxu0 %v274
    %348 = vmatpush.msra.mxu0 %v266
    %349 = vmatpush.msra.mxu0 %v258
    %350 = vmatpush.msra.mxu0 %v250
    %351 = vmatpush.msra.mxu0 %v242
    %352 = vmatpush.msra.mxu0 %v234
    %353 = vmatpush.msra.mxu0 %v226
    %354 = vmatpush.msra.mxu0 %v218
    %355 = vmatpush.msra.mxu0 %v210
    %356 = vmatpush.msra.mxu0 %v202
    %357 = vmatpush.msra.mxu0 %v194
    %358 = vmatpush.msra.mxu0 %v186
    %359 = vmatpush.msra.mxu0 %v178
    %360 = vmatpush.msra.mxu0 %v170
    %361 = vmatpush.msra.mxu0 %v162
    %362 = vmatpush.msra.mxu0 %v154
    %363 = vmatmul.f32.gmra.mxu0 %v284
    %v364 = vpop.f32.mrf.mxu0
    %v365 = vadd.f32 %v345, %v364
    %366 = vdwg.mxu0
    %367 = vmatpush.msra.mxu0 %v147
    %368 = vmatpush.msra.mxu0 %v139
    %369 = vmatpush.msra.mxu0 %v131
    %370 = vmatpush.msra.mxu0 %v123
    %371 = vmatpush.msra.mxu0 %v115
    %372 = vmatpush.msra.mxu0 %v107
    %373 = vmatpush.msra.mxu0 %v99
    %374 = vmatpush.msra.mxu0 %v91
    %375 = vmatpush.msra.mxu0 %v83
    %376 = vmatpush.msra.mxu0 %v75
    %377 = vmatpush.msra.mxu0 %v67
    %378 = vmatpush.msra.mxu0 %v59
    %379 = vmatpush.msra.mxu0 %v51
    %380 = vmatpush.msra.mxu0 %v43
    %381 = vmatpush.msra.mxu0 %v35
    %382 = vmatpush.msra.mxu0 %v27
    %383 = vmatmul.f32.gmra.mxu0 %v283
    %v384 = vpop.f32.mrf.mxu0
    %v385 = vadd.f32 0.0, %v384
    %386 = vdwg.mxu0
    %387 = vmatpush.msra.mxu0 %v275
    %388 = vmatpush.msra.mxu0 %v267
    %389 = vmatpush.msra.mxu0 %v259
    %390 = vmatpush.msra.mxu0 %v251
    %391 = vmatpush.msra.mxu0 %v243
    %392 = vmatpush.msra.mxu0 %v235
    %393 = vmatpush.msra.mxu0 %v227
    %394 = vmatpush.msra.mxu0 %v219
    %395 = vmatpush.msra.mxu0 %v211
    %396 = vmatpush.msra.mxu0 %v203
    %397 = vmatpush.msra.mxu0 %v195
    %398 = vmatpush.msra.mxu0 %v187
    %399 = vmatpush.msra.mxu0 %v179
    %400 = vmatpush.msra.mxu0 %v171
    %401 = vmatpush.msra.mxu0 %v163
    %402 = vmatpush.msra.mxu0 %v155
    %403 = vmatmul.f32.gmra.mxu0 %v284
    %v404 = vpop.f32.mrf.mxu0
    %v405 = vadd.f32 %v385, %v404
    %406 = vdwg.mxu0
    %407 = vmatpush.msra.mxu0 %v148
    %408 = vmatpush.msra.mxu0 %v140
    %409 = vmatpush.msra.mxu0 %v132
    %410 = vmatpush.msra.mxu0 %v124
    %411 = vmatpush.msra.mxu0 %v116
    %412 = vmatpush.msra.mxu0 %v108
    %413 = vmatpush.msra.mxu0 %v100
    %414 = vmatpush.msra.mxu0 %v92
    %415 = vmatpush.msra.mxu0 %v84
    %416 = vmatpush.msra.mxu0 %v76
    %417 = vmatpush.msra.mxu0 %v68
    %418 = vmatpush.msra.mxu0 %v60
    %419 = vmatpush.msra.mxu0 %v52
    %420 = vmatpush.msra.mxu0 %v44
    %421 = vmatpush.msra.mxu0 %v36
    %422 = vmatpush.msra.mxu0 %v28
    %423 = vmatmul.f32.gmra.mxu0 %v283
    %v424 = vpop.f32.mrf.mxu0
    %v425 = vadd.f32 0.0, %v424
    %426 = vdwg.mxu0
    %427 = vmatpush.msra.mxu0 %v276
    %428 = vmatpush.msra.mxu0 %v268
    %429 = vmatpush.msra.mxu0 %v260
    %430 = vmatpush.msra.mxu0 %v252
    %431 = vmatpush.msra.mxu0 %v244
    %432 = vmatpush.msra.mxu0 %v236
    %433 = vmatpush.msra.mxu0 %v228
    %434 = vmatpush.msra.mxu0 %v220
    %435 = vmatpush.msra.mxu0 %v212
    %436 = vmatpush.msra.mxu0 %v204
    %437 = vmatpush.msra.mxu0 %v196
    %438 = vmatpush.msra.mxu0 %v188
    %439 = vmatpush.msra.mxu0 %v180
    %440 = vmatpush.msra.mxu0 %v172
    %441 = vmatpush.msra.mxu0 %v164
    %442 = vmatpush.msra.mxu0 %v156
    %443 = vmatmul.f32.gmra.mxu0 %v284
    %v444 = vpop.f32.mrf.mxu0
    %v445 = vadd.f32 %v425, %v444
    %446 = vdwg.mxu0
    %447 = vmatpush.msra.mxu0 %v149
    %448 = vmatpush.msra.mxu0 %v141
    %449 = vmatpush.msra.mxu0 %v133
    %450 = vmatpush.msra.mxu0 %v125
    %451 = vmatpush.msra.mxu0 %v117
    %452 = vmatpush.msra.mxu0 %v109
    %453 = vmatpush.msra.mxu0 %v101
    %454 = vmatpush.msra.mxu0 %v93
    %455 = vmatpush.msra.mxu0 %v85
    %456 = vmatpush.msra.mxu0 %v77
    %457 = vmatpush.msra.mxu0 %v69
    %458 = vmatpush.msra.mxu0 %v61
    %459 = vmatpush.msra.mxu0 %v53
    %460 = vmatpush.msra.mxu0 %v45
    %461 = vmatpush.msra.mxu0 %v37
    %462 = vmatpush.msra.mxu0 %v29
    %463 = vmatmul.f32.gmra.mxu0 %v283
    %v464 = vpop.f32.mrf.mxu0
    %v465 = vadd.f32 0.0, %v464
    %466 = vdwg.mxu0
    %467 = vmatpush.msra.mxu0 %v277
    %468 = vmatpush.msra.mxu0 %v269
    %469 = vmatpush.msra.mxu0 %v261
    %470 = vmatpush.msra.mxu0 %v253
    %471 = vmatpush.msra.mxu0 %v245
    %472 = vmatpush.msra.mxu0 %v237
    %473 = vmatpush.msra.mxu0 %v229
    %474 = vmatpush.msra.mxu0 %v221
    %475 = vmatpush.msra.mxu0 %v213
    %476 = vmatpush.msra.mxu0 %v205
    %477 = vmatpush.msra.mxu0 %v197
    %478 = vmatpush.msra.mxu0 %v189
    %479 = vmatpush.msra.mxu0 %v181
    %480 = vmatpush.msra.mxu0 %v173
    %481 = vmatpush.msra.mxu0 %v165
    %482 = vmatpush.msra.mxu0 %v157
    %483 = vmatmul.f32.gmra.mxu0 %v284
    %v484 = vpop.f32.mrf.mxu0
    %v485 = vadd.f32 %v465, %v484
    %486 = vdwg.mxu0
    %487 = vmatpush.msra.mxu0 %v150
    %488 = vmatpush.msra.mxu0 %v142
    %489 = vmatpush.msra.mxu0 %v134
    %490 = vmatpush.msra.mxu0 %v126
    %491 = vmatpush.msra.mxu0 %v118
    %492 = vmatpush.msra.mxu0 %v110
    %493 = vmatpush.msra.mxu0 %v102
    %494 = vmatpush.msra.mxu0 %v94
    %495 = vmatpush.msra.mxu0 %v86
    %496 = vmatpush.msra.mxu0 %v78
    %497 = vmatpush.msra.mxu0 %v70
    %498 = vmatpush.msra.mxu0 %v62
    %499 = vmatpush.msra.mxu0 %v54
    %500 = vmatpush.msra.mxu0 %v46
    %501 = vmatpush.msra.mxu0 %v38
    %502 = vmatpush.msra.mxu0 %v30
    %503 = vmatmul.f32.gmra.mxu0 %v283
    %v504 = vpop.f32.mrf.mxu0
    %v505 = vadd.f32 0.0, %v504
    %506 = vdwg.mxu0
    %507 = vmatpush.msra.mxu0 %v278
    %508 = vmatpush.msra.mxu0 %v270
    %509 = vmatpush.msra.mxu0 %v262
    %510 = vmatpush.msra.mxu0 %v254
    %511 = vmatpush.msra.mxu0 %v246
    %512 = vmatpush.msra.mxu0 %v238
    %513 = vmatpush.msra.mxu0 %v230
    %514 = vmatpush.msra.mxu0 %v222
    %515 = vmatpush.msra.mxu0 %v214
    %516 = vmatpush.msra.mxu0 %v206
    %517 = vmatpush.msra.mxu0 %v198
    %518 = vmatpush.msra.mxu0 %v190
    %519 = vmatpush.msra.mxu0 %v182
    %520 = vmatpush.msra.mxu0 %v174
    %521 = vmatpush.msra.mxu0 %v166
    %522 = vmatpush.msra.mxu0 %v158
    %523 = vmatmul.f32.gmra.mxu0 %v284
    %v524 = vpop.f32.mrf.mxu0
    %v525 = vadd.f32 %v505, %v524
    %526 = vdwg.mxu0
    %527 = vmatpush.msra.mxu0 %v151
    %528 = vmatpush.msra.mxu0 %v143
    %529 = vmatpush.msra.mxu0 %v135
    %530 = vmatpush.msra.mxu0 %v127
    %531 = vmatpush.msra.mxu0 %v119
    %532 = vmatpush.msra.mxu0 %v111
    %533 = vmatpush.msra.mxu0 %v103
    %534 = vmatpush.msra.mxu0 %v95
    %535 = vmatpush.msra.mxu0 %v87
    %536 = vmatpush.msra.mxu0 %v79
    %537 = vmatpush.msra.mxu0 %v71
    %538 = vmatpush.msra.mxu0 %v63
    %539 = vmatpush.msra.mxu0 %v55
    %540 = vmatpush.msra.mxu0 %v47
    %541 = vmatpush.msra.mxu0 %v39
    %542 = vmatpush.msra.mxu0 %v31
    %543 = vmatmul.f32.gmra.mxu0 %v283
    %v544 = vpop.f32.mrf.mxu0
    %v545 = vadd.f32 0.0, %v544
    %546 = vdwg.mxu0
    %547 = vmatpush.msra.mxu0 %v279
    %548 = vmatpush.msra.mxu0 %v271
    %549 = vmatpush.msra.mxu0 %v263
    %550 = vmatpush.msra.mxu0 %v255
    %551 = vmatpush.msra.mxu0 %v247
    %552 = vmatpush.msra.mxu0 %v239
    %553 = vmatpush.msra.mxu0 %v231
    %554 = vmatpush.msra.mxu0 %v223
    %555 = vmatpush.msra.mxu0 %v215
    %556 = vmatpush.msra.mxu0 %v207
    %557 = vmatpush.msra.mxu0 %v199
    %558 = vmatpush.msra.mxu0 %v191
    %559 = vmatpush.msra.mxu0 %v183
    %560 = vmatpush.msra.mxu0 %v175
    %561 = vmatpush.msra.mxu0 %v167
    %562 = vmatpush.msra.mxu0 %v159
    %563 = vmatmul.f32.gmra.mxu0 %v284
    %v564 = vpop.f32.mrf.mxu0
    %v565 = vadd.f32 %v545, %v564
    %566 = vdwg.mxu0
    %567 = vmatpush.msra.mxu0 %v152
    %568 = vmatpush.msra.mxu0 %v144
    %569 = vmatpush.msra.mxu0 %v136
    %570 = vmatpush.msra.mxu0 %v128
    %571 = vmatpush.msra.mxu0 %v120
    %572 = vmatpush.msra.mxu0 %v112
    %573 = vmatpush.msra.mxu0 %v104
    %574 = vmatpush.msra.mxu0 %v96
    %575 = vmatpush.msra.mxu0 %v88
    %576 = vmatpush.msra.mxu0 %v80
    %577 = vmatpush.msra.mxu0 %v72
    %578 = vmatpush.msra.mxu0 %v64
    %579 = vmatpush.msra.mxu0 %v56
    %580 = vmatpush.msra.mxu0 %v48
    %581 = vmatpush.msra.mxu0 %v40
    %582 = vmatpush.msra.mxu0 %v32
    %583 = vmatmul.f32.gmra.mxu0 %v283
    %v584 = vpop.f32.mrf.mxu0
    %v585 = vadd.f32 0.0, %v584
    %586 = vdwg.mxu0
    %587 = vmatpush.msra.mxu0 %v280
    %588 = vmatpush.msra.mxu0 %v272
    %589 = vmatpush.msra.mxu0 %v264
    %590 = vmatpush.msra.mxu0 %v256
    %591 = vmatpush.msra.mxu0 %v248
    %592 = vmatpush.msra.mxu0 %v240
    %593 = vmatpush.msra.mxu0 %v232
    %594 = vmatpush.msra.mxu0 %v224
    %595 = vmatpush.msra.mxu0 %v216
    %596 = vmatpush.msra.mxu0 %v208
    %597 = vmatpush.msra.mxu0 %v200
    %598 = vmatpush.msra.mxu0 %v192
    %599 = vmatpush.msra.mxu0 %v184
    %600 = vmatpush.msra.mxu0 %v176
    %601 = vmatpush.msra.mxu0 %v168
    %602 = vmatpush.msra.mxu0 %v160
    %603 = vmatmul.f32.gmra.mxu0 %v284
    %v604 = vpop.f32.mrf.mxu0
    %v605 = vadd.f32 %v585, %v604
    %606 = vdwg.mxu0
    %v615 = vrot.slane %v365, 6
    %v616 = vrot.slane %v405, 4
    %v617 = vrot.slane %v445, 2
    %v618 = vrot.slane %v525, 6
    %v619 = vrot.slane %v565, 4
    %v620 = vrot.slane %v605, 2
    %vm621 = vcmask 1041408
    %v622 = vsel %vm621, %v325, %v615
    %vm623 = vcmask 1045508
    %v624 = vsel %vm623, %v616, %v617
    %vm625 = vcmask 1043456
    %v626 = vsel %vm625, %v622, %v624
    %v627 = vsel %vm621, %v485, %v618
    %v628 = vsel %vm623, %v619, %v620
    %v629 = vsel %vm625, %v627, %v628
    %v632 = vadd.f32 %v23, %v626
    %v633 = vadd.f32 %v24, %v629
    %v634 = vxor.u32 %v632, 2147483648
    %v635 = vmul.f32 %v634, 1.442695
    %v636 = vpow.pop %v635
    %v637 = vadd.f32 %v636, 1.0
    %v638 = vrcp.pop %v637
    %v639 = vmul.f32 %v637, %v638
    %v640 = vsub.f32 1.0, %v639
    %v641 = vmul.f32 %v638, %v640
    %v642 = vadd.f32 %v638, %v641
    %vm643 = vweird.f32 %v637
    %vm644 = vweird.f32 %v638
    %vm645 = vmor %vm643, %vm644
    %v646 = vsel %vm645, %v638, %v642
    %v647 = vand.u32 2147483647, %v637
    %vm648 = vcmp.eq.f32.partialorder %v647, 8.507059e+37
    %v649 = vand.u32 %v637, 2147483648
    %v650 = vor.u32 1.1754944e-38, %v649
    %v651 = vsel %vm648, %v650, %v646
    %v652 = vmul.f32 1.0, %v651
    %v654 = vrot.slane %v632, 4
    %v656 = vxor.u32 %v654, 2147483648
    %v657 = vmul.f32 %v656, 1.442695
    %v658 = vpow.pop %v657
    %v659 = vadd.f32 %v658, 1.0
    %v660 = vrcp.pop %v659
    %v661 = vmul.f32 %v659, %v660
    %v662 = vsub.f32 1.0, %v661
    %v663 = vmul.f32 %v660, %v662
    %v664 = vadd.f32 %v660, %v663
    %vm665 = vweird.f32 %v659
    %vm666 = vweird.f32 %v660
    %vm667 = vmor %vm665, %vm666
    %v668 = vsel %vm667, %v660, %v664
    %v669 = vand.u32 2147483647, %v659
    %vm670 = vcmp.eq.f32.partialorder %v669, 8.507059e+37
    %v671 = vand.u32 %v659, 2147483648
    %v672 = vor.u32 1.1754944e-38, %v671
    %v673 = vsel %vm670, %v672, %v668
    %v674 = vmul.f32 1.0, %v673
    %v675 = vtanh.pop %v633
    %v677 = vrot.slane %v633, 4
    %v679 = vxor.u32 %v677, 2147483648
    %v680 = vmul.f32 %v679, 1.442695
    %v681 = vpow.pop %v680
    %v682 = vadd.f32 %v681, 1.0
    %v683 = vrcp.pop %v682
    %v684 = vmul.f32 %v682, %v683
    %v685 = vsub.f32 1.0, %v684
    %v686 = vmul.f32 %v683, %v685
    %v687 = vadd.f32 %v683, %v686
    %vm688 = vweird.f32 %v682
    %vm689 = vweird.f32 %v683
    %vm690 = vmor %vm688, %vm689
    %v691 = vsel %vm690, %v683, %v687
    %v692 = vand.u32 2147483647, %v682
    %vm693 = vcmp.eq.f32.partialorder %v692, 8.507059e+37
    %v694 = vand.u32 %v682, 2147483648
    %v695 = vor.u32 1.1754944e-38, %v694
    %v696 = vsel %vm693, %v695, %v691
    %v697 = vmul.f32 1.0, %v696
    %v698 = vmul.f32 %v674, %v18
    %v699 = vmul.f32 %v652, %v675
    %v700 = vadd.f32 %v698, %v699
    %v701 = vtanh.pop %v700
    %v702 = vmul.f32 %v697, %v701
    %s703 = smul.u32 %s19, 2
    %s704 = smul.addr %s703, 2
    %s705 = scalar_lea.vmem %s2, %s704
    %706 = vst [vmem:[%s705] sm:$0xf] %v702
    %s707 = sadd.s32 %s19, 1
    %s708 = smul.u32 %s707, 8
    %s709 = smul.addr %s708, 2
    %s710 = scalar_lea.vmem %s0, %s709
    %v711 = vld [vmem:[%s710] sm:$0xff]
    %v712 = vld [vmem:[%s710 + $0x8] sm:$0xff]
    %v713 = vld [vmem:[%s1] sm:$0xff]
    %v714 = vld [vmem:[%s1 + $0x8] sm:$0xff]
    %v715 = vld [vmem:[%s1 + $0x10] sm:$0xff]
    %v716 = vld [vmem:[%s1 + $0x18] sm:$0xff]
    %v717 = vld [vmem:[%s1 + $0x20] sm:$0xff]
    %v718 = vld [vmem:[%s1 + $0x28] sm:$0xff]
    %v719 = vld [vmem:[%s1 + $0x30] sm:$0xff]
    %v720 = vld [vmem:[%s1 + $0x38] sm:$0xff]
    %v721 = vld [vmem:[%s1 + $0x40] sm:$0xff]
    %v722 = vld [vmem:[%s1 + $0x48] sm:$0xff]
    %v723 = vld [vmem:[%s1 + $0x50] sm:$0xff]
    %v724 = vld [vmem:[%s1 + $0x58] sm:$0xff]
    %v725 = vld [vmem:[%s1 + $0x60] sm:$0xff]
    %v726 = vld [vmem:[%s1 + $0x68] sm:$0xff]
    %v727 = vld [vmem:[%s1 + $0x70] sm:$0xff]
    %v728 = vld [vmem:[%s1 + $0x78] sm:$0xff]
    %v729 = vld [vmem:[%s1 + $0x80] sm:$0xff]
    %v730 = vld [vmem:[%s1 + $0x88] sm:$0xff]
    %v731 = vld [vmem:[%s1 + $0x90] sm:$0xff]
    %v732 = vld [vmem:[%s1 + $0x98] sm:$0xff]
    %v733 = vld [vmem:[%s1 + $0xa0] sm:$0xff]
    %v734 = vld [vmem:[%s1 + $0xa8] sm:$0xff]
    %v735 = vld [vmem:[%s1 + $0xb0] sm:$0xff]
    %v736 = vld [vmem:[%s1 + $0xb8] sm:$0xff]
    %v737 = vld [vmem:[%s1 + $0xc0] sm:$0xff]
    %v738 = vld [vmem:[%s1 + $0xc8] sm:$0xff]
    %v739 = vld [vmem:[%s1 + $0xd0] sm:$0xff]
    %v740 = vld [vmem:[%s1 + $0xd8] sm:$0xff]
    %v741 = vld [vmem:[%s1 + $0xe0] sm:$0xff]
    %v742 = vld [vmem:[%s1 + $0xe8] sm:$0xff]
    %v743 = vld [vmem:[%s1 + $0xf0] sm:$0xff]
    %v744 = vld [vmem:[%s1 + $0xf8] sm:$0xff]
    %v745 = vld [vmem:[%s1 + $0x100] sm:$0xff]
    %v746 = vld [vmem:[%s1 + $0x108] sm:$0xff]
    %v747 = vld [vmem:[%s1 + $0x110] sm:$0xff]
    %v748 = vld [vmem:[%s1 + $0x118] sm:$0xff]
    %v749 = vld [vmem:[%s1 + $0x120] sm:$0xff]
    %v750 = vld [vmem:[%s1 + $0x128] sm:$0xff]
    %v751 = vld [vmem:[%s1 + $0x130] sm:$0xff]
    %v752 = vld [vmem:[%s1 + $0x138] sm:$0xff]
    %v753 = vld [vmem:[%s1 + $0x140] sm:$0xff]
    %v754 = vld [vmem:[%s1 + $0x148] sm:$0xff]
    %v755 = vld [vmem:[%s1 + $0x150] sm:$0xff]
    %v756 = vld [vmem:[%s1 + $0x158] sm:$0xff]
    %v757 = vld [vmem:[%s1 + $0x160] sm:$0xff]
    %v758 = vld [vmem:[%s1 + $0x168] sm:$0xff]
    %v759 = vld [vmem:[%s1 + $0x170] sm:$0xff]
    %v760 = vld [vmem:[%s1 + $0x178] sm:$0xff]
    %v761 = vld [vmem:[%s1 + $0x180] sm:$0xff]
    %v762 = vld [vmem:[%s1 + $0x188] sm:$0xff]
    %v763 = vld [vmem:[%s1 + $0x190] sm:$0xff]
    %v764 = vld [vmem:[%s1 + $0x198] sm:$0xff]
    %v765 = vld [vmem:[%s1 + $0x1a0] sm:$0xff]
    %v766 = vld [vmem:[%s1 + $0x1a8] sm:$0xff]
    %v767 = vld [vmem:[%s1 + $0x1b0] sm:$0xff]
    %v768 = vld [vmem:[%s1 + $0x1b8] sm:$0xff]
    %v769 = vld [vmem:[%s1 + $0x1c0] sm:$0xff]
    %v770 = vld [vmem:[%s1 + $0x1c8] sm:$0xff]
    %v771 = vld [vmem:[%s1 + $0x1d0] sm:$0xff]
    %v772 = vld [vmem:[%s1 + $0x1d8] sm:$0xff]
    %v773 = vld [vmem:[%s1 + $0x1e0] sm:$0xff]
    %v774 = vld [vmem:[%s1 + $0x1e8] sm:$0xff]
    %v775 = vld [vmem:[%s1 + $0x1f0] sm:$0xff]
    %v776 = vld [vmem:[%s1 + $0x1f8] sm:$0xff]
    %v777 = vld [vmem:[%s1 + $0x200] sm:$0xff]
    %v778 = vld [vmem:[%s1 + $0x208] sm:$0xff]
    %v779 = vld [vmem:[%s1 + $0x210] sm:$0xff]
    %v780 = vld [vmem:[%s1 + $0x218] sm:$0xff]
    %v781 = vld [vmem:[%s1 + $0x220] sm:$0xff]
    %v782 = vld [vmem:[%s1 + $0x228] sm:$0xff]
    %v783 = vld [vmem:[%s1 + $0x230] sm:$0xff]
    %v784 = vld [vmem:[%s1 + $0x238] sm:$0xff]
    %v785 = vld [vmem:[%s1 + $0x240] sm:$0xff]
    %v786 = vld [vmem:[%s1 + $0x248] sm:$0xff]
    %v787 = vld [vmem:[%s1 + $0x250] sm:$0xff]
    %v788 = vld [vmem:[%s1 + $0x258] sm:$0xff]
    %v789 = vld [vmem:[%s1 + $0x260] sm:$0xff]
    %v790 = vld [vmem:[%s1 + $0x268] sm:$0xff]
    %v791 = vld [vmem:[%s1 + $0x270] sm:$0xff]
    %v792 = vld [vmem:[%s1 + $0x278] sm:$0xff]
    %v793 = vld [vmem:[%s1 + $0x280] sm:$0xff]
    %v794 = vld [vmem:[%s1 + $0x288] sm:$0xff]
    %v795 = vld [vmem:[%s1 + $0x290] sm:$0xff]
    %v796 = vld [vmem:[%s1 + $0x298] sm:$0xff]
    %v797 = vld [vmem:[%s1 + $0x2a0] sm:$0xff]
    %v798 = vld [vmem:[%s1 + $0x2a8] sm:$0xff]
    %v799 = vld [vmem:[%s1 + $0x2b0] sm:$0xff]
    %v800 = vld [vmem:[%s1 + $0x2b8] sm:$0xff]
    %v801 = vld [vmem:[%s1 + $0x2c0] sm:$0xff]
    %v802 = vld [vmem:[%s1 + $0x2c8] sm:$0xff]
    %v803 = vld [vmem:[%s1 + $0x2d0] sm:$0xff]
    %v804 = vld [vmem:[%s1 + $0x2d8] sm:$0xff]
    %v805 = vld [vmem:[%s1 + $0x2e0] sm:$0xff]
    %v806 = vld [vmem:[%s1 + $0x2e8] sm:$0xff]
    %v807 = vld [vmem:[%s1 + $0x2f0] sm:$0xff]
    %v808 = vld [vmem:[%s1 + $0x2f8] sm:$0xff]
    %v809 = vld [vmem:[%s1 + $0x300] sm:$0xff]
    %v810 = vld [vmem:[%s1 + $0x308] sm:$0xff]
    %v811 = vld [vmem:[%s1 + $0x310] sm:$0xff]
    %v812 = vld [vmem:[%s1 + $0x318] sm:$0xff]
    %v813 = vld [vmem:[%s1 + $0x320] sm:$0xff]
    %v814 = vld [vmem:[%s1 + $0x328] sm:$0xff]
    %v815 = vld [vmem:[%s1 + $0x330] sm:$0xff]
    %v816 = vld [vmem:[%s1 + $0x338] sm:$0xff]
    %v817 = vld [vmem:[%s1 + $0x340] sm:$0xff]
    %v818 = vld [vmem:[%s1 + $0x348] sm:$0xff]
    %v819 = vld [vmem:[%s1 + $0x350] sm:$0xff]
    %v820 = vld [vmem:[%s1 + $0x358] sm:$0xff]
    %v821 = vld [vmem:[%s1 + $0x360] sm:$0xff]
    %v822 = vld [vmem:[%s1 + $0x368] sm:$0xff]
    %v823 = vld [vmem:[%s1 + $0x370] sm:$0xff]
    %v824 = vld [vmem:[%s1 + $0x378] sm:$0xff]
    %v825 = vld [vmem:[%s1 + $0x380] sm:$0xff]
    %v826 = vld [vmem:[%s1 + $0x388] sm:$0xff]
    %v827 = vld [vmem:[%s1 + $0x390] sm:$0xff]
    %v828 = vld [vmem:[%s1 + $0x398] sm:$0xff]
    %v829 = vld [vmem:[%s1 + $0x3a0] sm:$0xff]
    %v830 = vld [vmem:[%s1 + $0x3a8] sm:$0xff]
    %v831 = vld [vmem:[%s1 + $0x3b0] sm:$0xff]
    %v832 = vld [vmem:[%s1 + $0x3b8] sm:$0xff]
    %v833 = vld [vmem:[%s1 + $0x3c0] sm:$0xff]
    %v834 = vld [vmem:[%s1 + $0x3c8] sm:$0xff]
    %v835 = vld [vmem:[%s1 + $0x3d0] sm:$0xff]
    %v836 = vld [vmem:[%s1 + $0x3d8] sm:$0xff]
    %v837 = vld [vmem:[%s1 + $0x3e0] sm:$0xff]
    %v838 = vld [vmem:[%s1 + $0x3e8] sm:$0xff]
    %v839 = vld [vmem:[%s1 + $0x3f0] sm:$0xff]
    %v840 = vld [vmem:[%s1 + $0x3f8] sm:$0xff]
    %v841 = vld [vmem:[%s1 + $0x400] sm:$0xff]
    %v842 = vld [vmem:[%s1 + $0x408] sm:$0xff]
    %v843 = vld [vmem:[%s1 + $0x410] sm:$0xff]
    %v844 = vld [vmem:[%s1 + $0x418] sm:$0xff]
    %v845 = vld [vmem:[%s1 + $0x420] sm:$0xff]
    %v846 = vld [vmem:[%s1 + $0x428] sm:$0xff]
    %v847 = vld [vmem:[%s1 + $0x430] sm:$0xff]
    %v848 = vld [vmem:[%s1 + $0x438] sm:$0xff]
    %v849 = vld [vmem:[%s1 + $0x440] sm:$0xff]
    %v850 = vld [vmem:[%s1 + $0x448] sm:$0xff]
    %v851 = vld [vmem:[%s1 + $0x450] sm:$0xff]
    %v852 = vld [vmem:[%s1 + $0x458] sm:$0xff]
    %v853 = vld [vmem:[%s1 + $0x460] sm:$0xff]
    %v854 = vld [vmem:[%s1 + $0x468] sm:$0xff]
    %v855 = vld [vmem:[%s1 + $0x470] sm:$0xff]
    %v856 = vld [vmem:[%s1 + $0x478] sm:$0xff]
    %v857 = vld [vmem:[%s1 + $0x480] sm:$0xff]
    %v858 = vld [vmem:[%s1 + $0x488] sm:$0xff]
    %v859 = vld [vmem:[%s1 + $0x490] sm:$0xff]
    %v860 = vld [vmem:[%s1 + $0x498] sm:$0xff]
    %v861 = vld [vmem:[%s1 + $0x4a0] sm:$0xff]
    %v862 = vld [vmem:[%s1 + $0x4a8] sm:$0xff]
    %v863 = vld [vmem:[%s1 + $0x4b0] sm:$0xff]
    %v864 = vld [vmem:[%s1 + $0x4b8] sm:$0xff]
    %v865 = vld [vmem:[%s1 + $0x4c0] sm:$0xff]
    %v866 = vld [vmem:[%s1 + $0x4c8] sm:$0xff]
    %v867 = vld [vmem:[%s1 + $0x4d0] sm:$0xff]
    %v868 = vld [vmem:[%s1 + $0x4d8] sm:$0xff]
    %v869 = vld [vmem:[%s1 + $0x4e0] sm:$0xff]
    %v870 = vld [vmem:[%s1 + $0x4e8] sm:$0xff]
    %v871 = vld [vmem:[%s1 + $0x4f0] sm:$0xff]
    %v872 = vld [vmem:[%s1 + $0x4f8] sm:$0xff]
    %v873 = vld [vmem:[%s1 + $0x500] sm:$0xff]
    %v874 = vld [vmem:[%s1 + $0x508] sm:$0xff]
    %v875 = vld [vmem:[%s1 + $0x510] sm:$0xff]
    %v876 = vld [vmem:[%s1 + $0x518] sm:$0xff]
    %v877 = vld [vmem:[%s1 + $0x520] sm:$0xff]
    %v878 = vld [vmem:[%s1 + $0x528] sm:$0xff]
    %v879 = vld [vmem:[%s1 + $0x530] sm:$0xff]
    %v880 = vld [vmem:[%s1 + $0x538] sm:$0xff]
    %v881 = vld [vmem:[%s1 + $0x540] sm:$0xff]
    %v882 = vld [vmem:[%s1 + $0x548] sm:$0xff]
    %v883 = vld [vmem:[%s1 + $0x550] sm:$0xff]
    %v884 = vld [vmem:[%s1 + $0x558] sm:$0xff]
    %v885 = vld [vmem:[%s1 + $0x560] sm:$0xff]
    %v886 = vld [vmem:[%s1 + $0x568] sm:$0xff]
    %v887 = vld [vmem:[%s1 + $0x570] sm:$0xff]
    %v888 = vld [vmem:[%s1 + $0x578] sm:$0xff]
    %v889 = vld [vmem:[%s1 + $0x580] sm:$0xff]
    %v890 = vld [vmem:[%s1 + $0x588] sm:$0xff]
    %v891 = vld [vmem:[%s1 + $0x590] sm:$0xff]
    %v892 = vld [vmem:[%s1 + $0x598] sm:$0xff]
    %v893 = vld [vmem:[%s1 + $0x5a0] sm:$0xff]
    %v894 = vld [vmem:[%s1 + $0x5a8] sm:$0xff]
    %v895 = vld [vmem:[%s1 + $0x5b0] sm:$0xff]
    %v896 = vld [vmem:[%s1 + $0x5b8] sm:$0xff]
    %v897 = vld [vmem:[%s1 + $0x5c0] sm:$0xff]
    %v898 = vld [vmem:[%s1 + $0x5c8] sm:$0xff]
    %v899 = vld [vmem:[%s1 + $0x5d0] sm:$0xff]
    %v900 = vld [vmem:[%s1 + $0x5d8] sm:$0xff]
    %v901 = vld [vmem:[%s1 + $0x5e0] sm:$0xff]
    %v902 = vld [vmem:[%s1 + $0x5e8] sm:$0xff]
    %v903 = vld [vmem:[%s1 + $0x5f0] sm:$0xff]
    %v904 = vld [vmem:[%s1 + $0x5f8] sm:$0xff]
    %v905 = vld [vmem:[%s1 + $0x600] sm:$0xff]
    %v906 = vld [vmem:[%s1 + $0x608] sm:$0xff]
    %v907 = vld [vmem:[%s1 + $0x610] sm:$0xff]
    %v908 = vld [vmem:[%s1 + $0x618] sm:$0xff]
    %v909 = vld [vmem:[%s1 + $0x620] sm:$0xff]
    %v910 = vld [vmem:[%s1 + $0x628] sm:$0xff]
    %v911 = vld [vmem:[%s1 + $0x630] sm:$0xff]
    %v912 = vld [vmem:[%s1 + $0x638] sm:$0xff]
    %v913 = vld [vmem:[%s1 + $0x640] sm:$0xff]
    %v914 = vld [vmem:[%s1 + $0x648] sm:$0xff]
    %v915 = vld [vmem:[%s1 + $0x650] sm:$0xff]
    %v916 = vld [vmem:[%s1 + $0x658] sm:$0xff]
    %v917 = vld [vmem:[%s1 + $0x660] sm:$0xff]
    %v918 = vld [vmem:[%s1 + $0x668] sm:$0xff]
    %v919 = vld [vmem:[%s1 + $0x670] sm:$0xff]
    %v920 = vld [vmem:[%s1 + $0x678] sm:$0xff]
    %v921 = vld [vmem:[%s1 + $0x680] sm:$0xff]
    %v922 = vld [vmem:[%s1 + $0x688] sm:$0xff]
    %v923 = vld [vmem:[%s1 + $0x690] sm:$0xff]
    %v924 = vld [vmem:[%s1 + $0x698] sm:$0xff]
    %v925 = vld [vmem:[%s1 + $0x6a0] sm:$0xff]
    %v926 = vld [vmem:[%s1 + $0x6a8] sm:$0xff]
    %v927 = vld [vmem:[%s1 + $0x6b0] sm:$0xff]
    %v928 = vld [vmem:[%s1 + $0x6b8] sm:$0xff]
    %v929 = vld [vmem:[%s1 + $0x6c0] sm:$0xff]
    %v930 = vld [vmem:[%s1 + $0x6c8] sm:$0xff]
    %v931 = vld [vmem:[%s1 + $0x6d0] sm:$0xff]
    %v932 = vld [vmem:[%s1 + $0x6d8] sm:$0xff]
    %v933 = vld [vmem:[%s1 + $0x6e0] sm:$0xff]
    %v934 = vld [vmem:[%s1 + $0x6e8] sm:$0xff]
    %v935 = vld [vmem:[%s1 + $0x6f0] sm:$0xff]
    %v936 = vld [vmem:[%s1 + $0x6f8] sm:$0xff]
    %v937 = vld [vmem:[%s1 + $0x700] sm:$0xff]
    %v938 = vld [vmem:[%s1 + $0x708] sm:$0xff]
    %v939 = vld [vmem:[%s1 + $0x710] sm:$0xff]
    %v940 = vld [vmem:[%s1 + $0x718] sm:$0xff]
    %v941 = vld [vmem:[%s1 + $0x720] sm:$0xff]
    %v942 = vld [vmem:[%s1 + $0x728] sm:$0xff]
    %v943 = vld [vmem:[%s1 + $0x730] sm:$0xff]
    %v944 = vld [vmem:[%s1 + $0x738] sm:$0xff]
    %v945 = vld [vmem:[%s1 + $0x740] sm:$0xff]
    %v946 = vld [vmem:[%s1 + $0x748] sm:$0xff]
    %v947 = vld [vmem:[%s1 + $0x750] sm:$0xff]
    %v948 = vld [vmem:[%s1 + $0x758] sm:$0xff]
    %v949 = vld [vmem:[%s1 + $0x760] sm:$0xff]
    %v950 = vld [vmem:[%s1 + $0x768] sm:$0xff]
    %v951 = vld [vmem:[%s1 + $0x770] sm:$0xff]
    %v952 = vld [vmem:[%s1 + $0x778] sm:$0xff]
    %v953 = vld [vmem:[%s1 + $0x780] sm:$0xff]
    %v954 = vld [vmem:[%s1 + $0x788] sm:$0xff]
    %v955 = vld [vmem:[%s1 + $0x790] sm:$0xff]
    %v956 = vld [vmem:[%s1 + $0x798] sm:$0xff]
    %v957 = vld [vmem:[%s1 + $0x7a0] sm:$0xff]
    %v958 = vld [vmem:[%s1 + $0x7a8] sm:$0xff]
    %v959 = vld [vmem:[%s1 + $0x7b0] sm:$0xff]
    %v960 = vld [vmem:[%s1 + $0x7b8] sm:$0xff]
    %v961 = vld [vmem:[%s1 + $0x7c0] sm:$0xff]
    %v962 = vld [vmem:[%s1 + $0x7c8] sm:$0xff]
    %v963 = vld [vmem:[%s1 + $0x7d0] sm:$0xff]
    %v964 = vld [vmem:[%s1 + $0x7d8] sm:$0xff]
    %v965 = vld [vmem:[%s1 + $0x7e0] sm:$0xff]
    %v966 = vld [vmem:[%s1 + $0x7e8] sm:$0xff]
    %v967 = vld [vmem:[%s1 + $0x7f0] sm:$0xff]
    %v968 = vld [vmem:[%s1 + $0x7f8] sm:$0xff]
    %970 = vst [vmem:[#allocation1] ss:$4 sm:$0xff] %v702
    %v971 = vld.sshfl [vmem:[#allocation1] sm:$0xff pattern:$0x73625140]
    %v972 = vld.sshfl [vmem:[#allocation1 + $0x8] sm:$0xff pattern:$0x73625140]
    %975 = vmatpush.msra.mxu0 %v833
    %976 = vmatpush.msra.mxu0 %v825
    %977 = vmatpush.msra.mxu0 %v817
    %978 = vmatpush.msra.mxu0 %v809
    %979 = vmatpush.msra.mxu0 %v801
    %980 = vmatpush.msra.mxu0 %v793
    %981 = vmatpush.msra.mxu0 %v785
    %982 = vmatpush.msra.mxu0 %v777
    %983 = vmatpush.msra.mxu0 %v769
    %984 = vmatpush.msra.mxu0 %v761
    %985 = vmatpush.msra.mxu0 %v753
    %986 = vmatpush.msra.mxu0 %v745
    %987 = vmatpush.msra.mxu0 %v737
    %988 = vmatpush.msra.mxu0 %v729
    %989 = vmatpush.msra.mxu0 %v721
    %990 = vmatpush.msra.mxu0 %v713
    %991 = vmatmul.f32.gmra.mxu0 %v971
    %v992 = vpop.f32.mrf.mxu0
    %v993 = vadd.f32 0.0, %v992
    %994 = vdwg.mxu0
    %995 = vmatpush.msra.mxu0 %v961
    %996 = vmatpush.msra.mxu0 %v953
    %997 = vmatpush.msra.mxu0 %v945
    %998 = vmatpush.msra.mxu0 %v937
    %999 = vmatpush.msra.mxu0 %v929
    %1000 = vmatpush.msra.mxu0 %v921
    %1001 = vmatpush.msra.mxu0 %v913
    %1002 = vmatpush.msra.mxu0 %v905
    %1003 = vmatpush.msra.mxu0 %v897
    %1004 = vmatpush.msra.mxu0 %v889
    %1005 = vmatpush.msra.mxu0 %v881
    %1006 = vmatpush.msra.mxu0 %v873
    %1007 = vmatpush.msra.mxu0 %v865
    %1008 = vmatpush.msra.mxu0 %v857
    %1009 = vmatpush.msra.mxu0 %v849
    %1010 = vmatpush.msra.mxu0 %v841
    %1011 = vmatmul.f32.gmra.mxu0 %v972
    %v1012 = vpop.f32.mrf.mxu0
    %v1013 = vadd.f32 %v993, %v1012
    %1014 = vdwg.mxu0
    %1015 = vmatpush.msra.mxu0 %v834
    %1016 = vmatpush.msra.mxu0 %v826
    %1017 = vmatpush.msra.mxu0 %v818
    %1018 = vmatpush.msra.mxu0 %v810
    %1019 = vmatpush.msra.mxu0 %v802
    %1020 = vmatpush.msra.mxu0 %v794
    %1021 = vmatpush.msra.mxu0 %v786
    %1022 = vmatpush.msra.mxu0 %v778
    %1023 = vmatpush.msra.mxu0 %v770
    %1024 = vmatpush.msra.mxu0 %v762
    %1025 = vmatpush.msra.mxu0 %v754
    %1026 = vmatpush.msra.mxu0 %v746
    %1027 = vmatpush.msra.mxu0 %v738
    %1028 = vmatpush.msra.mxu0 %v730
    %1029 = vmatpush.msra.mxu0 %v722
    %1030 = vmatpush.msra.mxu0 %v714
    %1031 = vmatmul.f32.gmra.mxu0 %v971
    %v1032 = vpop.f32.mrf.mxu0
    %v1033 = vadd.f32 0.0, %v1032
    %1034 = vdwg.mxu0
    %1035 = vmatpush.msra.mxu0 %v962
    %1036 = vmatpush.msra.mxu0 %v954
    %1037 = vmatpush.msra.mxu0 %v946
    %1038 = vmatpush.msra.mxu0 %v938
    %1039 = vmatpush.msra.mxu0 %v930
    %1040 = vmatpush.msra.mxu0 %v922
    %1041 = vmatpush.msra.mxu0 %v914
    %1042 = vmatpush.msra.mxu0 %v906
    %1043 = vmatpush.msra.mxu0 %v898
    %1044 = vmatpush.msra.mxu0 %v890
    %1045 = vmatpush.msra.mxu0 %v882
    %1046 = vmatpush.msra.mxu0 %v874
    %1047 = vmatpush.msra.mxu0 %v866
    %1048 = vmatpush.msra.mxu0 %v858
    %1049 = vmatpush.msra.mxu0 %v850
    %1050 = vmatpush.msra.mxu0 %v842
    %1051 = vmatmul.f32.gmra.mxu0 %v972
    %v1052 = vpop.f32.mrf.mxu0
    %v1053 = vadd.f32 %v1033, %v1052
    %1054 = vdwg.mxu0
    %1055 = vmatpush.msra.mxu0 %v835
    %1056 = vmatpush.msra.mxu0 %v827
    %1057 = vmatpush.msra.mxu0 %v819
    %1058 = vmatpush.msra.mxu0 %v811
    %1059 = vmatpush.msra.mxu0 %v803
    %1060 = vmatpush.msra.mxu0 %v795
    %1061 = vmatpush.msra.mxu0 %v787
    %1062 = vmatpush.msra.mxu0 %v779
    %1063 = vmatpush.msra.mxu0 %v771
    %1064 = vmatpush.msra.mxu0 %v763
    %1065 = vmatpush.msra.mxu0 %v755
    %1066 = vmatpush.msra.mxu0 %v747
    %1067 = vmatpush.msra.mxu0 %v739
    %1068 = vmatpush.msra.mxu0 %v731
    %1069 = vmatpush.msra.mxu0 %v723
    %1070 = vmatpush.msra.mxu0 %v715
    %1071 = vmatmul.f32.gmra.mxu0 %v971
    %v1072 = vpop.f32.mrf.mxu0
    %v1073 = vadd.f32 0.0, %v1072
    %1074 = vdwg.mxu0
    %1075 = vmatpush.msra.mxu0 %v963
    %1076 = vmatpush.msra.mxu0 %v955
    %1077 = vmatpush.msra.mxu0 %v947
    %1078 = vmatpush.msra.mxu0 %v939
    %1079 = vmatpush.msra.mxu0 %v931
    %1080 = vmatpush.msra.mxu0 %v923
    %1081 = vmatpush.msra.mxu0 %v915
    %1082 = vmatpush.msra.mxu0 %v907
    %1083 = vmatpush.msra.mxu0 %v899
    %1084 = vmatpush.msra.mxu0 %v891
    %1085 = vmatpush.msra.mxu0 %v883
    %1086 = vmatpush.msra.mxu0 %v875
    %1087 = vmatpush.msra.mxu0 %v867
    %1088 = vmatpush.msra.mxu0 %v859
    %1089 = vmatpush.msra.mxu0 %v851
    %1090 = vmatpush.msra.mxu0 %v843
    %1091 = vmatmul.f32.gmra.mxu0 %v972
    %v1092 = vpop.f32.mrf.mxu0
    %v1093 = vadd.f32 %v1073, %v1092
    %1094 = vdwg.mxu0
    %1095 = vmatpush.msra.mxu0 %v836
    %1096 = vmatpush.msra.mxu0 %v828
    %1097 = vmatpush.msra.mxu0 %v820
    %1098 = vmatpush.msra.mxu0 %v812
    %1099 = vmatpush.msra.mxu0 %v804
    %1100 = vmatpush.msra.mxu0 %v796
    %1101 = vmatpush.msra.mxu0 %v788
    %1102 = vmatpush.msra.mxu0 %v780
    %1103 = vmatpush.msra.mxu0 %v772
    %1104 = vmatpush.msra.mxu0 %v764
    %1105 = vmatpush.msra.mxu0 %v756
    %1106 = vmatpush.msra.mxu0 %v748
    %1107 = vmatpush.msra.mxu0 %v740
    %1108 = vmatpush.msra.mxu0 %v732
    %1109 = vmatpush.msra.mxu0 %v724
    %1110 = vmatpush.msra.mxu0 %v716
    %1111 = vmatmul.f32.gmra.mxu0 %v971
    %v1112 = vpop.f32.mrf.mxu0
    %v1113 = vadd.f32 0.0, %v1112
    %1114 = vdwg.mxu0
    %1115 = vmatpush.msra.mxu0 %v964
    %1116 = vmatpush.msra.mxu0 %v956
    %1117 = vmatpush.msra.mxu0 %v948
    %1118 = vmatpush.msra.mxu0 %v940
    %1119 = vmatpush.msra.mxu0 %v932
    %1120 = vmatpush.msra.mxu0 %v924
    %1121 = vmatpush.msra.mxu0 %v916
    %1122 = vmatpush.msra.mxu0 %v908
    %1123 = vmatpush.msra.mxu0 %v900
    %1124 = vmatpush.msra.mxu0 %v892
    %1125 = vmatpush.msra.mxu0 %v884
    %1126 = vmatpush.msra.mxu0 %v876
    %1127 = vmatpush.msra.mxu0 %v868
    %1128 = vmatpush.msra.mxu0 %v860
    %1129 = vmatpush.msra.mxu0 %v852
    %1130 = vmatpush.msra.mxu0 %v844
    %1131 = vmatmul.f32.gmra.mxu0 %v972
    %v1132 = vpop.f32.mrf.mxu0
    %v1133 = vadd.f32 %v1113, %v1132
    %1134 = vdwg.mxu0
    %1135 = vmatpush.msra.mxu0 %v837
    %1136 = vmatpush.msra.mxu0 %v829
    %1137 = vmatpush.msra.mxu0 %v821
    %1138 = vmatpush.msra.mxu0 %v813
    %1139 = vmatpush.msra.mxu0 %v805
    %1140 = vmatpush.msra.mxu0 %v797
    %1141 = vmatpush.msra.mxu0 %v789
    %1142 = vmatpush.msra.mxu0 %v781
    %1143 = vmatpush.msra.mxu0 %v773
    %1144 = vmatpush.msra.mxu0 %v765
    %1145 = vmatpush.msra.mxu0 %v757
    %1146 = vmatpush.msra.mxu0 %v749
    %1147 = vmatpush.msra.mxu0 %v741
    %1148 = vmatpush.msra.mxu0 %v733
    %1149 = vmatpush.msra.mxu0 %v725
    %1150 = vmatpush.msra.mxu0 %v717
    %1151 = vmatmul.f32.gmra.mxu0 %v971
    %v1152 = vpop.f32.mrf.mxu0
    %v1153 = vadd.f32 0.0, %v1152
    %1154 = vdwg.mxu0
    %1155 = vmatpush.msra.mxu0 %v965
    %1156 = vmatpush.msra.mxu0 %v957
    %1157 = vmatpush.msra.mxu0 %v949
    %1158 = vmatpush.msra.mxu0 %v941
    %1159 = vmatpush.msra.mxu0 %v933
    %1160 = vmatpush.msra.mxu0 %v925
    %1161 = vmatpush.msra.mxu0 %v917
    %1162 = vmatpush.msra.mxu0 %v909
    %1163 = vmatpush.msra.mxu0 %v901
    %1164 = vmatpush.msra.mxu0 %v893
    %1165 = vmatpush.msra.mxu0 %v885
    %1166 = vmatpush.msra.mxu0 %v877
    %1167 = vmatpush.msra.mxu0 %v869
    %1168 = vmatpush.msra.mxu0 %v861
    %1169 = vmatpush.msra.mxu0 %v853
    %1170 = vmatpush.msra.mxu0 %v845
    %1171 = vmatmul.f32.gmra.mxu0 %v972
    %v1172 = vpop.f32.mrf.mxu0
    %v1173 = vadd.f32 %v1153, %v1172
    %1174 = vdwg.mxu0
    %1175 = vmatpush.msra.mxu0 %v838
    %1176 = vmatpush.msra.mxu0 %v830
    %1177 = vmatpush.msra.mxu0 %v822
    %1178 = vmatpush.msra.mxu0 %v814
    %1179 = vmatpush.msra.mxu0 %v806
    %1180 = vmatpush.msra.mxu0 %v798
    %1181 = vmatpush.msra.mxu0 %v790
    %1182 = vmatpush.msra.mxu0 %v782
    %1183 = vmatpush.msra.mxu0 %v774
    %1184 = vmatpush.msra.mxu0 %v766
    %1185 = vmatpush.msra.mxu0 %v758
    %1186 = vmatpush.msra.mxu0 %v750
    %1187 = vmatpush.msra.mxu0 %v742
    %1188 = vmatpush.msra.mxu0 %v734
    %1189 = vmatpush.msra.mxu0 %v726
    %1190 = vmatpush.msra.mxu0 %v718
    %1191 = vmatmul.f32.gmra.mxu0 %v971
    %v1192 = vpop.f32.mrf.mxu0
    %v1193 = vadd.f32 0.0, %v1192
    %1194 = vdwg.mxu0
    %1195 = vmatpush.msra.mxu0 %v966
    %1196 = vmatpush.msra.mxu0 %v958
    %1197 = vmatpush.msra.mxu0 %v950
    %1198 = vmatpush.msra.mxu0 %v942
    %1199 = vmatpush.msra.mxu0 %v934
    %1200 = vmatpush.msra.mxu0 %v926
    %1201 = vmatpush.msra.mxu0 %v918
    %1202 = vmatpush.msra.mxu0 %v910
    %1203 = vmatpush.msra.mxu0 %v902
    %1204 = vmatpush.msra.mxu0 %v894
    %1205 = vmatpush.msra.mxu0 %v886
    %1206 = vmatpush.msra.mxu0 %v878
    %1207 = vmatpush.msra.mxu0 %v870
    %1208 = vmatpush.msra.mxu0 %v862
    %1209 = vmatpush.msra.mxu0 %v854
    %1210 = vmatpush.msra.mxu0 %v846
    %1211 = vmatmul.f32.gmra.mxu0 %v972
    %v1212 = vpop.f32.mrf.mxu0
    %v1213 = vadd.f32 %v1193, %v1212
    %1214 = vdwg.mxu0
    %1215 = vmatpush.msra.mxu0 %v839
    %1216 = vmatpush.msra.mxu0 %v831
    %1217 = vmatpush.msra.mxu0 %v823
    %1218 = vmatpush.msra.mxu0 %v815
    %1219 = vmatpush.msra.mxu0 %v807
    %1220 = vmatpush.msra.mxu0 %v799
    %1221 = vmatpush.msra.mxu0 %v791
    %1222 = vmatpush.msra.mxu0 %v783
    %1223 = vmatpush.msra.mxu0 %v775
    %1224 = vmatpush.msra.mxu0 %v767
    %1225 = vmatpush.msra.mxu0 %v759
    %1226 = vmatpush.msra.mxu0 %v751
    %1227 = vmatpush.msra.mxu0 %v743
    %1228 = vmatpush.msra.mxu0 %v735
    %1229 = vmatpush.msra.mxu0 %v727
    %1230 = vmatpush.msra.mxu0 %v719
    %1231 = vmatmul.f32.gmra.mxu0 %v971
    %v1232 = vpop.f32.mrf.mxu0
    %v1233 = vadd.f32 0.0, %v1232
    %1234 = vdwg.mxu0
    %1235 = vmatpush.msra.mxu0 %v967
    %1236 = vmatpush.msra.mxu0 %v959
    %1237 = vmatpush.msra.mxu0 %v951
    %1238 = vmatpush.msra.mxu0 %v943
    %1239 = vmatpush.msra.mxu0 %v935
    %1240 = vmatpush.msra.mxu0 %v927
    %1241 = vmatpush.msra.mxu0 %v919
    %1242 = vmatpush.msra.mxu0 %v911
    %1243 = vmatpush.msra.mxu0 %v903
    %1244 = vmatpush.msra.mxu0 %v895
    %1245 = vmatpush.msra.mxu0 %v887
    %1246 = vmatpush.msra.mxu0 %v879
    %1247 = vmatpush.msra.mxu0 %v871
    %1248 = vmatpush.msra.mxu0 %v863
    %1249 = vmatpush.msra.mxu0 %v855
    %1250 = vmatpush.msra.mxu0 %v847
    %1251 = vmatmul.f32.gmra.mxu0 %v972
    %v1252 = vpop.f32.mrf.mxu0
    %v1253 = vadd.f32 %v1233, %v1252
    %1254 = vdwg.mxu0
    %1255 = vmatpush.msra.mxu0 %v840
    %1256 = vmatpush.msra.mxu0 %v832
    %1257 = vmatpush.msra.mxu0 %v824
    %1258 = vmatpush.msra.mxu0 %v816
    %1259 = vmatpush.msra.mxu0 %v808
    %1260 = vmatpush.msra.mxu0 %v800
    %1261 = vmatpush.msra.mxu0 %v792
    %1262 = vmatpush.msra.mxu0 %v784
    %1263 = vmatpush.msra.mxu0 %v776
    %1264 = vmatpush.msra.mxu0 %v768
    %1265 = vmatpush.msra.mxu0 %v760
    %1266 = vmatpush.msra.mxu0 %v752
    %1267 = vmatpush.msra.mxu0 %v744
    %1268 = vmatpush.msra.mxu0 %v736
    %1269 = vmatpush.msra.mxu0 %v728
    %1270 = vmatpush.msra.mxu0 %v720
    %1271 = vmatmul.f32.gmra.mxu0 %v971
    %v1272 = vpop.f32.mrf.mxu0
    %v1273 = vadd.f32 0.0, %v1272
    %1274 = vdwg.mxu0
    %1275 = vmatpush.msra.mxu0 %v968
    %1276 = vmatpush.msra.mxu0 %v960
    %1277 = vmatpush.msra.mxu0 %v952
    %1278 = vmatpush.msra.mxu0 %v944
    %1279 = vmatpush.msra.mxu0 %v936
    %1280 = vmatpush.msra.mxu0 %v928
    %1281 = vmatpush.msra.mxu0 %v920
    %1282 = vmatpush.msra.mxu0 %v912
    %1283 = vmatpush.msra.mxu0 %v904
    %1284 = vmatpush.msra.mxu0 %v896
    %1285 = vmatpush.msra.mxu0 %v888
    %1286 = vmatpush.msra.mxu0 %v880
    %1287 = vmatpush.msra.mxu0 %v872
    %1288 = vmatpush.msra.mxu0 %v864
    %1289 = vmatpush.msra.mxu0 %v856
    %1290 = vmatpush.msra.mxu0 %v848
    %1291 = vmatmul.f32.gmra.mxu0 %v972
    %v1292 = vpop.f32.mrf.mxu0
    %v1293 = vadd.f32 %v1273, %v1292
    %1294 = vdwg.mxu0
    %v1303 = vrot.slane %v1053, 6
    %v1304 = vrot.slane %v1093, 4
    %v1305 = vrot.slane %v1133, 2
    %v1306 = vrot.slane %v1213, 6
    %v1307 = vrot.slane %v1253, 4
    %v1308 = vrot.slane %v1293, 2
    %v1309 = vsel %vm621, %v1013, %v1303
    %v1310 = vsel %vm623, %v1304, %v1305
    %v1311 = vsel %vm625, %v1309, %v1310
    %v1312 = vsel %vm621, %v1173, %v1306
    %v1313 = vsel %vm623, %v1307, %v1308
    %v1314 = vsel %vm625, %v1312, %v1313
    %v1317 = vadd.f32 %v711, %v1311
    %v1318 = vadd.f32 %v712, %v1314
    %v1319 = vxor.u32 %v1317, 2147483648
    %v1320 = vmul.f32 %v1319, 1.442695
    %v1321 = vpow.pop %v1320
    %v1322 = vadd.f32 %v1321, 1.0
    %v1323 = vrcp.pop %v1322
    %v1324 = vmul.f32 %v1322, %v1323
    %v1325 = vsub.f32 1.0, %v1324
    %v1326 = vmul.f32 %v1323, %v1325
    %v1327 = vadd.f32 %v1323, %v1326
    %vm1328 = vweird.f32 %v1322
    %vm1329 = vweird.f32 %v1323
    %vm1330 = vmor %vm1328, %vm1329
    %v1331 = vsel %vm1330, %v1323, %v1327
    %v1332 = vand.u32 2147483647, %v1322
    %vm1333 = vcmp.eq.f32.partialorder %v1332, 8.507059e+37
    %v1334 = vand.u32 %v1322, 2147483648
    %v1335 = vor.u32 1.1754944e-38, %v1334
    %v1336 = vsel %vm1333, %v1335, %v1331
    %v1337 = vmul.f32 1.0, %v1336
    %v1339 = vrot.slane %v1317, 4
    %v1341 = vxor.u32 %v1339, 2147483648
    %v1342 = vmul.f32 %v1341, 1.442695
    %v1343 = vpow.pop %v1342
    %v1344 = vadd.f32 %v1343, 1.0
    %v1345 = vrcp.pop %v1344
    %v1346 = vmul.f32 %v1344, %v1345
    %v1347 = vsub.f32 1.0, %v1346
    %v1348 = vmul.f32 %v1345, %v1347
    %v1349 = vadd.f32 %v1345, %v1348
    %vm1350 = vweird.f32 %v1344
    %vm1351 = vweird.f32 %v1345
    %vm1352 = vmor %vm1350, %vm1351
    %v1353 = vsel %vm1352, %v1345, %v1349
    %v1354 = vand.u32 2147483647, %v1344
    %vm1355 = vcmp.eq.f32.partialorder %v1354, 8.507059e+37
    %v1356 = vand.u32 %v1344, 2147483648
    %v1357 = vor.u32 1.1754944e-38, %v1356
    %v1358 = vsel %vm1355, %v1357, %v1353
    %v1359 = vmul.f32 1.0, %v1358
    %v1360 = vtanh.pop %v1318
    %v1362 = vrot.slane %v1318, 4
    %v1364 = vxor.u32 %v1362, 2147483648
    %v1365 = vmul.f32 %v1364, 1.442695
    %v1366 = vpow.pop %v1365
    %v1367 = vadd.f32 %v1366, 1.0
    %v1368 = vrcp.pop %v1367
    %v1369 = vmul.f32 %v1367, %v1368
    %v1370 = vsub.f32 1.0, %v1369
    %v1371 = vmul.f32 %v1368, %v1370
    %v1372 = vadd.f32 %v1368, %v1371
    %vm1373 = vweird.f32 %v1367
    %vm1374 = vweird.f32 %v1368
    %vm1375 = vmor %vm1373, %vm1374
    %v1376 = vsel %vm1375, %v1368, %v1372
    %v1377 = vand.u32 2147483647, %v1367
    %vm1378 = vcmp.eq.f32.partialorder %v1377, 8.507059e+37
    %v1379 = vand.u32 %v1367, 2147483648
    %v1380 = vor.u32 1.1754944e-38, %v1379
    %v1381 = vsel %vm1378, %v1380, %v1376
    %v1382 = vmul.f32 1.0, %v1381
    %v1383 = vmul.f32 %v1359, %v700
    %v1384 = vmul.f32 %v1337, %v1360
    %v1385 = vadd.f32 %v1383, %v1384
    %v1386 = vtanh.pop %v1385
    %v1387 = vmul.f32 %v1382, %v1386
    %s1388 = smul.u32 %s707, 2
    %s1389 = smul.addr %s1388, 2
    %s1390 = scalar_lea.vmem %s2, %s1389
    %1391 = vst [vmem:[%s1390] sm:$0xf] %v1387
    %s1392 = sadd.s32 %s19, 2
    %s1393 = smul.u32 %s1392, 8
    %s1394 = smul.addr %s1393, 2
    %s1395 = scalar_lea.vmem %s0, %s1394
    %v1396 = vld [vmem:[%s1395] sm:$0xff]
    %v1397 = vld [vmem:[%s1395 + $0x8] sm:$0xff]
    %v1398 = vld [vmem:[%s1] sm:$0xff]
    %v1399 = vld [vmem:[%s1 + $0x8] sm:$0xff]
    %v1400 = vld [vmem:[%s1 + $0x10] sm:$0xff]
    %v1401 = vld [vmem:[%s1 + $0x18] sm:$0xff]
    %v1402 = vld [vmem:[%s1 + $0x20] sm:$0xff]
    %v1403 = vld [vmem:[%s1 + $0x28] sm:$0xff]
    %v1404 = vld [vmem:[%s1 + $0x30] sm:$0xff]
    %v1405 = vld [vmem:[%s1 + $0x38] sm:$0xff]
    %v1406 = vld [vmem:[%s1 + $0x40] sm:$0xff]
    %v1407 = vld [vmem:[%s1 + $0x48] sm:$0xff]
    %v1408 = vld [vmem:[%s1 + $0x50] sm:$0xff]
    %v1409 = vld [vmem:[%s1 + $0x58] sm:$0xff]
    %v1410 = vld [vmem:[%s1 + $0x60] sm:$0xff]
    %v1411 = vld [vmem:[%s1 + $0x68] sm:$0xff]
    %v1412 = vld [vmem:[%s1 + $0x70] sm:$0xff]
    %v1413 = vld [vmem:[%s1 + $0x78] sm:$0xff]
    %v1414 = vld [vmem:[%s1 + $0x80] sm:$0xff]
    %v1415 = vld [vmem:[%s1 + $0x88] sm:$0xff]
    %v1416 = vld [vmem:[%s1 + $0x90] sm:$0xff]
    %v1417 = vld [vmem:[%s1 + $0x98] sm:$0xff]
    %v1418 = vld [vmem:[%s1 + $0xa0] sm:$0xff]
    %v1419 = vld [vmem:[%s1 + $0xa8] sm:$0xff]
    %v1420 = vld [vmem:[%s1 + $0xb0] sm:$0xff]
    %v1421 = vld [vmem:[%s1 + $0xb8] sm:$0xff]
    %v1422 = vld [vmem:[%s1 + $0xc0] sm:$0xff]
    %v1423 = vld [vmem:[%s1 + $0xc8] sm:$0xff]
    %v1424 = vld [vmem:[%s1 + $0xd0] sm:$0xff]
    %v1425 = vld [vmem:[%s1 + $0xd8] sm:$0xff]
    %v1426 = vld [vmem:[%s1 + $0xe0] sm:$0xff]
    %v1427 = vld [vmem:[%s1 + $0xe8] sm:$0xff]
    %v1428 = vld [vmem:[%s1 + $0xf0] sm:$0xff]
    %v1429 = vld [vmem:[%s1 + $0xf8] sm:$0xff]
    %v1430 = vld [vmem:[%s1 + $0x100] sm:$0xff]
    %v1431 = vld [vmem:[%s1 + $0x108] sm:$0xff]
    %v1432 = vld [vmem:[%s1 + $0x110] sm:$0xff]
    %v1433 = vld [vmem:[%s1 + $0x118] sm:$0xff]
    %v1434 = vld [vmem:[%s1 + $0x120] sm:$0xff]
    %v1435 = vld [vmem:[%s1 + $0x128] sm:$0xff]
    %v1436 = vld [vmem:[%s1 + $0x130] sm:$0xff]
    %v1437 = vld [vmem:[%s1 + $0x138] sm:$0xff]
    %v1438 = vld [vmem:[%s1 + $0x140] sm:$0xff]
    %v1439 = vld [vmem:[%s1 + $0x148] sm:$0xff]
    %v1440 = vld [vmem:[%s1 + $0x150] sm:$0xff]
    %v1441 = vld [vmem:[%s1 + $0x158] sm:$0xff]
    %v1442 = vld [vmem:[%s1 + $0x160] sm:$0xff]
    %v1443 = vld [vmem:[%s1 + $0x168] sm:$0xff]
    %v1444 = vld [vmem:[%s1 + $0x170] sm:$0xff]
    %v1445 = vld [vmem:[%s1 + $0x178] sm:$0xff]
    %v1446 = vld [vmem:[%s1 + $0x180] sm:$0xff]
    %v1447 = vld [vmem:[%s1 + $0x188] sm:$0xff]
    %v1448 = vld [vmem:[%s1 + $0x190] sm:$0xff]
    %v1449 = vld [vmem:[%s1 + $0x198] sm:$0xff]
    %v1450 = vld [vmem:[%s1 + $0x1a0] sm:$0xff]
    %v1451 = vld [vmem:[%s1 + $0x1a8] sm:$0xff]
    %v1452 = vld [vmem:[%s1 + $0x1b0] sm:$0xff]
    %v1453 = vld [vmem:[%s1 + $0x1b8] sm:$0xff]
    %v1454 = vld [vmem:[%s1 + $0x1c0] sm:$0xff]
    %v1455 = vld [vmem:[%s1 + $0x1c8] sm:$0xff]
    %v1456 = vld [vmem:[%s1 + $0x1d0] sm:$0xff]
    %v1457 = vld [vmem:[%s1 + $0x1d8] sm:$0xff]
    %v1458 = vld [vmem:[%s1 + $0x1e0] sm:$0xff]
    %v1459 = vld [vmem:[%s1 + $0x1e8] sm:$0xff]
    %v1460 = vld [vmem:[%s1 + $0x1f0] sm:$0xff]
    %v1461 = vld [vmem:[%s1 + $0x1f8] sm:$0xff]
    %v1462 = vld [vmem:[%s1 + $0x200] sm:$0xff]
    %v1463 = vld [vmem:[%s1 + $0x208] sm:$0xff]
    %v1464 = vld [vmem:[%s1 + $0x210] sm:$0xff]
    %v1465 = vld [vmem:[%s1 + $0x218] sm:$0xff]
    %v1466 = vld [vmem:[%s1 + $0x220] sm:$0xff]
    %v1467 = vld [vmem:[%s1 + $0x228] sm:$0xff]
    %v1468 = vld [vmem:[%s1 + $0x230] sm:$0xff]
    %v1469 = vld [vmem:[%s1 + $0x238] sm:$0xff]
    %v1470 = vld [vmem:[%s1 + $0x240] sm:$0xff]
    %v1471 = vld [vmem:[%s1 + $0x248] sm:$0xff]
    %v1472 = vld [vmem:[%s1 + $0x250] sm:$0xff]
    %v1473 = vld [vmem:[%s1 + $0x258] sm:$0xff]
    %v1474 = vld [vmem:[%s1 + $0x260] sm:$0xff]
    %v1475 = vld [vmem:[%s1 + $0x268] sm:$0xff]
    %v1476 = vld [vmem:[%s1 + $0x270] sm:$0xff]
    %v1477 = vld [vmem:[%s1 + $0x278] sm:$0xff]
    %v1478 = vld [vmem:[%s1 + $0x280] sm:$0xff]
    %v1479 = vld [vmem:[%s1 + $0x288] sm:$0xff]
    %v1480 = vld [vmem:[%s1 + $0x290] sm:$0xff]
    %v1481 = vld [vmem:[%s1 + $0x298] sm:$0xff]
    %v1482 = vld [vmem:[%s1 + $0x2a0] sm:$0xff]
    %v1483 = vld [vmem:[%s1 + $0x2a8] sm:$0xff]
    %v1484 = vld [vmem:[%s1 + $0x2b0] sm:$0xff]
    %v1485 = vld [vmem:[%s1 + $0x2b8] sm:$0xff]
    %v1486 = vld [vmem:[%s1 + $0x2c0] sm:$0xff]
    %v1487 = vld [vmem:[%s1 + $0x2c8] sm:$0xff]
    %v1488 = vld [vmem:[%s1 + $0x2d0] sm:$0xff]
    %v1489 = vld [vmem:[%s1 + $0x2d8] sm:$0xff]
    %v1490 = vld [vmem:[%s1 + $0x2e0] sm:$0xff]
    %v1491 = vld [vmem:[%s1 + $0x2e8] sm:$0xff]
    %v1492 = vld [vmem:[%s1 + $0x2f0] sm:$0xff]
    %v1493 = vld [vmem:[%s1 + $0x2f8] sm:$0xff]
    %v1494 = vld [vmem:[%s1 + $0x300] sm:$0xff]
    %v1495 = vld [vmem:[%s1 + $0x308] sm:$0xff]
    %v1496 = vld [vmem:[%s1 + $0x310] sm:$0xff]
    %v1497 = vld [vmem:[%s1 + $0x318] sm:$0xff]
    %v1498 = vld [vmem:[%s1 + $0x320] sm:$0xff]
    %v1499 = vld [vmem:[%s1 + $0x328] sm:$0xff]
    %v1500 = vld [vmem:[%s1 + $0x330] sm:$0xff]
    %v1501 = vld [vmem:[%s1 + $0x338] sm:$0xff]
    %v1502 = vld [vmem:[%s1 + $0x340] sm:$0xff]
    %v1503 = vld [vmem:[%s1 + $0x348] sm:$0xff]
    %v1504 = vld [vmem:[%s1 + $0x350] sm:$0xff]
    %v1505 = vld [vmem:[%s1 + $0x358] sm:$0xff]
    %v1506 = vld [vmem:[%s1 + $0x360] sm:$0xff]
    %v1507 = vld [vmem:[%s1 + $0x368] sm:$0xff]
    %v1508 = vld [vmem:[%s1 + $0x370] sm:$0xff]
    %v1509 = vld [vmem:[%s1 + $0x378] sm:$0xff]
    %v1510 = vld [vmem:[%s1 + $0x380] sm:$0xff]
    %v1511 = vld [vmem:[%s1 + $0x388] sm:$0xff]
    %v1512 = vld [vmem:[%s1 + $0x390] sm:$0xff]
    %v1513 = vld [vmem:[%s1 + $0x398] sm:$0xff]
    %v1514 = vld [vmem:[%s1 + $0x3a0] sm:$0xff]
    %v1515 = vld [vmem:[%s1 + $0x3a8] sm:$0xff]
    %v1516 = vld [vmem:[%s1 + $0x3b0] sm:$0xff]
    %v1517 = vld [vmem:[%s1 + $0x3b8] sm:$0xff]
    %v1518 = vld [vmem:[%s1 + $0x3c0] sm:$0xff]
    %v1519 = vld [vmem:[%s1 + $0x3c8] sm:$0xff]
    %v1520 = vld [vmem:[%s1 + $0x3d0] sm:$0xff]
    %v1521 = vld [vmem:[%s1 + $0x3d8] sm:$0xff]
    %v1522 = vld [vmem:[%s1 + $0x3e0] sm:$0xff]
    %v1523 = vld [vmem:[%s1 + $0x3e8] sm:$0xff]
    %v1524 = vld [vmem:[%s1 + $0x3f0] sm:$0xff]
    %v1525 = vld [vmem:[%s1 + $0x3f8] sm:$0xff]
    %v1526 = vld [vmem:[%s1 + $0x400] sm:$0xff]
    %v1527 = vld [vmem:[%s1 + $0x408] sm:$0xff]
    %v1528 = vld [vmem:[%s1 + $0x410] sm:$0xff]
    %v1529 = vld [vmem:[%s1 + $0x418] sm:$0xff]
    %v1530 = vld [vmem:[%s1 + $0x420] sm:$0xff]
    %v1531 = vld [vmem:[%s1 + $0x428] sm:$0xff]
    %v1532 = vld [vmem:[%s1 + $0x430] sm:$0xff]
    %v1533 = vld [vmem:[%s1 + $0x438] sm:$0xff]
    %v1534 = vld [vmem:[%s1 + $0x440] sm:$0xff]
    %v1535 = vld [vmem:[%s1 + $0x448] sm:$0xff]
    %v1536 = vld [vmem:[%s1 + $0x450] sm:$0xff]
    %v1537 = vld [vmem:[%s1 + $0x458] sm:$0xff]
    %v1538 = vld [vmem:[%s1 + $0x460] sm:$0xff]
    %v1539 = vld [vmem:[%s1 + $0x468] sm:$0xff]
    %v1540 = vld [vmem:[%s1 + $0x470] sm:$0xff]
    %v1541 = vld [vmem:[%s1 + $0x478] sm:$0xff]
    %v1542 = vld [vmem:[%s1 + $0x480] sm:$0xff]
    %v1543 = vld [vmem:[%s1 + $0x488] sm:$0xff]
    %v1544 = vld [vmem:[%s1 + $0x490] sm:$0xff]
    %v1545 = vld [vmem:[%s1 + $0x498] sm:$0xff]
    %v1546 = vld [vmem:[%s1 + $0x4a0] sm:$0xff]
    %v1547 = vld [vmem:[%s1 + $0x4a8] sm:$0xff]
    %v1548 = vld [vmem:[%s1 + $0x4b0] sm:$0xff]
    %v1549 = vld [vmem:[%s1 + $0x4b8] sm:$0xff]
    %v1550 = vld [vmem:[%s1 + $0x4c0] sm:$0xff]
    %v1551 = vld [vmem:[%s1 + $0x4c8] sm:$0xff]
    %v1552 = vld [vmem:[%s1 + $0x4d0] sm:$0xff]
    %v1553 = vld [vmem:[%s1 + $0x4d8] sm:$0xff]
    %v1554 = vld [vmem:[%s1 + $0x4e0] sm:$0xff]
    %v1555 = vld [vmem:[%s1 + $0x4e8] sm:$0xff]
    %v1556 = vld [vmem:[%s1 + $0x4f0] sm:$0xff]
    %v1557 = vld [vmem:[%s1 + $0x4f8] sm:$0xff]
    %v1558 = vld [vmem:[%s1 + $0x500] sm:$0xff]
    %v1559 = vld [vmem:[%s1 + $0x508] sm:$0xff]
    %v1560 = vld [vmem:[%s1 + $0x510] sm:$0xff]
    %v1561 = vld [vmem:[%s1 + $0x518] sm:$0xff]
    %v1562 = vld [vmem:[%s1 + $0x520] sm:$0xff]
    %v1563 = vld [vmem:[%s1 + $0x528] sm:$0xff]
    %v1564 = vld [vmem:[%s1 + $0x530] sm:$0xff]
    %v1565 = vld [vmem:[%s1 + $0x538] sm:$0xff]
    %v1566 = vld [vmem:[%s1 + $0x540] sm:$0xff]
    %v1567 = vld [vmem:[%s1 + $0x548] sm:$0xff]
    %v1568 = vld [vmem:[%s1 + $0x550] sm:$0xff]
    %v1569 = vld [vmem:[%s1 + $0x558] sm:$0xff]
    %v1570 = vld [vmem:[%s1 + $0x560] sm:$0xff]
    %v1571 = vld [vmem:[%s1 + $0x568] sm:$0xff]
    %v1572 = vld [vmem:[%s1 + $0x570] sm:$0xff]
    %v1573 = vld [vmem:[%s1 + $0x578] sm:$0xff]
    %v1574 = vld [vmem:[%s1 + $0x580] sm:$0xff]
    %v1575 = vld [vmem:[%s1 + $0x588] sm:$0xff]
    %v1576 = vld [vmem:[%s1 + $0x590] sm:$0xff]
    %v1577 = vld [vmem:[%s1 + $0x598] sm:$0xff]
    %v1578 = vld [vmem:[%s1 + $0x5a0] sm:$0xff]
    %v1579 = vld [vmem:[%s1 + $0x5a8] sm:$0xff]
    %v1580 = vld [vmem:[%s1 + $0x5b0] sm:$0xff]
    %v1581 = vld [vmem:[%s1 + $0x5b8] sm:$0xff]
    %v1582 = vld [vmem:[%s1 + $0x5c0] sm:$0xff]
    %v1583 = vld [vmem:[%s1 + $0x5c8] sm:$0xff]
    %v1584 = vld [vmem:[%s1 + $0x5d0] sm:$0xff]
    %v1585 = vld [vmem:[%s1 + $0x5d8] sm:$0xff]
    %v1586 = vld [vmem:[%s1 + $0x5e0] sm:$0xff]
    %v1587 = vld [vmem:[%s1 + $0x5e8] sm:$0xff]
    %v1588 = vld [vmem:[%s1 + $0x5f0] sm:$0xff]
    %v1589 = vld [vmem:[%s1 + $0x5f8] sm:$0xff]
    %v1590 = vld [vmem:[%s1 + $0x600] sm:$0xff]
    %v1591 = vld [vmem:[%s1 + $0x608] sm:$0xff]
    %v1592 = vld [vmem:[%s1 + $0x610] sm:$0xff]
    %v1593 = vld [vmem:[%s1 + $0x618] sm:$0xff]
    %v1594 = vld [vmem:[%s1 + $0x620] sm:$0xff]
    %v1595 = vld [vmem:[%s1 + $0x628] sm:$0xff]
    %v1596 = vld [vmem:[%s1 + $0x630] sm:$0xff]
    %v1597 = vld [vmem:[%s1 + $0x638] sm:$0xff]
    %v1598 = vld [vmem:[%s1 + $0x640] sm:$0xff]
    %v1599 = vld [vmem:[%s1 + $0x648] sm:$0xff]
    %v1600 = vld [vmem:[%s1 + $0x650] sm:$0xff]
    %v1601 = vld [vmem:[%s1 + $0x658] sm:$0xff]
    %v1602 = vld [vmem:[%s1 + $0x660] sm:$0xff]
    %v1603 = vld [vmem:[%s1 + $0x668] sm:$0xff]
    %v1604 = vld [vmem:[%s1 + $0x670] sm:$0xff]
    %v1605 = vld [vmem:[%s1 + $0x678] sm:$0xff]
    %v1606 = vld [vmem:[%s1 + $0x680] sm:$0xff]
    %v1607 = vld [vmem:[%s1 + $0x688] sm:$0xff]
    %v1608 = vld [vmem:[%s1 + $0x690] sm:$0xff]
    %v1609 = vld [vmem:[%s1 + $0x698] sm:$0xff]
    %v1610 = vld [vmem:[%s1 + $0x6a0] sm:$0xff]
    %v1611 = vld [vmem:[%s1 + $0x6a8] sm:$0xff]
    %v1612 = vld [vmem:[%s1 + $0x6b0] sm:$0xff]
    %v1613 = vld [vmem:[%s1 + $0x6b8] sm:$0xff]
    %v1614 = vld [vmem:[%s1 + $0x6c0] sm:$0xff]
    %v1615 = vld [vmem:[%s1 + $0x6c8] sm:$0xff]
    %v1616 = vld [vmem:[%s1 + $0x6d0] sm:$0xff]
    %v1617 = vld [vmem:[%s1 + $0x6d8] sm:$0xff]
    %v1618 = vld [vmem:[%s1 + $0x6e0] sm:$0xff]
    %v1619 = vld [vmem:[%s1 + $0x6e8] sm:$0xff]
    %v1620 = vld [vmem:[%s1 + $0x6f0] sm:$0xff]
    %v1621 = vld [vmem:[%s1 + $0x6f8] sm:$0xff]
    %v1622 = vld [vmem:[%s1 + $0x700] sm:$0xff]
    %v1623 = vld [vmem:[%s1 + $0x708] sm:$0xff]
    %v1624 = vld [vmem:[%s1 + $0x710] sm:$0xff]
    %v1625 = vld [vmem:[%s1 + $0x718] sm:$0xff]
    %v1626 = vld [vmem:[%s1 + $0x720] sm:$0xff]
    %v1627 = vld [vmem:[%s1 + $0x728] sm:$0xff]
    %v1628 = vld [vmem:[%s1 + $0x730] sm:$0xff]
    %v1629 = vld [vmem:[%s1 + $0x738] sm:$0xff]
    %v1630 = vld [vmem:[%s1 + $0x740] sm:$0xff]
    %v1631 = vld [vmem:[%s1 + $0x748] sm:$0xff]
    %v1632 = vld [vmem:[%s1 + $0x750] sm:$0xff]
    %v1633 = vld [vmem:[%s1 + $0x758] sm:$0xff]
    %v1634 = vld [vmem:[%s1 + $0x760] sm:$0xff]
    %v1635 = vld [vmem:[%s1 + $0x768] sm:$0xff]
    %v1636 = vld [vmem:[%s1 + $0x770] sm:$0xff]
    %v1637 = vld [vmem:[%s1 + $0x778] sm:$0xff]
    %v1638 = vld [vmem:[%s1 + $0x780] sm:$0xff]
    %v1639 = vld [vmem:[%s1 + $0x788] sm:$0xff]
    %v1640 = vld [vmem:[%s1 + $0x790] sm:$0xff]
    %v1641 = vld [vmem:[%s1 + $0x798] sm:$0xff]
    %v1642 = vld [vmem:[%s1 + $0x7a0] sm:$0xff]
    %v1643 = vld [vmem:[%s1 + $0x7a8] sm:$0xff]
    %v1644 = vld [vmem:[%s1 + $0x7b0] sm:$0xff]
    %v1645 = vld [vmem:[%s1 + $0x7b8] sm:$0xff]
    %v1646 = vld [vmem:[%s1 + $0x7c0] sm:$0xff]
    %v1647 = vld [vmem:[%s1 + $0x7c8] sm:$0xff]
    %v1648 = vld [vmem:[%s1 + $0x7d0] sm:$0xff]
    %v1649 = vld [vmem:[%s1 + $0x7d8] sm:$0xff]
    %v1650 = vld [vmem:[%s1 + $0x7e0] sm:$0xff]
    %v1651 = vld [vmem:[%s1 + $0x7e8] sm:$0xff]
    %v1652 = vld [vmem:[%s1 + $0x7f0] sm:$0xff]
    %v1653 = vld [vmem:[%s1 + $0x7f8] sm:$0xff]
    %1655 = vst [vmem:[#allocation1] ss:$4 sm:$0xff] %v1387
    %v1656 = vld.sshfl [vmem:[#allocation1] sm:$0xff pattern:$0x73625140]
    %v1657 = vld.sshfl [vmem:[#allocation1 + $0x8] sm:$0xff pattern:$0x73625140]
    %1660 = vmatpush.msra.mxu0 %v1518
    %1661 = vmatpush.msra.mxu0 %v1510
    %1662 = vmatpush.msra.mxu0 %v1502
    %1663 = vmatpush.msra.mxu0 %v1494
    %1664 = vmatpush.msra.mxu0 %v1486
    %1665 = vmatpush.msra.mxu0 %v1478
    %1666 = vmatpush.msra.mxu0 %v1470
    %1667 = vmatpush.msra.mxu0 %v1462
    %1668 = vmatpush.msra.mxu0 %v1454
    %1669 = vmatpush.msra.mxu0 %v1446
    %1670 = vmatpush.msra.mxu0 %v1438
    %1671 = vmatpush.msra.mxu0 %v1430
    %1672 = vmatpush.msra.mxu0 %v1422
    %1673 = vmatpush.msra.mxu0 %v1414
    %1674 = vmatpush.msra.mxu0 %v1406
    %1675 = vmatpush.msra.mxu0 %v1398
    %1676 = vmatmul.f32.gmra.mxu0 %v1656
    %v1677 = vpop.f32.mrf.mxu0
    %v1678 = vadd.f32 0.0, %v1677
    %1679 = vdwg.mxu0
    %1680 = vmatpush.msra.mxu0 %v1646
    %1681 = vmatpush.msra.mxu0 %v1638
    %1682 = vmatpush.msra.mxu0 %v1630
    %1683 = vmatpush.msra.mxu0 %v1622
    %1684 = vmatpush.msra.mxu0 %v1614
    %1685 = vmatpush.msra.mxu0 %v1606
    %1686 = vmatpush.msra.mxu0 %v1598
    %1687 = vmatpush.msra.mxu0 %v1590
    %1688 = vmatpush.msra.mxu0 %v1582
    %1689 = vmatpush.msra.mxu0 %v1574
    %1690 = vmatpush.msra.mxu0 %v1566
    %1691 = vmatpush.msra.mxu0 %v1558
    %1692 = vmatpush.msra.mxu0 %v1550
    %1693 = vmatpush.msra.mxu0 %v1542
    %1694 = vmatpush.msra.mxu0 %v1534
    %1695 = vmatpush.msra.mxu0 %v1526
    %1696 = vmatmul.f32.gmra.mxu0 %v1657
    %v1697 = vpop.f32.mrf.mxu0
    %v1698 = vadd.f32 %v1678, %v1697
    %1699 = vdwg.mxu0
    %1700 = vmatpush.msra.mxu0 %v1519
    %1701 = vmatpush.msra.mxu0 %v1511
    %1702 = vmatpush.msra.mxu0 %v1503
    %1703 = vmatpush.msra.mxu0 %v1495
    %1704 = vmatpush.msra.mxu0 %v1487
    %1705 = vmatpush.msra.mxu0 %v1479
    %1706 = vmatpush.msra.mxu0 %v1471
    %1707 = vmatpush.msra.mxu0 %v1463
    %1708 = vmatpush.msra.mxu0 %v1455
    %1709 = vmatpush.msra.mxu0 %v1447
    %1710 = vmatpush.msra.mxu0 %v1439
    %1711 = vmatpush.msra.mxu0 %v1431
    %1712 = vmatpush.msra.mxu0 %v1423
    %1713 = vmatpush.msra.mxu0 %v1415
    %1714 = vmatpush.msra.mxu0 %v1407
    %1715 = vmatpush.msra.mxu0 %v1399
    %1716 = vmatmul.f32.gmra.mxu0 %v1656
    %v1717 = vpop.f32.mrf.mxu0
    %v1718 = vadd.f32 0.0, %v1717
    %1719 = vdwg.mxu0
    %1720 = vmatpush.msra.mxu0 %v1647
    %1721 = vmatpush.msra.mxu0 %v1639
    %1722 = vmatpush.msra.mxu0 %v1631
    %1723 = vmatpush.msra.mxu0 %v1623
    %1724 = vmatpush.msra.mxu0 %v1615
    %1725 = vmatpush.msra.mxu0 %v1607
    %1726 = vmatpush.msra.mxu0 %v1599
    %1727 = vmatpush.msra.mxu0 %v1591
    %1728 = vmatpush.msra.mxu0 %v1583
    %1729 = vmatpush.msra.mxu0 %v1575
    %1730 = vmatpush.msra.mxu0 %v1567
    %1731 = vmatpush.msra.mxu0 %v1559
    %1732 = vmatpush.msra.mxu0 %v1551
    %1733 = vmatpush.msra.mxu0 %v1543
    %1734 = vmatpush.msra.mxu0 %v1535
    %1735 = vmatpush.msra.mxu0 %v1527
    %1736 = vmatmul.f32.gmra.mxu0 %v1657
    %v1737 = vpop.f32.mrf.mxu0
    %v1738 = vadd.f32 %v1718, %v1737
    %1739 = vdwg.mxu0
    %1740 = vmatpush.msra.mxu0 %v1520
    %1741 = vmatpush.msra.mxu0 %v1512
    %1742 = vmatpush.msra.mxu0 %v1504
    %1743 = vmatpush.msra.mxu0 %v1496
    %1744 = vmatpush.msra.mxu0 %v1488
    %1745 = vmatpush.msra.mxu0 %v1480
    %1746 = vmatpush.msra.mxu0 %v1472
    %1747 = vmatpush.msra.mxu0 %v1464
    %1748 = vmatpush.msra.mxu0 %v1456
    %1749 = vmatpush.msra.mxu0 %v1448
    %1750 = vmatpush.msra.mxu0 %v1440
    %1751 = vmatpush.msra.mxu0 %v1432
    %1752 = vmatpush.msra.mxu0 %v1424
    %1753 = vmatpush.msra.mxu0 %v1416
    %1754 = vmatpush.msra.mxu0 %v1408
    %1755 = vmatpush.msra.mxu0 %v1400
    %1756 = vmatmul.f32.gmra.mxu0 %v1656
    %v1757 = vpop.f32.mrf.mxu0
    %v1758 = vadd.f32 0.0, %v1757
    %1759 = vdwg.mxu0
    %1760 = vmatpush.msra.mxu0 %v1648
    %1761 = vmatpush.msra.mxu0 %v1640
    %1762 = vmatpush.msra.mxu0 %v1632
    %1763 = vmatpush.msra.mxu0 %v1624
    %1764 = vmatpush.msra.mxu0 %v1616
    %1765 = vmatpush.msra.mxu0 %v1608
    %1766 = vmatpush.msra.mxu0 %v1600
    %1767 = vmatpush.msra.mxu0 %v1592
    %1768 = vmatpush.msra.mxu0 %v1584
    %1769 = vmatpush.msra.mxu0 %v1576
    %1770 = vmatpush.msra.mxu0 %v1568
    %1771 = vmatpush.msra.mxu0 %v1560
    %1772 = vmatpush.msra.mxu0 %v1552
    %1773 = vmatpush.msra.mxu0 %v1544
    %1774 = vmatpush.msra.mxu0 %v1536
    %1775 = vmatpush.msra.mxu0 %v1528
    %1776 = vmatmul.f32.gmra.mxu0 %v1657
    %v1777 = vpop.f32.mrf.mxu0
    %v1778 = vadd.f32 %v1758, %v1777
    %1779 = vdwg.mxu0
    %1780 = vmatpush.msra.mxu0 %v1521
    %1781 = vmatpush.msra.mxu0 %v1513
    %1782 = vmatpush.msra.mxu0 %v1505
    %1783 = vmatpush.msra.mxu0 %v1497
    %1784 = vmatpush.msra.mxu0 %v1489
    %1785 = vmatpush.msra.mxu0 %v1481
    %1786 = vmatpush.msra.mxu0 %v1473
    %1787 = vmatpush.msra.mxu0 %v1465
    %1788 = vmatpush.msra.mxu0 %v1457
    %1789 = vmatpush.msra.mxu0 %v1449
    %1790 = vmatpush.msra.mxu0 %v1441
    %1791 = vmatpush.msra.mxu0 %v1433
    %1792 = vmatpush.msra.mxu0 %v1425
    %1793 = vmatpush.msra.mxu0 %v1417
    %1794 = vmatpush.msra.mxu0 %v1409
    %1795 = vmatpush.msra.mxu0 %v1401
    %1796 = vmatmul.f32.gmra.mxu0 %v1656
    %v1797 = vpop.f32.mrf.mxu0
    %v1798 = vadd.f32 0.0, %v1797
    %1799 = vdwg.mxu0
    %1800 = vmatpush.msra.mxu0 %v1649
    %1801 = vmatpush.msra.mxu0 %v1641
    %1802 = vmatpush.msra.mxu0 %v1633
    %1803 = vmatpush.msra.mxu0 %v1625
    %1804 = vmatpush.msra.mxu0 %v1617
    %1805 = vmatpush.msra.mxu0 %v1609
    %1806 = vmatpush.msra.mxu0 %v1601
    %1807 = vmatpush.msra.mxu0 %v1593
    %1808 = vmatpush.msra.mxu0 %v1585
    %1809 = vmatpush.msra.mxu0 %v1577
    %1810 = vmatpush.msra.mxu0 %v1569
    %1811 = vmatpush.msra.mxu0 %v1561
    %1812 = vmatpush.msra.mxu0 %v1553
    %1813 = vmatpush.msra.mxu0 %v1545
    %1814 = vmatpush.msra.mxu0 %v1537
    %1815 = vmatpush.msra.mxu0 %v1529
    %1816 = vmatmul.f32.gmra.mxu0 %v1657
    %v1817 = vpop.f32.mrf.mxu0
    %v1818 = vadd.f32 %v1798, %v1817
    %1819 = vdwg.mxu0
    %1820 = vmatpush.msra.mxu0 %v1522
    %1821 = vmatpush.msra.mxu0 %v1514
    %1822 = vmatpush.msra.mxu0 %v1506
    %1823 = vmatpush.msra.mxu0 %v1498
    %1824 = vmatpush.msra.mxu0 %v1490
    %1825 = vmatpush.msra.mxu0 %v1482
    %1826 = vmatpush.msra.mxu0 %v1474
    %1827 = vmatpush.msra.mxu0 %v1466
    %1828 = vmatpush.msra.mxu0 %v1458
    %1829 = vmatpush.msra.mxu0 %v1450
    %1830 = vmatpush.msra.mxu0 %v1442
    %1831 = vmatpush.msra.mxu0 %v1434
    %1832 = vmatpush.msra.mxu0 %v1426
    %1833 = vmatpush.msra.mxu0 %v1418
    %1834 = vmatpush.msra.mxu0 %v1410
    %1835 = vmatpush.msra.mxu0 %v1402
    %1836 = vmatmul.f32.gmra.mxu0 %v1656
    %v1837 = vpop.f32.mrf.mxu0
    %v1838 = vadd.f32 0.0, %v1837
    %1839 = vdwg.mxu0
    %1840 = vmatpush.msra.mxu0 %v1650
    %1841 = vmatpush.msra.mxu0 %v1642
    %1842 = vmatpush.msra.mxu0 %v1634
    %1843 = vmatpush.msra.mxu0 %v1626
    %1844 = vmatpush.msra.mxu0 %v1618
    %1845 = vmatpush.msra.mxu0 %v1610
    %1846 = vmatpush.msra.mxu0 %v1602
    %1847 = vmatpush.msra.mxu0 %v1594
    %1848 = vmatpush.msra.mxu0 %v1586
    %1849 = vmatpush.msra.mxu0 %v1578
    %1850 = vmatpush.msra.mxu0 %v1570
    %1851 = vmatpush.msra.mxu0 %v1562
    %1852 = vmatpush.msra.mxu0 %v1554
    %1853 = vmatpush.msra.mxu0 %v1546
    %1854 = vmatpush.msra.mxu0 %v1538
    %1855 = vmatpush.msra.mxu0 %v1530
    %1856 = vmatmul.f32.gmra.mxu0 %v1657
    %v1857 = vpop.f32.mrf.mxu0
    %v1858 = vadd.f32 %v1838, %v1857
    %1859 = vdwg.mxu0
    %1860 = vmatpush.msra.mxu0 %v1523
    %1861 = vmatpush.msra.mxu0 %v1515
    %1862 = vmatpush.msra.mxu0 %v1507
    %1863 = vmatpush.msra.mxu0 %v1499
    %1864 = vmatpush.msra.mxu0 %v1491
    %1865 = vmatpush.msra.mxu0 %v1483
    %1866 = vmatpush.msra.mxu0 %v1475
    %1867 = vmatpush.msra.mxu0 %v1467
    %1868 = vmatpush.msra.mxu0 %v1459
    %1869 = vmatpush.msra.mxu0 %v1451
    %1870 = vmatpush.msra.mxu0 %v1443
    %1871 = vmatpush.msra.mxu0 %v1435
    %1872 = vmatpush.msra.mxu0 %v1427
    %1873 = vmatpush.msra.mxu0 %v1419
    %1874 = vmatpush.msra.mxu0 %v1411
    %1875 = vmatpush.msra.mxu0 %v1403
    %1876 = vmatmul.f32.gmra.mxu0 %v1656
    %v1877 = vpop.f32.mrf.mxu0
    %v1878 = vadd.f32 0.0, %v1877
    %1879 = vdwg.mxu0
    %1880 = vmatpush.msra.mxu0 %v1651
    %1881 = vmatpush.msra.mxu0 %v1643
    %1882 = vmatpush.msra.mxu0 %v1635
    %1883 = vmatpush.msra.mxu0 %v1627
    %1884 = vmatpush.msra.mxu0 %v1619
    %1885 = vmatpush.msra.mxu0 %v1611
    %1886 = vmatpush.msra.mxu0 %v1603
    %1887 = vmatpush.msra.mxu0 %v1595
    %1888 = vmatpush.msra.mxu0 %v1587
    %1889 = vmatpush.msra.mxu0 %v1579
    %1890 = vmatpush.msra.mxu0 %v1571
    %1891 = vmatpush.msra.mxu0 %v1563
    %1892 = vmatpush.msra.mxu0 %v1555
    %1893 = vmatpush.msra.mxu0 %v1547
    %1894 = vmatpush.msra.mxu0 %v1539
    %1895 = vmatpush.msra.mxu0 %v1531
    %1896 = vmatmul.f32.gmra.mxu0 %v1657
    %v1897 = vpop.f32.mrf.mxu0
    %v1898 = vadd.f32 %v1878, %v1897
    %1899 = vdwg.mxu0
    %1900 = vmatpush.msra.mxu0 %v1524
    %1901 = vmatpush.msra.mxu0 %v1516
    %1902 = vmatpush.msra.mxu0 %v1508
    %1903 = vmatpush.msra.mxu0 %v1500
    %1904 = vmatpush.msra.mxu0 %v1492
    %1905 = vmatpush.msra.mxu0 %v1484
    %1906 = vmatpush.msra.mxu0 %v1476
    %1907 = vmatpush.msra.mxu0 %v1468
    %1908 = vmatpush.msra.mxu0 %v1460
    %1909 = vmatpush.msra.mxu0 %v1452
    %1910 = vmatpush.msra.mxu0 %v1444
    %1911 = vmatpush.msra.mxu0 %v1436
    %1912 = vmatpush.msra.mxu0 %v1428
    %1913 = vmatpush.msra.mxu0 %v1420
    %1914 = vmatpush.msra.mxu0 %v1412
    %1915 = vmatpush.msra.mxu0 %v1404
    %1916 = vmatmul.f32.gmra.mxu0 %v1656
    %v1917 = vpop.f32.mrf.mxu0
    %v1918 = vadd.f32 0.0, %v1917
    %1919 = vdwg.mxu0
    %1920 = vmatpush.msra.mxu0 %v1652
    %1921 = vmatpush.msra.mxu0 %v1644
    %1922 = vmatpush.msra.mxu0 %v1636
    %1923 = vmatpush.msra.mxu0 %v1628
    %1924 = vmatpush.msra.mxu0 %v1620
    %1925 = vmatpush.msra.mxu0 %v1612
    %1926 = vmatpush.msra.mxu0 %v1604
    %1927 = vmatpush.msra.mxu0 %v1596
    %1928 = vmatpush.msra.mxu0 %v1588
    %1929 = vmatpush.msra.mxu0 %v1580
    %1930 = vmatpush.msra.mxu0 %v1572
    %1931 = vmatpush.msra.mxu0 %v1564
    %1932 = vmatpush.msra.mxu0 %v1556
    %1933 = vmatpush.msra.mxu0 %v1548
    %1934 = vmatpush.msra.mxu0 %v1540
    %1935 = vmatpush.msra.mxu0 %v1532
    %1936 = vmatmul.f32.gmra.mxu0 %v1657
    %v1937 = vpop.f32.mrf.mxu0
    %v1938 = vadd.f32 %v1918, %v1937
    %1939 = vdwg.mxu0
    %1940 = vmatpush.msra.mxu0 %v1525
    %1941 = vmatpush.msra.mxu0 %v1517
    %1942 = vmatpush.msra.mxu0 %v1509
    %1943 = vmatpush.msra.mxu0 %v1501
    %1944 = vmatpush.msra.mxu0 %v1493
    %1945 = vmatpush.msra.mxu0 %v1485
    %1946 = vmatpush.msra.mxu0 %v1477
    %1947 = vmatpush.msra.mxu0 %v1469
    %1948 = vmatpush.msra.mxu0 %v1461
    %1949 = vmatpush.msra.mxu0 %v1453
    %1950 = vmatpush.msra.mxu0 %v1445
    %1951 = vmatpush.msra.mxu0 %v1437
    %1952 = vmatpush.msra.mxu0 %v1429
    %1953 = vmatpush.msra.mxu0 %v1421
    %1954 = vmatpush.msra.mxu0 %v1413
    %1955 = vmatpush.msra.mxu0 %v1405
    %1956 = vmatmul.f32.gmra.mxu0 %v1656
    %v1957 = vpop.f32.mrf.mxu0
    %v1958 = vadd.f32 0.0, %v1957
    %1959 = vdwg.mxu0
    %1960 = vmatpush.msra.mxu0 %v1653
    %1961 = vmatpush.msra.mxu0 %v1645
    %1962 = vmatpush.msra.mxu0 %v1637
    %1963 = vmatpush.msra.mxu0 %v1629
    %1964 = vmatpush.msra.mxu0 %v1621
    %1965 = vmatpush.msra.mxu0 %v1613
    %1966 = vmatpush.msra.mxu0 %v1605
    %1967 = vmatpush.msra.mxu0 %v1597
    %1968 = vmatpush.msra.mxu0 %v1589
    %1969 = vmatpush.msra.mxu0 %v1581
    %1970 = vmatpush.msra.mxu0 %v1573
    %1971 = vmatpush.msra.mxu0 %v1565
    %1972 = vmatpush.msra.mxu0 %v1557
    %1973 = vmatpush.msra.mxu0 %v1549
    %1974 = vmatpush.msra.mxu0 %v1541
    %1975 = vmatpush.msra.mxu0 %v1533
    %1976 = vmatmul.f32.gmra.mxu0 %v1657
    %v1977 = vpop.f32.mrf.mxu0
    %v1978 = vadd.f32 %v1958, %v1977
    %1979 = vdwg.mxu0
    %v1988 = vrot.slane %v1738, 6
    %v1989 = vrot.slane %v1778, 4
    %v1990 = vrot.slane %v1818, 2
    %v1991 = vrot.slane %v1898, 6
    %v1992 = vrot.slane %v1938, 4
    %v1993 = vrot.slane %v1978, 2
    %v1994 = vsel %vm621, %v1698, %v1988
    %v1995 = vsel %vm623, %v1989, %v1990
    %v1996 = vsel %vm625, %v1994, %v1995
    %v1997 = vsel %vm621, %v1858, %v1991
    %v1998 = vsel %vm623, %v1992, %v1993
    %v1999 = vsel %vm625, %v1997, %v1998
    %v2002 = vadd.f32 %v1396, %v1996
    %v2003 = vadd.f32 %v1397, %v1999
    %v2004 = vxor.u32 %v2002, 2147483648
    %v2005 = vmul.f32 %v2004, 1.442695
    %v2006 = vpow.pop %v2005
    %v2007 = vadd.f32 %v2006, 1.0
    %v2008 = vrcp.pop %v2007
    %v2009 = vmul.f32 %v2007, %v2008
    %v2010 = vsub.f32 1.0, %v2009
    %v2011 = vmul.f32 %v2008, %v2010
    %v2012 = vadd.f32 %v2008, %v2011
    %vm2013 = vweird.f32 %v2007
    %vm2014 = vweird.f32 %v2008
    %vm2015 = vmor %vm2013, %vm2014
    %v2016 = vsel %vm2015, %v2008, %v2012
    %v2017 = vand.u32 2147483647, %v2007
    %vm2018 = vcmp.eq.f32.partialorder %v2017, 8.507059e+37
    %v2019 = vand.u32 %v2007, 2147483648
    %v2020 = vor.u32 1.1754944e-38, %v2019
    %v2021 = vsel %vm2018, %v2020, %v2016
    %v2022 = vmul.f32 1.0, %v2021
    %v2024 = vrot.slane %v2002, 4
    %v2026 = vxor.u32 %v2024, 2147483648
    %v2027 = vmul.f32 %v2026, 1.442695
    %v2028 = vpow.pop %v2027
    %v2029 = vadd.f32 %v2028, 1.0
    %v2030 = vrcp.pop %v2029
    %v2031 = vmul.f32 %v2029, %v2030
    %v2032 = vsub.f32 1.0, %v2031
    %v2033 = vmul.f32 %v2030, %v2032
    %v2034 = vadd.f32 %v2030, %v2033
    %vm2035 = vweird.f32 %v2029
    %vm2036 = vweird.f32 %v2030
    %vm2037 = vmor %vm2035, %vm2036
    %v2038 = vsel %vm2037, %v2030, %v2034
    %v2039 = vand.u32 2147483647, %v2029
    %vm2040 = vcmp.eq.f32.partialorder %v2039, 8.507059e+37
    %v2041 = vand.u32 %v2029, 2147483648
    %v2042 = vor.u32 1.1754944e-38, %v2041
    %v2043 = vsel %vm2040, %v2042, %v2038
    %v2044 = vmul.f32 1.0, %v2043
    %v2045 = vtanh.pop %v2003
    %v2047 = vrot.slane %v2003, 4
    %v2049 = vxor.u32 %v2047, 2147483648
    %v2050 = vmul.f32 %v2049, 1.442695
    %v2051 = vpow.pop %v2050
    %v2052 = vadd.f32 %v2051, 1.0
    %v2053 = vrcp.pop %v2052
    %v2054 = vmul.f32 %v2052, %v2053
    %v2055 = vsub.f32 1.0, %v2054
    %v2056 = vmul.f32 %v2053, %v2055
    %v2057 = vadd.f32 %v2053, %v2056
    %vm2058 = vweird.f32 %v2052
    %vm2059 = vweird.f32 %v2053
    %vm2060 = vmor %vm2058, %vm2059
    %v2061 = vsel %vm2060, %v2053, %v2057
    %v2062 = vand.u32 2147483647, %v2052
    %vm2063 = vcmp.eq.f32.partialorder %v2062, 8.507059e+37
    %v2064 = vand.u32 %v2052, 2147483648
    %v2065 = vor.u32 1.1754944e-38, %v2064
    %v2066 = vsel %vm2063, %v2065, %v2061
    %v2067 = vmul.f32 1.0, %v2066
    %v2068 = vmul.f32 %v2044, %v1385
    %v2069 = vmul.f32 %v2022, %v2045
    %v2070 = vadd.f32 %v2068, %v2069
    %v2071 = vtanh.pop %v2070
    %v2072 = vmul.f32 %v2067, %v2071
    %s2073 = smul.u32 %s1392, 2
    %s2074 = smul.addr %s2073, 2
    %s2075 = scalar_lea.vmem %s2, %s2074
    %2076 = vst [vmem:[%s2075] sm:$0xf] %v2072
    %s2077 = sadd.s32 %s19, 3
    %s2078 = smul.u32 %s2077, 8
    %s2079 = smul.addr %s2078, 2
    %s2080 = scalar_lea.vmem %s0, %s2079
    %v2081 = vld [vmem:[%s2080] sm:$0xff]
    %v2082 = vld [vmem:[%s2080 + $0x8] sm:$0xff]
    %v2083 = vld [vmem:[%s1] sm:$0xff]
    %v2084 = vld [vmem:[%s1 + $0x8] sm:$0xff]
    %v2085 = vld [vmem:[%s1 + $0x10] sm:$0xff]
    %v2086 = vld [vmem:[%s1 + $0x18] sm:$0xff]
    %v2087 = vld [vmem:[%s1 + $0x20] sm:$0xff]
    %v2088 = vld [vmem:[%s1 + $0x28] sm:$0xff]
    %v2089 = vld [vmem:[%s1 + $0x30] sm:$0xff]
    %v2090 = vld [vmem:[%s1 + $0x38] sm:$0xff]
    %v2091 = vld [vmem:[%s1 + $0x40] sm:$0xff]
    %v2092 = vld [vmem:[%s1 + $0x48] sm:$0xff]
    %v2093 = vld [vmem:[%s1 + $0x50] sm:$0xff]
    %v2094 = vld [vmem:[%s1 + $0x58] sm:$0xff]
    %v2095 = vld [vmem:[%s1 + $0x60] sm:$0xff]
    %v2096 = vld [vmem:[%s1 + $0x68] sm:$0xff]
    %v2097 = vld [vmem:[%s1 + $0x70] sm:$0xff]
    %v2098 = vld [vmem:[%s1 + $0x78] sm:$0xff]
    %v2099 = vld [vmem:[%s1 + $0x80] sm:$0xff]
    %v2100 = vld [vmem:[%s1 + $0x88] sm:$0xff]
    %v2101 = vld [vmem:[%s1 + $0x90] sm:$0xff]
    %v2102 = vld [vmem:[%s1 + $0x98] sm:$0xff]
    %v2103 = vld [vmem:[%s1 + $0xa0] sm:$0xff]
    %v2104 = vld [vmem:[%s1 + $0xa8] sm:$0xff]
    %v2105 = vld [vmem:[%s1 + $0xb0] sm:$0xff]
    %v2106 = vld [vmem:[%s1 + $0xb8] sm:$0xff]
    %v2107 = vld [vmem:[%s1 + $0xc0] sm:$0xff]
    %v2108 = vld [vmem:[%s1 + $0xc8] sm:$0xff]
    %v2109 = vld [vmem:[%s1 + $0xd0] sm:$0xff]
    %v2110 = vld [vmem:[%s1 + $0xd8] sm:$0xff]
    %v2111 = vld [vmem:[%s1 + $0xe0] sm:$0xff]
    %v2112 = vld [vmem:[%s1 + $0xe8] sm:$0xff]
    %v2113 = vld [vmem:[%s1 + $0xf0] sm:$0xff]
    %v2114 = vld [vmem:[%s1 + $0xf8] sm:$0xff]
    %v2115 = vld [vmem:[%s1 + $0x100] sm:$0xff]
    %v2116 = vld [vmem:[%s1 + $0x108] sm:$0xff]
    %v2117 = vld [vmem:[%s1 + $0x110] sm:$0xff]
    %v2118 = vld [vmem:[%s1 + $0x118] sm:$0xff]
    %v2119 = vld [vmem:[%s1 + $0x120] sm:$0xff]
    %v2120 = vld [vmem:[%s1 + $0x128] sm:$0xff]
    %v2121 = vld [vmem:[%s1 + $0x130] sm:$0xff]
    %v2122 = vld [vmem:[%s1 + $0x138] sm:$0xff]
    %v2123 = vld [vmem:[%s1 + $0x140] sm:$0xff]
    %v2124 = vld [vmem:[%s1 + $0x148] sm:$0xff]
    %v2125 = vld [vmem:[%s1 + $0x150] sm:$0xff]
    %v2126 = vld [vmem:[%s1 + $0x158] sm:$0xff]
    %v2127 = vld [vmem:[%s1 + $0x160] sm:$0xff]
    %v2128 = vld [vmem:[%s1 + $0x168] sm:$0xff]
    %v2129 = vld [vmem:[%s1 + $0x170] sm:$0xff]
    %v2130 = vld [vmem:[%s1 + $0x178] sm:$0xff]
    %v2131 = vld [vmem:[%s1 + $0x180] sm:$0xff]
    %v2132 = vld [vmem:[%s1 + $0x188] sm:$0xff]
    %v2133 = vld [vmem:[%s1 + $0x190] sm:$0xff]
    %v2134 = vld [vmem:[%s1 + $0x198] sm:$0xff]
    %v2135 = vld [vmem:[%s1 + $0x1a0] sm:$0xff]
    %v2136 = vld [vmem:[%s1 + $0x1a8] sm:$0xff]
    %v2137 = vld [vmem:[%s1 + $0x1b0] sm:$0xff]
    %v2138 = vld [vmem:[%s1 + $0x1b8] sm:$0xff]
    %v2139 = vld [vmem:[%s1 + $0x1c0] sm:$0xff]
    %v2140 = vld [vmem:[%s1 + $0x1c8] sm:$0xff]
    %v2141 = vld [vmem:[%s1 + $0x1d0] sm:$0xff]
    %v2142 = vld [vmem:[%s1 + $0x1d8] sm:$0xff]
    %v2143 = vld [vmem:[%s1 + $0x1e0] sm:$0xff]
    %v2144 = vld [vmem:[%s1 + $0x1e8] sm:$0xff]
    %v2145 = vld [vmem:[%s1 + $0x1f0] sm:$0xff]
    %v2146 = vld [vmem:[%s1 + $0x1f8] sm:$0xff]
    %v2147 = vld [vmem:[%s1 + $0x200] sm:$0xff]
    %v2148 = vld [vmem:[%s1 + $0x208] sm:$0xff]
    %v2149 = vld [vmem:[%s1 + $0x210] sm:$0xff]
    %v2150 = vld [vmem:[%s1 + $0x218] sm:$0xff]
    %v2151 = vld [vmem:[%s1 + $0x220] sm:$0xff]
    %v2152 = vld [vmem:[%s1 + $0x228] sm:$0xff]
    %v2153 = vld [vmem:[%s1 + $0x230] sm:$0xff]
    %v2154 = vld [vmem:[%s1 + $0x238] sm:$0xff]
    %v2155 = vld [vmem:[%s1 + $0x240] sm:$0xff]
    %v2156 = vld [vmem:[%s1 + $0x248] sm:$0xff]
    %v2157 = vld [vmem:[%s1 + $0x250] sm:$0xff]
    %v2158 = vld [vmem:[%s1 + $0x258] sm:$0xff]
    %v2159 = vld [vmem:[%s1 + $0x260] sm:$0xff]
    %v2160 = vld [vmem:[%s1 + $0x268] sm:$0xff]
    %v2161 = vld [vmem:[%s1 + $0x270] sm:$0xff]
    %v2162 = vld [vmem:[%s1 + $0x278] sm:$0xff]
    %v2163 = vld [vmem:[%s1 + $0x280] sm:$0xff]
    %v2164 = vld [vmem:[%s1 + $0x288] sm:$0xff]
    %v2165 = vld [vmem:[%s1 + $0x290] sm:$0xff]
    %v2166 = vld [vmem:[%s1 + $0x298] sm:$0xff]
    %v2167 = vld [vmem:[%s1 + $0x2a0] sm:$0xff]
    %v2168 = vld [vmem:[%s1 + $0x2a8] sm:$0xff]
    %v2169 = vld [vmem:[%s1 + $0x2b0] sm:$0xff]
    %v2170 = vld [vmem:[%s1 + $0x2b8] sm:$0xff]
    %v2171 = vld [vmem:[%s1 + $0x2c0] sm:$0xff]
    %v2172 = vld [vmem:[%s1 + $0x2c8] sm:$0xff]
    %v2173 = vld [vmem:[%s1 + $0x2d0] sm:$0xff]
    %v2174 = vld [vmem:[%s1 + $0x2d8] sm:$0xff]
    %v2175 = vld [vmem:[%s1 + $0x2e0] sm:$0xff]
    %v2176 = vld [vmem:[%s1 + $0x2e8] sm:$0xff]
    %v2177 = vld [vmem:[%s1 + $0x2f0] sm:$0xff]
    %v2178 = vld [vmem:[%s1 + $0x2f8] sm:$0xff]
    %v2179 = vld [vmem:[%s1 + $0x300] sm:$0xff]
    %v2180 = vld [vmem:[%s1 + $0x308] sm:$0xff]
    %v2181 = vld [vmem:[%s1 + $0x310] sm:$0xff]
    %v2182 = vld [vmem:[%s1 + $0x318] sm:$0xff]
    %v2183 = vld [vmem:[%s1 + $0x320] sm:$0xff]
    %v2184 = vld [vmem:[%s1 + $0x328] sm:$0xff]
    %v2185 = vld [vmem:[%s1 + $0x330] sm:$0xff]
    %v2186 = vld [vmem:[%s1 + $0x338] sm:$0xff]
    %v2187 = vld [vmem:[%s1 + $0x340] sm:$0xff]
    %v2188 = vld [vmem:[%s1 + $0x348] sm:$0xff]
    %v2189 = vld [vmem:[%s1 + $0x350] sm:$0xff]
    %v2190 = vld [vmem:[%s1 + $0x358] sm:$0xff]
    %v2191 = vld [vmem:[%s1 + $0x360] sm:$0xff]
    %v2192 = vld [vmem:[%s1 + $0x368] sm:$0xff]
    %v2193 = vld [vmem:[%s1 + $0x370] sm:$0xff]
    %v2194 = vld [vmem:[%s1 + $0x378] sm:$0xff]
    %v2195 = vld [vmem:[%s1 + $0x380] sm:$0xff]
    %v2196 = vld [vmem:[%s1 + $0x388] sm:$0xff]
    %v2197 = vld [vmem:[%s1 + $0x390] sm:$0xff]
    %v2198 = vld [vmem:[%s1 + $0x398] sm:$0xff]
    %v2199 = vld [vmem:[%s1 + $0x3a0] sm:$0xff]
    %v2200 = vld [vmem:[%s1 + $0x3a8] sm:$0xff]
    %v2201 = vld [vmem:[%s1 + $0x3b0] sm:$0xff]
    %v2202 = vld [vmem:[%s1 + $0x3b8] sm:$0xff]
    %v2203 = vld [vmem:[%s1 + $0x3c0] sm:$0xff]
    %v2204 = vld [vmem:[%s1 + $0x3c8] sm:$0xff]
    %v2205 = vld [vmem:[%s1 + $0x3d0] sm:$0xff]
    %v2206 = vld [vmem:[%s1 + $0x3d8] sm:$0xff]
    %v2207 = vld [vmem:[%s1 + $0x3e0] sm:$0xff]
    %v2208 = vld [vmem:[%s1 + $0x3e8] sm:$0xff]
    %v2209 = vld [vmem:[%s1 + $0x3f0] sm:$0xff]
    %v2210 = vld [vmem:[%s1 + $0x3f8] sm:$0xff]
    %v2211 = vld [vmem:[%s1 + $0x400] sm:$0xff]
    %v2212 = vld [vmem:[%s1 + $0x408] sm:$0xff]
    %v2213 = vld [vmem:[%s1 + $0x410] sm:$0xff]
    %v2214 = vld [vmem:[%s1 + $0x418] sm:$0xff]
    %v2215 = vld [vmem:[%s1 + $0x420] sm:$0xff]
    %v2216 = vld [vmem:[%s1 + $0x428] sm:$0xff]
    %v2217 = vld [vmem:[%s1 + $0x430] sm:$0xff]
    %v2218 = vld [vmem:[%s1 + $0x438] sm:$0xff]
    %v2219 = vld [vmem:[%s1 + $0x440] sm:$0xff]
    %v2220 = vld [vmem:[%s1 + $0x448] sm:$0xff]
    %v2221 = vld [vmem:[%s1 + $0x450] sm:$0xff]
    %v2222 = vld [vmem:[%s1 + $0x458] sm:$0xff]
    %v2223 = vld [vmem:[%s1 + $0x460] sm:$0xff]
    %v2224 = vld [vmem:[%s1 + $0x468] sm:$0xff]
    %v2225 = vld [vmem:[%s1 + $0x470] sm:$0xff]
    %v2226 = vld [vmem:[%s1 + $0x478] sm:$0xff]
    %v2227 = vld [vmem:[%s1 + $0x480] sm:$0xff]
    %v2228 = vld [vmem:[%s1 + $0x488] sm:$0xff]
    %v2229 = vld [vmem:[%s1 + $0x490] sm:$0xff]
    %v2230 = vld [vmem:[%s1 + $0x498] sm:$0xff]
    %v2231 = vld [vmem:[%s1 + $0x4a0] sm:$0xff]
    %v2232 = vld [vmem:[%s1 + $0x4a8] sm:$0xff]
    %v2233 = vld [vmem:[%s1 + $0x4b0] sm:$0xff]
    %v2234 = vld [vmem:[%s1 + $0x4b8] sm:$0xff]
    %v2235 = vld [vmem:[%s1 + $0x4c0] sm:$0xff]
    %v2236 = vld [vmem:[%s1 + $0x4c8] sm:$0xff]
    %v2237 = vld [vmem:[%s1 + $0x4d0] sm:$0xff]
    %v2238 = vld [vmem:[%s1 + $0x4d8] sm:$0xff]
    %v2239 = vld [vmem:[%s1 + $0x4e0] sm:$0xff]
    %v2240 = vld [vmem:[%s1 + $0x4e8] sm:$0xff]
    %v2241 = vld [vmem:[%s1 + $0x4f0] sm:$0xff]
    %v2242 = vld [vmem:[%s1 + $0x4f8] sm:$0xff]
    %v2243 = vld [vmem:[%s1 + $0x500] sm:$0xff]
    %v2244 = vld [vmem:[%s1 + $0x508] sm:$0xff]
    %v2245 = vld [vmem:[%s1 + $0x510] sm:$0xff]
    %v2246 = vld [vmem:[%s1 + $0x518] sm:$0xff]
    %v2247 = vld [vmem:[%s1 + $0x520] sm:$0xff]
    %v2248 = vld [vmem:[%s1 + $0x528] sm:$0xff]
    %v2249 = vld [vmem:[%s1 + $0x530] sm:$0xff]
    %v2250 = vld [vmem:[%s1 + $0x538] sm:$0xff]
    %v2251 = vld [vmem:[%s1 + $0x540] sm:$0xff]
    %v2252 = vld [vmem:[%s1 + $0x548] sm:$0xff]
    %v2253 = vld [vmem:[%s1 + $0x550] sm:$0xff]
    %v2254 = vld [vmem:[%s1 + $0x558] sm:$0xff]
    %v2255 = vld [vmem:[%s1 + $0x560] sm:$0xff]
    %v2256 = vld [vmem:[%s1 + $0x568] sm:$0xff]
    %v2257 = vld [vmem:[%s1 + $0x570] sm:$0xff]
    %v2258 = vld [vmem:[%s1 + $0x578] sm:$0xff]
    %v2259 = vld [vmem:[%s1 + $0x580] sm:$0xff]
    %v2260 = vld [vmem:[%s1 + $0x588] sm:$0xff]
    %v2261 = vld [vmem:[%s1 + $0x590] sm:$0xff]
    %v2262 = vld [vmem:[%s1 + $0x598] sm:$0xff]
    %v2263 = vld [vmem:[%s1 + $0x5a0] sm:$0xff]
    %v2264 = vld [vmem:[%s1 + $0x5a8] sm:$0xff]
    %v2265 = vld [vmem:[%s1 + $0x5b0] sm:$0xff]
    %v2266 = vld [vmem:[%s1 + $0x5b8] sm:$0xff]
    %v2267 = vld [vmem:[%s1 + $0x5c0] sm:$0xff]
    %v2268 = vld [vmem:[%s1 + $0x5c8] sm:$0xff]
    %v2269 = vld [vmem:[%s1 + $0x5d0] sm:$0xff]
    %v2270 = vld [vmem:[%s1 + $0x5d8] sm:$0xff]
    %v2271 = vld [vmem:[%s1 + $0x5e0] sm:$0xff]
    %v2272 = vld [vmem:[%s1 + $0x5e8] sm:$0xff]
    %v2273 = vld [vmem:[%s1 + $0x5f0] sm:$0xff]
    %v2274 = vld [vmem:[%s1 + $0x5f8] sm:$0xff]
    %v2275 = vld [vmem:[%s1 + $0x600] sm:$0xff]
    %v2276 = vld [vmem:[%s1 + $0x608] sm:$0xff]
    %v2277 = vld [vmem:[%s1 + $0x610] sm:$0xff]
    %v2278 = vld [vmem:[%s1 + $0x618] sm:$0xff]
    %v2279 = vld [vmem:[%s1 + $0x620] sm:$0xff]
    %v2280 = vld [vmem:[%s1 + $0x628] sm:$0xff]
    %v2281 = vld [vmem:[%s1 + $0x630] sm:$0xff]
    %v2282 = vld [vmem:[%s1 + $0x638] sm:$0xff]
    %v2283 = vld [vmem:[%s1 + $0x640] sm:$0xff]
    %v2284 = vld [vmem:[%s1 + $0x648] sm:$0xff]
    %v2285 = vld [vmem:[%s1 + $0x650] sm:$0xff]
    %v2286 = vld [vmem:[%s1 + $0x658] sm:$0xff]
    %v2287 = vld [vmem:[%s1 + $0x660] sm:$0xff]
    %v2288 = vld [vmem:[%s1 + $0x668] sm:$0xff]
    %v2289 = vld [vmem:[%s1 + $0x670] sm:$0xff]
    %v2290 = vld [vmem:[%s1 + $0x678] sm:$0xff]
    %v2291 = vld [vmem:[%s1 + $0x680] sm:$0xff]
    %v2292 = vld [vmem:[%s1 + $0x688] sm:$0xff]
    %v2293 = vld [vmem:[%s1 + $0x690] sm:$0xff]
    %v2294 = vld [vmem:[%s1 + $0x698] sm:$0xff]
    %v2295 = vld [vmem:[%s1 + $0x6a0] sm:$0xff]
    %v2296 = vld [vmem:[%s1 + $0x6a8] sm:$0xff]
    %v2297 = vld [vmem:[%s1 + $0x6b0] sm:$0xff]
    %v2298 = vld [vmem:[%s1 + $0x6b8] sm:$0xff]
    %v2299 = vld [vmem:[%s1 + $0x6c0] sm:$0xff]
    %v2300 = vld [vmem:[%s1 + $0x6c8] sm:$0xff]
    %v2301 = vld [vmem:[%s1 + $0x6d0] sm:$0xff]
    %v2302 = vld [vmem:[%s1 + $0x6d8] sm:$0xff]
    %v2303 = vld [vmem:[%s1 + $0x6e0] sm:$0xff]
    %v2304 = vld [vmem:[%s1 + $0x6e8] sm:$0xff]
    %v2305 = vld [vmem:[%s1 + $0x6f0] sm:$0xff]
    %v2306 = vld [vmem:[%s1 + $0x6f8] sm:$0xff]
    %v2307 = vld [vmem:[%s1 + $0x700] sm:$0xff]
    %v2308 = vld [vmem:[%s1 + $0x708] sm:$0xff]
    %v2309 = vld [vmem:[%s1 + $0x710] sm:$0xff]
    %v2310 = vld [vmem:[%s1 + $0x718] sm:$0xff]
    %v2311 = vld [vmem:[%s1 + $0x720] sm:$0xff]
    %v2312 = vld [vmem:[%s1 + $0x728] sm:$0xff]
    %v2313 = vld [vmem:[%s1 + $0x730] sm:$0xff]
    %v2314 = vld [vmem:[%s1 + $0x738] sm:$0xff]
    %v2315 = vld [vmem:[%s1 + $0x740] sm:$0xff]
    %v2316 = vld [vmem:[%s1 + $0x748] sm:$0xff]
    %v2317 = vld [vmem:[%s1 + $0x750] sm:$0xff]
    %v2318 = vld [vmem:[%s1 + $0x758] sm:$0xff]
    %v2319 = vld [vmem:[%s1 + $0x760] sm:$0xff]
    %v2320 = vld [vmem:[%s1 + $0x768] sm:$0xff]
    %v2321 = vld [vmem:[%s1 + $0x770] sm:$0xff]
    %v2322 = vld [vmem:[%s1 + $0x778] sm:$0xff]
    %v2323 = vld [vmem:[%s1 + $0x780] sm:$0xff]
    %v2324 = vld [vmem:[%s1 + $0x788] sm:$0xff]
    %v2325 = vld [vmem:[%s1 + $0x790] sm:$0xff]
    %v2326 = vld [vmem:[%s1 + $0x798] sm:$0xff]
    %v2327 = vld [vmem:[%s1 + $0x7a0] sm:$0xff]
    %v2328 = vld [vmem:[%s1 + $0x7a8] sm:$0xff]
    %v2329 = vld [vmem:[%s1 + $0x7b0] sm:$0xff]
    %v2330 = vld [vmem:[%s1 + $0x7b8] sm:$0xff]
    %v2331 = vld [vmem:[%s1 + $0x7c0] sm:$0xff]
    %v2332 = vld [vmem:[%s1 + $0x7c8] sm:$0xff]
    %v2333 = vld [vmem:[%s1 + $0x7d0] sm:$0xff]
    %v2334 = vld [vmem:[%s1 + $0x7d8] sm:$0xff]
    %v2335 = vld [vmem:[%s1 + $0x7e0] sm:$0xff]
    %v2336 = vld [vmem:[%s1 + $0x7e8] sm:$0xff]
    %v2337 = vld [vmem:[%s1 + $0x7f0] sm:$0xff]
    %v2338 = vld [vmem:[%s1 + $0x7f8] sm:$0xff]
    %2340 = vst [vmem:[#allocation1] ss:$4 sm:$0xff] %v2072
    %v2341 = vld.sshfl [vmem:[#allocation1] sm:$0xff pattern:$0x73625140]
    %v2342 = vld.sshfl [vmem:[#allocation1 + $0x8] sm:$0xff pattern:$0x73625140]
    %2345 = vmatpush.msra.mxu0 %v2203
    %2346 = vmatpush.msra.mxu0 %v2195
    %2347 = vmatpush.msra.mxu0 %v2187
    %2348 = vmatpush.msra.mxu0 %v2179
    %2349 = vmatpush.msra.mxu0 %v2171
    %2350 = vmatpush.msra.mxu0 %v2163
    %2351 = vmatpush.msra.mxu0 %v2155
    %2352 = vmatpush.msra.mxu0 %v2147
    %2353 = vmatpush.msra.mxu0 %v2139
    %2354 = vmatpush.msra.mxu0 %v2131
    %2355 = vmatpush.msra.mxu0 %v2123
    %2356 = vmatpush.msra.mxu0 %v2115
    %2357 = vmatpush.msra.mxu0 %v2107
    %2358 = vmatpush.msra.mxu0 %v2099
    %2359 = vmatpush.msra.mxu0 %v2091
    %2360 = vmatpush.msra.mxu0 %v2083
    %2361 = vmatmul.f32.gmra.mxu0 %v2341
    %v2362 = vpop.f32.mrf.mxu0
    %v2363 = vadd.f32 0.0, %v2362
    %2364 = vdwg.mxu0
    %2365 = vmatpush.msra.mxu0 %v2331
    %2366 = vmatpush.msra.mxu0 %v2323
    %2367 = vmatpush.msra.mxu0 %v2315
    %2368 = vmatpush.msra.mxu0 %v2307
    %2369 = vmatpush.msra.mxu0 %v2299
    %2370 = vmatpush.msra.mxu0 %v2291
    %2371 = vmatpush.msra.mxu0 %v2283
    %2372 = vmatpush.msra.mxu0 %v2275
    %2373 = vmatpush.msra.mxu0 %v2267
    %2374 = vmatpush.msra.mxu0 %v2259
    %2375 = vmatpush.msra.mxu0 %v2251
    %2376 = vmatpush.msra.mxu0 %v2243
    %2377 = vmatpush.msra.mxu0 %v2235
    %2378 = vmatpush.msra.mxu0 %v2227
    %2379 = vmatpush.msra.mxu0 %v2219
    %2380 = vmatpush.msra.mxu0 %v2211
    %2381 = vmatmul.f32.gmra.mxu0 %v2342
    %v2382 = vpop.f32.mrf.mxu0
    %v2383 = vadd.f32 %v2363, %v2382
    %2384 = vdwg.mxu0
    %2385 = vmatpush.msra.mxu0 %v2204
    %2386 = vmatpush.msra.mxu0 %v2196
    %2387 = vmatpush.msra.mxu0 %v2188
    %2388 = vmatpush.msra.mxu0 %v2180
    %2389 = vmatpush.msra.mxu0 %v2172
    %2390 = vmatpush.msra.mxu0 %v2164
    %2391 = vmatpush.msra.mxu0 %v2156
    %2392 = vmatpush.msra.mxu0 %v2148
    %2393 = vmatpush.msra.mxu0 %v2140
    %2394 = vmatpush.msra.mxu0 %v2132
    %2395 = vmatpush.msra.mxu0 %v2124
    %2396 = vmatpush.msra.mxu0 %v2116
    %2397 = vmatpush.msra.mxu0 %v2108
    %2398 = vmatpush.msra.mxu0 %v2100
    %2399 = vmatpush.msra.mxu0 %v2092
    %2400 = vmatpush.msra.mxu0 %v2084
    %2401 = vmatmul.f32.gmra.mxu0 %v2341
    %v2402 = vpop.f32.mrf.mxu0
    %v2403 = vadd.f32 0.0, %v2402
    %2404 = vdwg.mxu0
    %2405 = vmatpush.msra.mxu0 %v2332
    %2406 = vmatpush.msra.mxu0 %v2324
    %2407 = vmatpush.msra.mxu0 %v2316
    %2408 = vmatpush.msra.mxu0 %v2308
    %2409 = vmatpush.msra.mxu0 %v2300
    %2410 = vmatpush.msra.mxu0 %v2292
    %2411 = vmatpush.msra.mxu0 %v2284
    %2412 = vmatpush.msra.mxu0 %v2276
    %2413 = vmatpush.msra.mxu0 %v2268
    %2414 = vmatpush.msra.mxu0 %v2260
    %2415 = vmatpush.msra.mxu0 %v2252
    %2416 = vmatpush.msra.mxu0 %v2244
    %2417 = vmatpush.msra.mxu0 %v2236
    %2418 = vmatpush.msra.mxu0 %v2228
    %2419 = vmatpush.msra.mxu0 %v2220
    %2420 = vmatpush.msra.mxu0 %v2212
    %2421 = vmatmul.f32.gmra.mxu0 %v2342
    %v2422 = vpop.f32.mrf.mxu0
    %v2423 = vadd.f32 %v2403, %v2422
    %2424 = vdwg.mxu0
    %2425 = vmatpush.msra.mxu0 %v2205
    %2426 = vmatpush.msra.mxu0 %v2197
    %2427 = vmatpush.msra.mxu0 %v2189
    %2428 = vmatpush.msra.mxu0 %v2181
    %2429 = vmatpush.msra.mxu0 %v2173
    %2430 = vmatpush.msra.mxu0 %v2165
    %2431 = vmatpush.msra.mxu0 %v2157
    %2432 = vmatpush.msra.mxu0 %v2149
    %2433 = vmatpush.msra.mxu0 %v2141
    %2434 = vmatpush.msra.mxu0 %v2133
    %2435 = vmatpush.msra.mxu0 %v2125
    %2436 = vmatpush.msra.mxu0 %v2117
    %2437 = vmatpush.msra.mxu0 %v2109
    %2438 = vmatpush.msra.mxu0 %v2101
    %2439 = vmatpush.msra.mxu0 %v2093
    %2440 = vmatpush.msra.mxu0 %v2085
    %2441 = vmatmul.f32.gmra.mxu0 %v2341
    %v2442 = vpop.f32.mrf.mxu0
    %v2443 = vadd.f32 0.0, %v2442
    %2444 = vdwg.mxu0
    %2445 = vmatpush.msra.mxu0 %v2333
    %2446 = vmatpush.msra.mxu0 %v2325
    %2447 = vmatpush.msra.mxu0 %v2317
    %2448 = vmatpush.msra.mxu0 %v2309
    %2449 = vmatpush.msra.mxu0 %v2301
    %2450 = vmatpush.msra.mxu0 %v2293
    %2451 = vmatpush.msra.mxu0 %v2285
    %2452 = vmatpush.msra.mxu0 %v2277
    %2453 = vmatpush.msra.mxu0 %v2269
    %2454 = vmatpush.msra.mxu0 %v2261
    %2455 = vmatpush.msra.mxu0 %v2253
    %2456 = vmatpush.msra.mxu0 %v2245
    %2457 = vmatpush.msra.mxu0 %v2237
    %2458 = vmatpush.msra.mxu0 %v2229
    %2459 = vmatpush.msra.mxu0 %v2221
    %2460 = vmatpush.msra.mxu0 %v2213
    %2461 = vmatmul.f32.gmra.mxu0 %v2342
    %v2462 = vpop.f32.mrf.mxu0
    %v2463 = vadd.f32 %v2443, %v2462
    %2464 = vdwg.mxu0
    %2465 = vmatpush.msra.mxu0 %v2206
    %2466 = vmatpush.msra.mxu0 %v2198
    %2467 = vmatpush.msra.mxu0 %v2190
    %2468 = vmatpush.msra.mxu0 %v2182
    %2469 = vmatpush.msra.mxu0 %v2174
    %2470 = vmatpush.msra.mxu0 %v2166
    %2471 = vmatpush.msra.mxu0 %v2158
    %2472 = vmatpush.msra.mxu0 %v2150
    %2473 = vmatpush.msra.mxu0 %v2142
    %2474 = vmatpush.msra.mxu0 %v2134
    %2475 = vmatpush.msra.mxu0 %v2126
    %2476 = vmatpush.msra.mxu0 %v2118
    %2477 = vmatpush.msra.mxu0 %v2110
    %2478 = vmatpush.msra.mxu0 %v2102
    %2479 = vmatpush.msra.mxu0 %v2094
    %2480 = vmatpush.msra.mxu0 %v2086
    %2481 = vmatmul.f32.gmra.mxu0 %v2341
    %v2482 = vpop.f32.mrf.mxu0
    %v2483 = vadd.f32 0.0, %v2482
    %2484 = vdwg.mxu0
    %2485 = vmatpush.msra.mxu0 %v2334
    %2486 = vmatpush.msra.mxu0 %v2326
    %2487 = vmatpush.msra.mxu0 %v2318
    %2488 = vmatpush.msra.mxu0 %v2310
    %2489 = vmatpush.msra.mxu0 %v2302
    %2490 = vmatpush.msra.mxu0 %v2294
    %2491 = vmatpush.msra.mxu0 %v2286
    %2492 = vmatpush.msra.mxu0 %v2278
    %2493 = vmatpush.msra.mxu0 %v2270
    %2494 = vmatpush.msra.mxu0 %v2262
    %2495 = vmatpush.msra.mxu0 %v2254
    %2496 = vmatpush.msra.mxu0 %v2246
    %2497 = vmatpush.msra.mxu0 %v2238
    %2498 = vmatpush.msra.mxu0 %v2230
    %2499 = vmatpush.msra.mxu0 %v2222
    %2500 = vmatpush.msra.mxu0 %v2214
    %2501 = vmatmul.f32.gmra.mxu0 %v2342
    %v2502 = vpop.f32.mrf.mxu0
    %v2503 = vadd.f32 %v2483, %v2502
    %2504 = vdwg.mxu0
    %2505 = vmatpush.msra.mxu0 %v2207
    %2506 = vmatpush.msra.mxu0 %v2199
    %2507 = vmatpush.msra.mxu0 %v2191
    %2508 = vmatpush.msra.mxu0 %v2183
    %2509 = vmatpush.msra.mxu0 %v2175
    %2510 = vmatpush.msra.mxu0 %v2167
    %2511 = vmatpush.msra.mxu0 %v2159
    %2512 = vmatpush.msra.mxu0 %v2151
    %2513 = vmatpush.msra.mxu0 %v2143
    %2514 = vmatpush.msra.mxu0 %v2135
    %2515 = vmatpush.msra.mxu0 %v2127
    %2516 = vmatpush.msra.mxu0 %v2119
    %2517 = vmatpush.msra.mxu0 %v2111
    %2518 = vmatpush.msra.mxu0 %v2103
    %2519 = vmatpush.msra.mxu0 %v2095
    %2520 = vmatpush.msra.mxu0 %v2087
    %2521 = vmatmul.f32.gmra.mxu0 %v2341
    %v2522 = vpop.f32.mrf.mxu0
    %v2523 = vadd.f32 0.0, %v2522
    %2524 = vdwg.mxu0
    %2525 = vmatpush.msra.mxu0 %v2335
    %2526 = vmatpush.msra.mxu0 %v2327
    %2527 = vmatpush.msra.mxu0 %v2319
    %2528 = vmatpush.msra.mxu0 %v2311
    %2529 = vmatpush.msra.mxu0 %v2303
    %2530 = vmatpush.msra.mxu0 %v2295
    %2531 = vmatpush.msra.mxu0 %v2287
    %2532 = vmatpush.msra.mxu0 %v2279
    %2533 = vmatpush.msra.mxu0 %v2271
    %2534 = vmatpush.msra.mxu0 %v2263
    %2535 = vmatpush.msra.mxu0 %v2255
    %2536 = vmatpush.msra.mxu0 %v2247
    %2537 = vmatpush.msra.mxu0 %v2239
    %2538 = vmatpush.msra.mxu0 %v2231
    %2539 = vmatpush.msra.mxu0 %v2223
    %2540 = vmatpush.msra.mxu0 %v2215
    %2541 = vmatmul.f32.gmra.mxu0 %v2342
    %v2542 = vpop.f32.mrf.mxu0
    %v2543 = vadd.f32 %v2523, %v2542
    %2544 = vdwg.mxu0
    %2545 = vmatpush.msra.mxu0 %v2208
    %2546 = vmatpush.msra.mxu0 %v2200
    %2547 = vmatpush.msra.mxu0 %v2192
    %2548 = vmatpush.msra.mxu0 %v2184
    %2549 = vmatpush.msra.mxu0 %v2176
    %2550 = vmatpush.msra.mxu0 %v2168
    %2551 = vmatpush.msra.mxu0 %v2160
    %2552 = vmatpush.msra.mxu0 %v2152
    %2553 = vmatpush.msra.mxu0 %v2144
    %2554 = vmatpush.msra.mxu0 %v2136
    %2555 = vmatpush.msra.mxu0 %v2128
    %2556 = vmatpush.msra.mxu0 %v2120
    %2557 = vmatpush.msra.mxu0 %v2112
    %2558 = vmatpush.msra.mxu0 %v2104
    %2559 = vmatpush.msra.mxu0 %v2096
    %2560 = vmatpush.msra.mxu0 %v2088
    %2561 = vmatmul.f32.gmra.mxu0 %v2341
    %v2562 = vpop.f32.mrf.mxu0
    %v2563 = vadd.f32 0.0, %v2562
    %2564 = vdwg.mxu0
    %2565 = vmatpush.msra.mxu0 %v2336
    %2566 = vmatpush.msra.mxu0 %v2328
    %2567 = vmatpush.msra.mxu0 %v2320
    %2568 = vmatpush.msra.mxu0 %v2312
    %2569 = vmatpush.msra.mxu0 %v2304
    %2570 = vmatpush.msra.mxu0 %v2296
    %2571 = vmatpush.msra.mxu0 %v2288
    %2572 = vmatpush.msra.mxu0 %v2280
    %2573 = vmatpush.msra.mxu0 %v2272
    %2574 = vmatpush.msra.mxu0 %v2264
    %2575 = vmatpush.msra.mxu0 %v2256
    %2576 = vmatpush.msra.mxu0 %v2248
    %2577 = vmatpush.msra.mxu0 %v2240
    %2578 = vmatpush.msra.mxu0 %v2232
    %2579 = vmatpush.msra.mxu0 %v2224
    %2580 = vmatpush.msra.mxu0 %v2216
    %2581 = vmatmul.f32.gmra.mxu0 %v2342
    %v2582 = vpop.f32.mrf.mxu0
    %v2583 = vadd.f32 %v2563, %v2582
    %2584 = vdwg.mxu0
    %2585 = vmatpush.msra.mxu0 %v2209
    %2586 = vmatpush.msra.mxu0 %v2201
    %2587 = vmatpush.msra.mxu0 %v2193
    %2588 = vmatpush.msra.mxu0 %v2185
    %2589 = vmatpush.msra.mxu0 %v2177
    %2590 = vmatpush.msra.mxu0 %v2169
    %2591 = vmatpush.msra.mxu0 %v2161
    %2592 = vmatpush.msra.mxu0 %v2153
    %2593 = vmatpush.msra.mxu0 %v2145
    %2594 = vmatpush.msra.mxu0 %v2137
    %2595 = vmatpush.msra.mxu0 %v2129
    %2596 = vmatpush.msra.mxu0 %v2121
    %2597 = vmatpush.msra.mxu0 %v2113
    %2598 = vmatpush.msra.mxu0 %v2105
    %2599 = vmatpush.msra.mxu0 %v2097
    %2600 = vmatpush.msra.mxu0 %v2089
    %2601 = vmatmul.f32.gmra.mxu0 %v2341
    %v2602 = vpop.f32.mrf.mxu0
    %v2603 = vadd.f32 0.0, %v2602
    %2604 = vdwg.mxu0
    %2605 = vmatpush.msra.mxu0 %v2337
    %2606 = vmatpush.msra.mxu0 %v2329
    %2607 = vmatpush.msra.mxu0 %v2321
    %2608 = vmatpush.msra.mxu0 %v2313
    %2609 = vmatpush.msra.mxu0 %v2305
    %2610 = vmatpush.msra.mxu0 %v2297
    %2611 = vmatpush.msra.mxu0 %v2289
    %2612 = vmatpush.msra.mxu0 %v2281
    %2613 = vmatpush.msra.mxu0 %v2273
    %2614 = vmatpush.msra.mxu0 %v2265
    %2615 = vmatpush.msra.mxu0 %v2257
    %2616 = vmatpush.msra.mxu0 %v2249
    %2617 = vmatpush.msra.mxu0 %v2241
    %2618 = vmatpush.msra.mxu0 %v2233
    %2619 = vmatpush.msra.mxu0 %v2225
    %2620 = vmatpush.msra.mxu0 %v2217
    %2621 = vmatmul.f32.gmra.mxu0 %v2342
    %v2622 = vpop.f32.mrf.mxu0
    %v2623 = vadd.f32 %v2603, %v2622
    %2624 = vdwg.mxu0
    %2625 = vmatpush.msra.mxu0 %v2210
    %2626 = vmatpush.msra.mxu0 %v2202
    %2627 = vmatpush.msra.mxu0 %v2194
    %2628 = vmatpush.msra.mxu0 %v2186
    %2629 = vmatpush.msra.mxu0 %v2178
    %2630 = vmatpush.msra.mxu0 %v2170
    %2631 = vmatpush.msra.mxu0 %v2162
    %2632 = vmatpush.msra.mxu0 %v2154
    %2633 = vmatpush.msra.mxu0 %v2146
    %2634 = vmatpush.msra.mxu0 %v2138
    %2635 = vmatpush.msra.mxu0 %v2130
    %2636 = vmatpush.msra.mxu0 %v2122
    %2637 = vmatpush.msra.mxu0 %v2114
    %2638 = vmatpush.msra.mxu0 %v2106
    %2639 = vmatpush.msra.mxu0 %v2098
    %2640 = vmatpush.msra.mxu0 %v2090
    %2641 = vmatmul.f32.gmra.mxu0 %v2341
    %v2642 = vpop.f32.mrf.mxu0
    %v2643 = vadd.f32 0.0, %v2642
    %2644 = vdwg.mxu0
    %2645 = vmatpush.msra.mxu0 %v2338
    %2646 = vmatpush.msra.mxu0 %v2330
    %2647 = vmatpush.msra.mxu0 %v2322
    %2648 = vmatpush.msra.mxu0 %v2314
    %2649 = vmatpush.msra.mxu0 %v2306
    %2650 = vmatpush.msra.mxu0 %v2298
    %2651 = vmatpush.msra.mxu0 %v2290
    %2652 = vmatpush.msra.mxu0 %v2282
    %2653 = vmatpush.msra.mxu0 %v2274
    %2654 = vmatpush.msra.mxu0 %v2266
    %2655 = vmatpush.msra.mxu0 %v2258
    %2656 = vmatpush.msra.mxu0 %v2250
    %2657 = vmatpush.msra.mxu0 %v2242
    %2658 = vmatpush.msra.mxu0 %v2234
    %2659 = vmatpush.msra.mxu0 %v2226
    %2660 = vmatpush.msra.mxu0 %v2218
    %2661 = vmatmul.f32.gmra.mxu0 %v2342
    %v2662 = vpop.f32.mrf.mxu0
    %v2663 = vadd.f32 %v2643, %v2662
    %2664 = vdwg.mxu0
    %v2673 = vrot.slane %v2423, 6
    %v2674 = vrot.slane %v2463, 4
    %v2675 = vrot.slane %v2503, 2
    %v2676 = vrot.slane %v2583, 6
    %v2677 = vrot.slane %v2623, 4
    %v2678 = vrot.slane %v2663, 2
    %v2679 = vsel %vm621, %v2383, %v2673
    %v2680 = vsel %vm623, %v2674, %v2675
    %v2681 = vsel %vm625, %v2679, %v2680
    %v2682 = vsel %vm621, %v2543, %v2676
    %v2683 = vsel %vm623, %v2677, %v2678
    %v2684 = vsel %vm625, %v2682, %v2683
    %v2687 = vadd.f32 %v2081, %v2681
    %v2688 = vadd.f32 %v2082, %v2684
    %v2689 = vxor.u32 %v2687, 2147483648
    %v2690 = vmul.f32 %v2689, 1.442695
    %v2691 = vpow.pop %v2690
    %v2692 = vadd.f32 %v2691, 1.0
    %v2693 = vrcp.pop %v2692
    %v2694 = vmul.f32 %v2692, %v2693
    %v2695 = vsub.f32 1.0, %v2694
    %v2696 = vmul.f32 %v2693, %v2695
    %v2697 = vadd.f32 %v2693, %v2696
    %vm2698 = vweird.f32 %v2692
    %vm2699 = vweird.f32 %v2693
    %vm2700 = vmor %vm2698, %vm2699
    %v2701 = vsel %vm2700, %v2693, %v2697
    %v2702 = vand.u32 2147483647, %v2692
    %vm2703 = vcmp.eq.f32.partialorder %v2702, 8.507059e+37
    %v2704 = vand.u32 %v2692, 2147483648
    %v2705 = vor.u32 1.1754944e-38, %v2704
    %v2706 = vsel %vm2703, %v2705, %v2701
    %v2707 = vmul.f32 1.0, %v2706
    %v2709 = vrot.slane %v2687, 4
    %v2711 = vxor.u32 %v2709, 2147483648
    %v2712 = vmul.f32 %v2711, 1.442695
    %v2713 = vpow.pop %v2712
    %v2714 = vadd.f32 %v2713, 1.0
    %v2715 = vrcp.pop %v2714
    %v2716 = vmul.f32 %v2714, %v2715
    %v2717 = vsub.f32 1.0, %v2716
    %v2718 = vmul.f32 %v2715, %v2717
    %v2719 = vadd.f32 %v2715, %v2718
    %vm2720 = vweird.f32 %v2714
    %vm2721 = vweird.f32 %v2715
    %vm2722 = vmor %vm2720, %vm2721
    %v2723 = vsel %vm2722, %v2715, %v2719
    %v2724 = vand.u32 2147483647, %v2714
    %vm2725 = vcmp.eq.f32.partialorder %v2724, 8.507059e+37
    %v2726 = vand.u32 %v2714, 2147483648
    %v2727 = vor.u32 1.1754944e-38, %v2726
    %v2728 = vsel %vm2725, %v2727, %v2723
    %v2729 = vmul.f32 1.0, %v2728
    %v2730 = vtanh.pop %v2688
    %v2732 = vrot.slane %v2688, 4
    %v2734 = vxor.u32 %v2732, 2147483648
    %v2735 = vmul.f32 %v2734, 1.442695
    %v2736 = vpow.pop %v2735
    %v2737 = vadd.f32 %v2736, 1.0
    %v2738 = vrcp.pop %v2737
    %v2739 = vmul.f32 %v2737, %v2738
    %v2740 = vsub.f32 1.0, %v2739
    %v2741 = vmul.f32 %v2738, %v2740
    %v2742 = vadd.f32 %v2738, %v2741
    %vm2743 = vweird.f32 %v2737
    %vm2744 = vweird.f32 %v2738
    %vm2745 = vmor %vm2743, %vm2744
    %v2746 = vsel %vm2745, %v2738, %v2742
    %v2747 = vand.u32 2147483647, %v2737
    %vm2748 = vcmp.eq.f32.partialorder %v2747, 8.507059e+37
    %v2749 = vand.u32 %v2737, 2147483648
    %v2750 = vor.u32 1.1754944e-38, %v2749
    %v2751 = vsel %vm2748, %v2750, %v2746
    %v2752 = vmul.f32 1.0, %v2751
    %v2753 = vmul.f32 %v2729, %v2070
    %v2754 = vmul.f32 %v2707, %v2730
    %v2755 = vadd.f32 %v2753, %v2754
    %v2756 = vtanh.pop %v2755
    %v2757 = vmul.f32 %v2752, %v2756
    %s2758 = smul.u32 %s2077, 2
    %s2759 = smul.addr %s2758, 2
    %s2760 = scalar_lea.vmem %s2, %s2759
    %2761 = vst [vmem:[%s2760] sm:$0xf] %v2757
    %s2762 = sadd.s32 %s19, 4
    %s2763 = smul.u32 %s2762, 8
    %s2764 = smul.addr %s2763, 2
    %s2765 = scalar_lea.vmem %s0, %s2764
    %v2766 = vld [vmem:[%s2765] sm:$0xff]
    %v2767 = vld [vmem:[%s2765 + $0x8] sm:$0xff]
    %v2768 = vld [vmem:[%s1] sm:$0xff]
    %v2769 = vld [vmem:[%s1 + $0x8] sm:$0xff]
    %v2770 = vld [vmem:[%s1 + $0x10] sm:$0xff]
    %v2771 = vld [vmem:[%s1 + $0x18] sm:$0xff]
    %v2772 = vld [vmem:[%s1 + $0x20] sm:$0xff]
    %v2773 = vld [vmem:[%s1 + $0x28] sm:$0xff]
    %v2774 = vld [vmem:[%s1 + $0x30] sm:$0xff]
    %v2775 = vld [vmem:[%s1 + $0x38] sm:$0xff]
    %v2776 = vld [vmem:[%s1 + $0x40] sm:$0xff]
    %v2777 = vld [vmem:[%s1 + $0x48] sm:$0xff]
    %v2778 = vld [vmem:[%s1 + $0x50] sm:$0xff]
    %v2779 = vld [vmem:[%s1 + $0x58] sm:$0xff]
    %v2780 = vld [vmem:[%s1 + $0x60] sm:$0xff]
    %v2781 = vld [vmem:[%s1 + $0x68] sm:$0xff]
    %v2782 = vld [vmem:[%s1 + $0x70] sm:$0xff]
    %v2783 = vld [vmem:[%s1 + $0x78] sm:$0xff]
    %v2784 = vld [vmem:[%s1 + $0x80] sm:$0xff]
    %v2785 = vld [vmem:[%s1 + $0x88] sm:$0xff]
    %v2786 = vld [vmem:[%s1 + $0x90] sm:$0xff]
    %v2787 = vld [vmem:[%s1 + $0x98] sm:$0xff]
    %v2788 = vld [vmem:[%s1 + $0xa0] sm:$0xff]
    %v2789 = vld [vmem:[%s1 + $0xa8] sm:$0xff]
    %v2790 = vld [vmem:[%s1 + $0xb0] sm:$0xff]
    %v2791 = vld [vmem:[%s1 + $0xb8] sm:$0xff]
    %v2792 = vld [vmem:[%s1 + $0xc0] sm:$0xff]
    %v2793 = vld [vmem:[%s1 + $0xc8] sm:$0xff]
    %v2794 = vld [vmem:[%s1 + $0xd0] sm:$0xff]
    %v2795 = vld [vmem:[%s1 + $0xd8] sm:$0xff]
    %v2796 = vld [vmem:[%s1 + $0xe0] sm:$0xff]
    %v2797 = vld [vmem:[%s1 + $0xe8] sm:$0xff]
    %v2798 = vld [vmem:[%s1 + $0xf0] sm:$0xff]
    %v2799 = vld [vmem:[%s1 + $0xf8] sm:$0xff]
    %v2800 = vld [vmem:[%s1 + $0x100] sm:$0xff]
    %v2801 = vld [vmem:[%s1 + $0x108] sm:$0xff]
    %v2802 = vld [vmem:[%s1 + $0x110] sm:$0xff]
    %v2803 = vld [vmem:[%s1 + $0x118] sm:$0xff]
    %v2804 = vld [vmem:[%s1 + $0x120] sm:$0xff]
    %v2805 = vld [vmem:[%s1 + $0x128] sm:$0xff]
    %v2806 = vld [vmem:[%s1 + $0x130] sm:$0xff]
    %v2807 = vld [vmem:[%s1 + $0x138] sm:$0xff]
    %v2808 = vld [vmem:[%s1 + $0x140] sm:$0xff]
    %v2809 = vld [vmem:[%s1 + $0x148] sm:$0xff]
    %v2810 = vld [vmem:[%s1 + $0x150] sm:$0xff]
    %v2811 = vld [vmem:[%s1 + $0x158] sm:$0xff]
    %v2812 = vld [vmem:[%s1 + $0x160] sm:$0xff]
    %v2813 = vld [vmem:[%s1 + $0x168] sm:$0xff]
    %v2814 = vld [vmem:[%s1 + $0x170] sm:$0xff]
    %v2815 = vld [vmem:[%s1 + $0x178] sm:$0xff]
    %v2816 = vld [vmem:[%s1 + $0x180] sm:$0xff]
    %v2817 = vld [vmem:[%s1 + $0x188] sm:$0xff]
    %v2818 = vld [vmem:[%s1 + $0x190] sm:$0xff]
    %v2819 = vld [vmem:[%s1 + $0x198] sm:$0xff]
    %v2820 = vld [vmem:[%s1 + $0x1a0] sm:$0xff]
    %v2821 = vld [vmem:[%s1 + $0x1a8] sm:$0xff]
    %v2822 = vld [vmem:[%s1 + $0x1b0] sm:$0xff]
    %v2823 = vld [vmem:[%s1 + $0x1b8] sm:$0xff]
    %v2824 = vld [vmem:[%s1 + $0x1c0] sm:$0xff]
    %v2825 = vld [vmem:[%s1 + $0x1c8] sm:$0xff]
    %v2826 = vld [vmem:[%s1 + $0x1d0] sm:$0xff]
    %v2827 = vld [vmem:[%s1 + $0x1d8] sm:$0xff]
    %v2828 = vld [vmem:[%s1 + $0x1e0] sm:$0xff]
    %v2829 = vld [vmem:[%s1 + $0x1e8] sm:$0xff]
    %v2830 = vld [vmem:[%s1 + $0x1f0] sm:$0xff]
    %v2831 = vld [vmem:[%s1 + $0x1f8] sm:$0xff]
    %v2832 = vld [vmem:[%s1 + $0x200] sm:$0xff]
    %v2833 = vld [vmem:[%s1 + $0x208] sm:$0xff]
    %v2834 = vld [vmem:[%s1 + $0x210] sm:$0xff]
    %v2835 = vld [vmem:[%s1 + $0x218] sm:$0xff]
    %v2836 = vld [vmem:[%s1 + $0x220] sm:$0xff]
    %v2837 = vld [vmem:[%s1 + $0x228] sm:$0xff]
    %v2838 = vld [vmem:[%s1 + $0x230] sm:$0xff]
    %v2839 = vld [vmem:[%s1 + $0x238] sm:$0xff]
    %v2840 = vld [vmem:[%s1 + $0x240] sm:$0xff]
    %v2841 = vld [vmem:[%s1 + $0x248] sm:$0xff]
    %v2842 = vld [vmem:[%s1 + $0x250] sm:$0xff]
    %v2843 = vld [vmem:[%s1 + $0x258] sm:$0xff]
    %v2844 = vld [vmem:[%s1 + $0x260] sm:$0xff]
    %v2845 = vld [vmem:[%s1 + $0x268] sm:$0xff]
    %v2846 = vld [vmem:[%s1 + $0x270] sm:$0xff]
    %v2847 = vld [vmem:[%s1 + $0x278] sm:$0xff]
    %v2848 = vld [vmem:[%s1 + $0x280] sm:$0xff]
    %v2849 = vld [vmem:[%s1 + $0x288] sm:$0xff]
    %v2850 = vld [vmem:[%s1 + $0x290] sm:$0xff]
    %v2851 = vld [vmem:[%s1 + $0x298] sm:$0xff]
    %v2852 = vld [vmem:[%s1 + $0x2a0] sm:$0xff]
    %v2853 = vld [vmem:[%s1 + $0x2a8] sm:$0xff]
    %v2854 = vld [vmem:[%s1 + $0x2b0] sm:$0xff]
    %v2855 = vld [vmem:[%s1 + $0x2b8] sm:$0xff]
    %v2856 = vld [vmem:[%s1 + $0x2c0] sm:$0xff]
    %v2857 = vld [vmem:[%s1 + $0x2c8] sm:$0xff]
    %v2858 = vld [vmem:[%s1 + $0x2d0] sm:$0xff]
    %v2859 = vld [vmem:[%s1 + $0x2d8] sm:$0xff]
    %v2860 = vld [vmem:[%s1 + $0x2e0] sm:$0xff]
    %v2861 = vld [vmem:[%s1 + $0x2e8] sm:$0xff]
    %v2862 = vld [vmem:[%s1 + $0x2f0] sm:$0xff]
    %v2863 = vld [vmem:[%s1 + $0x2f8] sm:$0xff]
    %v2864 = vld [vmem:[%s1 + $0x300] sm:$0xff]
    %v2865 = vld [vmem:[%s1 + $0x308] sm:$0xff]
    %v2866 = vld [vmem:[%s1 + $0x310] sm:$0xff]
    %v2867 = vld [vmem:[%s1 + $0x318] sm:$0xff]
    %v2868 = vld [vmem:[%s1 + $0x320] sm:$0xff]
    %v2869 = vld [vmem:[%s1 + $0x328] sm:$0xff]
    %v2870 = vld [vmem:[%s1 + $0x330] sm:$0xff]
    %v2871 = vld [vmem:[%s1 + $0x338] sm:$0xff]
    %v2872 = vld [vmem:[%s1 + $0x340] sm:$0xff]
    %v2873 = vld [vmem:[%s1 + $0x348] sm:$0xff]
    %v2874 = vld [vmem:[%s1 + $0x350] sm:$0xff]
    %v2875 = vld [vmem:[%s1 + $0x358] sm:$0xff]
    %v2876 = vld [vmem:[%s1 + $0x360] sm:$0xff]
    %v2877 = vld [vmem:[%s1 + $0x368] sm:$0xff]
    %v2878 = vld [vmem:[%s1 + $0x370] sm:$0xff]
    %v2879 = vld [vmem:[%s1 + $0x378] sm:$0xff]
    %v2880 = vld [vmem:[%s1 + $0x380] sm:$0xff]
    %v2881 = vld [vmem:[%s1 + $0x388] sm:$0xff]
    %v2882 = vld [vmem:[%s1 + $0x390] sm:$0xff]
    %v2883 = vld [vmem:[%s1 + $0x398] sm:$0xff]
    %v2884 = vld [vmem:[%s1 + $0x3a0] sm:$0xff]
    %v2885 = vld [vmem:[%s1 + $0x3a8] sm:$0xff]
    %v2886 = vld [vmem:[%s1 + $0x3b0] sm:$0xff]
    %v2887 = vld [vmem:[%s1 + $0x3b8] sm:$0xff]
    %v2888 = vld [vmem:[%s1 + $0x3c0] sm:$0xff]
    %v2889 = vld [vmem:[%s1 + $0x3c8] sm:$0xff]
    %v2890 = vld [vmem:[%s1 + $0x3d0] sm:$0xff]
    %v2891 = vld [vmem:[%s1 + $0x3d8] sm:$0xff]
    %v2892 = vld [vmem:[%s1 + $0x3e0] sm:$0xff]
    %v2893 = vld [vmem:[%s1 + $0x3e8] sm:$0xff]
    %v2894 = vld [vmem:[%s1 + $0x3f0] sm:$0xff]
    %v2895 = vld [vmem:[%s1 + $0x3f8] sm:$0xff]
    %v2896 = vld [vmem:[%s1 + $0x400] sm:$0xff]
    %v2897 = vld [vmem:[%s1 + $0x408] sm:$0xff]
    %v2898 = vld [vmem:[%s1 + $0x410] sm:$0xff]
    %v2899 = vld [vmem:[%s1 + $0x418] sm:$0xff]
    %v2900 = vld [vmem:[%s1 + $0x420] sm:$0xff]
    %v2901 = vld [vmem:[%s1 + $0x428] sm:$0xff]
    %v2902 = vld [vmem:[%s1 + $0x430] sm:$0xff]
    %v2903 = vld [vmem:[%s1 + $0x438] sm:$0xff]
    %v2904 = vld [vmem:[%s1 + $0x440] sm:$0xff]
    %v2905 = vld [vmem:[%s1 + $0x448] sm:$0xff]
    %v2906 = vld [vmem:[%s1 + $0x450] sm:$0xff]
    %v2907 = vld [vmem:[%s1 + $0x458] sm:$0xff]
    %v2908 = vld [vmem:[%s1 + $0x460] sm:$0xff]
    %v2909 = vld [vmem:[%s1 + $0x468] sm:$0xff]
    %v2910 = vld [vmem:[%s1 + $0x470] sm:$0xff]
    %v2911 = vld [vmem:[%s1 + $0x478] sm:$0xff]
    %v2912 = vld [vmem:[%s1 + $0x480] sm:$0xff]
    %v2913 = vld [vmem:[%s1 + $0x488] sm:$0xff]
    %v2914 = vld [vmem:[%s1 + $0x490] sm:$0xff]
    %v2915 = vld [vmem:[%s1 + $0x498] sm:$0xff]
    %v2916 = vld [vmem:[%s1 + $0x4a0] sm:$0xff]
    %v2917 = vld [vmem:[%s1 + $0x4a8] sm:$0xff]
    %v2918 = vld [vmem:[%s1 + $0x4b0] sm:$0xff]
    %v2919 = vld [vmem:[%s1 + $0x4b8] sm:$0xff]
    %v2920 = vld [vmem:[%s1 + $0x4c0] sm:$0xff]
    %v2921 = vld [vmem:[%s1 + $0x4c8] sm:$0xff]
    %v2922 = vld [vmem:[%s1 + $0x4d0] sm:$0xff]
    %v2923 = vld [vmem:[%s1 + $0x4d8] sm:$0xff]
    %v2924 = vld [vmem:[%s1 + $0x4e0] sm:$0xff]
    %v2925 = vld [vmem:[%s1 + $0x4e8] sm:$0xff]
    %v2926 = vld [vmem:[%s1 + $0x4f0] sm:$0xff]
    %v2927 = vld [vmem:[%s1 + $0x4f8] sm:$0xff]
    %v2928 = vld [vmem:[%s1 + $0x500] sm:$0xff]
    %v2929 = vld [vmem:[%s1 + $0x508] sm:$0xff]
    %v2930 = vld [vmem:[%s1 + $0x510] sm:$0xff]
    %v2931 = vld [vmem:[%s1 + $0x518] sm:$0xff]
    %v2932 = vld [vmem:[%s1 + $0x520] sm:$0xff]
    %v2933 = vld [vmem:[%s1 + $0x528] sm:$0xff]
    %v2934 = vld [vmem:[%s1 + $0x530] sm:$0xff]
    %v2935 = vld [vmem:[%s1 + $0x538] sm:$0xff]
    %v2936 = vld [vmem:[%s1 + $0x540] sm:$0xff]
    %v2937 = vld [vmem:[%s1 + $0x548] sm:$0xff]
    %v2938 = vld [vmem:[%s1 + $0x550] sm:$0xff]
    %v2939 = vld [vmem:[%s1 + $0x558] sm:$0xff]
    %v2940 = vld [vmem:[%s1 + $0x560] sm:$0xff]
    %v2941 = vld [vmem:[%s1 + $0x568] sm:$0xff]
    %v2942 = vld [vmem:[%s1 + $0x570] sm:$0xff]
    %v2943 = vld [vmem:[%s1 + $0x578] sm:$0xff]
    %v2944 = vld [vmem:[%s1 + $0x580] sm:$0xff]
    %v2945 = vld [vmem:[%s1 + $0x588] sm:$0xff]
    %v2946 = vld [vmem:[%s1 + $0x590] sm:$0xff]
    %v2947 = vld [vmem:[%s1 + $0x598] sm:$0xff]
    %v2948 = vld [vmem:[%s1 + $0x5a0] sm:$0xff]
    %v2949 = vld [vmem:[%s1 + $0x5a8] sm:$0xff]
    %v2950 = vld [vmem:[%s1 + $0x5b0] sm:$0xff]
    %v2951 = vld [vmem:[%s1 + $0x5b8] sm:$0xff]
    %v2952 = vld [vmem:[%s1 + $0x5c0] sm:$0xff]
    %v2953 = vld [vmem:[%s1 + $0x5c8] sm:$0xff]
    %v2954 = vld [vmem:[%s1 + $0x5d0] sm:$0xff]
    %v2955 = vld [vmem:[%s1 + $0x5d8] sm:$0xff]
    %v2956 = vld [vmem:[%s1 + $0x5e0] sm:$0xff]
    %v2957 = vld [vmem:[%s1 + $0x5e8] sm:$0xff]
    %v2958 = vld [vmem:[%s1 + $0x5f0] sm:$0xff]
    %v2959 = vld [vmem:[%s1 + $0x5f8] sm:$0xff]
    %v2960 = vld [vmem:[%s1 + $0x600] sm:$0xff]
    %v2961 = vld [vmem:[%s1 + $0x608] sm:$0xff]
    %v2962 = vld [vmem:[%s1 + $0x610] sm:$0xff]
    %v2963 = vld [vmem:[%s1 + $0x618] sm:$0xff]
    %v2964 = vld [vmem:[%s1 + $0x620] sm:$0xff]
    %v2965 = vld [vmem:[%s1 + $0x628] sm:$0xff]
    %v2966 = vld [vmem:[%s1 + $0x630] sm:$0xff]
    %v2967 = vld [vmem:[%s1 + $0x638] sm:$0xff]
    %v2968 = vld [vmem:[%s1 + $0x640] sm:$0xff]
    %v2969 = vld [vmem:[%s1 + $0x648] sm:$0xff]
    %v2970 = vld [vmem:[%s1 + $0x650] sm:$0xff]
    %v2971 = vld [vmem:[%s1 + $0x658] sm:$0xff]
    %v2972 = vld [vmem:[%s1 + $0x660] sm:$0xff]
    %v2973 = vld [vmem:[%s1 + $0x668] sm:$0xff]
    %v2974 = vld [vmem:[%s1 + $0x670] sm:$0xff]
    %v2975 = vld [vmem:[%s1 + $0x678] sm:$0xff]
    %v2976 = vld [vmem:[%s1 + $0x680] sm:$0xff]
    %v2977 = vld [vmem:[%s1 + $0x688] sm:$0xff]
    %v2978 = vld [vmem:[%s1 + $0x690] sm:$0xff]
    %v2979 = vld [vmem:[%s1 + $0x698] sm:$0xff]
    %v2980 = vld [vmem:[%s1 + $0x6a0] sm:$0xff]
    %v2981 = vld [vmem:[%s1 + $0x6a8] sm:$0xff]
    %v2982 = vld [vmem:[%s1 + $0x6b0] sm:$0xff]
    %v2983 = vld [vmem:[%s1 + $0x6b8] sm:$0xff]
    %v2984 = vld [vmem:[%s1 + $0x6c0] sm:$0xff]
    %v2985 = vld [vmem:[%s1 + $0x6c8] sm:$0xff]
    %v2986 = vld [vmem:[%s1 + $0x6d0] sm:$0xff]
    %v2987 = vld [vmem:[%s1 + $0x6d8] sm:$0xff]
    %v2988 = vld [vmem:[%s1 + $0x6e0] sm:$0xff]
    %v2989 = vld [vmem:[%s1 + $0x6e8] sm:$0xff]
    %v2990 = vld [vmem:[%s1 + $0x6f0] sm:$0xff]
    %v2991 = vld [vmem:[%s1 + $0x6f8] sm:$0xff]
    %v2992 = vld [vmem:[%s1 + $0x700] sm:$0xff]
    %v2993 = vld [vmem:[%s1 + $0x708] sm:$0xff]
    %v2994 = vld [vmem:[%s1 + $0x710] sm:$0xff]
    %v2995 = vld [vmem:[%s1 + $0x718] sm:$0xff]
    %v2996 = vld [vmem:[%s1 + $0x720] sm:$0xff]
    %v2997 = vld [vmem:[%s1 + $0x728] sm:$0xff]
    %v2998 = vld [vmem:[%s1 + $0x730] sm:$0xff]
    %v2999 = vld [vmem:[%s1 + $0x738] sm:$0xff]
    %v3000 = vld [vmem:[%s1 + $0x740] sm:$0xff]
    %v3001 = vld [vmem:[%s1 + $0x748] sm:$0xff]
    %v3002 = vld [vmem:[%s1 + $0x750] sm:$0xff]
    %v3003 = vld [vmem:[%s1 + $0x758] sm:$0xff]
    %v3004 = vld [vmem:[%s1 + $0x760] sm:$0xff]
    %v3005 = vld [vmem:[%s1 + $0x768] sm:$0xff]
    %v3006 = vld [vmem:[%s1 + $0x770] sm:$0xff]
    %v3007 = vld [vmem:[%s1 + $0x778] sm:$0xff]
    %v3008 = vld [vmem:[%s1 + $0x780] sm:$0xff]
    %v3009 = vld [vmem:[%s1 + $0x788] sm:$0xff]
    %v3010 = vld [vmem:[%s1 + $0x790] sm:$0xff]
    %v3011 = vld [vmem:[%s1 + $0x798] sm:$0xff]
    %v3012 = vld [vmem:[%s1 + $0x7a0] sm:$0xff]
    %v3013 = vld [vmem:[%s1 + $0x7a8] sm:$0xff]
    %v3014 = vld [vmem:[%s1 + $0x7b0] sm:$0xff]
    %v3015 = vld [vmem:[%s1 + $0x7b8] sm:$0xff]
    %v3016 = vld [vmem:[%s1 + $0x7c0] sm:$0xff]
    %v3017 = vld [vmem:[%s1 + $0x7c8] sm:$0xff]
    %v3018 = vld [vmem:[%s1 + $0x7d0] sm:$0xff]
    %v3019 = vld [vmem:[%s1 + $0x7d8] sm:$0xff]
    %v3020 = vld [vmem:[%s1 + $0x7e0] sm:$0xff]
    %v3021 = vld [vmem:[%s1 + $0x7e8] sm:$0xff]
    %v3022 = vld [vmem:[%s1 + $0x7f0] sm:$0xff]
    %v3023 = vld [vmem:[%s1 + $0x7f8] sm:$0xff]
    %3025 = vst [vmem:[#allocation1] ss:$4 sm:$0xff] %v2757
    %v3026 = vld.sshfl [vmem:[#allocation1] sm:$0xff pattern:$0x73625140]
    %v3027 = vld.sshfl [vmem:[#allocation1 + $0x8] sm:$0xff pattern:$0x73625140]
    %3030 = vmatpush.msra.mxu0 %v2888
    %3031 = vmatpush.msra.mxu0 %v2880
    %3032 = vmatpush.msra.mxu0 %v2872
    %3033 = vmatpush.msra.mxu0 %v2864
    %3034 = vmatpush.msra.mxu0 %v2856
    %3035 = vmatpush.msra.mxu0 %v2848
    %3036 = vmatpush.msra.mxu0 %v2840
    %3037 = vmatpush.msra.mxu0 %v2832
    %3038 = vmatpush.msra.mxu0 %v2824
    %3039 = vmatpush.msra.mxu0 %v2816
    %3040 = vmatpush.msra.mxu0 %v2808
    %3041 = vmatpush.msra.mxu0 %v2800
    %3042 = vmatpush.msra.mxu0 %v2792
    %3043 = vmatpush.msra.mxu0 %v2784
    %3044 = vmatpush.msra.mxu0 %v2776
    %3045 = vmatpush.msra.mxu0 %v2768
    %3046 = vmatmul.f32.gmra.mxu0 %v3026
    %v3047 = vpop.f32.mrf.mxu0
    %v3048 = vadd.f32 0.0, %v3047
    %3049 = vdwg.mxu0
    %3050 = vmatpush.msra.mxu0 %v3016
    %3051 = vmatpush.msra.mxu0 %v3008
    %3052 = vmatpush.msra.mxu0 %v3000
    %3053 = vmatpush.msra.mxu0 %v2992
    %3054 = vmatpush.msra.mxu0 %v2984
    %3055 = vmatpush.msra.mxu0 %v2976
    %3056 = vmatpush.msra.mxu0 %v2968
    %3057 = vmatpush.msra.mxu0 %v2960
    %3058 = vmatpush.msra.mxu0 %v2952
    %3059 = vmatpush.msra.mxu0 %v2944
    %3060 = vmatpush.msra.mxu0 %v2936
    %3061 = vmatpush.msra.mxu0 %v2928
    %3062 = vmatpush.msra.mxu0 %v2920
    %3063 = vmatpush.msra.mxu0 %v2912
    %3064 = vmatpush.msra.mxu0 %v2904
    %3065 = vmatpush.msra.mxu0 %v2896
    %3066 = vmatmul.f32.gmra.mxu0 %v3027
    %v3067 = vpop.f32.mrf.mxu0
    %v3068 = vadd.f32 %v3048, %v3067
    %3069 = vdwg.mxu0
    %3070 = vmatpush.msra.mxu0 %v2889
    %3071 = vmatpush.msra.mxu0 %v2881
    %3072 = vmatpush.msra.mxu0 %v2873
    %3073 = vmatpush.msra.mxu0 %v2865
    %3074 = vmatpush.msra.mxu0 %v2857
    %3075 = vmatpush.msra.mxu0 %v2849
    %3076 = vmatpush.msra.mxu0 %v2841
    %3077 = vmatpush.msra.mxu0 %v2833
    %3078 = vmatpush.msra.mxu0 %v2825
    %3079 = vmatpush.msra.mxu0 %v2817
    %3080 = vmatpush.msra.mxu0 %v2809
    %3081 = vmatpush.msra.mxu0 %v2801
    %3082 = vmatpush.msra.mxu0 %v2793
    %3083 = vmatpush.msra.mxu0 %v2785
    %3084 = vmatpush.msra.mxu0 %v2777
    %3085 = vmatpush.msra.mxu0 %v2769
    %3086 = vmatmul.f32.gmra.mxu0 %v3026
    %v3087 = vpop.f32.mrf.mxu0
    %v3088 = vadd.f32 0.0, %v3087
    %3089 = vdwg.mxu0
    %3090 = vmatpush.msra.mxu0 %v3017
    %3091 = vmatpush.msra.mxu0 %v3009
    %3092 = vmatpush.msra.mxu0 %v3001
    %3093 = vmatpush.msra.mxu0 %v2993
    %3094 = vmatpush.msra.mxu0 %v2985
    %3095 = vmatpush.msra.mxu0 %v2977
    %3096 = vmatpush.msra.mxu0 %v2969
    %3097 = vmatpush.msra.mxu0 %v2961
    %3098 = vmatpush.msra.mxu0 %v2953
    %3099 = vmatpush.msra.mxu0 %v2945
    %3100 = vmatpush.msra.mxu0 %v2937
    %3101 = vmatpush.msra.mxu0 %v2929
    %3102 = vmatpush.msra.mxu0 %v2921
    %3103 = vmatpush.msra.mxu0 %v2913
    %3104 = vmatpush.msra.mxu0 %v2905
    %3105 = vmatpush.msra.mxu0 %v2897
    %3106 = vmatmul.f32.gmra.mxu0 %v3027
    %v3107 = vpop.f32.mrf.mxu0
    %v3108 = vadd.f32 %v3088, %v3107
    %3109 = vdwg.mxu0
    %3110 = vmatpush.msra.mxu0 %v2890
    %3111 = vmatpush.msra.mxu0 %v2882
    %3112 = vmatpush.msra.mxu0 %v2874
    %3113 = vmatpush.msra.mxu0 %v2866
    %3114 = vmatpush.msra.mxu0 %v2858
    %3115 = vmatpush.msra.mxu0 %v2850
    %3116 = vmatpush.msra.mxu0 %v2842
    %3117 = vmatpush.msra.mxu0 %v2834
    %3118 = vmatpush.msra.mxu0 %v2826
    %3119 = vmatpush.msra.mxu0 %v2818
    %3120 = vmatpush.msra.mxu0 %v2810
    %3121 = vmatpush.msra.mxu0 %v2802
    %3122 = vmatpush.msra.mxu0 %v2794
    %3123 = vmatpush.msra.mxu0 %v2786
    %3124 = vmatpush.msra.mxu0 %v2778
    %3125 = vmatpush.msra.mxu0 %v2770
    %3126 = vmatmul.f32.gmra.mxu0 %v3026
    %v3127 = vpop.f32.mrf.mxu0
    %v3128 = vadd.f32 0.0, %v3127
    %3129 = vdwg.mxu0
    %3130 = vmatpush.msra.mxu0 %v3018
    %3131 = vmatpush.msra.mxu0 %v3010
    %3132 = vmatpush.msra.mxu0 %v3002
    %3133 = vmatpush.msra.mxu0 %v2994
    %3134 = vmatpush.msra.mxu0 %v2986
    %3135 = vmatpush.msra.mxu0 %v2978
    %3136 = vmatpush.msra.mxu0 %v2970
    %3137 = vmatpush.msra.mxu0 %v2962
    %3138 = vmatpush.msra.mxu0 %v2954
    %3139 = vmatpush.msra.mxu0 %v2946
    %3140 = vmatpush.msra.mxu0 %v2938
    %3141 = vmatpush.msra.mxu0 %v2930
    %3142 = vmatpush.msra.mxu0 %v2922
    %3143 = vmatpush.msra.mxu0 %v2914
    %3144 = vmatpush.msra.mxu0 %v2906
    %3145 = vmatpush.msra.mxu0 %v2898
    %3146 = vmatmul.f32.gmra.mxu0 %v3027
    %v3147 = vpop.f32.mrf.mxu0
    %v3148 = vadd.f32 %v3128, %v3147
    %3149 = vdwg.mxu0
    %3150 = vmatpush.msra.mxu0 %v2891
    %3151 = vmatpush.msra.mxu0 %v2883
    %3152 = vmatpush.msra.mxu0 %v2875
    %3153 = vmatpush.msra.mxu0 %v2867
    %3154 = vmatpush.msra.mxu0 %v2859
    %3155 = vmatpush.msra.mxu0 %v2851
    %3156 = vmatpush.msra.mxu0 %v2843
    %3157 = vmatpush.msra.mxu0 %v2835
    %3158 = vmatpush.msra.mxu0 %v2827
    %3159 = vmatpush.msra.mxu0 %v2819
    %3160 = vmatpush.msra.mxu0 %v2811
    %3161 = vmatpush.msra.mxu0 %v2803
    %3162 = vmatpush.msra.mxu0 %v2795
    %3163 = vmatpush.msra.mxu0 %v2787
    %3164 = vmatpush.msra.mxu0 %v2779
    %3165 = vmatpush.msra.mxu0 %v2771
    %3166 = vmatmul.f32.gmra.mxu0 %v3026
    %v3167 = vpop.f32.mrf.mxu0
    %v3168 = vadd.f32 0.0, %v3167
    %3169 = vdwg.mxu0
    %3170 = vmatpush.msra.mxu0 %v3019
    %3171 = vmatpush.msra.mxu0 %v3011
    %3172 = vmatpush.msra.mxu0 %v3003
    %3173 = vmatpush.msra.mxu0 %v2995
    %3174 = vmatpush.msra.mxu0 %v2987
    %3175 = vmatpush.msra.mxu0 %v2979
    %3176 = vmatpush.msra.mxu0 %v2971
    %3177 = vmatpush.msra.mxu0 %v2963
    %3178 = vmatpush.msra.mxu0 %v2955
    %3179 = vmatpush.msra.mxu0 %v2947
    %3180 = vmatpush.msra.mxu0 %v2939
    %3181 = vmatpush.msra.mxu0 %v2931
    %3182 = vmatpush.msra.mxu0 %v2923
    %3183 = vmatpush.msra.mxu0 %v2915
    %3184 = vmatpush.msra.mxu0 %v2907
    %3185 = vmatpush.msra.mxu0 %v2899
    %3186 = vmatmul.f32.gmra.mxu0 %v3027
    %v3187 = vpop.f32.mrf.mxu0
    %v3188 = vadd.f32 %v3168, %v3187
    %3189 = vdwg.mxu0
    %3190 = vmatpush.msra.mxu0 %v2892
    %3191 = vmatpush.msra.mxu0 %v2884
    %3192 = vmatpush.msra.mxu0 %v2876
    %3193 = vmatpush.msra.mxu0 %v2868
    %3194 = vmatpush.msra.mxu0 %v2860
    %3195 = vmatpush.msra.mxu0 %v2852
    %3196 = vmatpush.msra.mxu0 %v2844
    %3197 = vmatpush.msra.mxu0 %v2836
    %3198 = vmatpush.msra.mxu0 %v2828
    %3199 = vmatpush.msra.mxu0 %v2820
    %3200 = vmatpush.msra.mxu0 %v2812
    %3201 = vmatpush.msra.mxu0 %v2804
    %3202 = vmatpush.msra.mxu0 %v2796
    %3203 = vmatpush.msra.mxu0 %v2788
    %3204 = vmatpush.msra.mxu0 %v2780
    %3205 = vmatpush.msra.mxu0 %v2772
    %3206 = vmatmul.f32.gmra.mxu0 %v3026
    %v3207 = vpop.f32.mrf.mxu0
    %v3208 = vadd.f32 0.0, %v3207
    %3209 = vdwg.mxu0
    %3210 = vmatpush.msra.mxu0 %v3020
    %3211 = vmatpush.msra.mxu0 %v3012
    %3212 = vmatpush.msra.mxu0 %v3004
    %3213 = vmatpush.msra.mxu0 %v2996
    %3214 = vmatpush.msra.mxu0 %v2988
    %3215 = vmatpush.msra.mxu0 %v2980
    %3216 = vmatpush.msra.mxu0 %v2972
    %3217 = vmatpush.msra.mxu0 %v2964
    %3218 = vmatpush.msra.mxu0 %v2956
    %3219 = vmatpush.msra.mxu0 %v2948
    %3220 = vmatpush.msra.mxu0 %v2940
    %3221 = vmatpush.msra.mxu0 %v2932
    %3222 = vmatpush.msra.mxu0 %v2924
    %3223 = vmatpush.msra.mxu0 %v2916
    %3224 = vmatpush.msra.mxu0 %v2908
    %3225 = vmatpush.msra.mxu0 %v2900
    %3226 = vmatmul.f32.gmra.mxu0 %v3027
    %v3227 = vpop.f32.mrf.mxu0
    %v3228 = vadd.f32 %v3208, %v3227
    %3229 = vdwg.mxu0
    %3230 = vmatpush.msra.mxu0 %v2893
    %3231 = vmatpush.msra.mxu0 %v2885
    %3232 = vmatpush.msra.mxu0 %v2877
    %3233 = vmatpush.msra.mxu0 %v2869
    %3234 = vmatpush.msra.mxu0 %v2861
    %3235 = vmatpush.msra.mxu0 %v2853
    %3236 = vmatpush.msra.mxu0 %v2845
    %3237 = vmatpush.msra.mxu0 %v2837
    %3238 = vmatpush.msra.mxu0 %v2829
    %3239 = vmatpush.msra.mxu0 %v2821
    %3240 = vmatpush.msra.mxu0 %v2813
    %3241 = vmatpush.msra.mxu0 %v2805
    %3242 = vmatpush.msra.mxu0 %v2797
    %3243 = vmatpush.msra.mxu0 %v2789
    %3244 = vmatpush.msra.mxu0 %v2781
    %3245 = vmatpush.msra.mxu0 %v2773
    %3246 = vmatmul.f32.gmra.mxu0 %v3026
    %v3247 = vpop.f32.mrf.mxu0
    %v3248 = vadd.f32 0.0, %v3247
    %3249 = vdwg.mxu0
    %3250 = vmatpush.msra.mxu0 %v3021
    %3251 = vmatpush.msra.mxu0 %v3013
    %3252 = vmatpush.msra.mxu0 %v3005
    %3253 = vmatpush.msra.mxu0 %v2997
    %3254 = vmatpush.msra.mxu0 %v2989
    %3255 = vmatpush.msra.mxu0 %v2981
    %3256 = vmatpush.msra.mxu0 %v2973
    %3257 = vmatpush.msra.mxu0 %v2965
    %3258 = vmatpush.msra.mxu0 %v2957
    %3259 = vmatpush.msra.mxu0 %v2949
    %3260 = vmatpush.msra.mxu0 %v2941
    %3261 = vmatpush.msra.mxu0 %v2933
    %3262 = vmatpush.msra.mxu0 %v2925
    %3263 = vmatpush.msra.mxu0 %v2917
    %3264 = vmatpush.msra.mxu0 %v2909
    %3265 = vmatpush.msra.mxu0 %v2901
    %3266 = vmatmul.f32.gmra.mxu0 %v3027
    %v3267 = vpop.f32.mrf.mxu0
    %v3268 = vadd.f32 %v3248, %v3267
    %3269 = vdwg.mxu0
    %3270 = vmatpush.msra.mxu0 %v2894
    %3271 = vmatpush.msra.mxu0 %v2886
    %3272 = vmatpush.msra.mxu0 %v2878
    %3273 = vmatpush.msra.mxu0 %v2870
    %3274 = vmatpush.msra.mxu0 %v2862
    %3275 = vmatpush.msra.mxu0 %v2854
    %3276 = vmatpush.msra.mxu0 %v2846
    %3277 = vmatpush.msra.mxu0 %v2838
    %3278 = vmatpush.msra.mxu0 %v2830
    %3279 = vmatpush.msra.mxu0 %v2822
    %3280 = vmatpush.msra.mxu0 %v2814
    %3281 = vmatpush.msra.mxu0 %v2806
    %3282 = vmatpush.msra.mxu0 %v2798
    %3283 = vmatpush.msra.mxu0 %v2790
    %3284 = vmatpush.msra.mxu0 %v2782
    %3285 = vmatpush.msra.mxu0 %v2774
    %3286 = vmatmul.f32.gmra.mxu0 %v3026
    %v3287 = vpop.f32.mrf.mxu0
    %v3288 = vadd.f32 0.0, %v3287
    %3289 = vdwg.mxu0
    %3290 = vmatpush.msra.mxu0 %v3022
    %3291 = vmatpush.msra.mxu0 %v3014
    %3292 = vmatpush.msra.mxu0 %v3006
    %3293 = vmatpush.msra.mxu0 %v2998
    %3294 = vmatpush.msra.mxu0 %v2990
    %3295 = vmatpush.msra.mxu0 %v2982
    %3296 = vmatpush.msra.mxu0 %v2974
    %3297 = vmatpush.msra.mxu0 %v2966
    %3298 = vmatpush.msra.mxu0 %v2958
    %3299 = vmatpush.msra.mxu0 %v2950
    %3300 = vmatpush.msra.mxu0 %v2942
    %3301 = vmatpush.msra.mxu0 %v2934
    %3302 = vmatpush.msra.mxu0 %v2926
    %3303 = vmatpush.msra.mxu0 %v2918
    %3304 = vmatpush.msra.mxu0 %v2910
    %3305 = vmatpush.msra.mxu0 %v2902
    %3306 = vmatmul.f32.gmra.mxu0 %v3027
    %v3307 = vpop.f32.mrf.mxu0
    %v3308 = vadd.f32 %v3288, %v3307
    %3309 = vdwg.mxu0
    %3310 = vmatpush.msra.mxu0 %v2895
    %3311 = vmatpush.msra.mxu0 %v2887
    %3312 = vmatpush.msra.mxu0 %v2879
    %3313 = vmatpush.msra.mxu0 %v2871
    %3314 = vmatpush.msra.mxu0 %v2863
    %3315 = vmatpush.msra.mxu0 %v2855
    %3316 = vmatpush.msra.mxu0 %v2847
    %3317 = vmatpush.msra.mxu0 %v2839
    %3318 = vmatpush.msra.mxu0 %v2831
    %3319 = vmatpush.msra.mxu0 %v2823
    %3320 = vmatpush.msra.mxu0 %v2815
    %3321 = vmatpush.msra.mxu0 %v2807
    %3322 = vmatpush.msra.mxu0 %v2799
    %3323 = vmatpush.msra.mxu0 %v2791
    %3324 = vmatpush.msra.mxu0 %v2783
    %3325 = vmatpush.msra.mxu0 %v2775
    %3326 = vmatmul.f32.gmra.mxu0 %v3026
    %v3327 = vpop.f32.mrf.mxu0
    %v3328 = vadd.f32 0.0, %v3327
    %3329 = vdwg.mxu0
    %3330 = vmatpush.msra.mxu0 %v3023
    %3331 = vmatpush.msra.mxu0 %v3015
    %3332 = vmatpush.msra.mxu0 %v3007
    %3333 = vmatpush.msra.mxu0 %v2999
    %3334 = vmatpush.msra.mxu0 %v2991
    %3335 = vmatpush.msra.mxu0 %v2983
    %3336 = vmatpush.msra.mxu0 %v2975
    %3337 = vmatpush.msra.mxu0 %v2967
    %3338 = vmatpush.msra.mxu0 %v2959
    %3339 = vmatpush.msra.mxu0 %v2951
    %3340 = vmatpush.msra.mxu0 %v2943
    %3341 = vmatpush.msra.mxu0 %v2935
    %3342 = vmatpush.msra.mxu0 %v2927
    %3343 = vmatpush.msra.mxu0 %v2919
    %3344 = vmatpush.msra.mxu0 %v2911
    %3345 = vmatpush.msra.mxu0 %v2903
    %3346 = vmatmul.f32.gmra.mxu0 %v3027
    %v3347 = vpop.f32.mrf.mxu0
    %v3348 = vadd.f32 %v3328, %v3347
    %3349 = vdwg.mxu0
    %v3358 = vrot.slane %v3108, 6
    %v3359 = vrot.slane %v3148, 4
    %v3360 = vrot.slane %v3188, 2
    %v3361 = vrot.slane %v3268, 6
    %v3362 = vrot.slane %v3308, 4
    %v3363 = vrot.slane %v3348, 2
    %v3364 = vsel %vm621, %v3068, %v3358
    %v3365 = vsel %vm623, %v3359, %v3360
    %v3366 = vsel %vm625, %v3364, %v3365
    %v3367 = vsel %vm621, %v3228, %v3361
    %v3368 = vsel %vm623, %v3362, %v3363
    %v3369 = vsel %vm625, %v3367, %v3368
    %v3372 = vadd.f32 %v2766, %v3366
    %v3373 = vadd.f32 %v2767, %v3369
    %v3374 = vxor.u32 %v3372, 2147483648
    %v3375 = vmul.f32 %v3374, 1.442695
    %v3376 = vpow.pop %v3375
    %v3377 = vadd.f32 %v3376, 1.0
    %v3378 = vrcp.pop %v3377
    %v3379 = vmul.f32 %v3377, %v3378
    %v3380 = vsub.f32 1.0, %v3379
    %v3381 = vmul.f32 %v3378, %v3380
    %v3382 = vadd.f32 %v3378, %v3381
    %vm3383 = vweird.f32 %v3377
    %vm3384 = vweird.f32 %v3378
    %vm3385 = vmor %vm3383, %vm3384
    %v3386 = vsel %vm3385, %v3378, %v3382
    %v3387 = vand.u32 2147483647, %v3377
    %vm3388 = vcmp.eq.f32.partialorder %v3387, 8.507059e+37
    %v3389 = vand.u32 %v3377, 2147483648
    %v3390 = vor.u32 1.1754944e-38, %v3389
    %v3391 = vsel %vm3388, %v3390, %v3386
    %v3392 = vmul.f32 1.0, %v3391
    %v3394 = vrot.slane %v3372, 4
    %v3396 = vxor.u32 %v3394, 2147483648
    %v3397 = vmul.f32 %v3396, 1.442695
    %v3398 = vpow.pop %v3397
    %v3399 = vadd.f32 %v3398, 1.0
    %v3400 = vrcp.pop %v3399
    %v3401 = vmul.f32 %v3399, %v3400
    %v3402 = vsub.f32 1.0, %v3401
    %v3403 = vmul.f32 %v3400, %v3402
    %v3404 = vadd.f32 %v3400, %v3403
    %vm3405 = vweird.f32 %v3399
    %vm3406 = vweird.f32 %v3400
    %vm3407 = vmor %vm3405, %vm3406
    %v3408 = vsel %vm3407, %v3400, %v3404
    %v3409 = vand.u32 2147483647, %v3399
    %vm3410 = vcmp.eq.f32.partialorder %v3409, 8.507059e+37
    %v3411 = vand.u32 %v3399, 2147483648
    %v3412 = vor.u32 1.1754944e-38, %v3411
    %v3413 = vsel %vm3410, %v3412, %v3408
    %v3414 = vmul.f32 1.0, %v3413
    %v3415 = vtanh.pop %v3373
    %v3417 = vrot.slane %v3373, 4
    %v3419 = vxor.u32 %v3417, 2147483648
    %v3420 = vmul.f32 %v3419, 1.442695
    %v3421 = vpow.pop %v3420
    %v3422 = vadd.f32 %v3421, 1.0
    %v3423 = vrcp.pop %v3422
    %v3424 = vmul.f32 %v3422, %v3423
    %v3425 = vsub.f32 1.0, %v3424
    %v3426 = vmul.f32 %v3423, %v3425
    %v3427 = vadd.f32 %v3423, %v3426
    %vm3428 = vweird.f32 %v3422
    %vm3429 = vweird.f32 %v3423
    %vm3430 = vmor %vm3428, %vm3429
    %v3431 = vsel %vm3430, %v3423, %v3427
    %v3432 = vand.u32 2147483647, %v3422
    %vm3433 = vcmp.eq.f32.partialorder %v3432, 8.507059e+37
    %v3434 = vand.u32 %v3422, 2147483648
    %v3435 = vor.u32 1.1754944e-38, %v3434
    %v3436 = vsel %vm3433, %v3435, %v3431
    %v3437 = vmul.f32 1.0, %v3436
    %v3438 = vmul.f32 %v3414, %v2755
    %v3439 = vmul.f32 %v3392, %v3415
    %v3440 = vadd.f32 %v3438, %v3439
    %v3441 = vtanh.pop %v3440
    %v3442 = vmul.f32 %v3437, %v3441
    %s3443 = smul.u32 %s2762, 2
    %s3444 = smul.addr %s3443, 2
    %s3445 = scalar_lea.vmem %s2, %s3444
    %3446 = vst [vmem:[%s3445] sm:$0xf] %v3442
  $region14: #{forward.3} parent=0 // loop_footer
    %s16 = sadd.s32 1, %s12
  $region15: #{forward.3} parent=0 // loop_footer_branch
    %11 = sbr.rel target = $region11
  $region16: #{forward.3} parent=0 // loop_exit
    _
  // Predicated region
  $region17: #{forward.3} parent=0 // pred_check
    _
  $region18: #{forward.3} parent=0 // pred_check_branch
    %3448 = sbr.rel (0) target = $region20
  $region19: #{forward.3} parent=0 // pred_region
    _
  $region20: #{forward.3} parent=0 // pred_fallthru
    _
  // Predicated region
  $region21: #{forward.3} parent=0 // pred_check
    _
  $region22: #{forward.3} parent=0 // pred_check_branch
    %3450 = sbr.rel (0) target = $region24
  $region23: #{forward.3} parent=0 // pred_region
    _
  $region24: #{forward.3} parent=0 // pred_fallthru
    _

</llo_original>
